<compile_context>
chip_gen: v7x
topology: tpu7x:2x2x1
jax: 0.10.0
libtpu: 0.0.40
codegen_flags: <defaults>
</compile_context>

<pallas_src>
import functools

import jax
import jax.numpy as jnp
from jax.experimental import pallas as pl
from jax.experimental.pallas import tpu as pltpu

IN_C = 896
BR_C = 128
CAT_C = 256
SCALE = 0.1
BN_EPS = 1e-5


# ----------------------------------------------------------------------------
# Pallas kernel: one batch element per grid step, everything fused in VMEM.
# ----------------------------------------------------------------------------
def _inception_b_kernel(x_ref, w12_ref, b12_ref, w2b_ref, b2b_ref,
                        w2c_ref, b2c_ref, wfa_ref, wfb_ref, bf_ref, o_ref):
    _, H, W, C = x_ref.shape
    HW = H * W
    x = x_ref[0]                                   # (H, W, 896) f32
    xm = x.reshape(HW, C)                          # (HW, 896)   f32 (residual)
    xm_bf = xm.astype(jnp.bfloat16)

    # --- fused branch1 + branch2/conv1: one 896 -> 256 matmul (BN folded) ----
    z = jnp.maximum(
        jnp.dot(xm_bf, w12_ref[...], preferred_element_type=jnp.float32)
        + b12_ref[...], 0.0)                       # (HW, 256) f32
    br1 = z[:, :BR_C].astype(jnp.bfloat16)         # (HW, 128)  branch1 output
    t = z[:, BR_C:].astype(jnp.bfloat16)           # (HW, 128)  branch2/conv1

    # --- branch2 / conv2: 1x7 conv along W (pad 3) as ONE im2col matmul ------
    t3 = t.reshape(H, W, BR_C)
    zw = jnp.zeros((H, 3, BR_C), jnp.bfloat16)
    tp = jnp.concatenate([zw, t3, zw], axis=1)     # (H, W+6, 128) bf16
    colw = jnp.concatenate([tp[:, k:k + W, :] for k in range(7)],
                           axis=-1).reshape(HW, 7 * BR_C)   # (HW, 896)
    u = jnp.maximum(
        jnp.dot(colw, w2b_ref[...], preferred_element_type=jnp.float32)
        + b2b_ref[...], 0.0)                       # (HW, 128) f32

    # --- branch2 / conv3: 7x1 conv along H (pad 3) as ONE im2col matmul ------
    # (H shifts are along the major axis -> tile-aligned slices)
    u3 = u.astype(jnp.bfloat16).reshape(H, W, BR_C)
    zh = jnp.zeros((3, W, BR_C), jnp.bfloat16)
    up = jnp.concatenate([zh, u3, zh], axis=0)     # (H+6, W, 128) bf16
    colh = jnp.concatenate([up[k:k + H, :, :] for k in range(7)],
                           axis=-1).reshape(HW, 7 * BR_C)   # (HW, 896)
    br2 = jnp.maximum(
        jnp.dot(colh, w2c_ref[...], preferred_element_type=jnp.float32)
        + b2c_ref[...], 0.0).astype(jnp.bfloat16)  # (HW, 128)

    # --- final 1x1 conv (256 -> 896, real bias), concat-free split -----------
    y = (jnp.dot(br1, wfa_ref[...], preferred_element_type=jnp.float32)
         + jnp.dot(br2, wfb_ref[...], preferred_element_type=jnp.float32)
         + bf_ref[...])                            # (HW, 896) f32

    # --- scaled residual + ReLU (f32) ----------------------------------------
    out = jnp.maximum(SCALE * y + xm, 0.0)
    o_ref[0] = out.reshape(H, W, C).astype(o_ref.dtype)


def _zero_map(nd, n):
    return (0,) * nd


def inception_b_unit(x_nchw, kernel_params):
    """x_nchw: (N, 896, H, W) float32; returns (N, 896, H, W)."""
    N, C, H, W = x_nchw.shape
    assert C == IN_C
    x = jnp.transpose(x_nchw, (0, 2, 3, 1))                # -> NHWC

    in_specs = [pl.BlockSpec((1, H, W, C), lambda n: (n, 0, 0, 0))]
    for p in kernel_params:
        # Constant block index -> Pallas keeps the weight resident in VMEM.
        in_specs.append(
            pl.BlockSpec(p.shape, functools.partial(_zero_map, p.ndim)))

    # TODO(synk): add an H-tile grid axis (with a 3-row halo for the 7x1 conv)
    # so v7x megacore / the DMA pipeline gets more than N steps when N is tiny.
    out = pl.pallas_call(
        _inception_b_kernel,
        out_shape=jax.ShapeDtypeStruct((N, H, W, C), x.dtype),
        grid_spec=pltpu.PrefetchScalarGridSpec(
            num_scalar_prefetch=0,
            grid=(N,),
            in_specs=in_specs,
            out_specs=pl.BlockSpec((1, H, W, C), lambda n: (n, 0, 0, 0)),
        ),
        compiler_params=pltpu.CompilerParams(
            dimension_semantics=("parallel",),
            vmem_limit_bytes=48 * 1024 * 1024),     # fits v7x's 64 MiB VMEM
    )(x, *kernel_params)
    return jnp.transpose(out, (0, 3, 1, 2))                # -> NCHW


# ----------------------------------------------------------------------------
# Deterministic parameter construction (synthetic) + BN folding.
# ----------------------------------------------------------------------------
def _fold_bn(w_oihw, gamma, beta, mean, var, eps):
    scale = gamma / jnp.sqrt(var + eps)
    return w_oihw * scale[:, None, None, None], beta - mean * scale


def init_params(key):
    def convbn(k, cin, cout, kh, kw):
        ks = jax.random.split(k, 5)
        fan_in = cin * kh * kw
        w = jax.random.normal(ks[0], (cout, cin, kh, kw), jnp.float32) \
            / jnp.sqrt(jnp.float32(fan_in))
        gamma = 1.0 + 0.1 * jax.random.normal(ks[1], (cout,), jnp.float32)
        beta = 0.1 * jax.random.normal(ks[2], (cout,), jnp.float32)
        mean = 0.1 * jax.random.normal(ks[3], (cout,), jnp.float32)
        var = 0.5 + 0.5 * jax.nn.sigmoid(
            jax.random.normal(ks[4], (cout,), jnp.float32))
        return _fold_bn(w, gamma, beta, mean, var, BN_EPS)

    k = jax.random.split(key, 5)
    w1, b1 = convbn(k[0], IN_C, BR_C, 1, 1)
    w2a, b2a = convbn(k[1], IN_C, BR_C, 1, 1)
    w2b, b2b = convbn(k[2], BR_C, BR_C, 1, 7)
    w2c, b2c = convbn(k[3], BR_C, BR_C, 7, 1)
    kf = jax.random.split(k[4], 2)
    wf = jax.random.normal(kf[0], (IN_C, CAT_C, 1, 1), jnp.float32) \
        / jnp.sqrt(jnp.float32(CAT_C))
    bf = 0.1 * jax.random.normal(kf[1], (IN_C,), jnp.float32)
    return dict(w1=w1, b1=b1, w2a=w2a, b2a=b2a, w2b=w2b, b2b=b2b,
                w2c=w2c, b2c=b2c, wf=wf, bf=bf)


def to_kernel_params(p):
    """Folded OIHW conv weights -> fused, matmul-form, bf16 kernel weights."""
    bf = jnp.bfloat16
    b2d = lambda b: b.reshape(1, -1)                        # biases stay f32

    # Fused 1x1 weights: [branch1 | branch2-conv1] along the output axis.
    w1 = p['w1'][:, :, 0, 0].T                              # (896, 128)
    w2a = p['w2a'][:, :, 0, 0].T                            # (896, 128)
    w12 = jnp.concatenate([w1, w2a], axis=1).astype(bf)     # (896, 256)
    b12 = jnp.concatenate([p['b1'], p['b2a']]).reshape(1, -1)

    # im2col weights: row index = k*128 + cin, col = cout.
    w2b = jnp.transpose(p['w2b'][:, :, 0, :], (2, 1, 0)) \
             .reshape(7 * BR_C, BR_C).astype(bf)            # (896, 128)
    w2c = jnp.transpose(p['w2c'][:, :, :, 0], (2, 1, 0)) \
             .reshape(7 * BR_C, BR_C).astype(bf)            # (896, 128)

    # Final 1x1 split over the concat inputs (br1 rows, then br2 rows).
    wf = p['wf'][:, :, 0, 0].T                              # (256, 896)
    wfa = wf[:BR_C, :].astype(bf)                           # (128, 896)
    wfb = wf[BR_C:, :].astype(bf)                           # (128, 896)

    return (w12, b12, w2b, b2d(p['b2b']), w2c, b2d(p['b2c']),
            wfa, wfb, b2d(p['bf']))


# ----------------------------------------------------------------------------
# Pure-JAX reference (same folded f32 weights) for a sanity check.
# ----------------------------------------------------------------------------
def reference(x_nchw, p):
    def conv(x, w, b, pad):
        y = jax.lax.conv_general_dilated(
            x, w, window_strides=(1, 1), padding=pad,
            dimension_numbers=('NCHW', 'OIHW', 'NCHW'),
            precision=jax.lax.Precision.HIGHEST)
        return y + b[None, :, None, None]

    br1 = jax.nn.relu(conv(x_nchw, p['w1'], p['b1'], [(0, 0), (0, 0)]))
    t = jax.nn.relu(conv(x_nchw, p['w2a'], p['b2a'], [(0, 0), (0, 0)]))
    t = jax.nn.relu(conv(t, p['w2b'], p['b2b'], [(0, 0), (3, 3)]))
    t = jax.nn.relu(conv(t, p['w2c'], p['b2c'], [(3, 3), (0, 0)]))
    cat = jnp.concatenate([br1, t], axis=1)
    y = conv(cat, p['wf'], p['bf'], [(0, 0), (0, 0)])
    return jax.nn.relu(SCALE * y + x_nchw)


if __name__ == "__main__":
    key = jax.random.PRNGKey(0)
    kx, kp = jax.random.split(key)

    N, H, W = 2, 16, 16                       # small spatial; channels fixed by module
    x = jax.random.normal(kx, (N, IN_C, H, W), jnp.float32)

    params = init_params(kp)
    kparams = to_kernel_params(params)

    out = inception_b_unit(x, kparams)
    out = jax.block_until_ready(out)

    assert out.shape == (N, IN_C, H, W)
    ref = reference(x, params)
    max_err = float(jnp.max(jnp.abs(out - ref)))
    if not (max_err < 1e-1):                  # bf16-matmul kernel vs f32 HIGHEST ref
        raise SystemExit(f"kernel/reference mismatch: max abs err = {max_err}")

    print("KERNEL_OK")
</pallas_src>

<mosaic_0001>
module attributes {stable_mosaic.version = 11 : i64} {
  func.func @_inception_b_kernel(%arg0: i32, %arg1: memref<1x16x16x896xf32, #tpu.memory_space<vmem>>, %arg2: memref<896x256xbf16, #tpu.memory_space<vmem>>, %arg3: memref<1x256xf32, #tpu.memory_space<vmem>>, %arg4: memref<896x128xbf16, #tpu.memory_space<vmem>>, %arg5: memref<1x128xf32, #tpu.memory_space<vmem>>, %arg6: memref<896x128xbf16, #tpu.memory_space<vmem>>, %arg7: memref<1x128xf32, #tpu.memory_space<vmem>>, %arg8: memref<128x896xbf16, #tpu.memory_space<vmem>>, %arg9: memref<128x896xbf16, #tpu.memory_space<vmem>>, %arg10: memref<1x896xf32, #tpu.memory_space<vmem>>, %arg11: memref<1x16x16x896xf32, #tpu.memory_space<vmem>>) attributes {dimension_semantics = [#tpu.dimension_semantics<parallel>], iteration_bounds = array<i64: 2>, scalar_prefetch = 0 : i64, scratch_operands = 0 : i64, tpu.core_type = #tpu.core_type<tc>, window_params = [{transform_indices = @transform_0, window_bounds = array<i64: 1, 16, 16, 896>}, {pipeline_mode = #tpu.pipeline_mode<synchronous>, transform_indices = @transform_1, window_bounds = array<i64: 896, 256>}, {pipeline_mode = #tpu.pipeline_mode<synchronous>, transform_indices = @transform_2, window_bounds = array<i64: 1, 256>}, {pipeline_mode = #tpu.pipeline_mode<synchronous>, transform_indices = @transform_3, window_bounds = array<i64: 896, 128>}, {pipeline_mode = #tpu.pipeline_mode<synchronous>, transform_indices = @transform_4, window_bounds = array<i64: 1, 128>}, {pipeline_mode = #tpu.pipeline_mode<synchronous>, transform_indices = @transform_5, window_bounds = array<i64: 896, 128>}, {pipeline_mode = #tpu.pipeline_mode<synchronous>, transform_indices = @transform_6, window_bounds = array<i64: 1, 128>}, {pipeline_mode = #tpu.pipeline_mode<synchronous>, transform_indices = @transform_7, window_bounds = array<i64: 128, 896>}, {pipeline_mode = #tpu.pipeline_mode<synchronous>, transform_indices = @transform_8, window_bounds = array<i64: 128, 896>}, {pipeline_mode = #tpu.pipeline_mode<synchronous>, transform_indices = @transform_9, window_bounds = array<i64: 1, 896>}, {transform_indices = @transform_10, window_bounds = array<i64: 1, 16, 16, 896>}]} {
    %c0 = arith.constant 0 : index
    %c0_0 = arith.constant 0 : index
    %c0_1 = arith.constant 0 : index
    %c0_2 = arith.constant 0 : index
    %0 = vector.load %arg1[%c0, %c0_0, %c0_1, %c0_2] : memref<1x16x16x896xf32, #tpu.memory_space<vmem>>, vector<1x16x16x896xf32>
    %1 = vector.shape_cast %0 : vector<1x16x16x896xf32> to vector<16x16x896xf32>
    %2 = vector.shape_cast %1 : vector<16x16x896xf32> to vector<256x896xf32>
    %3 = arith.truncf %2 : vector<256x896xf32> to vector<256x896xbf16>
    %c0_3 = arith.constant 0 : index
    %c0_4 = arith.constant 0 : index
    %4 = vector.load %arg2[%c0_3, %c0_4] : memref<896x256xbf16, #tpu.memory_space<vmem>>, vector<896x256xbf16>
    %cst = arith.constant dense<0.000000e+00> : vector<256x256xf32>
    %5 = tpu.matmul %3, %4, %cst {dimension_numbers = #tpu.dot_dimension_numbers<[1], [0], [0], [1], [0, 0, 1, 1], [], []>} : vector<256x896xbf16>, vector<896x256xbf16>, vector<256x256xf32> -> vector<256x256xf32>
    %c0_5 = arith.constant 0 : index
    %c0_6 = arith.constant 0 : index
    %6 = vector.load %arg3[%c0_5, %c0_6] : memref<1x256xf32, #tpu.memory_space<vmem>>, vector<1x256xf32>
    %7 = vector.broadcast %6 : vector<1x256xf32> to vector<256x256xf32>
    %8 = arith.addf %5, %7 : vector<256x256xf32>
    %cst_7 = arith.constant 0.000000e+00 : f32
    %9 = vector.broadcast %cst_7 : f32 to vector<256x256xf32>
    %10 = arith.maximumf %8, %9 : vector<256x256xf32>
    %11 = vector.extract_strided_slice %10 {offsets = [0, 0], sizes = [256, 128], strides = [1, 1]} : vector<256x256xf32> to vector<256x128xf32>
    %12 = arith.truncf %11 : vector<256x128xf32> to vector<256x128xbf16>
    %13 = vector.extract_strided_slice %10 {offsets = [0, 128], sizes = [256, 128], strides = [1, 1]} : vector<256x256xf32> to vector<256x128xf32>
    %14 = arith.truncf %13 : vector<256x128xf32> to vector<256x128xbf16>
    %15 = vector.shape_cast %14 : vector<256x128xbf16> to vector<16x16x128xbf16>
    %cst_8 = arith.constant 0.000000e+00 : bf16
    %16 = vector.broadcast %cst_8 : bf16 to vector<16x3x128xbf16>
    %17 = tpu.concatenate %16, %15, %16 in 1 : vector<16x3x128xbf16>, vector<16x16x128xbf16>, vector<16x3x128xbf16> -> vector<16x22x128xbf16>
    %18 = vector.extract_strided_slice %17 {offsets = [0, 0, 0], sizes = [16, 16, 128], strides = [1, 1, 1]} : vector<16x22x128xbf16> to vector<16x16x128xbf16>
    %19 = vector.extract_strided_slice %17 {offsets = [0, 1, 0], sizes = [16, 16, 128], strides = [1, 1, 1]} : vector<16x22x128xbf16> to vector<16x16x128xbf16>
    %20 = vector.extract_strided_slice %17 {offsets = [0, 2, 0], sizes = [16, 16, 128], strides = [1, 1, 1]} : vector<16x22x128xbf16> to vector<16x16x128xbf16>
    %21 = vector.extract_strided_slice %17 {offsets = [0, 3, 0], sizes = [16, 16, 128], strides = [1, 1, 1]} : vector<16x22x128xbf16> to vector<16x16x128xbf16>
    %22 = vector.extract_strided_slice %17 {offsets = [0, 4, 0], sizes = [16, 16, 128], strides = [1, 1, 1]} : vector<16x22x128xbf16> to vector<16x16x128xbf16>
    %23 = vector.extract_strided_slice %17 {offsets = [0, 5, 0], sizes = [16, 16, 128], strides = [1, 1, 1]} : vector<16x22x128xbf16> to vector<16x16x128xbf16>
    %24 = vector.extract_strided_slice %17 {offsets = [0, 6, 0], sizes = [16, 16, 128], strides = [1, 1, 1]} : vector<16x22x128xbf16> to vector<16x16x128xbf16>
    %25 = tpu.concatenate %18, %19, %20, %21, %22, %23, %24 in 2 : vector<16x16x128xbf16>, vector<16x16x128xbf16>, vector<16x16x128xbf16>, vector<16x16x128xbf16>, vector<16x16x128xbf16>, vector<16x16x128xbf16>, vector<16x16x128xbf16> -> vector<16x16x896xbf16>
    %26 = vector.shape_cast %25 : vector<16x16x896xbf16> to vector<256x896xbf16>
    %c0_9 = arith.constant 0 : index
    %c0_10 = arith.constant 0 : index
    %27 = vector.load %arg4[%c0_9, %c0_10] : memref<896x128xbf16, #tpu.memory_space<vmem>>, vector<896x128xbf16>
    %cst_11 = arith.constant dense<0.000000e+00> : vector<256x128xf32>
    %28 = tpu.matmul %26, %27, %cst_11 {dimension_numbers = #tpu.dot_dimension_numbers<[1], [0], [0], [1], [0, 0, 1, 1], [], []>} : vector<256x896xbf16>, vector<896x128xbf16>, vector<256x128xf32> -> vector<256x128xf32>
    %c0_12 = arith.constant 0 : index
    %c0_13 = arith.constant 0 : index
    %29 = vector.load %arg5[%c0_12, %c0_13] : memref<1x128xf32, #tpu.memory_space<vmem>>, vector<1x128xf32>
    %30 = vector.broadcast %29 : vector<1x128xf32> to vector<256x128xf32>
    %31 = arith.addf %28, %30 : vector<256x128xf32>
    %cst_14 = arith.constant 0.000000e+00 : f32
    %32 = vector.broadcast %cst_14 : f32 to vector<256x128xf32>
    %33 = arith.maximumf %31, %32 : vector<256x128xf32>
    %34 = arith.truncf %33 : vector<256x128xf32> to vector<256x128xbf16>
    %35 = vector.shape_cast %34 : vector<256x128xbf16> to vector<16x16x128xbf16>
    %cst_15 = arith.constant 0.000000e+00 : bf16
    %36 = vector.broadcast %cst_15 : bf16 to vector<3x16x128xbf16>
    %37 = tpu.concatenate %36, %35, %36 in 0 : vector<3x16x128xbf16>, vector<16x16x128xbf16>, vector<3x16x128xbf16> -> vector<22x16x128xbf16>
    %38 = vector.extract_strided_slice %37 {offsets = [0, 0, 0], sizes = [16, 16, 128], strides = [1, 1, 1]} : vector<22x16x128xbf16> to vector<16x16x128xbf16>
    %39 = vector.extract_strided_slice %37 {offsets = [1, 0, 0], sizes = [16, 16, 128], strides = [1, 1, 1]} : vector<22x16x128xbf16> to vector<16x16x128xbf16>
    %40 = vector.extract_strided_slice %37 {offsets = [2, 0, 0], sizes = [16, 16, 128], strides = [1, 1, 1]} : vector<22x16x128xbf16> to vector<16x16x128xbf16>
    %41 = vector.extract_strided_slice %37 {offsets = [3, 0, 0], sizes = [16, 16, 128], strides = [1, 1, 1]} : vector<22x16x128xbf16> to vector<16x16x128xbf16>
    %42 = vector.extract_strided_slice %37 {offsets = [4, 0, 0], sizes = [16, 16, 128], strides = [1, 1, 1]} : vector<22x16x128xbf16> to vector<16x16x128xbf16>
    %43 = vector.extract_strided_slice %37 {offsets = [5, 0, 0], sizes = [16, 16, 128], strides = [1, 1, 1]} : vector<22x16x128xbf16> to vector<16x16x128xbf16>
    %44 = vector.extract_strided_slice %37 {offsets = [6, 0, 0], sizes = [16, 16, 128], strides = [1, 1, 1]} : vector<22x16x128xbf16> to vector<16x16x128xbf16>
    %45 = tpu.concatenate %38, %39, %40, %41, %42, %43, %44 in 2 : vector<16x16x128xbf16>, vector<16x16x128xbf16>, vector<16x16x128xbf16>, vector<16x16x128xbf16>, vector<16x16x128xbf16>, vector<16x16x128xbf16>, vector<16x16x128xbf16> -> vector<16x16x896xbf16>
    %46 = vector.shape_cast %45 : vector<16x16x896xbf16> to vector<256x896xbf16>
    %c0_16 = arith.constant 0 : index
    %c0_17 = arith.constant 0 : index
    %47 = vector.load %arg6[%c0_16, %c0_17] : memref<896x128xbf16, #tpu.memory_space<vmem>>, vector<896x128xbf16>
    %cst_18 = arith.constant dense<0.000000e+00> : vector<256x128xf32>
    %48 = tpu.matmul %46, %47, %cst_18 {dimension_numbers = #tpu.dot_dimension_numbers<[1], [0], [0], [1], [0, 0, 1, 1], [], []>} : vector<256x896xbf16>, vector<896x128xbf16>, vector<256x128xf32> -> vector<256x128xf32>
    %c0_19 = arith.constant 0 : index
    %c0_20 = arith.constant 0 : index
    %49 = vector.load %arg7[%c0_19, %c0_20] : memref<1x128xf32, #tpu.memory_space<vmem>>, vector<1x128xf32>
    %50 = vector.broadcast %49 : vector<1x128xf32> to vector<256x128xf32>
    %51 = arith.addf %48, %50 : vector<256x128xf32>
    %cst_21 = arith.constant 0.000000e+00 : f32
    %52 = vector.broadcast %cst_21 : f32 to vector<256x128xf32>
    %53 = arith.maximumf %51, %52 : vector<256x128xf32>
    %54 = arith.truncf %53 : vector<256x128xf32> to vector<256x128xbf16>
    %c0_22 = arith.constant 0 : index
    %c0_23 = arith.constant 0 : index
    %55 = vector.load %arg8[%c0_22, %c0_23] : memref<128x896xbf16, #tpu.memory_space<vmem>>, vector<128x896xbf16>
    %cst_24 = arith.constant dense<0.000000e+00> : vector<256x896xf32>
    %56 = tpu.matmul %12, %55, %cst_24 {dimension_numbers = #tpu.dot_dimension_numbers<[1], [0], [0], [1], [0, 0, 1, 1], [], []>} : vector<256x128xbf16>, vector<128x896xbf16>, vector<256x896xf32> -> vector<256x896xf32>
    %c0_25 = arith.constant 0 : index
    %c0_26 = arith.constant 0 : index
    %57 = vector.load %arg9[%c0_25, %c0_26] : memref<128x896xbf16, #tpu.memory_space<vmem>>, vector<128x896xbf16>
    %cst_27 = arith.constant dense<0.000000e+00> : vector<256x896xf32>
    %58 = tpu.matmul %54, %57, %cst_27 {dimension_numbers = #tpu.dot_dimension_numbers<[1], [0], [0], [1], [0, 0, 1, 1], [], []>} : vector<256x128xbf16>, vector<128x896xbf16>, vector<256x896xf32> -> vector<256x896xf32>
    %59 = arith.addf %56, %58 : vector<256x896xf32>
    %c0_28 = arith.constant 0 : index
    %c0_29 = arith.constant 0 : index
    %60 = vector.load %arg10[%c0_28, %c0_29] : memref<1x896xf32, #tpu.memory_space<vmem>>, vector<1x896xf32>
    %61 = vector.broadcast %60 : vector<1x896xf32> to vector<256x896xf32>
    %62 = arith.addf %59, %61 : vector<256x896xf32>
    %cst_30 = arith.constant 1.000000e-01 : f32
    %63 = vector.broadcast %cst_30 : f32 to vector<256x896xf32>
    %64 = arith.mulf %63, %62 : vector<256x896xf32>
    %65 = arith.addf %64, %2 : vector<256x896xf32>
    %cst_31 = arith.constant 0.000000e+00 : f32
    %66 = vector.broadcast %cst_31 : f32 to vector<256x896xf32>
    %67 = arith.maximumf %65, %66 : vector<256x896xf32>
    %68 = vector.shape_cast %67 : vector<256x896xf32> to vector<16x16x896xf32>
    %c0_32 = arith.constant 0 : index
    %c0_33 = arith.constant 0 : index
    %c0_34 = arith.constant 0 : index
    %c0_35 = arith.constant 0 : index
    %69 = vector.load %arg11[%c0_32, %c0_33, %c0_34, %c0_35] : memref<1x16x16x896xf32, #tpu.memory_space<vmem>>, vector<1x16x16x896xf32>
    %70 = vector.shape_cast %69 : vector<1x16x16x896xf32> to vector<16x16x896xf32>
    %71 = vector.shape_cast %68 : vector<16x16x896xf32> to vector<1x16x16x896xf32>
    tpu.vector_store %arg11[%c0_32, %c0_33, %c0_34, %c0_35], %71 {strides = array<i32>} : memref<1x16x16x896xf32, #tpu.memory_space<vmem>>, vector<1x16x16x896xf32>,
    return
  }
  func.func @transform_0(%arg0: i32) -> (i32, i32, i32, i32) {
    %c0_i32 = arith.constant 0 : i32
    %c0_i32_0 = arith.constant 0 : i32
    %c0_i32_1 = arith.constant 0 : i32
    %c0_i32_2 = arith.constant 0 : i32
    return %arg0, %c0_i32, %c0_i32_0, %c0_i32_1 : i32, i32, i32, i32
  }
  func.func @transform_1(%arg0: i32) -> (i32, i32) {
    %c0_i32 = arith.constant 0 : i32
    %c0_i32_0 = arith.constant 0 : i32
    %c0_i32_1 = arith.constant 0 : i32
    return %c0_i32, %c0_i32_0 : i32, i32
  }
  func.func @transform_2(%arg0: i32) -> (i32, i32) {
    %c0_i32 = arith.constant 0 : i32
    %c0_i32_0 = arith.constant 0 : i32
    %c0_i32_1 = arith.constant 0 : i32
    return %c0_i32, %c0_i32_0 : i32, i32
  }
  func.func @transform_3(%arg0: i32) -> (i32, i32) {
    %c0_i32 = arith.constant 0 : i32
    %c0_i32_0 = arith.constant 0 : i32
    %c0_i32_1 = arith.constant 0 : i32
    return %c0_i32, %c0_i32_0 : i32, i32
  }
  func.func @transform_4(%arg0: i32) -> (i32, i32) {
    %c0_i32 = arith.constant 0 : i32
    %c0_i32_0 = arith.constant 0 : i32
    %c0_i32_1 = arith.constant 0 : i32
    return %c0_i32, %c0_i32_0 : i32, i32
  }
  func.func @transform_5(%arg0: i32) -> (i32, i32) {
    %c0_i32 = arith.constant 0 : i32
    %c0_i32_0 = arith.constant 0 : i32
    %c0_i32_1 = arith.constant 0 : i32
    return %c0_i32, %c0_i32_0 : i32, i32
  }
  func.func @transform_6(%arg0: i32) -> (i32, i32) {
    %c0_i32 = arith.constant 0 : i32
    %c0_i32_0 = arith.constant 0 : i32
    %c0_i32_1 = arith.constant 0 : i32
    return %c0_i32, %c0_i32_0 : i32, i32
  }
  func.func @transform_7(%arg0: i32) -> (i32, i32) {
    %c0_i32 = arith.constant 0 : i32
    %c0_i32_0 = arith.constant 0 : i32
    %c0_i32_1 = arith.constant 0 : i32
    return %c0_i32, %c0_i32_0 : i32, i32
  }
  func.func @transform_8(%arg0: i32) -> (i32, i32) {
    %c0_i32 = arith.constant 0 : i32
    %c0_i32_0 = arith.constant 0 : i32
    %c0_i32_1 = arith.constant 0 : i32
    return %c0_i32, %c0_i32_0 : i32, i32
  }
  func.func @transform_9(%arg0: i32) -> (i32, i32) {
    %c0_i32 = arith.constant 0 : i32
    %c0_i32_0 = arith.constant 0 : i32
    %c0_i32_1 = arith.constant 0 : i32
    return %c0_i32, %c0_i32_0 : i32, i32
  }
  func.func @transform_10(%arg0: i32) -> (i32, i32, i32, i32) {
    %c0_i32 = arith.constant 0 : i32
    %c0_i32_0 = arith.constant 0 : i32
    %c0_i32_1 = arith.constant 0 : i32
    %c0_i32_2 = arith.constant 0 : i32
    return %arg0, %c0_i32, %c0_i32_0, %c0_i32_1 : i32, i32, i32, i32
  }
}

</mosaic_0001>

<llo_original>
// kernel: tpu_custom_call.1
$region0: #{tpu_custom_call.1}
  #allocation0 [shape = 'u32[]', space=smem, size = 0x4, offset = 0x4, fixed_abs, tag = 'smem constant byte address 0x4 - core index']
  #allocation1 [shape = 'u32[144,128]{1,0:T(1,128)}', space=vmem, size = 0x12000, scoped, tag = 'internal scratch']
  %s0 = inlined_call_operand.hbm [shape: f32[2,16,16,896], index: 0, kind: input, shape index: {}]
  %s1 = inlined_call_operand.hbm [shape: bf16[896,256], index: 1, kind: input, shape index: {}]
  %s2 = inlined_call_operand.hbm [shape: f32[1,256], index: 2, kind: input, shape index: {}]
  %s3 = inlined_call_operand.hbm [shape: bf16[896,128], index: 3, kind: input, shape index: {}]
  %s4 = inlined_call_operand.hbm [shape: f32[1,128], index: 4, kind: input, shape index: {}]
  %s5 = inlined_call_operand.hbm [shape: bf16[896,128], index: 5, kind: input, shape index: {}]
  %s6 = inlined_call_operand.hbm [shape: f32[1,128], index: 6, kind: input, shape index: {}]
  %s7 = inlined_call_operand.hbm [shape: bf16[128,896], index: 7, kind: input, shape index: {}]
  %s8 = inlined_call_operand.hbm [shape: bf16[128,896], index: 8, kind: input, shape index: {}]
  %s9 = inlined_call_operand.hbm [shape: f32[1,896], index: 9, kind: input, shape index: {}]
  %s10 = inlined_call_operand.hbm [shape: f32[2,16,16,896], index: 10, kind: output, shape index: {}]
  %s11 = sld [smem:[#allocation0]]
  $region113: #{tpu_custom_call.1} parent=0
    _
  %s13 = ssub.s32 1, %s11
  %s14 = scalar_select 0, %s13, %s11
  $region1: #{tpu_custom_call.1} parent=0
    #allocation2 [shape = 'u8[1835008]{0}', space=vmem, size = 0x1c0000, scoped, tag = 'input window, operand 0']
    #allocation3 [shape = 's32[2]{0}', space=sflag, size = 0x8, scoped, tag = 'scoped memory for tpu_custom_call.1']
    #allocation4 [shape = 's32[2]{0}', space=sflag, size = 0x8, scoped, tag = 'scoped memory for tpu_custom_call.1']
    #allocation5 [shape = 'u8[458752]{0}', space=vmem, size = 0x70000, scoped, tag = 'input window, operand 1, single buffered']
    #allocation6 [shape = 's32[1]{0}', space=sflag, size = 0x4, scoped, tag = 'scoped memory for tpu_custom_call.1']
    #allocation7 [shape = 'u8[1024]{0}', space=vmem, size = 0x400, scoped, tag = 'input window, operand 2, single buffered']
    #allocation8 [shape = 'u8[229376]{0}', space=vmem, size = 0x38000, scoped, tag = 'input window, operand 3, single buffered']
    #allocation9 [shape = 's32[1]{0}', space=sflag, size = 0x4, scoped, tag = 'scoped memory for tpu_custom_call.1']
    #allocation10 [shape = 'u8[512]{0}', space=vmem, size = 0x400, scoped, tag = 'input window, operand 4, single buffered']
    #allocation11 [shape = 'u8[229376]{0}', space=vmem, size = 0x38000, scoped, tag = 'input window, operand 5, single buffered']
    #allocation12 [shape = 's32[1]{0}', space=sflag, size = 0x4, scoped, tag = 'scoped memory for tpu_custom_call.1']
    #allocation13 [shape = 'u8[512]{0}', space=vmem, size = 0x400, scoped, tag = 'input window, operand 6, single buffered']
    #allocation14 [shape = 'u8[229376]{0}', space=vmem, size = 0x38000, scoped, tag = 'input window, operand 7, single buffered']
    #allocation15 [shape = 's32[1]{0}', space=sflag, size = 0x4, scoped, tag = 'scoped memory for tpu_custom_call.1']
    #allocation16 [shape = 'u8[229376]{0}', space=vmem, size = 0x38000, scoped, tag = 'input window, operand 8, single buffered']
    #allocation17 [shape = 'u8[3584]{0}', space=vmem, size = 0x1000, scoped, tag = 'input window, operand 9, single buffered']
    #allocation18 [shape = 's32[1]{0}', space=sflag, size = 0x4, scoped, tag = 'scoped memory for tpu_custom_call.1']
    #allocation19 [shape = 'u8[1835008]{0}', space=vmem, size = 0x1c0000, scoped, tag = 'output window, operand 0']
    %15 = vsyncpa [#allocation3], 0
    %s16 = scalar_lea.sflag [#allocation3], 1
    %17 = vsyncpa %s16, 0
    %18 = vsyncpa [#allocation6], 0
    %19 = vsyncpa [#allocation9], 0
    %20 = vsyncpa [#allocation12], 0
    %21 = vsyncpa [#allocation15], 0
    %22 = vsyncpa [#allocation18], 0
    %23 = vsyncpa [#allocation4], 0
    %s24 = scalar_lea.sflag [#allocation4], 1
    %25 = vsyncpa %s24, 0
    loop: start=0, step=1, limit=4
    $region2: #{tpu_custom_call.1} parent=1 // loop_pre_header
      _
    $region3: #{tpu_custom_call.1} parent=1 // loop_header
      %s27 = sphi 0, %s31
      %p28 = scmp.ge.s32.totalorder %s27, 4
      %s37 = sphi 0, %s39
      %s40 = sphi 0, %s37
      %s41 = sphi 0, %s40
      %s57 = sphi 0, %s41
      %s61 = sphi 0, %s61
      %s63 = sphi 0, %s61
      %s64 = sphi 0, %s63
      %s78 = sphi 0, %s64
      %s82 = sphi 0, %s82
      %s84 = sphi 0, %s82
      %s85 = sphi 0, %s84
      %s99 = sphi 0, %s85
      %s103 = sphi 0, %s103
      %s105 = sphi 0, %s103
      %s106 = sphi 0, %s105
      %s120 = sphi 0, %s106
      %s124 = sphi 0, %s124
      %s126 = sphi 0, %s124
      %s127 = sphi 0, %s126
      %s141 = sphi 0, %s127
      %s145 = sphi 0, %s145
      %s147 = sphi 0, %s145
      %s148 = sphi 0, %s147
      %s162 = sphi 0, %s148
      %s166 = sphi 0, %s166
      %s168 = sphi 0, %s166
      %s169 = sphi 0, %s168
      %s183 = sphi 0, %s169
      %s187 = sphi 0, %s187
      %s189 = sphi 0, %s187
      %s190 = sphi 0, %s189
      %s204 = sphi 0, %s190
      %s208 = sphi 0, %s208
      %s210 = sphi 0, %s208
      %s211 = sphi 0, %s210
      %s225 = sphi 0, %s211
      %s229 = sphi 0, %s229
      %s231 = sphi 0, %s229
      %s232 = sphi 0, %s231
      %s246 = sphi 0, %s232
      %s252 = sphi 0, %s254
      %s255 = sphi 0, %s252
      %s256 = sphi 0, %s255
      %s272 = sphi 0, %s256
    $region4: #{tpu_custom_call.1} parent=1 // loop_header_branch
      %30 = sbr.rel (%p28) target = $region8
    $region5: #{tpu_custom_call.1} parent=1 // loop_body
      %s32 = ssub.s32 %s27, 1
      %s33 = ssub.s32 %s27, 2
      %s34 = sadd.s32 %s27, 1
      %s35 = ssub.s32 %s27, %s34
      %p36 = scmp.eq.s32.totalorder %s35, 0
      %s38 = sadd.s32 %s37, 1
      %s39 = scalar_select %p36, %s37, %s38
      %p42 = pneg %p36
      %p43 = scmp.eq.s32.totalorder %s27, 1
      %p44 = por %p42, %p43
      %p45 = scmp.ne.s32.totalorder %s37, %s40
      %p46 = scmp.eq.s32.totalorder %s27, 0
      %p47 = por %p45, %p46
      %p48 = scmp.ne.s32.totalorder %s37, %s40
      %p49 = scmp.eq.s32.totalorder %s32, 1
      %p50 = por %p48, %p49
      %p51 = scmp.ne.s32.totalorder %s40, %s41
      %p52 = scmp.eq.s32.totalorder %s32, 0
      %p53 = por %p51, %p52
      %p54 = scmp.ne.s32.totalorder %s40, %s41
      %p55 = scmp.eq.s32.totalorder %s33, 1
      %p56 = por %p54, %p55
      %p58 = scmp.ne.s32.totalorder %s41, %s57
      %p59 = scmp.eq.s32.totalorder %s33, 0
      %p60 = por %p58, %p59
      %s62 = sadd.s32 %s61, 1
      %p65 = scmp.eq.s32.totalorder %s27, 1
      %p66 = scmp.ne.s32.totalorder %s61, %s63
      %p67 = scmp.eq.s32.totalorder %s27, 0
      %p68 = por %p66, %p67
      %p69 = scmp.ne.s32.totalorder %s61, %s63
      %p70 = scmp.eq.s32.totalorder %s32, 1
      %p71 = por %p69, %p70
      %p72 = scmp.ne.s32.totalorder %s63, %s64
      %p73 = scmp.eq.s32.totalorder %s32, 0
      %p74 = por %p72, %p73
      %p75 = scmp.ne.s32.totalorder %s63, %s64
      %p76 = scmp.eq.s32.totalorder %s33, 1
      %p77 = por %p75, %p76
      %p79 = scmp.ne.s32.totalorder %s64, %s78
      %p80 = scmp.eq.s32.totalorder %s33, 0
      %p81 = por %p79, %p80
      %s83 = sadd.s32 %s82, 1
      %p86 = scmp.eq.s32.totalorder %s27, 1
      %p87 = scmp.ne.s32.totalorder %s82, %s84
      %p88 = scmp.eq.s32.totalorder %s27, 0
      %p89 = por %p87, %p88
      %p90 = scmp.ne.s32.totalorder %s82, %s84
      %p91 = scmp.eq.s32.totalorder %s32, 1
      %p92 = por %p90, %p91
      %p93 = scmp.ne.s32.totalorder %s84, %s85
      %p94 = scmp.eq.s32.totalorder %s32, 0
      %p95 = por %p93, %p94
      %p96 = scmp.ne.s32.totalorder %s84, %s85
      %p97 = scmp.eq.s32.totalorder %s33, 1
      %p98 = por %p96, %p97
      %p100 = scmp.ne.s32.totalorder %s85, %s99
      %p101 = scmp.eq.s32.totalorder %s33, 0
      %p102 = por %p100, %p101
      %s104 = sadd.s32 %s103, 1
      %p107 = scmp.eq.s32.totalorder %s27, 1
      %p108 = scmp.ne.s32.totalorder %s103, %s105
      %p109 = scmp.eq.s32.totalorder %s27, 0
      %p110 = por %p108, %p109
      %p111 = scmp.ne.s32.totalorder %s103, %s105
      %p112 = scmp.eq.s32.totalorder %s32, 1
      %p113 = por %p111, %p112
      %p114 = scmp.ne.s32.totalorder %s105, %s106
      %p115 = scmp.eq.s32.totalorder %s32, 0
      %p116 = por %p114, %p115
      %p117 = scmp.ne.s32.totalorder %s105, %s106
      %p118 = scmp.eq.s32.totalorder %s33, 1
      %p119 = por %p117, %p118
      %p121 = scmp.ne.s32.totalorder %s106, %s120
      %p122 = scmp.eq.s32.totalorder %s33, 0
      %p123 = por %p121, %p122
      %s125 = sadd.s32 %s124, 1
      %p128 = scmp.eq.s32.totalorder %s27, 1
      %p129 = scmp.ne.s32.totalorder %s124, %s126
      %p130 = scmp.eq.s32.totalorder %s27, 0
      %p131 = por %p129, %p130
      %p132 = scmp.ne.s32.totalorder %s124, %s126
      %p133 = scmp.eq.s32.totalorder %s32, 1
      %p134 = por %p132, %p133
      %p135 = scmp.ne.s32.totalorder %s126, %s127
      %p136 = scmp.eq.s32.totalorder %s32, 0
      %p137 = por %p135, %p136
      %p138 = scmp.ne.s32.totalorder %s126, %s127
      %p139 = scmp.eq.s32.totalorder %s33, 1
      %p140 = por %p138, %p139
      %p142 = scmp.ne.s32.totalorder %s127, %s141
      %p143 = scmp.eq.s32.totalorder %s33, 0
      %p144 = por %p142, %p143
      %s146 = sadd.s32 %s145, 1
      %p149 = scmp.eq.s32.totalorder %s27, 1
      %p150 = scmp.ne.s32.totalorder %s145, %s147
      %p151 = scmp.eq.s32.totalorder %s27, 0
      %p152 = por %p150, %p151
      %p153 = scmp.ne.s32.totalorder %s145, %s147
      %p154 = scmp.eq.s32.totalorder %s32, 1
      %p155 = por %p153, %p154
      %p156 = scmp.ne.s32.totalorder %s147, %s148
      %p157 = scmp.eq.s32.totalorder %s32, 0
      %p158 = por %p156, %p157
      %p159 = scmp.ne.s32.totalorder %s147, %s148
      %p160 = scmp.eq.s32.totalorder %s33, 1
      %p161 = por %p159, %p160
      %p163 = scmp.ne.s32.totalorder %s148, %s162
      %p164 = scmp.eq.s32.totalorder %s33, 0
      %p165 = por %p163, %p164
      %s167 = sadd.s32 %s166, 1
      %p170 = scmp.eq.s32.totalorder %s27, 1
      %p171 = scmp.ne.s32.totalorder %s166, %s168
      %p172 = scmp.eq.s32.totalorder %s27, 0
      %p173 = por %p171, %p172
      %p174 = scmp.ne.s32.totalorder %s166, %s168
      %p175 = scmp.eq.s32.totalorder %s32, 1
      %p176 = por %p174, %p175
      %p177 = scmp.ne.s32.totalorder %s168, %s169
      %p178 = scmp.eq.s32.totalorder %s32, 0
      %p179 = por %p177, %p178
      %p180 = scmp.ne.s32.totalorder %s168, %s169
      %p181 = scmp.eq.s32.totalorder %s33, 1
      %p182 = por %p180, %p181
      %p184 = scmp.ne.s32.totalorder %s169, %s183
      %p185 = scmp.eq.s32.totalorder %s33, 0
      %p186 = por %p184, %p185
      %s188 = sadd.s32 %s187, 1
      %p191 = scmp.eq.s32.totalorder %s27, 1
      %p192 = scmp.ne.s32.totalorder %s187, %s189
      %p193 = scmp.eq.s32.totalorder %s27, 0
      %p194 = por %p192, %p193
      %p195 = scmp.ne.s32.totalorder %s187, %s189
      %p196 = scmp.eq.s32.totalorder %s32, 1
      %p197 = por %p195, %p196
      %p198 = scmp.ne.s32.totalorder %s189, %s190
      %p199 = scmp.eq.s32.totalorder %s32, 0
      %p200 = por %p198, %p199
      %p201 = scmp.ne.s32.totalorder %s189, %s190
      %p202 = scmp.eq.s32.totalorder %s33, 1
      %p203 = por %p201, %p202
      %p205 = scmp.ne.s32.totalorder %s190, %s204
      %p206 = scmp.eq.s32.totalorder %s33, 0
      %p207 = por %p205, %p206
      %s209 = sadd.s32 %s208, 1
      %p212 = scmp.eq.s32.totalorder %s27, 1
      %p213 = scmp.ne.s32.totalorder %s208, %s210
      %p214 = scmp.eq.s32.totalorder %s27, 0
      %p215 = por %p213, %p214
      %p216 = scmp.ne.s32.totalorder %s208, %s210
      %p217 = scmp.eq.s32.totalorder %s32, 1
      %p218 = por %p216, %p217
      %p219 = scmp.ne.s32.totalorder %s210, %s211
      %p220 = scmp.eq.s32.totalorder %s32, 0
      %p221 = por %p219, %p220
      %p222 = scmp.ne.s32.totalorder %s210, %s211
      %p223 = scmp.eq.s32.totalorder %s33, 1
      %p224 = por %p222, %p223
      %p226 = scmp.ne.s32.totalorder %s211, %s225
      %p227 = scmp.eq.s32.totalorder %s33, 0
      %p228 = por %p226, %p227
      %s230 = sadd.s32 %s229, 1
      %p233 = scmp.eq.s32.totalorder %s27, 1
      %p234 = scmp.ne.s32.totalorder %s229, %s231
      %p235 = scmp.eq.s32.totalorder %s27, 0
      %p236 = por %p234, %p235
      %p237 = scmp.ne.s32.totalorder %s229, %s231
      %p238 = scmp.eq.s32.totalorder %s32, 1
      %p239 = por %p237, %p238
      %p240 = scmp.ne.s32.totalorder %s231, %s232
      %p241 = scmp.eq.s32.totalorder %s32, 0
      %p242 = por %p240, %p241
      %p243 = scmp.ne.s32.totalorder %s231, %s232
      %p244 = scmp.eq.s32.totalorder %s33, 1
      %p245 = por %p243, %p244
      %p247 = scmp.ne.s32.totalorder %s232, %s246
      %p248 = scmp.eq.s32.totalorder %s33, 0
      %p249 = por %p247, %p248
      %s250 = ssub.s32 %s27, %s34
      %p251 = scmp.eq.s32.totalorder %s250, 0
      %s253 = sadd.s32 %s252, 1
      %s254 = scalar_select %p251, %s252, %s253
      %p257 = pneg %p251
      %p258 = scmp.eq.s32.totalorder %s27, 1
      %p259 = por %p257, %p258
      %p260 = scmp.ne.s32.totalorder %s252, %s255
      %p261 = scmp.eq.s32.totalorder %s27, 0
      %p262 = por %p260, %p261
      %p263 = scmp.ne.s32.totalorder %s252, %s255
      %p264 = scmp.eq.s32.totalorder %s32, 1
      %p265 = por %p263, %p264
      %p266 = scmp.ne.s32.totalorder %s255, %s256
      %p267 = scmp.eq.s32.totalorder %s32, 0
      %p268 = por %p266, %p267
      %p269 = scmp.ne.s32.totalorder %s255, %s256
      %p270 = scmp.eq.s32.totalorder %s33, 1
      %p271 = por %p269, %p270
      %p273 = scmp.ne.s32.totalorder %s256, %s272
      %p274 = scmp.eq.s32.totalorder %s33, 0
      %p275 = por %p273, %p274
      %p276 = scmp.le.s32.totalorder 1, %s27
      %p277 = scmp.lt.s32.totalorder %s27, 3
      %p278 = pnand %p276, %p277
      %p279 = pneg %p278
      // Predicated region
      $region9: #{tpu_custom_call.1} parent=5 // pred_check
        _
      $region10: #{tpu_custom_call.1} parent=5 // pred_check_branch
        %281 = sbr.rel (%p278) target = $region12
      $region11: #{tpu_custom_call.1} parent=5 // pred_region
        %s282 = ssub.s32 %s27, 1
        // Predicated region
        $region13: #{tpu_custom_call.1} parent=11 // pred_check
          %p283 = pneg %p74
        $region14: #{tpu_custom_call.1} parent=11 // pred_check_branch
          %285 = sbr.rel (%p283) target = $region16
        $region15: #{tpu_custom_call.1} parent=11 // pred_region
          %s287 = ssub.s32 14336, 14336
          %288 = vsyncadd [#allocation6], %s287
          %s289 = sshll.u32 [#allocation5], 4
          %s290 = int_to_ptr.vmem [resolvable:$true] %s289
          %295 = dma.hbm_to_vmem [thread:$0]  %s1, 14336, %s290, [#allocation6], 128, 128, 8
        $region16: #{tpu_custom_call.1} parent=11 // pred_fallthru
          _
        // Predicated region
        $region17: #{tpu_custom_call.1} parent=11 // pred_check
          %p296 = pneg %p95
        $region18: #{tpu_custom_call.1} parent=11 // pred_check_branch
          %298 = sbr.rel (%p296) target = $region20
        $region19: #{tpu_custom_call.1} parent=11 // pred_region
          %s300 = ssub.s32 32, 32
          %301 = vsyncadd [#allocation6], %s300
          %s303 = sshll.u32 [#allocation7], 4
          %s304 = int_to_ptr.vmem [resolvable:$true] %s303
          %306 = dma.hbm_to_vmem [thread:$0]  %s2, 32, %s304, [#allocation6]
        $region20: #{tpu_custom_call.1} parent=11 // pred_fallthru
          _
        // Predicated region
        $region21: #{tpu_custom_call.1} parent=11 // pred_check
          %p307 = pneg %p116
        $region22: #{tpu_custom_call.1} parent=11 // pred_check_branch
          %309 = sbr.rel (%p307) target = $region24
        $region23: #{tpu_custom_call.1} parent=11 // pred_region
          %s311 = ssub.s32 7168, 7168
          %312 = vsyncadd [#allocation9], %s311
          %s313 = sshll.u32 [#allocation8], 4
          %s314 = int_to_ptr.vmem [resolvable:$true] %s313
          %319 = dma.hbm_to_vmem [thread:$0]  %s3, 7168, %s314, [#allocation9], 64, 64, 4
        $region24: #{tpu_custom_call.1} parent=11 // pred_fallthru
          _
        // Predicated region
        $region25: #{tpu_custom_call.1} parent=11 // pred_check
          %p320 = pneg %p137
        $region26: #{tpu_custom_call.1} parent=11 // pred_check_branch
          %322 = sbr.rel (%p320) target = $region28
        $region27: #{tpu_custom_call.1} parent=11 // pred_region
          %s324 = ssub.s32 16, 16
          %325 = vsyncadd [#allocation9], %s324
          %s327 = sshll.u32 [#allocation10], 4
          %s328 = int_to_ptr.vmem [resolvable:$true] %s327
          %330 = dma.hbm_to_vmem [thread:$0]  %s4, 16, %s328, [#allocation9]
        $region28: #{tpu_custom_call.1} parent=11 // pred_fallthru
          _
        // Predicated region
        $region29: #{tpu_custom_call.1} parent=11 // pred_check
          %p331 = pneg %p158
        $region30: #{tpu_custom_call.1} parent=11 // pred_check_branch
          %333 = sbr.rel (%p331) target = $region32
        $region31: #{tpu_custom_call.1} parent=11 // pred_region
          %s335 = ssub.s32 7168, 7168
          %336 = vsyncadd [#allocation12], %s335
          %s337 = sshll.u32 [#allocation11], 4
          %s338 = int_to_ptr.vmem [resolvable:$true] %s337
          %343 = dma.hbm_to_vmem [thread:$0]  %s5, 7168, %s338, [#allocation12], 64, 64, 4
        $region32: #{tpu_custom_call.1} parent=11 // pred_fallthru
          _
        // Predicated region
        $region33: #{tpu_custom_call.1} parent=11 // pred_check
          %p344 = pneg %p179
        $region34: #{tpu_custom_call.1} parent=11 // pred_check_branch
          %346 = sbr.rel (%p344) target = $region36
        $region35: #{tpu_custom_call.1} parent=11 // pred_region
          %s348 = ssub.s32 16, 16
          %349 = vsyncadd [#allocation12], %s348
          %s351 = sshll.u32 [#allocation13], 4
          %s352 = int_to_ptr.vmem [resolvable:$true] %s351
          %354 = dma.hbm_to_vmem [thread:$0]  %s6, 16, %s352, [#allocation12]
        $region36: #{tpu_custom_call.1} parent=11 // pred_fallthru
          _
        // Predicated region
        $region37: #{tpu_custom_call.1} parent=11 // pred_check
          %p355 = pneg %p200
        $region38: #{tpu_custom_call.1} parent=11 // pred_check_branch
          %357 = sbr.rel (%p355) target = $region40
        $region39: #{tpu_custom_call.1} parent=11 // pred_region
          %s359 = ssub.s32 7168, 7168
          %360 = vsyncadd [#allocation15], %s359
          %s361 = sshll.u32 [#allocation14], 4
          %s362 = int_to_ptr.vmem [resolvable:$true] %s361
          %367 = dma.hbm_to_vmem [thread:$0]  %s7, 7168, %s362, [#allocation15], 448, 448, 28
        $region40: #{tpu_custom_call.1} parent=11 // pred_fallthru
          _
        // Predicated region
        $region41: #{tpu_custom_call.1} parent=11 // pred_check
          %p368 = pneg %p221
        $region42: #{tpu_custom_call.1} parent=11 // pred_check_branch
          %370 = sbr.rel (%p368) target = $region44
        $region43: #{tpu_custom_call.1} parent=11 // pred_region
          %s372 = ssub.s32 7168, 7168
          %373 = vsyncadd [#allocation15], %s372
          %s374 = sshll.u32 [#allocation16], 4
          %s375 = int_to_ptr.vmem [resolvable:$true] %s374
          %380 = dma.hbm_to_vmem [thread:$0]  %s8, 7168, %s375, [#allocation15], 448, 448, 28
        $region44: #{tpu_custom_call.1} parent=11 // pred_fallthru
          _
        // Predicated region
        $region45: #{tpu_custom_call.1} parent=11 // pred_check
          %p381 = pneg %p242
        $region46: #{tpu_custom_call.1} parent=11 // pred_check_branch
          %383 = sbr.rel (%p381) target = $region48
        $region47: #{tpu_custom_call.1} parent=11 // pred_region
          %s385 = ssub.s32 112, 112
          %386 = vsyncadd [#allocation18], %s385
          %s388 = sshll.u32 [#allocation17], 4
          %s389 = int_to_ptr.vmem [resolvable:$true] %s388
          %391 = dma.hbm_to_vmem [thread:$0]  %s9, 112, %s389, [#allocation18]
        $region48: #{tpu_custom_call.1} parent=11 // pred_fallthru
          _
      $region12: #{tpu_custom_call.1} parent=5 // pred_fallthru
        _
      %p392 = scmp.lt.s32.totalorder %s27, 2
      // Predicated region
      $region49: #{tpu_custom_call.1} parent=5 // pred_check
        %p393 = pneg %p392
      $region50: #{tpu_custom_call.1} parent=5 // pred_check_branch
        %395 = sbr.rel (%p393) target = $region52
      $region51: #{tpu_custom_call.1} parent=5 // pred_region
        // Predicated region
        $region53: #{tpu_custom_call.1} parent=51 // pred_check
          %p396 = pneg %p47
        $region54: #{tpu_custom_call.1} parent=51 // pred_check_branch
          %398 = sbr.rel (%p396) target = $region56
        $region55: #{tpu_custom_call.1} parent=51 // pred_region
          %s399 = sand.u32 %s37, 1
          %s400 = scalar_lea.sflag [#allocation3], %s399
          %s401 = sand.u32 %s37, 1
          %s402 = smul.addr %s401, 1792
          %s403 = scalar_lea.vmem [#allocation2], %s402
          %s405 = ssub.s32 28672, 28672
          %406 = vsyncadd %s400, %s405
          %s407 = smul.addr %s27, 224
          %s408 = smul.addr %s407, 128
          %s409 = scalar_lea.hbm %s0, %s408
          %s410 = sshll.u32 %s403, 4
          %s411 = int_to_ptr.vmem [resolvable:$true] %s410
          %416 = dma.hbm_to_vmem [thread:$0]  %s409, 28672, %s411, %s400, 896, 896, 56
        $region56: #{tpu_custom_call.1} parent=51 // pred_fallthru
          _
      $region52: #{tpu_custom_call.1} parent=5 // pred_fallthru
        _
      %p417 = scmp.le.s32.totalorder 1, %s27
      %p418 = scmp.lt.s32.totalorder %s27, 3
      %p419 = pnand %p417, %p418
      %p420 = pneg %p419
      // Predicated region
      $region57: #{tpu_custom_call.1} parent=5 // pred_check
        _
      $region58: #{tpu_custom_call.1} parent=5 // pred_check_branch
        %422 = sbr.rel (%p419) target = $region60
      $region59: #{tpu_custom_call.1} parent=5 // pred_region
        %s423 = ssub.s32 %s27, 1
        %s424 = sand.u32 %s40, 1
        %s425 = scalar_lea.sflag [#allocation3], %s424
        %s426 = sand.u32 %s40, 1
        %s427 = smul.addr %s426, 1792
        %s428 = scalar_lea.vmem [#allocation2], %s427
        // Predicated region
        $region61: #{tpu_custom_call.1} parent=59 // pred_check
          %p429 = pneg %p53
        $region62: #{tpu_custom_call.1} parent=59 // pred_check_branch
          %431 = sbr.rel (%p429) target = $region64
        $region63: #{tpu_custom_call.1} parent=59 // pred_region
          %432 = dma.done %s425, 28672
        $region64: #{tpu_custom_call.1} parent=59 // pred_fallthru
          _
        // Predicated region
        $region65: #{tpu_custom_call.1} parent=59 // pred_check
          %p433 = pneg %p74
        $region66: #{tpu_custom_call.1} parent=59 // pred_check_branch
          %435 = sbr.rel (%p433) target = $region68
        $region67: #{tpu_custom_call.1} parent=59 // pred_region
          %436 = dma.done [#allocation6], 14336
        $region68: #{tpu_custom_call.1} parent=59 // pred_fallthru
          _
        // Predicated region
        $region69: #{tpu_custom_call.1} parent=59 // pred_check
          %p437 = pneg %p95
        $region70: #{tpu_custom_call.1} parent=59 // pred_check_branch
          %439 = sbr.rel (%p437) target = $region72
        $region71: #{tpu_custom_call.1} parent=59 // pred_region
          %440 = dma.done [#allocation6], 32
        $region72: #{tpu_custom_call.1} parent=59 // pred_fallthru
          _
        // Predicated region
        $region73: #{tpu_custom_call.1} parent=59 // pred_check
          %p441 = pneg %p116
        $region74: #{tpu_custom_call.1} parent=59 // pred_check_branch
          %443 = sbr.rel (%p441) target = $region76
        $region75: #{tpu_custom_call.1} parent=59 // pred_region
          %444 = dma.done [#allocation9], 7168
        $region76: #{tpu_custom_call.1} parent=59 // pred_fallthru
          _
        // Predicated region
        $region77: #{tpu_custom_call.1} parent=59 // pred_check
          %p445 = pneg %p137
        $region78: #{tpu_custom_call.1} parent=59 // pred_check_branch
          %447 = sbr.rel (%p445) target = $region80
        $region79: #{tpu_custom_call.1} parent=59 // pred_region
          %448 = dma.done [#allocation9], 16
        $region80: #{tpu_custom_call.1} parent=59 // pred_fallthru
          _
        // Predicated region
        $region81: #{tpu_custom_call.1} parent=59 // pred_check
          %p449 = pneg %p158
        $region82: #{tpu_custom_call.1} parent=59 // pred_check_branch
          %451 = sbr.rel (%p449) target = $region84
        $region83: #{tpu_custom_call.1} parent=59 // pred_region
          %452 = dma.done [#allocation12], 7168
        $region84: #{tpu_custom_call.1} parent=59 // pred_fallthru
          _
        // Predicated region
        $region85: #{tpu_custom_call.1} parent=59 // pred_check
          %p453 = pneg %p179
        $region86: #{tpu_custom_call.1} parent=59 // pred_check_branch
          %455 = sbr.rel (%p453) target = $region88
        $region87: #{tpu_custom_call.1} parent=59 // pred_region
          %456 = dma.done [#allocation12], 16
        $region88: #{tpu_custom_call.1} parent=59 // pred_fallthru
          _
        // Predicated region
        $region89: #{tpu_custom_call.1} parent=59 // pred_check
          %p457 = pneg %p200
        $region90: #{tpu_custom_call.1} parent=59 // pred_check_branch
          %459 = sbr.rel (%p457) target = $region92
        $region91: #{tpu_custom_call.1} parent=59 // pred_region
          %460 = dma.done [#allocation15], 7168
        $region92: #{tpu_custom_call.1} parent=59 // pred_fallthru
          _
        // Predicated region
        $region93: #{tpu_custom_call.1} parent=59 // pred_check
          %p461 = pneg %p221
        $region94: #{tpu_custom_call.1} parent=59 // pred_check_branch
          %463 = sbr.rel (%p461) target = $region96
        $region95: #{tpu_custom_call.1} parent=59 // pred_region
          %464 = dma.done [#allocation15], 7168
        $region96: #{tpu_custom_call.1} parent=59 // pred_fallthru
          _
        // Predicated region
        $region97: #{tpu_custom_call.1} parent=59 // pred_check
          %p465 = pneg %p242
        $region98: #{tpu_custom_call.1} parent=59 // pred_check_branch
          %467 = sbr.rel (%p465) target = $region100
        $region99: #{tpu_custom_call.1} parent=59 // pred_region
          %468 = dma.done [#allocation18], 112
        $region100: #{tpu_custom_call.1} parent=59 // pred_fallthru
          _
        %s469 = sand.u32 %s40, 1
        %s470 = scalar_lea.sflag [#allocation3], %s469
        %s471 = sand.u32 %s40, 1
        %s472 = smul.addr %s471, 1792
        %s473 = scalar_lea.vmem [#allocation2], %s472
        %p474 = pneg %p53
        %p475 = pneg %p50
        %p476 = pneg %p74
        %p477 = pneg %p71
        %p478 = pneg %p95
        %p479 = pneg %p92
        %p480 = pneg %p116
        %p481 = pneg %p113
        %p482 = pneg %p137
        %p483 = pneg %p134
        %p484 = pneg %p158
        %p485 = pneg %p155
        %p486 = pneg %p179
        %p487 = pneg %p176
        %p488 = pneg %p200
        %p489 = pneg %p197
        %p490 = pneg %p221
        %p491 = pneg %p218
        %p492 = pneg %p242
        %p493 = pneg %p239
        %p494 = pneg %p268
        %p495 = pneg %p265
        %s496 = sand.u32 %s255, 1
        %s497 = scalar_lea.sflag [#allocation4], %s496
        %s498 = sand.u32 %s255, 1
        %s499 = smul.addr %s498, 1792
        %s500 = scalar_lea.vmem [#allocation19], %s499
        %v502 = vld [vmem:[%s428] sm:$0xff]
        %v503 = vld [vmem:[%s428 + $0x8] sm:$0xff]
        %v504 = vld [vmem:[%s428 + $0x10] sm:$0xff]
        %v505 = vld [vmem:[%s428 + $0x18] sm:$0xff]
        %v506 = vld [vmem:[%s428 + $0x20] sm:$0xff]
        %v507 = vld [vmem:[%s428 + $0x28] sm:$0xff]
        %v508 = vld [vmem:[%s428 + $0x30] sm:$0xff]
        %v509 = vld [vmem:[%s428 + $0x38] sm:$0xff]
        %v510 = vld [vmem:[%s428 + $0x40] sm:$0xff]
        %v511 = vld [vmem:[%s428 + $0x48] sm:$0xff]
        %v512 = vld [vmem:[%s428 + $0x50] sm:$0xff]
        %v513 = vld [vmem:[%s428 + $0x58] sm:$0xff]
        %v514 = vld [vmem:[%s428 + $0x60] sm:$0xff]
        %v515 = vld [vmem:[%s428 + $0x68] sm:$0xff]
        %v516 = vld [vmem:[%s428 + $0x70] sm:$0xff]
        %v517 = vld [vmem:[%s428 + $0x78] sm:$0xff]
        %v518 = vld [vmem:[%s428 + $0x80] sm:$0xff]
        %v519 = vld [vmem:[%s428 + $0x88] sm:$0xff]
        %v520 = vld [vmem:[%s428 + $0x90] sm:$0xff]
        %v521 = vld [vmem:[%s428 + $0x98] sm:$0xff]
        %v522 = vld [vmem:[%s428 + $0xa0] sm:$0xff]
        %v523 = vld [vmem:[%s428 + $0xa8] sm:$0xff]
        %v524 = vld [vmem:[%s428 + $0xb0] sm:$0xff]
        %v525 = vld [vmem:[%s428 + $0xb8] sm:$0xff]
        %v526 = vld [vmem:[%s428 + $0xc0] sm:$0xff]
        %v527 = vld [vmem:[%s428 + $0xc8] sm:$0xff]
        %v528 = vld [vmem:[%s428 + $0xd0] sm:$0xff]
        %v529 = vld [vmem:[%s428 + $0xd8] sm:$0xff]
        %v530 = vld [vmem:[%s428 + $0xe0] sm:$0xff]
        %v531 = vld [vmem:[%s428 + $0xe8] sm:$0xff]
        %v532 = vld [vmem:[%s428 + $0xf0] sm:$0xff]
        %v533 = vld [vmem:[%s428 + $0xf8] sm:$0xff]
        %v534 = vld [vmem:[%s428 + $0x100] sm:$0xff]
        %v535 = vld [vmem:[%s428 + $0x108] sm:$0xff]
        %v536 = vld [vmem:[%s428 + $0x110] sm:$0xff]
        %v537 = vld [vmem:[%s428 + $0x118] sm:$0xff]
        %v538 = vld [vmem:[%s428 + $0x120] sm:$0xff]
        %v539 = vld [vmem:[%s428 + $0x128] sm:$0xff]
        %v540 = vld [vmem:[%s428 + $0x130] sm:$0xff]
        %v541 = vld [vmem:[%s428 + $0x138] sm:$0xff]
        %v542 = vld [vmem:[%s428 + $0x140] sm:$0xff]
        %v543 = vld [vmem:[%s428 + $0x148] sm:$0xff]
        %v544 = vld [vmem:[%s428 + $0x150] sm:$0xff]
        %v545 = vld [vmem:[%s428 + $0x158] sm:$0xff]
        %v546 = vld [vmem:[%s428 + $0x160] sm:$0xff]
        %v547 = vld [vmem:[%s428 + $0x168] sm:$0xff]
        %v548 = vld [vmem:[%s428 + $0x170] sm:$0xff]
        %v549 = vld [vmem:[%s428 + $0x178] sm:$0xff]
        %v550 = vld [vmem:[%s428 + $0x180] sm:$0xff]
        %v551 = vld [vmem:[%s428 + $0x188] sm:$0xff]
        %v552 = vld [vmem:[%s428 + $0x190] sm:$0xff]
        %v553 = vld [vmem:[%s428 + $0x198] sm:$0xff]
        %v554 = vld [vmem:[%s428 + $0x1a0] sm:$0xff]
        %v555 = vld [vmem:[%s428 + $0x1a8] sm:$0xff]
        %v556 = vld [vmem:[%s428 + $0x1b0] sm:$0xff]
        %v557 = vld [vmem:[%s428 + $0x1b8] sm:$0xff]
        %v558 = vld [vmem:[%s428 + $0x1c0] sm:$0xff]
        %v559 = vld [vmem:[%s428 + $0x1c8] sm:$0xff]
        %v560 = vld [vmem:[%s428 + $0x1d0] sm:$0xff]
        %v561 = vld [vmem:[%s428 + $0x1d8] sm:$0xff]
        %v562 = vld [vmem:[%s428 + $0x1e0] sm:$0xff]
        %v563 = vld [vmem:[%s428 + $0x1e8] sm:$0xff]
        %v564 = vld [vmem:[%s428 + $0x1f0] sm:$0xff]
        %v565 = vld [vmem:[%s428 + $0x1f8] sm:$0xff]
        %v566 = vld [vmem:[%s428 + $0x200] sm:$0xff]
        %v567 = vld [vmem:[%s428 + $0x208] sm:$0xff]
        %v568 = vld [vmem:[%s428 + $0x210] sm:$0xff]
        %v569 = vld [vmem:[%s428 + $0x218] sm:$0xff]
        %v570 = vld [vmem:[%s428 + $0x220] sm:$0xff]
        %v571 = vld [vmem:[%s428 + $0x228] sm:$0xff]
        %v572 = vld [vmem:[%s428 + $0x230] sm:$0xff]
        %v573 = vld [vmem:[%s428 + $0x238] sm:$0xff]
        %v574 = vld [vmem:[%s428 + $0x240] sm:$0xff]
        %v575 = vld [vmem:[%s428 + $0x248] sm:$0xff]
        %v576 = vld [vmem:[%s428 + $0x250] sm:$0xff]
        %v577 = vld [vmem:[%s428 + $0x258] sm:$0xff]
        %v578 = vld [vmem:[%s428 + $0x260] sm:$0xff]
        %v579 = vld [vmem:[%s428 + $0x268] sm:$0xff]
        %v580 = vld [vmem:[%s428 + $0x270] sm:$0xff]
        %v581 = vld [vmem:[%s428 + $0x278] sm:$0xff]
        %v582 = vld [vmem:[%s428 + $0x280] sm:$0xff]
        %v583 = vld [vmem:[%s428 + $0x288] sm:$0xff]
        %v584 = vld [vmem:[%s428 + $0x290] sm:$0xff]
        %v585 = vld [vmem:[%s428 + $0x298] sm:$0xff]
        %v586 = vld [vmem:[%s428 + $0x2a0] sm:$0xff]
        %v587 = vld [vmem:[%s428 + $0x2a8] sm:$0xff]
        %v588 = vld [vmem:[%s428 + $0x2b0] sm:$0xff]
        %v589 = vld [vmem:[%s428 + $0x2b8] sm:$0xff]
        %v590 = vld [vmem:[%s428 + $0x2c0] sm:$0xff]
        %v591 = vld [vmem:[%s428 + $0x2c8] sm:$0xff]
        %v592 = vld [vmem:[%s428 + $0x2d0] sm:$0xff]
        %v593 = vld [vmem:[%s428 + $0x2d8] sm:$0xff]
        %v594 = vld [vmem:[%s428 + $0x2e0] sm:$0xff]
        %v595 = vld [vmem:[%s428 + $0x2e8] sm:$0xff]
        %v596 = vld [vmem:[%s428 + $0x2f0] sm:$0xff]
        %v597 = vld [vmem:[%s428 + $0x2f8] sm:$0xff]
        %v598 = vld [vmem:[%s428 + $0x300] sm:$0xff]
        %v599 = vld [vmem:[%s428 + $0x308] sm:$0xff]
        %v600 = vld [vmem:[%s428 + $0x310] sm:$0xff]
        %v601 = vld [vmem:[%s428 + $0x318] sm:$0xff]
        %v602 = vld [vmem:[%s428 + $0x320] sm:$0xff]
        %v603 = vld [vmem:[%s428 + $0x328] sm:$0xff]
        %v604 = vld [vmem:[%s428 + $0x330] sm:$0xff]
        %v605 = vld [vmem:[%s428 + $0x338] sm:$0xff]
        %v606 = vld [vmem:[%s428 + $0x340] sm:$0xff]
        %v607 = vld [vmem:[%s428 + $0x348] sm:$0xff]
        %v608 = vld [vmem:[%s428 + $0x350] sm:$0xff]
        %v609 = vld [vmem:[%s428 + $0x358] sm:$0xff]
        %v610 = vld [vmem:[%s428 + $0x360] sm:$0xff]
        %v611 = vld [vmem:[%s428 + $0x368] sm:$0xff]
        %v612 = vld [vmem:[%s428 + $0x370] sm:$0xff]
        %v613 = vld [vmem:[%s428 + $0x378] sm:$0xff]
        %v614 = vld [vmem:[%s428 + $0x380] sm:$0xff]
        %v615 = vld [vmem:[%s428 + $0x388] sm:$0xff]
        %v616 = vld [vmem:[%s428 + $0x390] sm:$0xff]
        %v617 = vld [vmem:[%s428 + $0x398] sm:$0xff]
        %v618 = vld [vmem:[%s428 + $0x3a0] sm:$0xff]
        %v619 = vld [vmem:[%s428 + $0x3a8] sm:$0xff]
        %v620 = vld [vmem:[%s428 + $0x3b0] sm:$0xff]
        %v621 = vld [vmem:[%s428 + $0x3b8] sm:$0xff]
        %v622 = vld [vmem:[%s428 + $0x3c0] sm:$0xff]
        %v623 = vld [vmem:[%s428 + $0x3c8] sm:$0xff]
        %v624 = vld [vmem:[%s428 + $0x3d0] sm:$0xff]
        %v625 = vld [vmem:[%s428 + $0x3d8] sm:$0xff]
        %v626 = vld [vmem:[%s428 + $0x3e0] sm:$0xff]
        %v627 = vld [vmem:[%s428 + $0x3e8] sm:$0xff]
        %v628 = vld [vmem:[%s428 + $0x3f0] sm:$0xff]
        %v629 = vld [vmem:[%s428 + $0x3f8] sm:$0xff]
        %v630 = vld [vmem:[%s428 + $0x400] sm:$0xff]
        %v631 = vld [vmem:[%s428 + $0x408] sm:$0xff]
        %v632 = vld [vmem:[%s428 + $0x410] sm:$0xff]
        %v633 = vld [vmem:[%s428 + $0x418] sm:$0xff]
        %v634 = vld [vmem:[%s428 + $0x420] sm:$0xff]
        %v635 = vld [vmem:[%s428 + $0x428] sm:$0xff]
        %v636 = vld [vmem:[%s428 + $0x430] sm:$0xff]
        %v637 = vld [vmem:[%s428 + $0x438] sm:$0xff]
        %v638 = vld [vmem:[%s428 + $0x440] sm:$0xff]
        %v639 = vld [vmem:[%s428 + $0x448] sm:$0xff]
        %v640 = vld [vmem:[%s428 + $0x450] sm:$0xff]
        %v641 = vld [vmem:[%s428 + $0x458] sm:$0xff]
        %v642 = vld [vmem:[%s428 + $0x460] sm:$0xff]
        %v643 = vld [vmem:[%s428 + $0x468] sm:$0xff]
        %v644 = vld [vmem:[%s428 + $0x470] sm:$0xff]
        %v645 = vld [vmem:[%s428 + $0x478] sm:$0xff]
        %v646 = vld [vmem:[%s428 + $0x480] sm:$0xff]
        %v647 = vld [vmem:[%s428 + $0x488] sm:$0xff]
        %v648 = vld [vmem:[%s428 + $0x490] sm:$0xff]
        %v649 = vld [vmem:[%s428 + $0x498] sm:$0xff]
        %v650 = vld [vmem:[%s428 + $0x4a0] sm:$0xff]
        %v651 = vld [vmem:[%s428 + $0x4a8] sm:$0xff]
        %v652 = vld [vmem:[%s428 + $0x4b0] sm:$0xff]
        %v653 = vld [vmem:[%s428 + $0x4b8] sm:$0xff]
        %v654 = vld [vmem:[%s428 + $0x4c0] sm:$0xff]
        %v655 = vld [vmem:[%s428 + $0x4c8] sm:$0xff]
        %v656 = vld [vmem:[%s428 + $0x4d0] sm:$0xff]
        %v657 = vld [vmem:[%s428 + $0x4d8] sm:$0xff]
        %v658 = vld [vmem:[%s428 + $0x4e0] sm:$0xff]
        %v659 = vld [vmem:[%s428 + $0x4e8] sm:$0xff]
        %v660 = vld [vmem:[%s428 + $0x4f0] sm:$0xff]
        %v661 = vld [vmem:[%s428 + $0x4f8] sm:$0xff]
        %v662 = vld [vmem:[%s428 + $0x500] sm:$0xff]
        %v663 = vld [vmem:[%s428 + $0x508] sm:$0xff]
        %v664 = vld [vmem:[%s428 + $0x510] sm:$0xff]
        %v665 = vld [vmem:[%s428 + $0x518] sm:$0xff]
        %v666 = vld [vmem:[%s428 + $0x520] sm:$0xff]
        %v667 = vld [vmem:[%s428 + $0x528] sm:$0xff]
        %v668 = vld [vmem:[%s428 + $0x530] sm:$0xff]
        %v669 = vld [vmem:[%s428 + $0x538] sm:$0xff]
        %v670 = vld [vmem:[%s428 + $0x540] sm:$0xff]
        %v671 = vld [vmem:[%s428 + $0x548] sm:$0xff]
        %v672 = vld [vmem:[%s428 + $0x550] sm:$0xff]
        %v673 = vld [vmem:[%s428 + $0x558] sm:$0xff]
        %v674 = vld [vmem:[%s428 + $0x560] sm:$0xff]
        %v675 = vld [vmem:[%s428 + $0x568] sm:$0xff]
        %v676 = vld [vmem:[%s428 + $0x570] sm:$0xff]
        %v677 = vld [vmem:[%s428 + $0x578] sm:$0xff]
        %v678 = vld [vmem:[%s428 + $0x580] sm:$0xff]
        %v679 = vld [vmem:[%s428 + $0x588] sm:$0xff]
        %v680 = vld [vmem:[%s428 + $0x590] sm:$0xff]
        %v681 = vld [vmem:[%s428 + $0x598] sm:$0xff]
        %v682 = vld [vmem:[%s428 + $0x5a0] sm:$0xff]
        %v683 = vld [vmem:[%s428 + $0x5a8] sm:$0xff]
        %v684 = vld [vmem:[%s428 + $0x5b0] sm:$0xff]
        %v685 = vld [vmem:[%s428 + $0x5b8] sm:$0xff]
        %v686 = vld [vmem:[%s428 + $0x5c0] sm:$0xff]
        %v687 = vld [vmem:[%s428 + $0x5c8] sm:$0xff]
        %v688 = vld [vmem:[%s428 + $0x5d0] sm:$0xff]
        %v689 = vld [vmem:[%s428 + $0x5d8] sm:$0xff]
        %v690 = vld [vmem:[%s428 + $0x5e0] sm:$0xff]
        %v691 = vld [vmem:[%s428 + $0x5e8] sm:$0xff]
        %v692 = vld [vmem:[%s428 + $0x5f0] sm:$0xff]
        %v693 = vld [vmem:[%s428 + $0x5f8] sm:$0xff]
        %v694 = vld [vmem:[%s428 + $0x600] sm:$0xff]
        %v695 = vld [vmem:[%s428 + $0x608] sm:$0xff]
        %v696 = vld [vmem:[%s428 + $0x610] sm:$0xff]
        %v697 = vld [vmem:[%s428 + $0x618] sm:$0xff]
        %v698 = vld [vmem:[%s428 + $0x620] sm:$0xff]
        %v699 = vld [vmem:[%s428 + $0x628] sm:$0xff]
        %v700 = vld [vmem:[%s428 + $0x630] sm:$0xff]
        %v701 = vld [vmem:[%s428 + $0x638] sm:$0xff]
        %v702 = vld [vmem:[%s428 + $0x640] sm:$0xff]
        %v703 = vld [vmem:[%s428 + $0x648] sm:$0xff]
        %v704 = vld [vmem:[%s428 + $0x650] sm:$0xff]
        %v705 = vld [vmem:[%s428 + $0x658] sm:$0xff]
        %v706 = vld [vmem:[%s428 + $0x660] sm:$0xff]
        %v707 = vld [vmem:[%s428 + $0x668] sm:$0xff]
        %v708 = vld [vmem:[%s428 + $0x670] sm:$0xff]
        %v709 = vld [vmem:[%s428 + $0x678] sm:$0xff]
        %v710 = vld [vmem:[%s428 + $0x680] sm:$0xff]
        %v711 = vld [vmem:[%s428 + $0x688] sm:$0xff]
        %v712 = vld [vmem:[%s428 + $0x690] sm:$0xff]
        %v713 = vld [vmem:[%s428 + $0x698] sm:$0xff]
        %v714 = vld [vmem:[%s428 + $0x6a0] sm:$0xff]
        %v715 = vld [vmem:[%s428 + $0x6a8] sm:$0xff]
        %v716 = vld [vmem:[%s428 + $0x6b0] sm:$0xff]
        %v717 = vld [vmem:[%s428 + $0x6b8] sm:$0xff]
        %v718 = vld [vmem:[%s428 + $0x6c0] sm:$0xff]
        %v719 = vld [vmem:[%s428 + $0x6c8] sm:$0xff]
        %v720 = vld [vmem:[%s428 + $0x6d0] sm:$0xff]
        %v721 = vld [vmem:[%s428 + $0x6d8] sm:$0xff]
        %v722 = vld [vmem:[%s428 + $0x6e0] sm:$0xff]
        %v723 = vld [vmem:[%s428 + $0x6e8] sm:$0xff]
        %v724 = vld [vmem:[%s428 + $0x6f0] sm:$0xff]
        %v725 = vld [vmem:[%s428 + $0x6f8] sm:$0xff]
        %v726 = vpack.c.bf16 %v509, %v502
        %v727 = vpack.c.bf16 %v510, %v503
        %v728 = vpack.c.bf16 %v511, %v504
        %v729 = vpack.c.bf16 %v512, %v505
        %v730 = vpack.c.bf16 %v513, %v506
        %v731 = vpack.c.bf16 %v514, %v507
        %v732 = vpack.c.bf16 %v515, %v508
        %v733 = vpack.c.bf16 %v523, %v516
        %v734 = vpack.c.bf16 %v524, %v517
        %v735 = vpack.c.bf16 %v525, %v518
        %v736 = vpack.c.bf16 %v526, %v519
        %v737 = vpack.c.bf16 %v527, %v520
        %v738 = vpack.c.bf16 %v528, %v521
        %v739 = vpack.c.bf16 %v529, %v522
        %v740 = vpack.c.bf16 %v537, %v530
        %v741 = vpack.c.bf16 %v538, %v531
        %v742 = vpack.c.bf16 %v539, %v532
        %v743 = vpack.c.bf16 %v540, %v533
        %v744 = vpack.c.bf16 %v541, %v534
        %v745 = vpack.c.bf16 %v542, %v535
        %v746 = vpack.c.bf16 %v543, %v536
        %v747 = vpack.c.bf16 %v551, %v544
        %v748 = vpack.c.bf16 %v552, %v545
        %v749 = vpack.c.bf16 %v553, %v546
        %v750 = vpack.c.bf16 %v554, %v547
        %v751 = vpack.c.bf16 %v555, %v548
        %v752 = vpack.c.bf16 %v556, %v549
        %v753 = vpack.c.bf16 %v557, %v550
        %v754 = vpack.c.bf16 %v565, %v558
        %v755 = vpack.c.bf16 %v566, %v559
        %v756 = vpack.c.bf16 %v567, %v560
        %v757 = vpack.c.bf16 %v568, %v561
        %v758 = vpack.c.bf16 %v569, %v562
        %v759 = vpack.c.bf16 %v570, %v563
        %v760 = vpack.c.bf16 %v571, %v564
        %v761 = vpack.c.bf16 %v579, %v572
        %v762 = vpack.c.bf16 %v580, %v573
        %v763 = vpack.c.bf16 %v581, %v574
        %v764 = vpack.c.bf16 %v582, %v575
        %v765 = vpack.c.bf16 %v583, %v576
        %v766 = vpack.c.bf16 %v584, %v577
        %v767 = vpack.c.bf16 %v585, %v578
        %v768 = vpack.c.bf16 %v593, %v586
        %v769 = vpack.c.bf16 %v594, %v587
        %v770 = vpack.c.bf16 %v595, %v588
        %v771 = vpack.c.bf16 %v596, %v589
        %v772 = vpack.c.bf16 %v597, %v590
        %v773 = vpack.c.bf16 %v598, %v591
        %v774 = vpack.c.bf16 %v599, %v592
        %v775 = vpack.c.bf16 %v607, %v600
        %v776 = vpack.c.bf16 %v608, %v601
        %v777 = vpack.c.bf16 %v609, %v602
        %v778 = vpack.c.bf16 %v610, %v603
        %v779 = vpack.c.bf16 %v611, %v604
        %v780 = vpack.c.bf16 %v612, %v605
        %v781 = vpack.c.bf16 %v613, %v606
        %v782 = vpack.c.bf16 %v621, %v614
        %v783 = vpack.c.bf16 %v622, %v615
        %v784 = vpack.c.bf16 %v623, %v616
        %v785 = vpack.c.bf16 %v624, %v617
        %v786 = vpack.c.bf16 %v625, %v618
        %v787 = vpack.c.bf16 %v626, %v619
        %v788 = vpack.c.bf16 %v627, %v620
        %v789 = vpack.c.bf16 %v635, %v628
        %v790 = vpack.c.bf16 %v636, %v629
        %v791 = vpack.c.bf16 %v637, %v630
        %v792 = vpack.c.bf16 %v638, %v631
        %v793 = vpack.c.bf16 %v639, %v632
        %v794 = vpack.c.bf16 %v640, %v633
        %v795 = vpack.c.bf16 %v641, %v634
        %v796 = vpack.c.bf16 %v649, %v642
        %v797 = vpack.c.bf16 %v650, %v643
        %v798 = vpack.c.bf16 %v651, %v644
        %v799 = vpack.c.bf16 %v652, %v645
        %v800 = vpack.c.bf16 %v653, %v646
        %v801 = vpack.c.bf16 %v654, %v647
        %v802 = vpack.c.bf16 %v655, %v648
        %v803 = vpack.c.bf16 %v663, %v656
        %v804 = vpack.c.bf16 %v664, %v657
        %v805 = vpack.c.bf16 %v665, %v658
        %v806 = vpack.c.bf16 %v666, %v659
        %v807 = vpack.c.bf16 %v667, %v660
        %v808 = vpack.c.bf16 %v668, %v661
        %v809 = vpack.c.bf16 %v669, %v662
        %v810 = vpack.c.bf16 %v677, %v670
        %v811 = vpack.c.bf16 %v678, %v671
        %v812 = vpack.c.bf16 %v679, %v672
        %v813 = vpack.c.bf16 %v680, %v673
        %v814 = vpack.c.bf16 %v681, %v674
        %v815 = vpack.c.bf16 %v682, %v675
        %v816 = vpack.c.bf16 %v683, %v676
        %v817 = vpack.c.bf16 %v691, %v684
        %v818 = vpack.c.bf16 %v692, %v685
        %v819 = vpack.c.bf16 %v693, %v686
        %v820 = vpack.c.bf16 %v694, %v687
        %v821 = vpack.c.bf16 %v695, %v688
        %v822 = vpack.c.bf16 %v696, %v689
        %v823 = vpack.c.bf16 %v697, %v690
        %v824 = vpack.c.bf16 %v705, %v698
        %v825 = vpack.c.bf16 %v706, %v699
        %v826 = vpack.c.bf16 %v707, %v700
        %v827 = vpack.c.bf16 %v708, %v701
        %v828 = vpack.c.bf16 %v709, %v702
        %v829 = vpack.c.bf16 %v710, %v703
        %v830 = vpack.c.bf16 %v711, %v704
        %v831 = vpack.c.bf16 %v719, %v712
        %v832 = vpack.c.bf16 %v720, %v713
        %v833 = vpack.c.bf16 %v721, %v714
        %v834 = vpack.c.bf16 %v722, %v715
        %v835 = vpack.c.bf16 %v723, %v716
        %v836 = vpack.c.bf16 %v724, %v717
        %v837 = vpack.c.bf16 %v725, %v718
        %v838 = vld [vmem:[#allocation5] sm:$0xff]
        %v839 = vld [vmem:[#allocation5 + $0x8] sm:$0xff]
        %v840 = vld [vmem:[#allocation5 + $0x10] sm:$0xff]
        %v841 = vld [vmem:[#allocation5 + $0x18] sm:$0xff]
        %v842 = vld [vmem:[#allocation5 + $0x20] sm:$0xff]
        %v843 = vld [vmem:[#allocation5 + $0x28] sm:$0xff]
        %v844 = vld [vmem:[#allocation5 + $0x30] sm:$0xff]
        %v845 = vld [vmem:[#allocation5 + $0x38] sm:$0xff]
        %v846 = vld [vmem:[#allocation5 + $0x40] sm:$0xff]
        %v847 = vld [vmem:[#allocation5 + $0x48] sm:$0xff]
        %v848 = vld [vmem:[#allocation5 + $0x50] sm:$0xff]
        %v849 = vld [vmem:[#allocation5 + $0x58] sm:$0xff]
        %v850 = vld [vmem:[#allocation5 + $0x60] sm:$0xff]
        %v851 = vld [vmem:[#allocation5 + $0x68] sm:$0xff]
        %v852 = vld [vmem:[#allocation5 + $0x70] sm:$0xff]
        %v853 = vld [vmem:[#allocation5 + $0x78] sm:$0xff]
        %v854 = vld [vmem:[#allocation5 + $0x80] sm:$0xff]
        %v855 = vld [vmem:[#allocation5 + $0x88] sm:$0xff]
        %v856 = vld [vmem:[#allocation5 + $0x90] sm:$0xff]
        %v857 = vld [vmem:[#allocation5 + $0x98] sm:$0xff]
        %v858 = vld [vmem:[#allocation5 + $0xa0] sm:$0xff]
        %v859 = vld [vmem:[#allocation5 + $0xa8] sm:$0xff]
        %v860 = vld [vmem:[#allocation5 + $0xb0] sm:$0xff]
        %v861 = vld [vmem:[#allocation5 + $0xb8] sm:$0xff]
        %v862 = vld [vmem:[#allocation5 + $0xc0] sm:$0xff]
        %v863 = vld [vmem:[#allocation5 + $0xc8] sm:$0xff]
        %v864 = vld [vmem:[#allocation5 + $0xd0] sm:$0xff]
        %v865 = vld [vmem:[#allocation5 + $0xd8] sm:$0xff]
        %v866 = vld [vmem:[#allocation5 + $0xe0] sm:$0xff]
        %v867 = vld [vmem:[#allocation5 + $0xe8] sm:$0xff]
        %v868 = vld [vmem:[#allocation5 + $0xf0] sm:$0xff]
        %v869 = vld [vmem:[#allocation5 + $0xf8] sm:$0xff]
        %v870 = vld [vmem:[#allocation5 + $0x100] sm:$0xff]
        %v871 = vld [vmem:[#allocation5 + $0x108] sm:$0xff]
        %v872 = vld [vmem:[#allocation5 + $0x110] sm:$0xff]
        %v873 = vld [vmem:[#allocation5 + $0x118] sm:$0xff]
        %v874 = vld [vmem:[#allocation5 + $0x120] sm:$0xff]
        %v875 = vld [vmem:[#allocation5 + $0x128] sm:$0xff]
        %v876 = vld [vmem:[#allocation5 + $0x130] sm:$0xff]
        %v877 = vld [vmem:[#allocation5 + $0x138] sm:$0xff]
        %v878 = vld [vmem:[#allocation5 + $0x140] sm:$0xff]
        %v879 = vld [vmem:[#allocation5 + $0x148] sm:$0xff]
        %v880 = vld [vmem:[#allocation5 + $0x150] sm:$0xff]
        %v881 = vld [vmem:[#allocation5 + $0x158] sm:$0xff]
        %v882 = vld [vmem:[#allocation5 + $0x160] sm:$0xff]
        %v883 = vld [vmem:[#allocation5 + $0x168] sm:$0xff]
        %v884 = vld [vmem:[#allocation5 + $0x170] sm:$0xff]
        %v885 = vld [vmem:[#allocation5 + $0x178] sm:$0xff]
        %v886 = vld [vmem:[#allocation5 + $0x180] sm:$0xff]
        %v887 = vld [vmem:[#allocation5 + $0x188] sm:$0xff]
        %v888 = vld [vmem:[#allocation5 + $0x190] sm:$0xff]
        %v889 = vld [vmem:[#allocation5 + $0x198] sm:$0xff]
        %v890 = vld [vmem:[#allocation5 + $0x1a0] sm:$0xff]
        %v891 = vld [vmem:[#allocation5 + $0x1a8] sm:$0xff]
        %v892 = vld [vmem:[#allocation5 + $0x1b0] sm:$0xff]
        %v893 = vld [vmem:[#allocation5 + $0x1b8] sm:$0xff]
        %v894 = vld [vmem:[#allocation5 + $0x1c0] sm:$0xff]
        %v895 = vld [vmem:[#allocation5 + $0x1c8] sm:$0xff]
        %v896 = vld [vmem:[#allocation5 + $0x1d0] sm:$0xff]
        %v897 = vld [vmem:[#allocation5 + $0x1d8] sm:$0xff]
        %v898 = vld [vmem:[#allocation5 + $0x1e0] sm:$0xff]
        %v899 = vld [vmem:[#allocation5 + $0x1e8] sm:$0xff]
        %v900 = vld [vmem:[#allocation5 + $0x1f0] sm:$0xff]
        %v901 = vld [vmem:[#allocation5 + $0x1f8] sm:$0xff]
        %v902 = vld [vmem:[#allocation5 + $0x200] sm:$0xff]
        %v903 = vld [vmem:[#allocation5 + $0x208] sm:$0xff]
        %v904 = vld [vmem:[#allocation5 + $0x210] sm:$0xff]
        %v905 = vld [vmem:[#allocation5 + $0x218] sm:$0xff]
        %v906 = vld [vmem:[#allocation5 + $0x220] sm:$0xff]
        %v907 = vld [vmem:[#allocation5 + $0x228] sm:$0xff]
        %v908 = vld [vmem:[#allocation5 + $0x230] sm:$0xff]
        %v909 = vld [vmem:[#allocation5 + $0x238] sm:$0xff]
        %v910 = vld [vmem:[#allocation5 + $0x240] sm:$0xff]
        %v911 = vld [vmem:[#allocation5 + $0x248] sm:$0xff]
        %v912 = vld [vmem:[#allocation5 + $0x250] sm:$0xff]
        %v913 = vld [vmem:[#allocation5 + $0x258] sm:$0xff]
        %v914 = vld [vmem:[#allocation5 + $0x260] sm:$0xff]
        %v915 = vld [vmem:[#allocation5 + $0x268] sm:$0xff]
        %v916 = vld [vmem:[#allocation5 + $0x270] sm:$0xff]
        %v917 = vld [vmem:[#allocation5 + $0x278] sm:$0xff]
        %v918 = vld [vmem:[#allocation5 + $0x280] sm:$0xff]
        %v919 = vld [vmem:[#allocation5 + $0x288] sm:$0xff]
        %v920 = vld [vmem:[#allocation5 + $0x290] sm:$0xff]
        %v921 = vld [vmem:[#allocation5 + $0x298] sm:$0xff]
        %v922 = vld [vmem:[#allocation5 + $0x2a0] sm:$0xff]
        %v923 = vld [vmem:[#allocation5 + $0x2a8] sm:$0xff]
        %v924 = vld [vmem:[#allocation5 + $0x2b0] sm:$0xff]
        %v925 = vld [vmem:[#allocation5 + $0x2b8] sm:$0xff]
        %v926 = vld [vmem:[#allocation5 + $0x2c0] sm:$0xff]
        %v927 = vld [vmem:[#allocation5 + $0x2c8] sm:$0xff]
        %v928 = vld [vmem:[#allocation5 + $0x2d0] sm:$0xff]
        %v929 = vld [vmem:[#allocation5 + $0x2d8] sm:$0xff]
        %v930 = vld [vmem:[#allocation5 + $0x2e0] sm:$0xff]
        %v931 = vld [vmem:[#allocation5 + $0x2e8] sm:$0xff]
        %v932 = vld [vmem:[#allocation5 + $0x2f0] sm:$0xff]
        %v933 = vld [vmem:[#allocation5 + $0x2f8] sm:$0xff]
        %v934 = vld [vmem:[#allocation5 + $0x300] sm:$0xff]
        %v935 = vld [vmem:[#allocation5 + $0x308] sm:$0xff]
        %v936 = vld [vmem:[#allocation5 + $0x310] sm:$0xff]
        %v937 = vld [vmem:[#allocation5 + $0x318] sm:$0xff]
        %v938 = vld [vmem:[#allocation5 + $0x320] sm:$0xff]
        %v939 = vld [vmem:[#allocation5 + $0x328] sm:$0xff]
        %v940 = vld [vmem:[#allocation5 + $0x330] sm:$0xff]
        %v941 = vld [vmem:[#allocation5 + $0x338] sm:$0xff]
        %v942 = vld [vmem:[#allocation5 + $0x340] sm:$0xff]
        %v943 = vld [vmem:[#allocation5 + $0x348] sm:$0xff]
        %v944 = vld [vmem:[#allocation5 + $0x350] sm:$0xff]
        %v945 = vld [vmem:[#allocation5 + $0x358] sm:$0xff]
        %v946 = vld [vmem:[#allocation5 + $0x360] sm:$0xff]
        %v947 = vld [vmem:[#allocation5 + $0x368] sm:$0xff]
        %v948 = vld [vmem:[#allocation5 + $0x370] sm:$0xff]
        %v949 = vld [vmem:[#allocation5 + $0x378] sm:$0xff]
        %v950 = vld [vmem:[#allocation7] sm:$0x3]
        %v952 = vlaneseq
        %v953 = vshrl.u32 %v952, 7
        %v954 = vsub.s32 0, %v953
        %v955 = vrot.slane %v950, %v954
        %v956 = vlaneseq
        %v957 = vshrl.u32 %v956, 7
        %v958 = vsub.s32 1, %v957
        %v959 = vrot.slane %v950, %v958
        %v1074 = vunpack.c.l.b16 %v838
        %v1075 = vunpack.c.h.b16 %v838
        %v1076 = vunpack.c.l.b16 %v839
        %v1077 = vunpack.c.h.b16 %v839
        %v1078 = vunpack.c.l.b16 %v840
        %v1079 = vunpack.c.h.b16 %v840
        %v1080 = vunpack.c.l.b16 %v841
        %v1081 = vunpack.c.h.b16 %v841
        %v1082 = vunpack.c.l.b16 %v842
        %v1083 = vunpack.c.h.b16 %v842
        %v1084 = vunpack.c.l.b16 %v843
        %v1085 = vunpack.c.h.b16 %v843
        %v1086 = vunpack.c.l.b16 %v844
        %v1087 = vunpack.c.h.b16 %v844
        %v1088 = vunpack.c.l.b16 %v845
        %v1089 = vunpack.c.h.b16 %v845
        %v1090 = vunpack.c.l.b16 %v846
        %v1091 = vunpack.c.h.b16 %v846
        %v1092 = vunpack.c.l.b16 %v847
        %v1093 = vunpack.c.h.b16 %v847
        %v1094 = vunpack.c.l.b16 %v848
        %v1095 = vunpack.c.h.b16 %v848
        %v1096 = vunpack.c.l.b16 %v849
        %v1097 = vunpack.c.h.b16 %v849
        %v1098 = vunpack.c.l.b16 %v850
        %v1099 = vunpack.c.h.b16 %v850
        %v1100 = vunpack.c.l.b16 %v851
        %v1101 = vunpack.c.h.b16 %v851
        %v1102 = vunpack.c.l.b16 %v852
        %v1103 = vunpack.c.h.b16 %v852
        %v1104 = vunpack.c.l.b16 %v853
        %v1105 = vunpack.c.h.b16 %v853
        %v1106 = vunpack.c.l.b16 %v854
        %v1107 = vunpack.c.h.b16 %v854
        %v1108 = vunpack.c.l.b16 %v855
        %v1109 = vunpack.c.h.b16 %v855
        %v1110 = vunpack.c.l.b16 %v856
        %v1111 = vunpack.c.h.b16 %v856
        %v1112 = vunpack.c.l.b16 %v857
        %v1113 = vunpack.c.h.b16 %v857
        %v1114 = vunpack.c.l.b16 %v858
        %v1115 = vunpack.c.h.b16 %v858
        %v1116 = vunpack.c.l.b16 %v859
        %v1117 = vunpack.c.h.b16 %v859
        %v1118 = vunpack.c.l.b16 %v860
        %v1119 = vunpack.c.h.b16 %v860
        %v1120 = vunpack.c.l.b16 %v861
        %v1121 = vunpack.c.h.b16 %v861
        %v1122 = vunpack.c.l.b16 %v862
        %v1123 = vunpack.c.h.b16 %v862
        %v1124 = vunpack.c.l.b16 %v863
        %v1125 = vunpack.c.h.b16 %v863
        %v1126 = vunpack.c.l.b16 %v864
        %v1127 = vunpack.c.h.b16 %v864
        %v1128 = vunpack.c.l.b16 %v865
        %v1129 = vunpack.c.h.b16 %v865
        %v1130 = vunpack.c.l.b16 %v866
        %v1131 = vunpack.c.h.b16 %v866
        %v1132 = vunpack.c.l.b16 %v867
        %v1133 = vunpack.c.h.b16 %v867
        %v1134 = vunpack.c.l.b16 %v868
        %v1135 = vunpack.c.h.b16 %v868
        %v1136 = vunpack.c.l.b16 %v869
        %v1137 = vunpack.c.h.b16 %v869
        %v1138 = vunpack.c.l.b16 %v870
        %v1139 = vunpack.c.h.b16 %v870
        %v1140 = vunpack.c.l.b16 %v871
        %v1141 = vunpack.c.h.b16 %v871
        %v1142 = vunpack.c.l.b16 %v872
        %v1143 = vunpack.c.h.b16 %v872
        %v1144 = vunpack.c.l.b16 %v873
        %v1145 = vunpack.c.h.b16 %v873
        %v1146 = vunpack.c.l.b16 %v874
        %v1147 = vunpack.c.h.b16 %v874
        %v1148 = vunpack.c.l.b16 %v875
        %v1149 = vunpack.c.h.b16 %v875
        %v1150 = vunpack.c.l.b16 %v876
        %v1151 = vunpack.c.h.b16 %v876
        %v1152 = vunpack.c.l.b16 %v877
        %v1153 = vunpack.c.h.b16 %v877
        %v1154 = vunpack.c.l.b16 %v878
        %v1155 = vunpack.c.h.b16 %v878
        %v1156 = vunpack.c.l.b16 %v879
        %v1157 = vunpack.c.h.b16 %v879
        %v1158 = vunpack.c.l.b16 %v880
        %v1159 = vunpack.c.h.b16 %v880
        %v1160 = vunpack.c.l.b16 %v881
        %v1161 = vunpack.c.h.b16 %v881
        %v1162 = vunpack.c.l.b16 %v882
        %v1163 = vunpack.c.h.b16 %v882
        %v1164 = vunpack.c.l.b16 %v883
        %v1165 = vunpack.c.h.b16 %v883
        %v1166 = vunpack.c.l.b16 %v884
        %v1167 = vunpack.c.h.b16 %v884
        %v1168 = vunpack.c.l.b16 %v885
        %v1169 = vunpack.c.h.b16 %v885
        %v1170 = vunpack.c.l.b16 %v886
        %v1171 = vunpack.c.h.b16 %v886
        %v1172 = vunpack.c.l.b16 %v887
        %v1173 = vunpack.c.h.b16 %v887
        %v1174 = vunpack.c.l.b16 %v888
        %v1175 = vunpack.c.h.b16 %v888
        %v1176 = vunpack.c.l.b16 %v889
        %v1177 = vunpack.c.h.b16 %v889
        %v1178 = vunpack.c.l.b16 %v890
        %v1179 = vunpack.c.h.b16 %v890
        %v1180 = vunpack.c.l.b16 %v891
        %v1181 = vunpack.c.h.b16 %v891
        %v1182 = vunpack.c.l.b16 %v892
        %v1183 = vunpack.c.h.b16 %v892
        %v1184 = vunpack.c.l.b16 %v893
        %v1185 = vunpack.c.h.b16 %v893
        %v1186 = vunpack.c.l.b16 %v894
        %v1187 = vunpack.c.h.b16 %v894
        %v1188 = vunpack.c.l.b16 %v895
        %v1189 = vunpack.c.h.b16 %v895
        %v1190 = vunpack.c.l.b16 %v896
        %v1191 = vunpack.c.h.b16 %v896
        %v1192 = vunpack.c.l.b16 %v897
        %v1193 = vunpack.c.h.b16 %v897
        %v1194 = vunpack.c.l.b16 %v898
        %v1195 = vunpack.c.h.b16 %v898
        %v1196 = vunpack.c.l.b16 %v899
        %v1197 = vunpack.c.h.b16 %v899
        %v1198 = vunpack.c.l.b16 %v900
        %v1199 = vunpack.c.h.b16 %v900
        %v1200 = vunpack.c.l.b16 %v901
        %v1201 = vunpack.c.h.b16 %v901
        %v1202 = vunpack.c.l.b16 %v902
        %v1203 = vunpack.c.h.b16 %v902
        %v1204 = vunpack.c.l.b16 %v903
        %v1205 = vunpack.c.h.b16 %v903
        %v1206 = vunpack.c.l.b16 %v904
        %v1207 = vunpack.c.h.b16 %v904
        %v1208 = vunpack.c.l.b16 %v905
        %v1209 = vunpack.c.h.b16 %v905
        %v1210 = vunpack.c.l.b16 %v906
        %v1211 = vunpack.c.h.b16 %v906
        %v1212 = vunpack.c.l.b16 %v907
        %v1213 = vunpack.c.h.b16 %v907
        %v1214 = vunpack.c.l.b16 %v908
        %v1215 = vunpack.c.h.b16 %v908
        %v1216 = vunpack.c.l.b16 %v909
        %v1217 = vunpack.c.h.b16 %v909
        %v1218 = vunpack.c.l.b16 %v910
        %v1219 = vunpack.c.h.b16 %v910
        %v1220 = vunpack.c.l.b16 %v911
        %v1221 = vunpack.c.h.b16 %v911
        %v1222 = vunpack.c.l.b16 %v912
        %v1223 = vunpack.c.h.b16 %v912
        %v1224 = vunpack.c.l.b16 %v913
        %v1225 = vunpack.c.h.b16 %v913
        %v1226 = vunpack.c.l.b16 %v914
        %v1227 = vunpack.c.h.b16 %v914
        %v1228 = vunpack.c.l.b16 %v915
        %v1229 = vunpack.c.h.b16 %v915
        %v1230 = vunpack.c.l.b16 %v916
        %v1231 = vunpack.c.h.b16 %v916
        %v1232 = vunpack.c.l.b16 %v917
        %v1233 = vunpack.c.h.b16 %v917
        %v1234 = vunpack.c.l.b16 %v918
        %v1235 = vunpack.c.h.b16 %v918
        %v1236 = vunpack.c.l.b16 %v919
        %v1237 = vunpack.c.h.b16 %v919
        %v1238 = vunpack.c.l.b16 %v920
        %v1239 = vunpack.c.h.b16 %v920
        %v1240 = vunpack.c.l.b16 %v921
        %v1241 = vunpack.c.h.b16 %v921
        %v1242 = vunpack.c.l.b16 %v922
        %v1243 = vunpack.c.h.b16 %v922
        %v1244 = vunpack.c.l.b16 %v923
        %v1245 = vunpack.c.h.b16 %v923
        %v1246 = vunpack.c.l.b16 %v924
        %v1247 = vunpack.c.h.b16 %v924
        %v1248 = vunpack.c.l.b16 %v925
        %v1249 = vunpack.c.h.b16 %v925
        %v1250 = vunpack.c.l.b16 %v926
        %v1251 = vunpack.c.h.b16 %v926
        %v1252 = vunpack.c.l.b16 %v927
        %v1253 = vunpack.c.h.b16 %v927
        %v1254 = vunpack.c.l.b16 %v928
        %v1255 = vunpack.c.h.b16 %v928
        %v1256 = vunpack.c.l.b16 %v929
        %v1257 = vunpack.c.h.b16 %v929
        %v1258 = vunpack.c.l.b16 %v930
        %v1259 = vunpack.c.h.b16 %v930
        %v1260 = vunpack.c.l.b16 %v931
        %v1261 = vunpack.c.h.b16 %v931
        %v1262 = vunpack.c.l.b16 %v932
        %v1263 = vunpack.c.h.b16 %v932
        %v1264 = vunpack.c.l.b16 %v933
        %v1265 = vunpack.c.h.b16 %v933
        %v1266 = vunpack.c.l.b16 %v934
        %v1267 = vunpack.c.h.b16 %v934
        %v1268 = vunpack.c.l.b16 %v935
        %v1269 = vunpack.c.h.b16 %v935
        %v1270 = vunpack.c.l.b16 %v936
        %v1271 = vunpack.c.h.b16 %v936
        %v1272 = vunpack.c.l.b16 %v937
        %v1273 = vunpack.c.h.b16 %v937
        %v1274 = vunpack.c.l.b16 %v938
        %v1275 = vunpack.c.h.b16 %v938
        %v1276 = vunpack.c.l.b16 %v939
        %v1277 = vunpack.c.h.b16 %v939
        %v1278 = vunpack.c.l.b16 %v940
        %v1279 = vunpack.c.h.b16 %v940
        %v1280 = vunpack.c.l.b16 %v941
        %v1281 = vunpack.c.h.b16 %v941
        %v1282 = vunpack.c.l.b16 %v942
        %v1283 = vunpack.c.h.b16 %v942
        %v1284 = vunpack.c.l.b16 %v943
        %v1285 = vunpack.c.h.b16 %v943
        %v1286 = vunpack.c.l.b16 %v944
        %v1287 = vunpack.c.h.b16 %v944
        %v1288 = vunpack.c.l.b16 %v945
        %v1289 = vunpack.c.h.b16 %v945
        %v1290 = vunpack.c.l.b16 %v946
        %v1291 = vunpack.c.h.b16 %v946
        %v1292 = vunpack.c.l.b16 %v947
        %v1293 = vunpack.c.h.b16 %v947
        %v1294 = vunpack.c.l.b16 %v948
        %v1295 = vunpack.c.h.b16 %v948
        %v1296 = vunpack.c.l.b16 %v949
        %v1297 = vunpack.c.h.b16 %v949
        %v1298 = vpack.c.b16 %v1076, %v1074
        %v1299 = vpack.c.b16 %v1077, %v1075
        %v1300 = vpack.c.b16 %v1080, %v1078
        %v1301 = vpack.c.b16 %v1081, %v1079
        %v1302 = vpack.c.b16 %v1084, %v1082
        %v1303 = vpack.c.b16 %v1085, %v1083
        %v1304 = vpack.c.b16 %v1088, %v1086
        %v1305 = vpack.c.b16 %v1089, %v1087
        %v1306 = vpack.c.b16 %v1092, %v1090
        %v1307 = vpack.c.b16 %v1093, %v1091
        %v1308 = vpack.c.b16 %v1096, %v1094
        %v1309 = vpack.c.b16 %v1097, %v1095
        %v1310 = vpack.c.b16 %v1100, %v1098
        %v1311 = vpack.c.b16 %v1101, %v1099
        %v1312 = vpack.c.b16 %v1104, %v1102
        %v1313 = vpack.c.b16 %v1105, %v1103
        %v1314 = vpack.c.b16 %v1108, %v1106
        %v1315 = vpack.c.b16 %v1109, %v1107
        %v1316 = vpack.c.b16 %v1112, %v1110
        %v1317 = vpack.c.b16 %v1113, %v1111
        %v1318 = vpack.c.b16 %v1116, %v1114
        %v1319 = vpack.c.b16 %v1117, %v1115
        %v1320 = vpack.c.b16 %v1120, %v1118
        %v1321 = vpack.c.b16 %v1121, %v1119
        %v1322 = vpack.c.b16 %v1124, %v1122
        %v1323 = vpack.c.b16 %v1125, %v1123
        %v1324 = vpack.c.b16 %v1128, %v1126
        %v1325 = vpack.c.b16 %v1129, %v1127
        %v1326 = vpack.c.b16 %v1132, %v1130
        %v1327 = vpack.c.b16 %v1133, %v1131
        %v1328 = vpack.c.b16 %v1136, %v1134
        %v1329 = vpack.c.b16 %v1137, %v1135
        %v1330 = vpack.c.b16 %v1140, %v1138
        %v1331 = vpack.c.b16 %v1141, %v1139
        %v1332 = vpack.c.b16 %v1144, %v1142
        %v1333 = vpack.c.b16 %v1145, %v1143
        %v1334 = vpack.c.b16 %v1148, %v1146
        %v1335 = vpack.c.b16 %v1149, %v1147
        %v1336 = vpack.c.b16 %v1152, %v1150
        %v1337 = vpack.c.b16 %v1153, %v1151
        %v1338 = vpack.c.b16 %v1156, %v1154
        %v1339 = vpack.c.b16 %v1157, %v1155
        %v1340 = vpack.c.b16 %v1160, %v1158
        %v1341 = vpack.c.b16 %v1161, %v1159
        %v1342 = vpack.c.b16 %v1164, %v1162
        %v1343 = vpack.c.b16 %v1165, %v1163
        %v1344 = vpack.c.b16 %v1168, %v1166
        %v1345 = vpack.c.b16 %v1169, %v1167
        %v1346 = vpack.c.b16 %v1172, %v1170
        %v1347 = vpack.c.b16 %v1173, %v1171
        %v1348 = vpack.c.b16 %v1176, %v1174
        %v1349 = vpack.c.b16 %v1177, %v1175
        %v1350 = vpack.c.b16 %v1180, %v1178
        %v1351 = vpack.c.b16 %v1181, %v1179
        %v1352 = vpack.c.b16 %v1184, %v1182
        %v1353 = vpack.c.b16 %v1185, %v1183
        %v1354 = vpack.c.b16 %v1188, %v1186
        %v1355 = vpack.c.b16 %v1189, %v1187
        %v1356 = vpack.c.b16 %v1192, %v1190
        %v1357 = vpack.c.b16 %v1193, %v1191
        %v1358 = vpack.c.b16 %v1196, %v1194
        %v1359 = vpack.c.b16 %v1197, %v1195
        %v1360 = vpack.c.b16 %v1200, %v1198
        %v1361 = vpack.c.b16 %v1201, %v1199
        %v1362 = vpack.c.b16 %v1204, %v1202
        %v1363 = vpack.c.b16 %v1205, %v1203
        %v1364 = vpack.c.b16 %v1208, %v1206
        %v1365 = vpack.c.b16 %v1209, %v1207
        %v1366 = vpack.c.b16 %v1212, %v1210
        %v1367 = vpack.c.b16 %v1213, %v1211
        %v1368 = vpack.c.b16 %v1216, %v1214
        %v1369 = vpack.c.b16 %v1217, %v1215
        %v1370 = vpack.c.b16 %v1220, %v1218
        %v1371 = vpack.c.b16 %v1221, %v1219
        %v1372 = vpack.c.b16 %v1224, %v1222
        %v1373 = vpack.c.b16 %v1225, %v1223
        %v1374 = vpack.c.b16 %v1228, %v1226
        %v1375 = vpack.c.b16 %v1229, %v1227
        %v1376 = vpack.c.b16 %v1232, %v1230
        %v1377 = vpack.c.b16 %v1233, %v1231
        %v1378 = vpack.c.b16 %v1236, %v1234
        %v1379 = vpack.c.b16 %v1237, %v1235
        %v1380 = vpack.c.b16 %v1240, %v1238
        %v1381 = vpack.c.b16 %v1241, %v1239
        %v1382 = vpack.c.b16 %v1244, %v1242
        %v1383 = vpack.c.b16 %v1245, %v1243
        %v1384 = vpack.c.b16 %v1248, %v1246
        %v1385 = vpack.c.b16 %v1249, %v1247
        %v1386 = vpack.c.b16 %v1252, %v1250
        %v1387 = vpack.c.b16 %v1253, %v1251
        %v1388 = vpack.c.b16 %v1256, %v1254
        %v1389 = vpack.c.b16 %v1257, %v1255
        %v1390 = vpack.c.b16 %v1260, %v1258
        %v1391 = vpack.c.b16 %v1261, %v1259
        %v1392 = vpack.c.b16 %v1264, %v1262
        %v1393 = vpack.c.b16 %v1265, %v1263
        %v1394 = vpack.c.b16 %v1268, %v1266
        %v1395 = vpack.c.b16 %v1269, %v1267
        %v1396 = vpack.c.b16 %v1272, %v1270
        %v1397 = vpack.c.b16 %v1273, %v1271
        %v1398 = vpack.c.b16 %v1276, %v1274
        %v1399 = vpack.c.b16 %v1277, %v1275
        %v1400 = vpack.c.b16 %v1280, %v1278
        %v1401 = vpack.c.b16 %v1281, %v1279
        %v1402 = vpack.c.b16 %v1284, %v1282
        %v1403 = vpack.c.b16 %v1285, %v1283
        %v1404 = vpack.c.b16 %v1288, %v1286
        %v1405 = vpack.c.b16 %v1289, %v1287
        %v1406 = vpack.c.b16 %v1292, %v1290
        %v1407 = vpack.c.b16 %v1293, %v1291
        %v1408 = vpack.c.b16 %v1296, %v1294
        %v1409 = vpack.c.b16 %v1297, %v1295
        %1522 = vmatprep.subr.bf16.mxu0 %v1299
        %1523 = vmatpush1.bf16.msra.mxu0 %v1298
        %1524 = vmatprep.subr.bf16.mxu0 %v1301
        %1525 = vmatpush1.bf16.msra.mxu0 %v1300
        %1526 = vmatprep.subr.bf16.mxu0 %v1303
        %1527 = vmatpush1.bf16.msra.mxu0 %v1302
        %1528 = vmatprep.subr.bf16.mxu0 %v1305
        %1529 = vmatpush1.bf16.msra.mxu0 %v1304
        %1530 = vmatprep.subr.bf16.mxu0 %v1307
        %1531 = vmatpush1.bf16.msra.mxu0 %v1306
        %1532 = vmatprep.subr.bf16.mxu0 %v1309
        %1533 = vmatpush1.bf16.msra.mxu0 %v1308
        %1534 = vmatprep.subr.bf16.mxu0 %v1311
        %1535 = vmatpush1.bf16.msra.mxu0 %v1310
        %1536 = vmatprep.subr.bf16.mxu0 %v1313
        %1537 = vmatpush1.bf16.msra.mxu0 %v1312
        %1538 = vmatprep.subr.bf16.mxu0 %v1315
        %1539 = vmatpush1.bf16.msra.mxu0 %v1314
        %1540 = vmatprep.subr.bf16.mxu0 %v1317
        %1541 = vmatpush1.bf16.msra.mxu0 %v1316
        %1542 = vmatprep.subr.bf16.mxu0 %v1319
        %1543 = vmatpush1.bf16.msra.mxu0 %v1318
        %1544 = vmatprep.subr.bf16.mxu0 %v1321
        %1545 = vmatpush1.bf16.msra.mxu0 %v1320
        %1546 = vmatprep.subr.bf16.mxu0 %v1323
        %1547 = vmatpush1.bf16.msra.mxu0 %v1322
        %1548 = vmatprep.subr.bf16.mxu0 %v1325
        %1549 = vmatpush1.bf16.msra.mxu0 %v1324
        %1550 = vmatprep.subr.bf16.mxu0 %v1327
        %1551 = vmatpush1.bf16.msra.mxu0 %v1326
        %1552 = vmatprep.subr.bf16.mxu0 %v1329
        %1553 = vmatpush1.bf16.msra.mxu0 %v1328
        %1554 = vmatprep.mubr.bf16.mxu0 %v727
        %1555 = vmatmul.mubr.bf16.gmra.mrb[0].mxu0 %v726
        %v1556 = vpop.f32.mrb[0].mxu0
        %v1557 = vadd.f32 %v955, %v1556
        %v1558 = vpop.f32.mrb[0].mxu0
        %v1559 = vadd.f32 %v959, %v1558
        %v1560 = vpop.f32.mrb[0].mxu0
        %v1561 = vadd.f32 %v955, %v1560
        %v1562 = vpop.f32.mrb[0].mxu0
        %v1563 = vadd.f32 %v959, %v1562
        %1564 = vmatprep.mubr.bf16.mxu0 %v734
        %1565 = vmatmul.mubr.bf16.gmra.mrb[0].mxu0 %v733
        %v1566 = vpop.f32.mrb[0].mxu0
        %v1567 = vadd.f32 %v955, %v1566
        %v1568 = vpop.f32.mrb[0].mxu0
        %v1569 = vadd.f32 %v959, %v1568
        %v1570 = vpop.f32.mrb[0].mxu0
        %v1571 = vadd.f32 %v955, %v1570
        %v1572 = vpop.f32.mrb[0].mxu0
        %v1573 = vadd.f32 %v959, %v1572
        %1574 = vmatprep.mubr.bf16.mxu0 %v741
        %1575 = vmatmul.mubr.bf16.gmra.mrb[0].mxu0 %v740
        %v1576 = vpop.f32.mrb[0].mxu0
        %v1577 = vadd.f32 %v955, %v1576
        %v1578 = vpop.f32.mrb[0].mxu0
        %v1579 = vadd.f32 %v959, %v1578
        %v1580 = vpop.f32.mrb[0].mxu0
        %v1581 = vadd.f32 %v955, %v1580
        %v1582 = vpop.f32.mrb[0].mxu0
        %v1583 = vadd.f32 %v959, %v1582
        %1584 = vmatprep.mubr.bf16.mxu0 %v748
        %1585 = vmatmul.mubr.bf16.gmra.mrb[0].mxu0 %v747
        %v1586 = vpop.f32.mrb[0].mxu0
        %v1587 = vadd.f32 %v955, %v1586
        %v1588 = vpop.f32.mrb[0].mxu0
        %v1589 = vadd.f32 %v959, %v1588
        %v1590 = vpop.f32.mrb[0].mxu0
        %v1591 = vadd.f32 %v955, %v1590
        %v1592 = vpop.f32.mrb[0].mxu0
        %v1593 = vadd.f32 %v959, %v1592
        %1594 = vmatprep.mubr.bf16.mxu0 %v755
        %1595 = vmatmul.mubr.bf16.gmra.mrb[0].mxu0 %v754
        %v1596 = vpop.f32.mrb[0].mxu0
        %v1597 = vadd.f32 %v955, %v1596
        %v1598 = vpop.f32.mrb[0].mxu0
        %v1599 = vadd.f32 %v959, %v1598
        %v1600 = vpop.f32.mrb[0].mxu0
        %v1601 = vadd.f32 %v955, %v1600
        %v1602 = vpop.f32.mrb[0].mxu0
        %v1603 = vadd.f32 %v959, %v1602
        %1604 = vmatprep.mubr.bf16.mxu0 %v762
        %1605 = vmatmul.mubr.bf16.gmra.mrb[0].mxu0 %v761
        %v1606 = vpop.f32.mrb[0].mxu0
        %v1607 = vadd.f32 %v955, %v1606
        %v1608 = vpop.f32.mrb[0].mxu0
        %v1609 = vadd.f32 %v959, %v1608
        %v1610 = vpop.f32.mrb[0].mxu0
        %v1611 = vadd.f32 %v955, %v1610
        %v1612 = vpop.f32.mrb[0].mxu0
        %v1613 = vadd.f32 %v959, %v1612
        %1614 = vmatprep.mubr.bf16.mxu0 %v769
        %1615 = vmatmul.mubr.bf16.gmra.mrb[0].mxu0 %v768
        %v1616 = vpop.f32.mrb[0].mxu0
        %v1617 = vadd.f32 %v955, %v1616
        %v1618 = vpop.f32.mrb[0].mxu0
        %v1619 = vadd.f32 %v959, %v1618
        %v1620 = vpop.f32.mrb[0].mxu0
        %v1621 = vadd.f32 %v955, %v1620
        %v1622 = vpop.f32.mrb[0].mxu0
        %v1623 = vadd.f32 %v959, %v1622
        %1624 = vmatprep.mubr.bf16.mxu0 %v776
        %1625 = vmatmul.mubr.bf16.gmra.mrb[0].mxu0 %v775
        %v1626 = vpop.f32.mrb[0].mxu0
        %v1627 = vadd.f32 %v955, %v1626
        %v1628 = vpop.f32.mrb[0].mxu0
        %v1629 = vadd.f32 %v959, %v1628
        %v1630 = vpop.f32.mrb[0].mxu0
        %v1631 = vadd.f32 %v955, %v1630
        %v1632 = vpop.f32.mrb[0].mxu0
        %v1633 = vadd.f32 %v959, %v1632
        %1634 = vmatprep.mubr.bf16.mxu0 %v783
        %1635 = vmatmul.mubr.bf16.gmra.mrb[0].mxu0 %v782
        %v1636 = vpop.f32.mrb[0].mxu0
        %v1637 = vadd.f32 %v955, %v1636
        %v1638 = vpop.f32.mrb[0].mxu0
        %v1639 = vadd.f32 %v959, %v1638
        %v1640 = vpop.f32.mrb[0].mxu0
        %v1641 = vadd.f32 %v955, %v1640
        %v1642 = vpop.f32.mrb[0].mxu0
        %v1643 = vadd.f32 %v959, %v1642
        %1644 = vmatprep.mubr.bf16.mxu0 %v790
        %1645 = vmatmul.mubr.bf16.gmra.mrb[0].mxu0 %v789
        %v1646 = vpop.f32.mrb[0].mxu0
        %v1647 = vadd.f32 %v955, %v1646
        %v1648 = vpop.f32.mrb[0].mxu0
        %v1649 = vadd.f32 %v959, %v1648
        %v1650 = vpop.f32.mrb[0].mxu0
        %v1651 = vadd.f32 %v955, %v1650
        %v1652 = vpop.f32.mrb[0].mxu0
        %v1653 = vadd.f32 %v959, %v1652
        %1654 = vmatprep.mubr.bf16.mxu0 %v797
        %1655 = vmatmul.mubr.bf16.gmra.mrb[0].mxu0 %v796
        %v1656 = vpop.f32.mrb[0].mxu0
        %v1657 = vadd.f32 %v955, %v1656
        %v1658 = vpop.f32.mrb[0].mxu0
        %v1659 = vadd.f32 %v959, %v1658
        %v1660 = vpop.f32.mrb[0].mxu0
        %v1661 = vadd.f32 %v955, %v1660
        %v1662 = vpop.f32.mrb[0].mxu0
        %v1663 = vadd.f32 %v959, %v1662
        %1664 = vmatprep.mubr.bf16.mxu0 %v804
        %1665 = vmatmul.mubr.bf16.gmra.mrb[0].mxu0 %v803
        %v1666 = vpop.f32.mrb[0].mxu0
        %v1667 = vadd.f32 %v955, %v1666
        %v1668 = vpop.f32.mrb[0].mxu0
        %v1669 = vadd.f32 %v959, %v1668
        %v1670 = vpop.f32.mrb[0].mxu0
        %v1671 = vadd.f32 %v955, %v1670
        %v1672 = vpop.f32.mrb[0].mxu0
        %v1673 = vadd.f32 %v959, %v1672
        %1674 = vmatprep.mubr.bf16.mxu0 %v811
        %1675 = vmatmul.mubr.bf16.gmra.mrb[0].mxu0 %v810
        %v1676 = vpop.f32.mrb[0].mxu0
        %v1677 = vadd.f32 %v955, %v1676
        %v1678 = vpop.f32.mrb[0].mxu0
        %v1679 = vadd.f32 %v959, %v1678
        %v1680 = vpop.f32.mrb[0].mxu0
        %v1681 = vadd.f32 %v955, %v1680
        %v1682 = vpop.f32.mrb[0].mxu0
        %v1683 = vadd.f32 %v959, %v1682
        %1684 = vmatprep.mubr.bf16.mxu0 %v818
        %1685 = vmatmul.mubr.bf16.gmra.mrb[0].mxu0 %v817
        %v1686 = vpop.f32.mrb[0].mxu0
        %v1687 = vadd.f32 %v955, %v1686
        %v1688 = vpop.f32.mrb[0].mxu0
        %v1689 = vadd.f32 %v959, %v1688
        %v1690 = vpop.f32.mrb[0].mxu0
        %v1691 = vadd.f32 %v955, %v1690
        %v1692 = vpop.f32.mrb[0].mxu0
        %v1693 = vadd.f32 %v959, %v1692
        %1694 = vmatprep.mubr.bf16.mxu0 %v825
        %1695 = vmatmul.mubr.bf16.gmra.mrb[0].mxu0 %v824
        %v1696 = vpop.f32.mrb[0].mxu0
        %v1697 = vadd.f32 %v955, %v1696
        %v1698 = vpop.f32.mrb[0].mxu0
        %v1699 = vadd.f32 %v959, %v1698
        %v1700 = vpop.f32.mrb[0].mxu0
        %v1701 = vadd.f32 %v955, %v1700
        %v1702 = vpop.f32.mrb[0].mxu0
        %v1703 = vadd.f32 %v959, %v1702
        %1704 = vmatprep.mubr.bf16.mxu0 %v832
        %1705 = vmatmul.mubr.bf16.gmra.mrb[0].mxu0 %v831
        %v1706 = vpop.f32.mrb[0].mxu0
        %v1707 = vadd.f32 %v955, %v1706
        %v1708 = vpop.f32.mrb[0].mxu0
        %v1709 = vadd.f32 %v959, %v1708
        %v1710 = vpop.f32.mrb[0].mxu0
        %v1711 = vadd.f32 %v955, %v1710
        %v1712 = vpop.f32.mrb[0].mxu0
        %v1713 = vadd.f32 %v959, %v1712
        %1714 = vdwg.mxu0
        %1715 = vmatprep.subr.bf16.mxu0 %v1331
        %1716 = vmatpush1.bf16.msra.mxu0 %v1330
        %1717 = vmatprep.subr.bf16.mxu0 %v1333
        %1718 = vmatpush1.bf16.msra.mxu0 %v1332
        %1719 = vmatprep.subr.bf16.mxu0 %v1335
        %1720 = vmatpush1.bf16.msra.mxu0 %v1334
        %1721 = vmatprep.subr.bf16.mxu0 %v1337
        %1722 = vmatpush1.bf16.msra.mxu0 %v1336
        %1723 = vmatprep.subr.bf16.mxu0 %v1339
        %1724 = vmatpush1.bf16.msra.mxu0 %v1338
        %1725 = vmatprep.subr.bf16.mxu0 %v1341
        %1726 = vmatpush1.bf16.msra.mxu0 %v1340
        %1727 = vmatprep.subr.bf16.mxu0 %v1343
        %1728 = vmatpush1.bf16.msra.mxu0 %v1342
        %1729 = vmatprep.subr.bf16.mxu0 %v1345
        %1730 = vmatpush1.bf16.msra.mxu0 %v1344
        %1731 = vmatprep.subr.bf16.mxu0 %v1347
        %1732 = vmatpush1.bf16.msra.mxu0 %v1346
        %1733 = vmatprep.subr.bf16.mxu0 %v1349
        %1734 = vmatpush1.bf16.msra.mxu0 %v1348
        %1735 = vmatprep.subr.bf16.mxu0 %v1351
        %1736 = vmatpush1.bf16.msra.mxu0 %v1350
        %1737 = vmatprep.subr.bf16.mxu0 %v1353
        %1738 = vmatpush1.bf16.msra.mxu0 %v1352
        %1739 = vmatprep.subr.bf16.mxu0 %v1355
        %1740 = vmatpush1.bf16.msra.mxu0 %v1354
        %1741 = vmatprep.subr.bf16.mxu0 %v1357
        %1742 = vmatpush1.bf16.msra.mxu0 %v1356
        %1743 = vmatprep.subr.bf16.mxu0 %v1359
        %1744 = vmatpush1.bf16.msra.mxu0 %v1358
        %1745 = vmatprep.subr.bf16.mxu0 %v1361
        %1746 = vmatpush1.bf16.msra.mxu0 %v1360
        %1747 = vmatprep.mubr.bf16.mxu0 %v729
        %1748 = vmatmul.mubr.bf16.gmra.mrb[0].mxu0 %v728
        %v1749 = vpop.f32.mrb[0].mxu0
        %v1750 = vadd.f32 %v1557, %v1749
        %v1751 = vpop.f32.mrb[0].mxu0
        %v1752 = vadd.f32 %v1559, %v1751
        %v1753 = vpop.f32.mrb[0].mxu0
        %v1754 = vadd.f32 %v1561, %v1753
        %v1755 = vpop.f32.mrb[0].mxu0
        %v1756 = vadd.f32 %v1563, %v1755
        %1757 = vmatprep.mubr.bf16.mxu0 %v736
        %1758 = vmatmul.mubr.bf16.gmra.mrb[0].mxu0 %v735
        %v1759 = vpop.f32.mrb[0].mxu0
        %v1760 = vadd.f32 %v1567, %v1759
        %v1761 = vpop.f32.mrb[0].mxu0
        %v1762 = vadd.f32 %v1569, %v1761
        %v1763 = vpop.f32.mrb[0].mxu0
        %v1764 = vadd.f32 %v1571, %v1763
        %v1765 = vpop.f32.mrb[0].mxu0
        %v1766 = vadd.f32 %v1573, %v1765
        %1767 = vmatprep.mubr.bf16.mxu0 %v743
        %1768 = vmatmul.mubr.bf16.gmra.mrb[0].mxu0 %v742
        %v1769 = vpop.f32.mrb[0].mxu0
        %v1770 = vadd.f32 %v1577, %v1769
        %v1771 = vpop.f32.mrb[0].mxu0
        %v1772 = vadd.f32 %v1579, %v1771
        %v1773 = vpop.f32.mrb[0].mxu0
        %v1774 = vadd.f32 %v1581, %v1773
        %v1775 = vpop.f32.mrb[0].mxu0
        %v1776 = vadd.f32 %v1583, %v1775
        %1777 = vmatprep.mubr.bf16.mxu0 %v750
        %1778 = vmatmul.mubr.bf16.gmra.mrb[0].mxu0 %v749
        %v1779 = vpop.f32.mrb[0].mxu0
        %v1780 = vadd.f32 %v1587, %v1779
        %v1781 = vpop.f32.mrb[0].mxu0
        %v1782 = vadd.f32 %v1589, %v1781
        %v1783 = vpop.f32.mrb[0].mxu0
        %v1784 = vadd.f32 %v1591, %v1783
        %v1785 = vpop.f32.mrb[0].mxu0
        %v1786 = vadd.f32 %v1593, %v1785
        %1787 = vmatprep.mubr.bf16.mxu0 %v757
        %1788 = vmatmul.mubr.bf16.gmra.mrb[0].mxu0 %v756
        %v1789 = vpop.f32.mrb[0].mxu0
        %v1790 = vadd.f32 %v1597, %v1789
        %v1791 = vpop.f32.mrb[0].mxu0
        %v1792 = vadd.f32 %v1599, %v1791
        %v1793 = vpop.f32.mrb[0].mxu0
        %v1794 = vadd.f32 %v1601, %v1793
        %v1795 = vpop.f32.mrb[0].mxu0
        %v1796 = vadd.f32 %v1603, %v1795
        %1797 = vmatprep.mubr.bf16.mxu0 %v764
        %1798 = vmatmul.mubr.bf16.gmra.mrb[0].mxu0 %v763
        %v1799 = vpop.f32.mrb[0].mxu0
        %v1800 = vadd.f32 %v1607, %v1799
        %v1801 = vpop.f32.mrb[0].mxu0
        %v1802 = vadd.f32 %v1609, %v1801
        %v1803 = vpop.f32.mrb[0].mxu0
        %v1804 = vadd.f32 %v1611, %v1803
        %v1805 = vpop.f32.mrb[0].mxu0
        %v1806 = vadd.f32 %v1613, %v1805
        %1807 = vmatprep.mubr.bf16.mxu0 %v771
        %1808 = vmatmul.mubr.bf16.gmra.mrb[0].mxu0 %v770
        %v1809 = vpop.f32.mrb[0].mxu0
        %v1810 = vadd.f32 %v1617, %v1809
        %v1811 = vpop.f32.mrb[0].mxu0
        %v1812 = vadd.f32 %v1619, %v1811
        %v1813 = vpop.f32.mrb[0].mxu0
        %v1814 = vadd.f32 %v1621, %v1813
        %v1815 = vpop.f32.mrb[0].mxu0
        %v1816 = vadd.f32 %v1623, %v1815
        %1817 = vmatprep.mubr.bf16.mxu0 %v778
        %1818 = vmatmul.mubr.bf16.gmra.mrb[0].mxu0 %v777
        %v1819 = vpop.f32.mrb[0].mxu0
        %v1820 = vadd.f32 %v1627, %v1819
        %v1821 = vpop.f32.mrb[0].mxu0
        %v1822 = vadd.f32 %v1629, %v1821
        %v1823 = vpop.f32.mrb[0].mxu0
        %v1824 = vadd.f32 %v1631, %v1823
        %v1825 = vpop.f32.mrb[0].mxu0
        %v1826 = vadd.f32 %v1633, %v1825
        %1827 = vmatprep.mubr.bf16.mxu0 %v785
        %1828 = vmatmul.mubr.bf16.gmra.mrb[0].mxu0 %v784
        %v1829 = vpop.f32.mrb[0].mxu0
        %v1830 = vadd.f32 %v1637, %v1829
        %v1831 = vpop.f32.mrb[0].mxu0
        %v1832 = vadd.f32 %v1639, %v1831
        %v1833 = vpop.f32.mrb[0].mxu0
        %v1834 = vadd.f32 %v1641, %v1833
        %v1835 = vpop.f32.mrb[0].mxu0
        %v1836 = vadd.f32 %v1643, %v1835
        %1837 = vmatprep.mubr.bf16.mxu0 %v792
        %1838 = vmatmul.mubr.bf16.gmra.mrb[0].mxu0 %v791
        %v1839 = vpop.f32.mrb[0].mxu0
        %v1840 = vadd.f32 %v1647, %v1839
        %v1841 = vpop.f32.mrb[0].mxu0
        %v1842 = vadd.f32 %v1649, %v1841
        %v1843 = vpop.f32.mrb[0].mxu0
        %v1844 = vadd.f32 %v1651, %v1843
        %v1845 = vpop.f32.mrb[0].mxu0
        %v1846 = vadd.f32 %v1653, %v1845
        %1847 = vmatprep.mubr.bf16.mxu0 %v799
        %1848 = vmatmul.mubr.bf16.gmra.mrb[0].mxu0 %v798
        %v1849 = vpop.f32.mrb[0].mxu0
        %v1850 = vadd.f32 %v1657, %v1849
        %v1851 = vpop.f32.mrb[0].mxu0
        %v1852 = vadd.f32 %v1659, %v1851
        %v1853 = vpop.f32.mrb[0].mxu0
        %v1854 = vadd.f32 %v1661, %v1853
        %v1855 = vpop.f32.mrb[0].mxu0
        %v1856 = vadd.f32 %v1663, %v1855
        %1857 = vmatprep.mubr.bf16.mxu0 %v806
        %1858 = vmatmul.mubr.bf16.gmra.mrb[0].mxu0 %v805
        %v1859 = vpop.f32.mrb[0].mxu0
        %v1860 = vadd.f32 %v1667, %v1859
        %v1861 = vpop.f32.mrb[0].mxu0
        %v1862 = vadd.f32 %v1669, %v1861
        %v1863 = vpop.f32.mrb[0].mxu0
        %v1864 = vadd.f32 %v1671, %v1863
        %v1865 = vpop.f32.mrb[0].mxu0
        %v1866 = vadd.f32 %v1673, %v1865
        %1867 = vmatprep.mubr.bf16.mxu0 %v813
        %1868 = vmatmul.mubr.bf16.gmra.mrb[0].mxu0 %v812
        %v1869 = vpop.f32.mrb[0].mxu0
        %v1870 = vadd.f32 %v1677, %v1869
        %v1871 = vpop.f32.mrb[0].mxu0
        %v1872 = vadd.f32 %v1679, %v1871
        %v1873 = vpop.f32.mrb[0].mxu0
        %v1874 = vadd.f32 %v1681, %v1873
        %v1875 = vpop.f32.mrb[0].mxu0
        %v1876 = vadd.f32 %v1683, %v1875
        %1877 = vmatprep.mubr.bf16.mxu0 %v820
        %1878 = vmatmul.mubr.bf16.gmra.mrb[0].mxu0 %v819
        %v1879 = vpop.f32.mrb[0].mxu0
        %v1880 = vadd.f32 %v1687, %v1879
        %v1881 = vpop.f32.mrb[0].mxu0
        %v1882 = vadd.f32 %v1689, %v1881
        %v1883 = vpop.f32.mrb[0].mxu0
        %v1884 = vadd.f32 %v1691, %v1883
        %v1885 = vpop.f32.mrb[0].mxu0
        %v1886 = vadd.f32 %v1693, %v1885
        %1887 = vmatprep.mubr.bf16.mxu0 %v827
        %1888 = vmatmul.mubr.bf16.gmra.mrb[0].mxu0 %v826
        %v1889 = vpop.f32.mrb[0].mxu0
        %v1890 = vadd.f32 %v1697, %v1889
        %v1891 = vpop.f32.mrb[0].mxu0
        %v1892 = vadd.f32 %v1699, %v1891
        %v1893 = vpop.f32.mrb[0].mxu0
        %v1894 = vadd.f32 %v1701, %v1893
        %v1895 = vpop.f32.mrb[0].mxu0
        %v1896 = vadd.f32 %v1703, %v1895
        %1897 = vmatprep.mubr.bf16.mxu0 %v834
        %1898 = vmatmul.mubr.bf16.gmra.mrb[0].mxu0 %v833
        %v1899 = vpop.f32.mrb[0].mxu0
        %v1900 = vadd.f32 %v1707, %v1899
        %v1901 = vpop.f32.mrb[0].mxu0
        %v1902 = vadd.f32 %v1709, %v1901
        %v1903 = vpop.f32.mrb[0].mxu0
        %v1904 = vadd.f32 %v1711, %v1903
        %v1905 = vpop.f32.mrb[0].mxu0
        %v1906 = vadd.f32 %v1713, %v1905
        %1907 = vdwg.mxu0
        %1908 = vmatprep.subr.bf16.mxu0 %v1363
        %1909 = vmatpush1.bf16.msra.mxu0 %v1362
        %1910 = vmatprep.subr.bf16.mxu0 %v1365
        %1911 = vmatpush1.bf16.msra.mxu0 %v1364
        %1912 = vmatprep.subr.bf16.mxu0 %v1367
        %1913 = vmatpush1.bf16.msra.mxu0 %v1366
        %1914 = vmatprep.subr.bf16.mxu0 %v1369
        %1915 = vmatpush1.bf16.msra.mxu0 %v1368
        %1916 = vmatprep.subr.bf16.mxu0 %v1371
        %1917 = vmatpush1.bf16.msra.mxu0 %v1370
        %1918 = vmatprep.subr.bf16.mxu0 %v1373
        %1919 = vmatpush1.bf16.msra.mxu0 %v1372
        %1920 = vmatprep.subr.bf16.mxu0 %v1375
        %1921 = vmatpush1.bf16.msra.mxu0 %v1374
        %1922 = vmatprep.subr.bf16.mxu0 %v1377
        %1923 = vmatpush1.bf16.msra.mxu0 %v1376
        %1924 = vmatprep.subr.bf16.mxu0 %v1379
        %1925 = vmatpush1.bf16.msra.mxu0 %v1378
        %1926 = vmatprep.subr.bf16.mxu0 %v1381
        %1927 = vmatpush1.bf16.msra.mxu0 %v1380
        %1928 = vmatprep.subr.bf16.mxu0 %v1383
        %1929 = vmatpush1.bf16.msra.mxu0 %v1382
        %1930 = vmatprep.subr.bf16.mxu0 %v1385
        %1931 = vmatpush1.bf16.msra.mxu0 %v1384
        %1932 = vmatprep.subr.bf16.mxu0 %v1387
        %1933 = vmatpush1.bf16.msra.mxu0 %v1386
        %1934 = vmatprep.subr.bf16.mxu0 %v1389
        %1935 = vmatpush1.bf16.msra.mxu0 %v1388
        %1936 = vmatprep.subr.bf16.mxu0 %v1391
        %1937 = vmatpush1.bf16.msra.mxu0 %v1390
        %1938 = vmatprep.subr.bf16.mxu0 %v1393
        %1939 = vmatpush1.bf16.msra.mxu0 %v1392
        %1940 = vmatprep.mubr.bf16.mxu0 %v731
        %1941 = vmatmul.mubr.bf16.gmra.mrb[0].mxu0 %v730
        %v1942 = vpop.f32.mrb[0].mxu0
        %v1943 = vadd.f32 %v1750, %v1942
        %v1944 = vpop.f32.mrb[0].mxu0
        %v1945 = vadd.f32 %v1752, %v1944
        %v1946 = vpop.f32.mrb[0].mxu0
        %v1947 = vadd.f32 %v1754, %v1946
        %v1948 = vpop.f32.mrb[0].mxu0
        %v1949 = vadd.f32 %v1756, %v1948
        %1950 = vmatprep.mubr.bf16.mxu0 %v738
        %1951 = vmatmul.mubr.bf16.gmra.mrb[0].mxu0 %v737
        %v1952 = vpop.f32.mrb[0].mxu0
        %v1953 = vadd.f32 %v1760, %v1952
        %v1954 = vpop.f32.mrb[0].mxu0
        %v1955 = vadd.f32 %v1762, %v1954
        %v1956 = vpop.f32.mrb[0].mxu0
        %v1957 = vadd.f32 %v1764, %v1956
        %v1958 = vpop.f32.mrb[0].mxu0
        %v1959 = vadd.f32 %v1766, %v1958
        %1960 = vmatprep.mubr.bf16.mxu0 %v745
        %1961 = vmatmul.mubr.bf16.gmra.mrb[0].mxu0 %v744
        %v1962 = vpop.f32.mrb[0].mxu0
        %v1963 = vadd.f32 %v1770, %v1962
        %v1964 = vpop.f32.mrb[0].mxu0
        %v1965 = vadd.f32 %v1772, %v1964
        %v1966 = vpop.f32.mrb[0].mxu0
        %v1967 = vadd.f32 %v1774, %v1966
        %v1968 = vpop.f32.mrb[0].mxu0
        %v1969 = vadd.f32 %v1776, %v1968
        %1970 = vmatprep.mubr.bf16.mxu0 %v752
        %1971 = vmatmul.mubr.bf16.gmra.mrb[0].mxu0 %v751
        %v1972 = vpop.f32.mrb[0].mxu0
        %v1973 = vadd.f32 %v1780, %v1972
        %v1974 = vpop.f32.mrb[0].mxu0
        %v1975 = vadd.f32 %v1782, %v1974
        %v1976 = vpop.f32.mrb[0].mxu0
        %v1977 = vadd.f32 %v1784, %v1976
        %v1978 = vpop.f32.mrb[0].mxu0
        %v1979 = vadd.f32 %v1786, %v1978
        %1980 = vmatprep.mubr.bf16.mxu0 %v759
        %1981 = vmatmul.mubr.bf16.gmra.mrb[0].mxu0 %v758
        %v1982 = vpop.f32.mrb[0].mxu0
        %v1983 = vadd.f32 %v1790, %v1982
        %v1984 = vpop.f32.mrb[0].mxu0
        %v1985 = vadd.f32 %v1792, %v1984
        %v1986 = vpop.f32.mrb[0].mxu0
        %v1987 = vadd.f32 %v1794, %v1986
        %v1988 = vpop.f32.mrb[0].mxu0
        %v1989 = vadd.f32 %v1796, %v1988
        %1990 = vmatprep.mubr.bf16.mxu0 %v766
        %1991 = vmatmul.mubr.bf16.gmra.mrb[0].mxu0 %v765
        %v1992 = vpop.f32.mrb[0].mxu0
        %v1993 = vadd.f32 %v1800, %v1992
        %v1994 = vpop.f32.mrb[0].mxu0
        %v1995 = vadd.f32 %v1802, %v1994
        %v1996 = vpop.f32.mrb[0].mxu0
        %v1997 = vadd.f32 %v1804, %v1996
        %v1998 = vpop.f32.mrb[0].mxu0
        %v1999 = vadd.f32 %v1806, %v1998
        %2000 = vmatprep.mubr.bf16.mxu0 %v773
        %2001 = vmatmul.mubr.bf16.gmra.mrb[0].mxu0 %v772
        %v2002 = vpop.f32.mrb[0].mxu0
        %v2003 = vadd.f32 %v1810, %v2002
        %v2004 = vpop.f32.mrb[0].mxu0
        %v2005 = vadd.f32 %v1812, %v2004
        %v2006 = vpop.f32.mrb[0].mxu0
        %v2007 = vadd.f32 %v1814, %v2006
        %v2008 = vpop.f32.mrb[0].mxu0
        %v2009 = vadd.f32 %v1816, %v2008
        %2010 = vmatprep.mubr.bf16.mxu0 %v780
        %2011 = vmatmul.mubr.bf16.gmra.mrb[0].mxu0 %v779
        %v2012 = vpop.f32.mrb[0].mxu0
        %v2013 = vadd.f32 %v1820, %v2012
        %v2014 = vpop.f32.mrb[0].mxu0
        %v2015 = vadd.f32 %v1822, %v2014
        %v2016 = vpop.f32.mrb[0].mxu0
        %v2017 = vadd.f32 %v1824, %v2016
        %v2018 = vpop.f32.mrb[0].mxu0
        %v2019 = vadd.f32 %v1826, %v2018
        %2020 = vmatprep.mubr.bf16.mxu0 %v787
        %2021 = vmatmul.mubr.bf16.gmra.mrb[0].mxu0 %v786
        %v2022 = vpop.f32.mrb[0].mxu0
        %v2023 = vadd.f32 %v1830, %v2022
        %v2024 = vpop.f32.mrb[0].mxu0
        %v2025 = vadd.f32 %v1832, %v2024
        %v2026 = vpop.f32.mrb[0].mxu0
        %v2027 = vadd.f32 %v1834, %v2026
        %v2028 = vpop.f32.mrb[0].mxu0
        %v2029 = vadd.f32 %v1836, %v2028
        %2030 = vmatprep.mubr.bf16.mxu0 %v794
        %2031 = vmatmul.mubr.bf16.gmra.mrb[0].mxu0 %v793
        %v2032 = vpop.f32.mrb[0].mxu0
        %v2033 = vadd.f32 %v1840, %v2032
        %v2034 = vpop.f32.mrb[0].mxu0
        %v2035 = vadd.f32 %v1842, %v2034
        %v2036 = vpop.f32.mrb[0].mxu0
        %v2037 = vadd.f32 %v1844, %v2036
        %v2038 = vpop.f32.mrb[0].mxu0
        %v2039 = vadd.f32 %v1846, %v2038
        %2040 = vmatprep.mubr.bf16.mxu0 %v801
        %2041 = vmatmul.mubr.bf16.gmra.mrb[0].mxu0 %v800
        %v2042 = vpop.f32.mrb[0].mxu0
        %v2043 = vadd.f32 %v1850, %v2042
        %v2044 = vpop.f32.mrb[0].mxu0
        %v2045 = vadd.f32 %v1852, %v2044
        %v2046 = vpop.f32.mrb[0].mxu0
        %v2047 = vadd.f32 %v1854, %v2046
        %v2048 = vpop.f32.mrb[0].mxu0
        %v2049 = vadd.f32 %v1856, %v2048
        %2050 = vmatprep.mubr.bf16.mxu0 %v808
        %2051 = vmatmul.mubr.bf16.gmra.mrb[0].mxu0 %v807
        %v2052 = vpop.f32.mrb[0].mxu0
        %v2053 = vadd.f32 %v1860, %v2052
        %v2054 = vpop.f32.mrb[0].mxu0
        %v2055 = vadd.f32 %v1862, %v2054
        %v2056 = vpop.f32.mrb[0].mxu0
        %v2057 = vadd.f32 %v1864, %v2056
        %v2058 = vpop.f32.mrb[0].mxu0
        %v2059 = vadd.f32 %v1866, %v2058
        %2060 = vmatprep.mubr.bf16.mxu0 %v815
        %2061 = vmatmul.mubr.bf16.gmra.mrb[0].mxu0 %v814
        %v2062 = vpop.f32.mrb[0].mxu0
        %v2063 = vadd.f32 %v1870, %v2062
        %v2064 = vpop.f32.mrb[0].mxu0
        %v2065 = vadd.f32 %v1872, %v2064
        %v2066 = vpop.f32.mrb[0].mxu0
        %v2067 = vadd.f32 %v1874, %v2066
        %v2068 = vpop.f32.mrb[0].mxu0
        %v2069 = vadd.f32 %v1876, %v2068
        %2070 = vmatprep.mubr.bf16.mxu0 %v822
        %2071 = vmatmul.mubr.bf16.gmra.mrb[0].mxu0 %v821
        %v2072 = vpop.f32.mrb[0].mxu0
        %v2073 = vadd.f32 %v1880, %v2072
        %v2074 = vpop.f32.mrb[0].mxu0
        %v2075 = vadd.f32 %v1882, %v2074
        %v2076 = vpop.f32.mrb[0].mxu0
        %v2077 = vadd.f32 %v1884, %v2076
        %v2078 = vpop.f32.mrb[0].mxu0
        %v2079 = vadd.f32 %v1886, %v2078
        %2080 = vmatprep.mubr.bf16.mxu0 %v829
        %2081 = vmatmul.mubr.bf16.gmra.mrb[0].mxu0 %v828
        %v2082 = vpop.f32.mrb[0].mxu0
        %v2083 = vadd.f32 %v1890, %v2082
        %v2084 = vpop.f32.mrb[0].mxu0
        %v2085 = vadd.f32 %v1892, %v2084
        %v2086 = vpop.f32.mrb[0].mxu0
        %v2087 = vadd.f32 %v1894, %v2086
        %v2088 = vpop.f32.mrb[0].mxu0
        %v2089 = vadd.f32 %v1896, %v2088
        %2090 = vmatprep.mubr.bf16.mxu0 %v836
        %2091 = vmatmul.mubr.bf16.gmra.mrb[0].mxu0 %v835
        %v2092 = vpop.f32.mrb[0].mxu0
        %v2093 = vadd.f32 %v1900, %v2092
        %v2094 = vpop.f32.mrb[0].mxu0
        %v2095 = vadd.f32 %v1902, %v2094
        %v2096 = vpop.f32.mrb[0].mxu0
        %v2097 = vadd.f32 %v1904, %v2096
        %v2098 = vpop.f32.mrb[0].mxu0
        %v2099 = vadd.f32 %v1906, %v2098
        %2100 = vdwg.mxu0
        %2101 = vmatprep.subr.bf16.mxu0 %v1395
        %2102 = vmatpush1.bf16.msra.mxu0 %v1394
        %2103 = vmatprep.subr.bf16.mxu0 %v1397
        %2104 = vmatpush1.bf16.msra.mxu0 %v1396
        %2105 = vmatprep.subr.bf16.mxu0 %v1399
        %2106 = vmatpush1.bf16.msra.mxu0 %v1398
        %2107 = vmatprep.subr.bf16.mxu0 %v1401
        %2108 = vmatpush1.bf16.msra.mxu0 %v1400
        %2109 = vmatprep.subr.bf16.mxu0 %v1403
        %2110 = vmatpush1.bf16.msra.mxu0 %v1402
        %2111 = vmatprep.subr.bf16.mxu0 %v1405
        %2112 = vmatpush1.bf16.msra.mxu0 %v1404
        %2113 = vmatprep.subr.bf16.mxu0 %v1407
        %2114 = vmatpush1.bf16.msra.mxu0 %v1406
        %2115 = vmatprep.subr.bf16.mxu0 %v1409
        %2116 = vmatpush1.bf16.msra.mxu0 %v1408
        %2117 = vmatprep.subr.bf16.mxu0 0
        %2118 = vmatpush1.bf16.msra.mxu0 0
        %2119 = vmatprep.subr.bf16.mxu0 0
        %2120 = vmatpush1.bf16.msra.mxu0 0
        %2121 = vmatprep.subr.bf16.mxu0 0
        %2122 = vmatpush1.bf16.msra.mxu0 0
        %2123 = vmatprep.subr.bf16.mxu0 0
        %2124 = vmatpush1.bf16.msra.mxu0 0
        %2125 = vmatprep.subr.bf16.mxu0 0
        %2126 = vmatpush1.bf16.msra.mxu0 0
        %2127 = vmatprep.subr.bf16.mxu0 0
        %2128 = vmatpush1.bf16.msra.mxu0 0
        %2129 = vmatprep.subr.bf16.mxu0 0
        %2130 = vmatpush1.bf16.msra.mxu0 0
        %2131 = vmatprep.subr.bf16.mxu0 0
        %2132 = vmatpush1.bf16.msra.mxu0 0
        %2133 = vmatprep.mubr.bf16.mxu0 0
        %2134 = vmatmul.mubr.bf16.gmra.mrb[0].mxu0 %v732
        %v2135 = vpop.f32.mrb[0].mxu0
        %v2136 = vadd.f32 %v1943, %v2135
        %v2137 = vpop.f32.mrb[0].mxu0
        %v2138 = vadd.f32 %v1945, %v2137
        %v2139 = vpop.f32.mrb[0].mxu0
        %v2140 = vadd.f32 %v1947, %v2139
        %v2141 = vpop.f32.mrb[0].mxu0
        %v2142 = vadd.f32 %v1949, %v2141
        %2143 = vmatprep.mubr.bf16.mxu0 0
        %2144 = vmatmul.mubr.bf16.gmra.mrb[0].mxu0 %v739
        %v2145 = vpop.f32.mrb[0].mxu0
        %v2146 = vadd.f32 %v1953, %v2145
        %v2147 = vpop.f32.mrb[0].mxu0
        %v2148 = vadd.f32 %v1955, %v2147
        %v2149 = vpop.f32.mrb[0].mxu0
        %v2150 = vadd.f32 %v1957, %v2149
        %v2151 = vpop.f32.mrb[0].mxu0
        %v2152 = vadd.f32 %v1959, %v2151
        %2153 = vmatprep.mubr.bf16.mxu0 0
        %2154 = vmatmul.mubr.bf16.gmra.mrb[0].mxu0 %v746
        %v2155 = vpop.f32.mrb[0].mxu0
        %v2156 = vadd.f32 %v1963, %v2155
        %v2157 = vpop.f32.mrb[0].mxu0
        %v2158 = vadd.f32 %v1965, %v2157
        %v2159 = vpop.f32.mrb[0].mxu0
        %v2160 = vadd.f32 %v1967, %v2159
        %v2161 = vpop.f32.mrb[0].mxu0
        %v2162 = vadd.f32 %v1969, %v2161
        %2163 = vmatprep.mubr.bf16.mxu0 0
        %2164 = vmatmul.mubr.bf16.gmra.mrb[0].mxu0 %v753
        %v2165 = vpop.f32.mrb[0].mxu0
        %v2166 = vadd.f32 %v1973, %v2165
        %v2167 = vpop.f32.mrb[0].mxu0
        %v2168 = vadd.f32 %v1975, %v2167
        %v2169 = vpop.f32.mrb[0].mxu0
        %v2170 = vadd.f32 %v1977, %v2169
        %v2171 = vpop.f32.mrb[0].mxu0
        %v2172 = vadd.f32 %v1979, %v2171
        %2173 = vmatprep.mubr.bf16.mxu0 0
        %2174 = vmatmul.mubr.bf16.gmra.mrb[0].mxu0 %v760
        %v2175 = vpop.f32.mrb[0].mxu0
        %v2176 = vadd.f32 %v1983, %v2175
        %v2177 = vpop.f32.mrb[0].mxu0
        %v2178 = vadd.f32 %v1985, %v2177
        %v2179 = vpop.f32.mrb[0].mxu0
        %v2180 = vadd.f32 %v1987, %v2179
        %v2181 = vpop.f32.mrb[0].mxu0
        %v2182 = vadd.f32 %v1989, %v2181
        %2183 = vmatprep.mubr.bf16.mxu0 0
        %2184 = vmatmul.mubr.bf16.gmra.mrb[0].mxu0 %v767
        %v2185 = vpop.f32.mrb[0].mxu0
        %v2186 = vadd.f32 %v1993, %v2185
        %v2187 = vpop.f32.mrb[0].mxu0
        %v2188 = vadd.f32 %v1995, %v2187
        %v2189 = vpop.f32.mrb[0].mxu0
        %v2190 = vadd.f32 %v1997, %v2189
        %v2191 = vpop.f32.mrb[0].mxu0
        %v2192 = vadd.f32 %v1999, %v2191
        %2193 = vmatprep.mubr.bf16.mxu0 0
        %2194 = vmatmul.mubr.bf16.gmra.mrb[0].mxu0 %v774
        %v2195 = vpop.f32.mrb[0].mxu0
        %v2196 = vadd.f32 %v2003, %v2195
        %v2197 = vpop.f32.mrb[0].mxu0
        %v2198 = vadd.f32 %v2005, %v2197
        %v2199 = vpop.f32.mrb[0].mxu0
        %v2200 = vadd.f32 %v2007, %v2199
        %v2201 = vpop.f32.mrb[0].mxu0
        %v2202 = vadd.f32 %v2009, %v2201
        %2203 = vmatprep.mubr.bf16.mxu0 0
        %2204 = vmatmul.mubr.bf16.gmra.mrb[0].mxu0 %v781
        %v2205 = vpop.f32.mrb[0].mxu0
        %v2206 = vadd.f32 %v2013, %v2205
        %v2207 = vpop.f32.mrb[0].mxu0
        %v2208 = vadd.f32 %v2015, %v2207
        %v2209 = vpop.f32.mrb[0].mxu0
        %v2210 = vadd.f32 %v2017, %v2209
        %v2211 = vpop.f32.mrb[0].mxu0
        %v2212 = vadd.f32 %v2019, %v2211
        %2213 = vmatprep.mubr.bf16.mxu0 0
        %2214 = vmatmul.mubr.bf16.gmra.mrb[0].mxu0 %v788
        %v2215 = vpop.f32.mrb[0].mxu0
        %v2216 = vadd.f32 %v2023, %v2215
        %v2217 = vpop.f32.mrb[0].mxu0
        %v2218 = vadd.f32 %v2025, %v2217
        %v2219 = vpop.f32.mrb[0].mxu0
        %v2220 = vadd.f32 %v2027, %v2219
        %v2221 = vpop.f32.mrb[0].mxu0
        %v2222 = vadd.f32 %v2029, %v2221
        %2223 = vmatprep.mubr.bf16.mxu0 0
        %2224 = vmatmul.mubr.bf16.gmra.mrb[0].mxu0 %v795
        %v2225 = vpop.f32.mrb[0].mxu0
        %v2226 = vadd.f32 %v2033, %v2225
        %v2227 = vpop.f32.mrb[0].mxu0
        %v2228 = vadd.f32 %v2035, %v2227
        %v2229 = vpop.f32.mrb[0].mxu0
        %v2230 = vadd.f32 %v2037, %v2229
        %v2231 = vpop.f32.mrb[0].mxu0
        %v2232 = vadd.f32 %v2039, %v2231
        %2233 = vmatprep.mubr.bf16.mxu0 0
        %2234 = vmatmul.mubr.bf16.gmra.mrb[0].mxu0 %v802
        %v2235 = vpop.f32.mrb[0].mxu0
        %v2236 = vadd.f32 %v2043, %v2235
        %v2237 = vpop.f32.mrb[0].mxu0
        %v2238 = vadd.f32 %v2045, %v2237
        %v2239 = vpop.f32.mrb[0].mxu0
        %v2240 = vadd.f32 %v2047, %v2239
        %v2241 = vpop.f32.mrb[0].mxu0
        %v2242 = vadd.f32 %v2049, %v2241
        %2243 = vmatprep.mubr.bf16.mxu0 0
        %2244 = vmatmul.mubr.bf16.gmra.mrb[0].mxu0 %v809
        %v2245 = vpop.f32.mrb[0].mxu0
        %v2246 = vadd.f32 %v2053, %v2245
        %v2247 = vpop.f32.mrb[0].mxu0
        %v2248 = vadd.f32 %v2055, %v2247
        %v2249 = vpop.f32.mrb[0].mxu0
        %v2250 = vadd.f32 %v2057, %v2249
        %v2251 = vpop.f32.mrb[0].mxu0
        %v2252 = vadd.f32 %v2059, %v2251
        %2253 = vmatprep.mubr.bf16.mxu0 0
        %2254 = vmatmul.mubr.bf16.gmra.mrb[0].mxu0 %v816
        %v2255 = vpop.f32.mrb[0].mxu0
        %v2256 = vadd.f32 %v2063, %v2255
        %v2257 = vpop.f32.mrb[0].mxu0
        %v2258 = vadd.f32 %v2065, %v2257
        %v2259 = vpop.f32.mrb[0].mxu0
        %v2260 = vadd.f32 %v2067, %v2259
        %v2261 = vpop.f32.mrb[0].mxu0
        %v2262 = vadd.f32 %v2069, %v2261
        %2263 = vmatprep.mubr.bf16.mxu0 0
        %2264 = vmatmul.mubr.bf16.gmra.mrb[0].mxu0 %v823
        %v2265 = vpop.f32.mrb[0].mxu0
        %v2266 = vadd.f32 %v2073, %v2265
        %v2267 = vpop.f32.mrb[0].mxu0
        %v2268 = vadd.f32 %v2075, %v2267
        %v2269 = vpop.f32.mrb[0].mxu0
        %v2270 = vadd.f32 %v2077, %v2269
        %v2271 = vpop.f32.mrb[0].mxu0
        %v2272 = vadd.f32 %v2079, %v2271
        %2273 = vmatprep.mubr.bf16.mxu0 0
        %2274 = vmatmul.mubr.bf16.gmra.mrb[0].mxu0 %v830
        %v2275 = vpop.f32.mrb[0].mxu0
        %v2276 = vadd.f32 %v2083, %v2275
        %v2277 = vpop.f32.mrb[0].mxu0
        %v2278 = vadd.f32 %v2085, %v2277
        %v2279 = vpop.f32.mrb[0].mxu0
        %v2280 = vadd.f32 %v2087, %v2279
        %v2281 = vpop.f32.mrb[0].mxu0
        %v2282 = vadd.f32 %v2089, %v2281
        %2283 = vmatprep.mubr.bf16.mxu0 0
        %2284 = vmatmul.mubr.bf16.gmra.mrb[0].mxu0 %v837
        %v2285 = vpop.f32.mrb[0].mxu0
        %v2286 = vadd.f32 %v2093, %v2285
        %v2287 = vpop.f32.mrb[0].mxu0
        %v2288 = vadd.f32 %v2095, %v2287
        %v2289 = vpop.f32.mrb[0].mxu0
        %v2290 = vadd.f32 %v2097, %v2289
        %v2291 = vpop.f32.mrb[0].mxu0
        %v2292 = vadd.f32 %v2099, %v2291
        %2293 = vdwg.mxu0
        %v2294 = vmax.f32 %v2136, 0.0
        %v2295 = vmax.f32 %v2138, 0.0
        %v2296 = vmax.f32 %v2140, 0.0
        %v2297 = vmax.f32 %v2142, 0.0
        %v2298 = vmax.f32 %v2146, 0.0
        %v2299 = vmax.f32 %v2148, 0.0
        %v2300 = vmax.f32 %v2150, 0.0
        %v2301 = vmax.f32 %v2152, 0.0
        %v2302 = vmax.f32 %v2156, 0.0
        %v2303 = vmax.f32 %v2158, 0.0
        %v2304 = vmax.f32 %v2160, 0.0
        %v2305 = vmax.f32 %v2162, 0.0
        %v2306 = vmax.f32 %v2166, 0.0
        %v2307 = vmax.f32 %v2168, 0.0
        %v2308 = vmax.f32 %v2170, 0.0
        %v2309 = vmax.f32 %v2172, 0.0
        %v2310 = vmax.f32 %v2176, 0.0
        %v2311 = vmax.f32 %v2178, 0.0
        %v2312 = vmax.f32 %v2180, 0.0
        %v2313 = vmax.f32 %v2182, 0.0
        %v2314 = vmax.f32 %v2186, 0.0
        %v2315 = vmax.f32 %v2188, 0.0
        %v2316 = vmax.f32 %v2190, 0.0
        %v2317 = vmax.f32 %v2192, 0.0
        %v2318 = vmax.f32 %v2196, 0.0
        %v2319 = vmax.f32 %v2198, 0.0
        %v2320 = vmax.f32 %v2200, 0.0
        %v2321 = vmax.f32 %v2202, 0.0
        %v2322 = vmax.f32 %v2206, 0.0
        %v2323 = vmax.f32 %v2208, 0.0
        %v2324 = vmax.f32 %v2210, 0.0
        %v2325 = vmax.f32 %v2212, 0.0
        %v2326 = vmax.f32 %v2216, 0.0
        %v2327 = vmax.f32 %v2218, 0.0
        %v2328 = vmax.f32 %v2220, 0.0
        %v2329 = vmax.f32 %v2222, 0.0
        %v2330 = vmax.f32 %v2226, 0.0
        %v2331 = vmax.f32 %v2228, 0.0
        %v2332 = vmax.f32 %v2230, 0.0
        %v2333 = vmax.f32 %v2232, 0.0
        %v2334 = vmax.f32 %v2236, 0.0
        %v2335 = vmax.f32 %v2238, 0.0
        %v2336 = vmax.f32 %v2240, 0.0
        %v2337 = vmax.f32 %v2242, 0.0
        %v2338 = vmax.f32 %v2246, 0.0
        %v2339 = vmax.f32 %v2248, 0.0
        %v2340 = vmax.f32 %v2250, 0.0
        %v2341 = vmax.f32 %v2252, 0.0
        %v2342 = vmax.f32 %v2256, 0.0
        %v2343 = vmax.f32 %v2258, 0.0
        %v2344 = vmax.f32 %v2260, 0.0
        %v2345 = vmax.f32 %v2262, 0.0
        %v2346 = vmax.f32 %v2266, 0.0
        %v2347 = vmax.f32 %v2268, 0.0
        %v2348 = vmax.f32 %v2270, 0.0
        %v2349 = vmax.f32 %v2272, 0.0
        %v2350 = vmax.f32 %v2276, 0.0
        %v2351 = vmax.f32 %v2278, 0.0
        %v2352 = vmax.f32 %v2280, 0.0
        %v2353 = vmax.f32 %v2282, 0.0
        %v2354 = vmax.f32 %v2286, 0.0
        %v2355 = vmax.f32 %v2288, 0.0
        %v2356 = vmax.f32 %v2290, 0.0
        %v2357 = vmax.f32 %v2292, 0.0
        %v2358 = vpack.c.bf16 %v2296, %v2294
        %v2359 = vpack.c.bf16 %v2300, %v2298
        %v2360 = vpack.c.bf16 %v2304, %v2302
        %v2361 = vpack.c.bf16 %v2308, %v2306
        %v2362 = vpack.c.bf16 %v2312, %v2310
        %v2363 = vpack.c.bf16 %v2316, %v2314
        %v2364 = vpack.c.bf16 %v2320, %v2318
        %v2365 = vpack.c.bf16 %v2324, %v2322
        %v2366 = vpack.c.bf16 %v2328, %v2326
        %v2367 = vpack.c.bf16 %v2332, %v2330
        %v2368 = vpack.c.bf16 %v2336, %v2334
        %v2369 = vpack.c.bf16 %v2340, %v2338
        %v2370 = vpack.c.bf16 %v2344, %v2342
        %v2371 = vpack.c.bf16 %v2348, %v2346
        %v2372 = vpack.c.bf16 %v2352, %v2350
        %v2373 = vpack.c.bf16 %v2356, %v2354
        %v2374 = vpack.c.bf16 %v2297, %v2295
        %v2375 = vpack.c.bf16 %v2301, %v2299
        %v2376 = vpack.c.bf16 %v2305, %v2303
        %v2377 = vpack.c.bf16 %v2309, %v2307
        %v2378 = vpack.c.bf16 %v2313, %v2311
        %v2379 = vpack.c.bf16 %v2317, %v2315
        %v2380 = vpack.c.bf16 %v2321, %v2319
        %v2381 = vpack.c.bf16 %v2325, %v2323
        %v2382 = vpack.c.bf16 %v2329, %v2327
        %v2383 = vpack.c.bf16 %v2333, %v2331
        %v2384 = vpack.c.bf16 %v2337, %v2335
        %v2385 = vpack.c.bf16 %v2341, %v2339
        %v2386 = vpack.c.bf16 %v2345, %v2343
        %v2387 = vpack.c.bf16 %v2349, %v2347
        %v2388 = vpack.c.bf16 %v2353, %v2351
        %v2389 = vpack.c.bf16 %v2357, %v2355
        %v2391 = vshrl.u32 %v2374, 16
        %v2393 = vrot.slane %v2391, 6
        %v2394 = vshll.u32 %v2374, 16
        %v2396 = vrot.slane %v2394, 7
        %v2397 = vor.u32 %v2393, %v2396
        %v2399 = vshrl.u32 %v2375, 16
        %v2401 = vrot.slane %v2399, 6
        %v2402 = vshll.u32 %v2375, 16
        %v2404 = vrot.slane %v2402, 7
        %v2405 = vor.u32 %v2401, %v2404
        %v2407 = vshrl.u32 %v2376, 16
        %v2409 = vrot.slane %v2407, 6
        %v2410 = vshll.u32 %v2376, 16
        %v2412 = vrot.slane %v2410, 7
        %v2413 = vor.u32 %v2409, %v2412
        %v2415 = vshrl.u32 %v2377, 16
        %v2417 = vrot.slane %v2415, 6
        %v2418 = vshll.u32 %v2377, 16
        %v2420 = vrot.slane %v2418, 7
        %v2421 = vor.u32 %v2417, %v2420
        %v2423 = vshrl.u32 %v2378, 16
        %v2425 = vrot.slane %v2423, 6
        %v2426 = vshll.u32 %v2378, 16
        %v2428 = vrot.slane %v2426, 7
        %v2429 = vor.u32 %v2425, %v2428
        %v2431 = vshrl.u32 %v2379, 16
        %v2433 = vrot.slane %v2431, 6
        %v2434 = vshll.u32 %v2379, 16
        %v2436 = vrot.slane %v2434, 7
        %v2437 = vor.u32 %v2433, %v2436
        %v2439 = vshrl.u32 %v2380, 16
        %v2441 = vrot.slane %v2439, 6
        %v2442 = vshll.u32 %v2380, 16
        %v2444 = vrot.slane %v2442, 7
        %v2445 = vor.u32 %v2441, %v2444
        %v2447 = vshrl.u32 %v2381, 16
        %v2449 = vrot.slane %v2447, 6
        %v2450 = vshll.u32 %v2381, 16
        %v2452 = vrot.slane %v2450, 7
        %v2453 = vor.u32 %v2449, %v2452
        %v2455 = vshrl.u32 %v2382, 16
        %v2457 = vrot.slane %v2455, 6
        %v2458 = vshll.u32 %v2382, 16
        %v2460 = vrot.slane %v2458, 7
        %v2461 = vor.u32 %v2457, %v2460
        %v2463 = vshrl.u32 %v2383, 16
        %v2465 = vrot.slane %v2463, 6
        %v2466 = vshll.u32 %v2383, 16
        %v2468 = vrot.slane %v2466, 7
        %v2469 = vor.u32 %v2465, %v2468
        %v2471 = vshrl.u32 %v2384, 16
        %v2473 = vrot.slane %v2471, 6
        %v2474 = vshll.u32 %v2384, 16
        %v2476 = vrot.slane %v2474, 7
        %v2477 = vor.u32 %v2473, %v2476
        %v2479 = vshrl.u32 %v2385, 16
        %v2481 = vrot.slane %v2479, 6
        %v2482 = vshll.u32 %v2385, 16
        %v2484 = vrot.slane %v2482, 7
        %v2485 = vor.u32 %v2481, %v2484
        %v2487 = vshrl.u32 %v2386, 16
        %v2489 = vrot.slane %v2487, 6
        %v2490 = vshll.u32 %v2386, 16
        %v2492 = vrot.slane %v2490, 7
        %v2493 = vor.u32 %v2489, %v2492
        %v2495 = vshrl.u32 %v2387, 16
        %v2497 = vrot.slane %v2495, 6
        %v2498 = vshll.u32 %v2387, 16
        %v2500 = vrot.slane %v2498, 7
        %v2501 = vor.u32 %v2497, %v2500
        %v2503 = vshrl.u32 %v2388, 16
        %v2505 = vrot.slane %v2503, 6
        %v2506 = vshll.u32 %v2388, 16
        %v2508 = vrot.slane %v2506, 7
        %v2509 = vor.u32 %v2505, %v2508
        %v2511 = vshrl.u32 %v2389, 16
        %v2513 = vrot.slane %v2511, 6
        %v2514 = vshll.u32 %v2389, 16
        %v2516 = vrot.slane %v2514, 7
        %v2517 = vor.u32 %v2513, %v2516
        %vm2534 = vcmask 1041408
        %vm2535 = vsmask.f32 1280
        %vm2536 = vmand %vm2534, %vm2535
        %v2537 = vsel %vm2536, 0, %v2397
        %v2538 = vsel %vm2536, 0, %v2405
        %v2539 = vsel %vm2536, 0, %v2413
        %v2540 = vsel %vm2536, 0, %v2421
        %v2541 = vsel %vm2536, 0, %v2429
        %v2542 = vsel %vm2536, 0, %v2437
        %v2543 = vsel %vm2536, 0, %v2445
        %v2544 = vsel %vm2536, 0, %v2453
        %v2545 = vsel %vm2536, 0, %v2461
        %v2546 = vsel %vm2536, 0, %v2469
        %v2547 = vsel %vm2536, 0, %v2477
        %v2548 = vsel %vm2536, 0, %v2485
        %v2549 = vsel %vm2536, 0, %v2493
        %v2550 = vsel %vm2536, 0, %v2501
        %v2551 = vsel %vm2536, 0, %v2509
        %v2552 = vsel %vm2536, 0, %v2517
        %v2553 = vsel %vm2536, %v2397, 0
        %v2554 = vsel %vm2536, %v2405, 0
        %v2555 = vsel %vm2536, %v2413, 0
        %v2556 = vsel %vm2536, %v2421, 0
        %v2557 = vsel %vm2536, %v2429, 0
        %v2558 = vsel %vm2536, %v2437, 0
        %v2559 = vsel %vm2536, %v2445, 0
        %v2560 = vsel %vm2536, %v2453, 0
        %v2561 = vsel %vm2536, %v2461, 0
        %v2562 = vsel %vm2536, %v2469, 0
        %v2563 = vsel %vm2536, %v2477, 0
        %v2564 = vsel %vm2536, %v2485, 0
        %v2565 = vsel %vm2536, %v2493, 0
        %v2566 = vsel %vm2536, %v2501, 0
        %v2567 = vsel %vm2536, %v2509, 0
        %v2568 = vsel %vm2536, %v2517, 0
        %vm2569 = vsmask.f32 7424
        %v2571 = vshrl.u32 %v2537, 16
        %v2573 = vshll.u32 %v2537, 16
        %v2575 = vrot.slane %v2573, 1
        %v2576 = vor.u32 %v2571, %v2575
        %v2578 = vshll.u32 %v2553, 16
        %v2580 = vrot.slane %v2578, 1
        %v2581 = vsel %vm2569, %v2576, %v2580
        %v2583 = vshrl.u32 %v2538, 16
        %v2585 = vshll.u32 %v2538, 16
        %v2587 = vrot.slane %v2585, 1
        %v2588 = vor.u32 %v2583, %v2587
        %v2590 = vshll.u32 %v2554, 16
        %v2592 = vrot.slane %v2590, 1
        %v2593 = vsel %vm2569, %v2588, %v2592
        %v2595 = vshrl.u32 %v2539, 16
        %v2597 = vshll.u32 %v2539, 16
        %v2599 = vrot.slane %v2597, 1
        %v2600 = vor.u32 %v2595, %v2599
        %v2602 = vshll.u32 %v2555, 16
        %v2604 = vrot.slane %v2602, 1
        %v2605 = vsel %vm2569, %v2600, %v2604
        %v2607 = vshrl.u32 %v2540, 16
        %v2609 = vshll.u32 %v2540, 16
        %v2611 = vrot.slane %v2609, 1
        %v2612 = vor.u32 %v2607, %v2611
        %v2614 = vshll.u32 %v2556, 16
        %v2616 = vrot.slane %v2614, 1
        %v2617 = vsel %vm2569, %v2612, %v2616
        %v2619 = vshrl.u32 %v2541, 16
        %v2621 = vshll.u32 %v2541, 16
        %v2623 = vrot.slane %v2621, 1
        %v2624 = vor.u32 %v2619, %v2623
        %v2626 = vshll.u32 %v2557, 16
        %v2628 = vrot.slane %v2626, 1
        %v2629 = vsel %vm2569, %v2624, %v2628
        %v2631 = vshrl.u32 %v2542, 16
        %v2633 = vshll.u32 %v2542, 16
        %v2635 = vrot.slane %v2633, 1
        %v2636 = vor.u32 %v2631, %v2635
        %v2638 = vshll.u32 %v2558, 16
        %v2640 = vrot.slane %v2638, 1
        %v2641 = vsel %vm2569, %v2636, %v2640
        %v2643 = vshrl.u32 %v2543, 16
        %v2645 = vshll.u32 %v2543, 16
        %v2647 = vrot.slane %v2645, 1
        %v2648 = vor.u32 %v2643, %v2647
        %v2650 = vshll.u32 %v2559, 16
        %v2652 = vrot.slane %v2650, 1
        %v2653 = vsel %vm2569, %v2648, %v2652
        %v2655 = vshrl.u32 %v2544, 16
        %v2657 = vshll.u32 %v2544, 16
        %v2659 = vrot.slane %v2657, 1
        %v2660 = vor.u32 %v2655, %v2659
        %v2662 = vshll.u32 %v2560, 16
        %v2664 = vrot.slane %v2662, 1
        %v2665 = vsel %vm2569, %v2660, %v2664
        %v2667 = vshrl.u32 %v2545, 16
        %v2669 = vshll.u32 %v2545, 16
        %v2671 = vrot.slane %v2669, 1
        %v2672 = vor.u32 %v2667, %v2671
        %v2674 = vshll.u32 %v2561, 16
        %v2676 = vrot.slane %v2674, 1
        %v2677 = vsel %vm2569, %v2672, %v2676
        %v2679 = vshrl.u32 %v2546, 16
        %v2681 = vshll.u32 %v2546, 16
        %v2683 = vrot.slane %v2681, 1
        %v2684 = vor.u32 %v2679, %v2683
        %v2686 = vshll.u32 %v2562, 16
        %v2688 = vrot.slane %v2686, 1
        %v2689 = vsel %vm2569, %v2684, %v2688
        %v2691 = vshrl.u32 %v2547, 16
        %v2693 = vshll.u32 %v2547, 16
        %v2695 = vrot.slane %v2693, 1
        %v2696 = vor.u32 %v2691, %v2695
        %v2698 = vshll.u32 %v2563, 16
        %v2700 = vrot.slane %v2698, 1
        %v2701 = vsel %vm2569, %v2696, %v2700
        %v2703 = vshrl.u32 %v2548, 16
        %v2705 = vshll.u32 %v2548, 16
        %v2707 = vrot.slane %v2705, 1
        %v2708 = vor.u32 %v2703, %v2707
        %v2710 = vshll.u32 %v2564, 16
        %v2712 = vrot.slane %v2710, 1
        %v2713 = vsel %vm2569, %v2708, %v2712
        %v2715 = vshrl.u32 %v2549, 16
        %v2717 = vshll.u32 %v2549, 16
        %v2719 = vrot.slane %v2717, 1
        %v2720 = vor.u32 %v2715, %v2719
        %v2722 = vshll.u32 %v2565, 16
        %v2724 = vrot.slane %v2722, 1
        %v2725 = vsel %vm2569, %v2720, %v2724
        %v2727 = vshrl.u32 %v2550, 16
        %v2729 = vshll.u32 %v2550, 16
        %v2731 = vrot.slane %v2729, 1
        %v2732 = vor.u32 %v2727, %v2731
        %v2734 = vshll.u32 %v2566, 16
        %v2736 = vrot.slane %v2734, 1
        %v2737 = vsel %vm2569, %v2732, %v2736
        %v2739 = vshrl.u32 %v2551, 16
        %v2741 = vshll.u32 %v2551, 16
        %v2743 = vrot.slane %v2741, 1
        %v2744 = vor.u32 %v2739, %v2743
        %v2746 = vshll.u32 %v2567, 16
        %v2748 = vrot.slane %v2746, 1
        %v2749 = vsel %vm2569, %v2744, %v2748
        %v2751 = vshrl.u32 %v2552, 16
        %v2753 = vshll.u32 %v2552, 16
        %v2755 = vrot.slane %v2753, 1
        %v2756 = vor.u32 %v2751, %v2755
        %v2758 = vshll.u32 %v2568, 16
        %v2760 = vrot.slane %v2758, 1
        %v2761 = vsel %vm2569, %v2756, %v2760
        %vm2810 = vcmask 1046528
        %v2811 = vrot.slane %v2537, 1
        %v2812 = vrot.slane %v2553, 1
        %v2813 = vsel %vm2810, %v2811, %v2812
        %v2814 = vrot.slane %v2538, 1
        %v2815 = vrot.slane %v2554, 1
        %v2816 = vsel %vm2810, %v2814, %v2815
        %v2817 = vrot.slane %v2539, 1
        %v2818 = vrot.slane %v2555, 1
        %v2819 = vsel %vm2810, %v2817, %v2818
        %v2820 = vrot.slane %v2540, 1
        %v2821 = vrot.slane %v2556, 1
        %v2822 = vsel %vm2810, %v2820, %v2821
        %v2823 = vrot.slane %v2541, 1
        %v2824 = vrot.slane %v2557, 1
        %v2825 = vsel %vm2810, %v2823, %v2824
        %v2826 = vrot.slane %v2542, 1
        %v2827 = vrot.slane %v2558, 1
        %v2828 = vsel %vm2810, %v2826, %v2827
        %v2829 = vrot.slane %v2543, 1
        %v2830 = vrot.slane %v2559, 1
        %v2831 = vsel %vm2810, %v2829, %v2830
        %v2832 = vrot.slane %v2544, 1
        %v2833 = vrot.slane %v2560, 1
        %v2834 = vsel %vm2810, %v2832, %v2833
        %v2835 = vrot.slane %v2545, 1
        %v2836 = vrot.slane %v2561, 1
        %v2837 = vsel %vm2810, %v2835, %v2836
        %v2838 = vrot.slane %v2546, 1
        %v2839 = vrot.slane %v2562, 1
        %v2840 = vsel %vm2810, %v2838, %v2839
        %v2841 = vrot.slane %v2547, 1
        %v2842 = vrot.slane %v2563, 1
        %v2843 = vsel %vm2810, %v2841, %v2842
        %v2844 = vrot.slane %v2548, 1
        %v2845 = vrot.slane %v2564, 1
        %v2846 = vsel %vm2810, %v2844, %v2845
        %v2847 = vrot.slane %v2549, 1
        %v2848 = vrot.slane %v2565, 1
        %v2849 = vsel %vm2810, %v2847, %v2848
        %v2850 = vrot.slane %v2550, 1
        %v2851 = vrot.slane %v2566, 1
        %v2852 = vsel %vm2810, %v2850, %v2851
        %v2853 = vrot.slane %v2551, 1
        %v2854 = vrot.slane %v2567, 1
        %v2855 = vsel %vm2810, %v2853, %v2854
        %v2856 = vrot.slane %v2552, 1
        %v2857 = vrot.slane %v2568, 1
        %v2858 = vsel %vm2810, %v2856, %v2857
        %vm2875 = vsmask.f32 6400
        %v2876 = vrot.slane %v2571, 1
        %v2877 = vrot.slane %v2573, 2
        %v2878 = vor.u32 %v2876, %v2877
        %v2879 = vshrl.u32 %v2553, 16
        %v2881 = vrot.slane %v2879, 1
        %v2882 = vrot.slane %v2578, 2
        %v2883 = vor.u32 %v2881, %v2882
        %v2884 = vsel %vm2875, %v2878, %v2883
        %v2885 = vrot.slane %v2583, 1
        %v2886 = vrot.slane %v2585, 2
        %v2887 = vor.u32 %v2885, %v2886
        %v2888 = vshrl.u32 %v2554, 16
        %v2890 = vrot.slane %v2888, 1
        %v2891 = vrot.slane %v2590, 2
        %v2892 = vor.u32 %v2890, %v2891
        %v2893 = vsel %vm2875, %v2887, %v2892
        %v2894 = vrot.slane %v2595, 1
        %v2895 = vrot.slane %v2597, 2
        %v2896 = vor.u32 %v2894, %v2895
        %v2897 = vshrl.u32 %v2555, 16
        %v2899 = vrot.slane %v2897, 1
        %v2900 = vrot.slane %v2602, 2
        %v2901 = vor.u32 %v2899, %v2900
        %v2902 = vsel %vm2875, %v2896, %v2901
        %v2903 = vrot.slane %v2607, 1
        %v2904 = vrot.slane %v2609, 2
        %v2905 = vor.u32 %v2903, %v2904
        %v2906 = vshrl.u32 %v2556, 16
        %v2908 = vrot.slane %v2906, 1
        %v2909 = vrot.slane %v2614, 2
        %v2910 = vor.u32 %v2908, %v2909
        %v2911 = vsel %vm2875, %v2905, %v2910
        %v2912 = vrot.slane %v2619, 1
        %v2913 = vrot.slane %v2621, 2
        %v2914 = vor.u32 %v2912, %v2913
        %v2915 = vshrl.u32 %v2557, 16
        %v2917 = vrot.slane %v2915, 1
        %v2918 = vrot.slane %v2626, 2
        %v2919 = vor.u32 %v2917, %v2918
        %v2920 = vsel %vm2875, %v2914, %v2919
        %v2921 = vrot.slane %v2631, 1
        %v2922 = vrot.slane %v2633, 2
        %v2923 = vor.u32 %v2921, %v2922
        %v2924 = vshrl.u32 %v2558, 16
        %v2926 = vrot.slane %v2924, 1
        %v2927 = vrot.slane %v2638, 2
        %v2928 = vor.u32 %v2926, %v2927
        %v2929 = vsel %vm2875, %v2923, %v2928
        %v2930 = vrot.slane %v2643, 1
        %v2931 = vrot.slane %v2645, 2
        %v2932 = vor.u32 %v2930, %v2931
        %v2933 = vshrl.u32 %v2559, 16
        %v2935 = vrot.slane %v2933, 1
        %v2936 = vrot.slane %v2650, 2
        %v2937 = vor.u32 %v2935, %v2936
        %v2938 = vsel %vm2875, %v2932, %v2937
        %v2939 = vrot.slane %v2655, 1
        %v2940 = vrot.slane %v2657, 2
        %v2941 = vor.u32 %v2939, %v2940
        %v2942 = vshrl.u32 %v2560, 16
        %v2944 = vrot.slane %v2942, 1
        %v2945 = vrot.slane %v2662, 2
        %v2946 = vor.u32 %v2944, %v2945
        %v2947 = vsel %vm2875, %v2941, %v2946
        %v2948 = vrot.slane %v2667, 1
        %v2949 = vrot.slane %v2669, 2
        %v2950 = vor.u32 %v2948, %v2949
        %v2951 = vshrl.u32 %v2561, 16
        %v2953 = vrot.slane %v2951, 1
        %v2954 = vrot.slane %v2674, 2
        %v2955 = vor.u32 %v2953, %v2954
        %v2956 = vsel %vm2875, %v2950, %v2955
        %v2957 = vrot.slane %v2679, 1
        %v2958 = vrot.slane %v2681, 2
        %v2959 = vor.u32 %v2957, %v2958
        %v2960 = vshrl.u32 %v2562, 16
        %v2962 = vrot.slane %v2960, 1
        %v2963 = vrot.slane %v2686, 2
        %v2964 = vor.u32 %v2962, %v2963
        %v2965 = vsel %vm2875, %v2959, %v2964
        %v2966 = vrot.slane %v2691, 1
        %v2967 = vrot.slane %v2693, 2
        %v2968 = vor.u32 %v2966, %v2967
        %v2969 = vshrl.u32 %v2563, 16
        %v2971 = vrot.slane %v2969, 1
        %v2972 = vrot.slane %v2698, 2
        %v2973 = vor.u32 %v2971, %v2972
        %v2974 = vsel %vm2875, %v2968, %v2973
        %v2975 = vrot.slane %v2703, 1
        %v2976 = vrot.slane %v2705, 2
        %v2977 = vor.u32 %v2975, %v2976
        %v2978 = vshrl.u32 %v2564, 16
        %v2980 = vrot.slane %v2978, 1
        %v2981 = vrot.slane %v2710, 2
        %v2982 = vor.u32 %v2980, %v2981
        %v2983 = vsel %vm2875, %v2977, %v2982
        %v2984 = vrot.slane %v2715, 1
        %v2985 = vrot.slane %v2717, 2
        %v2986 = vor.u32 %v2984, %v2985
        %v2987 = vshrl.u32 %v2565, 16
        %v2989 = vrot.slane %v2987, 1
        %v2990 = vrot.slane %v2722, 2
        %v2991 = vor.u32 %v2989, %v2990
        %v2992 = vsel %vm2875, %v2986, %v2991
        %v2993 = vrot.slane %v2727, 1
        %v2994 = vrot.slane %v2729, 2
        %v2995 = vor.u32 %v2993, %v2994
        %v2996 = vshrl.u32 %v2566, 16
        %v2998 = vrot.slane %v2996, 1
        %v2999 = vrot.slane %v2734, 2
        %v3000 = vor.u32 %v2998, %v2999
        %v3001 = vsel %vm2875, %v2995, %v3000
        %v3002 = vrot.slane %v2739, 1
        %v3003 = vrot.slane %v2741, 2
        %v3004 = vor.u32 %v3002, %v3003
        %v3005 = vshrl.u32 %v2567, 16
        %v3007 = vrot.slane %v3005, 1
        %v3008 = vrot.slane %v2746, 2
        %v3009 = vor.u32 %v3007, %v3008
        %v3010 = vsel %vm2875, %v3004, %v3009
        %v3011 = vrot.slane %v2751, 1
        %v3012 = vrot.slane %v2753, 2
        %v3013 = vor.u32 %v3011, %v3012
        %v3014 = vshrl.u32 %v2568, 16
        %v3016 = vrot.slane %v3014, 1
        %v3017 = vrot.slane %v2758, 2
        %v3018 = vor.u32 %v3016, %v3017
        %v3019 = vsel %vm2875, %v3013, %v3018
        %vm3036 = vcmask 1045504
        %v3037 = vrot.slane %v2537, 2
        %v3038 = vrot.slane %v2553, 2
        %v3039 = vsel %vm3036, %v3037, %v3038
        %v3040 = vrot.slane %v2538, 2
        %v3041 = vrot.slane %v2554, 2
        %v3042 = vsel %vm3036, %v3040, %v3041
        %v3043 = vrot.slane %v2539, 2
        %v3044 = vrot.slane %v2555, 2
        %v3045 = vsel %vm3036, %v3043, %v3044
        %v3046 = vrot.slane %v2540, 2
        %v3047 = vrot.slane %v2556, 2
        %v3048 = vsel %vm3036, %v3046, %v3047
        %v3049 = vrot.slane %v2541, 2
        %v3050 = vrot.slane %v2557, 2
        %v3051 = vsel %vm3036, %v3049, %v3050
        %v3052 = vrot.slane %v2542, 2
        %v3053 = vrot.slane %v2558, 2
        %v3054 = vsel %vm3036, %v3052, %v3053
        %v3055 = vrot.slane %v2543, 2
        %v3056 = vrot.slane %v2559, 2
        %v3057 = vsel %vm3036, %v3055, %v3056
        %v3058 = vrot.slane %v2544, 2
        %v3059 = vrot.slane %v2560, 2
        %v3060 = vsel %vm3036, %v3058, %v3059
        %v3061 = vrot.slane %v2545, 2
        %v3062 = vrot.slane %v2561, 2
        %v3063 = vsel %vm3036, %v3061, %v3062
        %v3064 = vrot.slane %v2546, 2
        %v3065 = vrot.slane %v2562, 2
        %v3066 = vsel %vm3036, %v3064, %v3065
        %v3067 = vrot.slane %v2547, 2
        %v3068 = vrot.slane %v2563, 2
        %v3069 = vsel %vm3036, %v3067, %v3068
        %v3070 = vrot.slane %v2548, 2
        %v3071 = vrot.slane %v2564, 2
        %v3072 = vsel %vm3036, %v3070, %v3071
        %v3073 = vrot.slane %v2549, 2
        %v3074 = vrot.slane %v2565, 2
        %v3075 = vsel %vm3036, %v3073, %v3074
        %v3076 = vrot.slane %v2550, 2
        %v3077 = vrot.slane %v2566, 2
        %v3078 = vsel %vm3036, %v3076, %v3077
        %v3079 = vrot.slane %v2551, 2
        %v3080 = vrot.slane %v2567, 2
        %v3081 = vsel %vm3036, %v3079, %v3080
        %v3082 = vrot.slane %v2552, 2
        %v3083 = vrot.slane %v2568, 2
        %v3084 = vsel %vm3036, %v3082, %v3083
        %vm3101 = vsmask.f32 5376
        %v3102 = vrot.slane %v2571, 2
        %v3103 = vrot.slane %v2573, 3
        %v3104 = vor.u32 %v3102, %v3103
        %v3105 = vrot.slane %v2879, 2
        %v3106 = vrot.slane %v2578, 3
        %v3107 = vor.u32 %v3105, %v3106
        %v3108 = vsel %vm3101, %v3104, %v3107
        %v3109 = vrot.slane %v2583, 2
        %v3110 = vrot.slane %v2585, 3
        %v3111 = vor.u32 %v3109, %v3110
        %v3112 = vrot.slane %v2888, 2
        %v3113 = vrot.slane %v2590, 3
        %v3114 = vor.u32 %v3112, %v3113
        %v3115 = vsel %vm3101, %v3111, %v3114
        %v3116 = vrot.slane %v2595, 2
        %v3117 = vrot.slane %v2597, 3
        %v3118 = vor.u32 %v3116, %v3117
        %v3119 = vrot.slane %v2897, 2
        %v3120 = vrot.slane %v2602, 3
        %v3121 = vor.u32 %v3119, %v3120
        %v3122 = vsel %vm3101, %v3118, %v3121
        %v3123 = vrot.slane %v2607, 2
        %v3124 = vrot.slane %v2609, 3
        %v3125 = vor.u32 %v3123, %v3124
        %v3126 = vrot.slane %v2906, 2
        %v3127 = vrot.slane %v2614, 3
        %v3128 = vor.u32 %v3126, %v3127
        %v3129 = vsel %vm3101, %v3125, %v3128
        %v3130 = vrot.slane %v2619, 2
        %v3131 = vrot.slane %v2621, 3
        %v3132 = vor.u32 %v3130, %v3131
        %v3133 = vrot.slane %v2915, 2
        %v3134 = vrot.slane %v2626, 3
        %v3135 = vor.u32 %v3133, %v3134
        %v3136 = vsel %vm3101, %v3132, %v3135
        %v3137 = vrot.slane %v2631, 2
        %v3138 = vrot.slane %v2633, 3
        %v3139 = vor.u32 %v3137, %v3138
        %v3140 = vrot.slane %v2924, 2
        %v3141 = vrot.slane %v2638, 3
        %v3142 = vor.u32 %v3140, %v3141
        %v3143 = vsel %vm3101, %v3139, %v3142
        %v3144 = vrot.slane %v2643, 2
        %v3145 = vrot.slane %v2645, 3
        %v3146 = vor.u32 %v3144, %v3145
        %v3147 = vrot.slane %v2933, 2
        %v3148 = vrot.slane %v2650, 3
        %v3149 = vor.u32 %v3147, %v3148
        %v3150 = vsel %vm3101, %v3146, %v3149
        %v3151 = vrot.slane %v2655, 2
        %v3152 = vrot.slane %v2657, 3
        %v3153 = vor.u32 %v3151, %v3152
        %v3154 = vrot.slane %v2942, 2
        %v3155 = vrot.slane %v2662, 3
        %v3156 = vor.u32 %v3154, %v3155
        %v3157 = vsel %vm3101, %v3153, %v3156
        %v3158 = vrot.slane %v2667, 2
        %v3159 = vrot.slane %v2669, 3
        %v3160 = vor.u32 %v3158, %v3159
        %v3161 = vrot.slane %v2951, 2
        %v3162 = vrot.slane %v2674, 3
        %v3163 = vor.u32 %v3161, %v3162
        %v3164 = vsel %vm3101, %v3160, %v3163
        %v3165 = vrot.slane %v2679, 2
        %v3166 = vrot.slane %v2681, 3
        %v3167 = vor.u32 %v3165, %v3166
        %v3168 = vrot.slane %v2960, 2
        %v3169 = vrot.slane %v2686, 3
        %v3170 = vor.u32 %v3168, %v3169
        %v3171 = vsel %vm3101, %v3167, %v3170
        %v3172 = vrot.slane %v2691, 2
        %v3173 = vrot.slane %v2693, 3
        %v3174 = vor.u32 %v3172, %v3173
        %v3175 = vrot.slane %v2969, 2
        %v3176 = vrot.slane %v2698, 3
        %v3177 = vor.u32 %v3175, %v3176
        %v3178 = vsel %vm3101, %v3174, %v3177
        %v3179 = vrot.slane %v2703, 2
        %v3180 = vrot.slane %v2705, 3
        %v3181 = vor.u32 %v3179, %v3180
        %v3182 = vrot.slane %v2978, 2
        %v3183 = vrot.slane %v2710, 3
        %v3184 = vor.u32 %v3182, %v3183
        %v3185 = vsel %vm3101, %v3181, %v3184
        %v3186 = vrot.slane %v2715, 2
        %v3187 = vrot.slane %v2717, 3
        %v3188 = vor.u32 %v3186, %v3187
        %v3189 = vrot.slane %v2987, 2
        %v3190 = vrot.slane %v2722, 3
        %v3191 = vor.u32 %v3189, %v3190
        %v3192 = vsel %vm3101, %v3188, %v3191
        %v3193 = vrot.slane %v2727, 2
        %v3194 = vrot.slane %v2729, 3
        %v3195 = vor.u32 %v3193, %v3194
        %v3196 = vrot.slane %v2996, 2
        %v3197 = vrot.slane %v2734, 3
        %v3198 = vor.u32 %v3196, %v3197
        %v3199 = vsel %vm3101, %v3195, %v3198
        %v3200 = vrot.slane %v2739, 2
        %v3201 = vrot.slane %v2741, 3
        %v3202 = vor.u32 %v3200, %v3201
        %v3203 = vrot.slane %v3005, 2
        %v3204 = vrot.slane %v2746, 3
        %v3205 = vor.u32 %v3203, %v3204
        %v3206 = vsel %vm3101, %v3202, %v3205
        %v3207 = vrot.slane %v2751, 2
        %v3208 = vrot.slane %v2753, 3
        %v3209 = vor.u32 %v3207, %v3208
        %v3210 = vrot.slane %v3014, 2
        %v3211 = vrot.slane %v2758, 3
        %v3212 = vor.u32 %v3210, %v3211
        %v3213 = vsel %vm3101, %v3209, %v3212
        %vm3230 = vcmask 1044480
        %v3231 = vrot.slane %v2537, 3
        %v3232 = vrot.slane %v2553, 3
        %v3233 = vsel %vm3230, %v3231, %v3232
        %v3234 = vrot.slane %v2538, 3
        %v3235 = vrot.slane %v2554, 3
        %v3236 = vsel %vm3230, %v3234, %v3235
        %v3237 = vrot.slane %v2539, 3
        %v3238 = vrot.slane %v2555, 3
        %v3239 = vsel %vm3230, %v3237, %v3238
        %v3240 = vrot.slane %v2540, 3
        %v3241 = vrot.slane %v2556, 3
        %v3242 = vsel %vm3230, %v3240, %v3241
        %v3243 = vrot.slane %v2541, 3
        %v3244 = vrot.slane %v2557, 3
        %v3245 = vsel %vm3230, %v3243, %v3244
        %v3246 = vrot.slane %v2542, 3
        %v3247 = vrot.slane %v2558, 3
        %v3248 = vsel %vm3230, %v3246, %v3247
        %v3249 = vrot.slane %v2543, 3
        %v3250 = vrot.slane %v2559, 3
        %v3251 = vsel %vm3230, %v3249, %v3250
        %v3252 = vrot.slane %v2544, 3
        %v3253 = vrot.slane %v2560, 3
        %v3254 = vsel %vm3230, %v3252, %v3253
        %v3255 = vrot.slane %v2545, 3
        %v3256 = vrot.slane %v2561, 3
        %v3257 = vsel %vm3230, %v3255, %v3256
        %v3258 = vrot.slane %v2546, 3
        %v3259 = vrot.slane %v2562, 3
        %v3260 = vsel %vm3230, %v3258, %v3259
        %v3261 = vrot.slane %v2547, 3
        %v3262 = vrot.slane %v2563, 3
        %v3263 = vsel %vm3230, %v3261, %v3262
        %v3264 = vrot.slane %v2548, 3
        %v3265 = vrot.slane %v2564, 3
        %v3266 = vsel %vm3230, %v3264, %v3265
        %v3267 = vrot.slane %v2549, 3
        %v3268 = vrot.slane %v2565, 3
        %v3269 = vsel %vm3230, %v3267, %v3268
        %v3270 = vrot.slane %v2550, 3
        %v3271 = vrot.slane %v2566, 3
        %v3272 = vsel %vm3230, %v3270, %v3271
        %v3273 = vrot.slane %v2551, 3
        %v3274 = vrot.slane %v2567, 3
        %v3275 = vsel %vm3230, %v3273, %v3274
        %v3276 = vrot.slane %v2552, 3
        %v3277 = vrot.slane %v2568, 3
        %v3278 = vsel %vm3230, %v3276, %v3277
        %v3295 = vld [vmem:[#allocation8] sm:$0xf]
        %v3296 = vld [vmem:[#allocation8 + $0x4] sm:$0xf]
        %v3297 = vld [vmem:[#allocation8 + $0x8] sm:$0xf]
        %v3298 = vld [vmem:[#allocation8 + $0xc] sm:$0xf]
        %v3299 = vld [vmem:[#allocation8 + $0x10] sm:$0xf]
        %v3300 = vld [vmem:[#allocation8 + $0x14] sm:$0xf]
        %v3301 = vld [vmem:[#allocation8 + $0x18] sm:$0xf]
        %v3302 = vld [vmem:[#allocation8 + $0x1c] sm:$0xf]
        %v3303 = vld [vmem:[#allocation8 + $0x20] sm:$0xf]
        %v3304 = vld [vmem:[#allocation8 + $0x24] sm:$0xf]
        %v3305 = vld [vmem:[#allocation8 + $0x28] sm:$0xf]
        %v3306 = vld [vmem:[#allocation8 + $0x2c] sm:$0xf]
        %v3307 = vld [vmem:[#allocation8 + $0x30] sm:$0xf]
        %v3308 = vld [vmem:[#allocation8 + $0x34] sm:$0xf]
        %v3309 = vld [vmem:[#allocation8 + $0x38] sm:$0xf]
        %v3310 = vld [vmem:[#allocation8 + $0x3c] sm:$0xf]
        %v3311 = vld [vmem:[#allocation8 + $0x40] sm:$0xf]
        %v3312 = vld [vmem:[#allocation8 + $0x44] sm:$0xf]
        %v3313 = vld [vmem:[#allocation8 + $0x48] sm:$0xf]
        %v3314 = vld [vmem:[#allocation8 + $0x4c] sm:$0xf]
        %v3315 = vld [vmem:[#allocation8 + $0x50] sm:$0xf]
        %v3316 = vld [vmem:[#allocation8 + $0x54] sm:$0xf]
        %v3317 = vld [vmem:[#allocation8 + $0x58] sm:$0xf]
        %v3318 = vld [vmem:[#allocation8 + $0x5c] sm:$0xf]
        %v3319 = vld [vmem:[#allocation8 + $0x60] sm:$0xf]
        %v3320 = vld [vmem:[#allocation8 + $0x64] sm:$0xf]
        %v3321 = vld [vmem:[#allocation8 + $0x68] sm:$0xf]
        %v3322 = vld [vmem:[#allocation8 + $0x6c] sm:$0xf]
        %v3323 = vld [vmem:[#allocation8 + $0x70] sm:$0xf]
        %v3324 = vld [vmem:[#allocation8 + $0x74] sm:$0xf]
        %v3325 = vld [vmem:[#allocation8 + $0x78] sm:$0xf]
        %v3326 = vld [vmem:[#allocation8 + $0x7c] sm:$0xf]
        %v3327 = vld [vmem:[#allocation8 + $0x80] sm:$0xf]
        %v3328 = vld [vmem:[#allocation8 + $0x84] sm:$0xf]
        %v3329 = vld [vmem:[#allocation8 + $0x88] sm:$0xf]
        %v3330 = vld [vmem:[#allocation8 + $0x8c] sm:$0xf]
        %v3331 = vld [vmem:[#allocation8 + $0x90] sm:$0xf]
        %v3332 = vld [vmem:[#allocation8 + $0x94] sm:$0xf]
        %v3333 = vld [vmem:[#allocation8 + $0x98] sm:$0xf]
        %v3334 = vld [vmem:[#allocation8 + $0x9c] sm:$0xf]
        %v3335 = vld [vmem:[#allocation8 + $0xa0] sm:$0xf]
        %v3336 = vld [vmem:[#allocation8 + $0xa4] sm:$0xf]
        %v3337 = vld [vmem:[#allocation8 + $0xa8] sm:$0xf]
        %v3338 = vld [vmem:[#allocation8 + $0xac] sm:$0xf]
        %v3339 = vld [vmem:[#allocation8 + $0xb0] sm:$0xf]
        %v3340 = vld [vmem:[#allocation8 + $0xb4] sm:$0xf]
        %v3341 = vld [vmem:[#allocation8 + $0xb8] sm:$0xf]
        %v3342 = vld [vmem:[#allocation8 + $0xbc] sm:$0xf]
        %v3343 = vld [vmem:[#allocation8 + $0xc0] sm:$0xf]
        %v3344 = vld [vmem:[#allocation8 + $0xc4] sm:$0xf]
        %v3345 = vld [vmem:[#allocation8 + $0xc8] sm:$0xf]
        %v3346 = vld [vmem:[#allocation8 + $0xcc] sm:$0xf]
        %v3347 = vld [vmem:[#allocation8 + $0xd0] sm:$0xf]
        %v3348 = vld [vmem:[#allocation8 + $0xd4] sm:$0xf]
        %v3349 = vld [vmem:[#allocation8 + $0xd8] sm:$0xf]
        %v3350 = vld [vmem:[#allocation8 + $0xdc] sm:$0xf]
        %v3351 = vld [vmem:[#allocation8 + $0xe0] sm:$0xf]
        %v3352 = vld [vmem:[#allocation8 + $0xe4] sm:$0xf]
        %v3353 = vld [vmem:[#allocation8 + $0xe8] sm:$0xf]
        %v3354 = vld [vmem:[#allocation8 + $0xec] sm:$0xf]
        %v3355 = vld [vmem:[#allocation8 + $0xf0] sm:$0xf]
        %v3356 = vld [vmem:[#allocation8 + $0xf4] sm:$0xf]
        %v3357 = vld [vmem:[#allocation8 + $0xf8] sm:$0xf]
        %v3358 = vld [vmem:[#allocation8 + $0xfc] sm:$0xf]
        %v3359 = vld [vmem:[#allocation8 + $0x100] sm:$0xf]
        %v3360 = vld [vmem:[#allocation8 + $0x104] sm:$0xf]
        %v3361 = vld [vmem:[#allocation8 + $0x108] sm:$0xf]
        %v3362 = vld [vmem:[#allocation8 + $0x10c] sm:$0xf]
        %v3363 = vld [vmem:[#allocation8 + $0x110] sm:$0xf]
        %v3364 = vld [vmem:[#allocation8 + $0x114] sm:$0xf]
        %v3365 = vld [vmem:[#allocation8 + $0x118] sm:$0xf]
        %v3366 = vld [vmem:[#allocation8 + $0x11c] sm:$0xf]
        %v3367 = vld [vmem:[#allocation8 + $0x120] sm:$0xf]
        %v3368 = vld [vmem:[#allocation8 + $0x124] sm:$0xf]
        %v3369 = vld [vmem:[#allocation8 + $0x128] sm:$0xf]
        %v3370 = vld [vmem:[#allocation8 + $0x12c] sm:$0xf]
        %v3371 = vld [vmem:[#allocation8 + $0x130] sm:$0xf]
        %v3372 = vld [vmem:[#allocation8 + $0x134] sm:$0xf]
        %v3373 = vld [vmem:[#allocation8 + $0x138] sm:$0xf]
        %v3374 = vld [vmem:[#allocation8 + $0x13c] sm:$0xf]
        %v3375 = vld [vmem:[#allocation8 + $0x140] sm:$0xf]
        %v3376 = vld [vmem:[#allocation8 + $0x144] sm:$0xf]
        %v3377 = vld [vmem:[#allocation8 + $0x148] sm:$0xf]
        %v3378 = vld [vmem:[#allocation8 + $0x14c] sm:$0xf]
        %v3379 = vld [vmem:[#allocation8 + $0x150] sm:$0xf]
        %v3380 = vld [vmem:[#allocation8 + $0x154] sm:$0xf]
        %v3381 = vld [vmem:[#allocation8 + $0x158] sm:$0xf]
        %v3382 = vld [vmem:[#allocation8 + $0x15c] sm:$0xf]
        %v3383 = vld [vmem:[#allocation8 + $0x160] sm:$0xf]
        %v3384 = vld [vmem:[#allocation8 + $0x164] sm:$0xf]
        %v3385 = vld [vmem:[#allocation8 + $0x168] sm:$0xf]
        %v3386 = vld [vmem:[#allocation8 + $0x16c] sm:$0xf]
        %v3387 = vld [vmem:[#allocation8 + $0x170] sm:$0xf]
        %v3388 = vld [vmem:[#allocation8 + $0x174] sm:$0xf]
        %v3389 = vld [vmem:[#allocation8 + $0x178] sm:$0xf]
        %v3390 = vld [vmem:[#allocation8 + $0x17c] sm:$0xf]
        %v3391 = vld [vmem:[#allocation8 + $0x180] sm:$0xf]
        %v3392 = vld [vmem:[#allocation8 + $0x184] sm:$0xf]
        %v3393 = vld [vmem:[#allocation8 + $0x188] sm:$0xf]
        %v3394 = vld [vmem:[#allocation8 + $0x18c] sm:$0xf]
        %v3395 = vld [vmem:[#allocation8 + $0x190] sm:$0xf]
        %v3396 = vld [vmem:[#allocation8 + $0x194] sm:$0xf]
        %v3397 = vld [vmem:[#allocation8 + $0x198] sm:$0xf]
        %v3398 = vld [vmem:[#allocation8 + $0x19c] sm:$0xf]
        %v3399 = vld [vmem:[#allocation8 + $0x1a0] sm:$0xf]
        %v3400 = vld [vmem:[#allocation8 + $0x1a4] sm:$0xf]
        %v3401 = vld [vmem:[#allocation8 + $0x1a8] sm:$0xf]
        %v3402 = vld [vmem:[#allocation8 + $0x1ac] sm:$0xf]
        %v3403 = vld [vmem:[#allocation8 + $0x1b0] sm:$0xf]
        %v3404 = vld [vmem:[#allocation8 + $0x1b4] sm:$0xf]
        %v3405 = vld [vmem:[#allocation8 + $0x1b8] sm:$0xf]
        %v3406 = vld [vmem:[#allocation8 + $0x1bc] sm:$0xf]
        %v3407 = vld [vmem:[#allocation10] sm:$0x1]
        %v3409 = vlaneseq
        %v3410 = vshrl.u32 %v3409, 7
        %v3411 = vsub.s32 0, %v3410
        %v3412 = vrot.slane %v3407, %v3411
        %v3526 = vunpack.c.l.b16 %v3295
        %v3527 = vunpack.c.l.b16 %v3296
        %v3528 = vunpack.c.l.b16 %v3297
        %v3529 = vunpack.c.l.b16 %v3298
        %v3530 = vunpack.c.l.b16 %v3299
        %v3531 = vunpack.c.l.b16 %v3300
        %v3532 = vunpack.c.l.b16 %v3301
        %v3533 = vunpack.c.l.b16 %v3302
        %v3534 = vunpack.c.l.b16 %v3303
        %v3535 = vunpack.c.l.b16 %v3304
        %v3536 = vunpack.c.l.b16 %v3305
        %v3537 = vunpack.c.l.b16 %v3306
        %v3538 = vunpack.c.l.b16 %v3307
        %v3539 = vunpack.c.l.b16 %v3308
        %v3540 = vunpack.c.l.b16 %v3309
        %v3541 = vunpack.c.l.b16 %v3310
        %v3542 = vunpack.c.l.b16 %v3311
        %v3543 = vunpack.c.l.b16 %v3312
        %v3544 = vunpack.c.l.b16 %v3313
        %v3545 = vunpack.c.l.b16 %v3314
        %v3546 = vunpack.c.l.b16 %v3315
        %v3547 = vunpack.c.l.b16 %v3316
        %v3548 = vunpack.c.l.b16 %v3317
        %v3549 = vunpack.c.l.b16 %v3318
        %v3550 = vunpack.c.l.b16 %v3319
        %v3551 = vunpack.c.l.b16 %v3320
        %v3552 = vunpack.c.l.b16 %v3321
        %v3553 = vunpack.c.l.b16 %v3322
        %v3554 = vunpack.c.l.b16 %v3323
        %v3555 = vunpack.c.l.b16 %v3324
        %v3556 = vunpack.c.l.b16 %v3325
        %v3557 = vunpack.c.l.b16 %v3326
        %v3558 = vunpack.c.l.b16 %v3327
        %v3559 = vunpack.c.l.b16 %v3328
        %v3560 = vunpack.c.l.b16 %v3329
        %v3561 = vunpack.c.l.b16 %v3330
        %v3562 = vunpack.c.l.b16 %v3331
        %v3563 = vunpack.c.l.b16 %v3332
        %v3564 = vunpack.c.l.b16 %v3333
        %v3565 = vunpack.c.l.b16 %v3334
        %v3566 = vunpack.c.l.b16 %v3335
        %v3567 = vunpack.c.l.b16 %v3336
        %v3568 = vunpack.c.l.b16 %v3337
        %v3569 = vunpack.c.l.b16 %v3338
        %v3570 = vunpack.c.l.b16 %v3339
        %v3571 = vunpack.c.l.b16 %v3340
        %v3572 = vunpack.c.l.b16 %v3341
        %v3573 = vunpack.c.l.b16 %v3342
        %v3574 = vunpack.c.l.b16 %v3343
        %v3575 = vunpack.c.l.b16 %v3344
        %v3576 = vunpack.c.l.b16 %v3345
        %v3577 = vunpack.c.l.b16 %v3346
        %v3578 = vunpack.c.l.b16 %v3347
        %v3579 = vunpack.c.l.b16 %v3348
        %v3580 = vunpack.c.l.b16 %v3349
        %v3581 = vunpack.c.l.b16 %v3350
        %v3582 = vunpack.c.l.b16 %v3351
        %v3583 = vunpack.c.l.b16 %v3352
        %v3584 = vunpack.c.l.b16 %v3353
        %v3585 = vunpack.c.l.b16 %v3354
        %v3586 = vunpack.c.l.b16 %v3355
        %v3587 = vunpack.c.l.b16 %v3356
        %v3588 = vunpack.c.l.b16 %v3357
        %v3589 = vunpack.c.l.b16 %v3358
        %v3590 = vunpack.c.l.b16 %v3359
        %v3591 = vunpack.c.l.b16 %v3360
        %v3592 = vunpack.c.l.b16 %v3361
        %v3593 = vunpack.c.l.b16 %v3362
        %v3594 = vunpack.c.l.b16 %v3363
        %v3595 = vunpack.c.l.b16 %v3364
        %v3596 = vunpack.c.l.b16 %v3365
        %v3597 = vunpack.c.l.b16 %v3366
        %v3598 = vunpack.c.l.b16 %v3367
        %v3599 = vunpack.c.l.b16 %v3368
        %v3600 = vunpack.c.l.b16 %v3369
        %v3601 = vunpack.c.l.b16 %v3370
        %v3602 = vunpack.c.l.b16 %v3371
        %v3603 = vunpack.c.l.b16 %v3372
        %v3604 = vunpack.c.l.b16 %v3373
        %v3605 = vunpack.c.l.b16 %v3374
        %v3606 = vunpack.c.l.b16 %v3375
        %v3607 = vunpack.c.l.b16 %v3376
        %v3608 = vunpack.c.l.b16 %v3377
        %v3609 = vunpack.c.l.b16 %v3378
        %v3610 = vunpack.c.l.b16 %v3379
        %v3611 = vunpack.c.l.b16 %v3380
        %v3612 = vunpack.c.l.b16 %v3381
        %v3613 = vunpack.c.l.b16 %v3382
        %v3614 = vunpack.c.l.b16 %v3383
        %v3615 = vunpack.c.l.b16 %v3384
        %v3616 = vunpack.c.l.b16 %v3385
        %v3617 = vunpack.c.l.b16 %v3386
        %v3618 = vunpack.c.l.b16 %v3387
        %v3619 = vunpack.c.l.b16 %v3388
        %v3620 = vunpack.c.l.b16 %v3389
        %v3621 = vunpack.c.l.b16 %v3390
        %v3622 = vunpack.c.l.b16 %v3391
        %v3623 = vunpack.c.l.b16 %v3392
        %v3624 = vunpack.c.l.b16 %v3393
        %v3625 = vunpack.c.l.b16 %v3394
        %v3626 = vunpack.c.l.b16 %v3395
        %v3627 = vunpack.c.l.b16 %v3396
        %v3628 = vunpack.c.l.b16 %v3397
        %v3629 = vunpack.c.l.b16 %v3398
        %v3630 = vunpack.c.l.b16 %v3399
        %v3631 = vunpack.c.l.b16 %v3400
        %v3632 = vunpack.c.l.b16 %v3401
        %v3633 = vunpack.c.l.b16 %v3402
        %v3634 = vunpack.c.l.b16 %v3403
        %v3635 = vunpack.c.l.b16 %v3404
        %v3636 = vunpack.c.l.b16 %v3405
        %v3637 = vunpack.c.l.b16 %v3406
        %v3638 = vpack.c.b16 %v3527, %v3526
        %v3639 = vpack.c.b16 %v3529, %v3528
        %v3640 = vpack.c.b16 %v3531, %v3530
        %v3641 = vpack.c.b16 %v3533, %v3532
        %v3642 = vpack.c.b16 %v3535, %v3534
        %v3643 = vpack.c.b16 %v3537, %v3536
        %v3644 = vpack.c.b16 %v3539, %v3538
        %v3645 = vpack.c.b16 %v3541, %v3540
        %v3646 = vpack.c.b16 %v3543, %v3542
        %v3647 = vpack.c.b16 %v3545, %v3544
        %v3648 = vpack.c.b16 %v3547, %v3546
        %v3649 = vpack.c.b16 %v3549, %v3548
        %v3650 = vpack.c.b16 %v3551, %v3550
        %v3651 = vpack.c.b16 %v3553, %v3552
        %v3652 = vpack.c.b16 %v3555, %v3554
        %v3653 = vpack.c.b16 %v3557, %v3556
        %v3654 = vpack.c.b16 %v3559, %v3558
        %v3655 = vpack.c.b16 %v3561, %v3560
        %v3656 = vpack.c.b16 %v3563, %v3562
        %v3657 = vpack.c.b16 %v3565, %v3564
        %v3658 = vpack.c.b16 %v3567, %v3566
        %v3659 = vpack.c.b16 %v3569, %v3568
        %v3660 = vpack.c.b16 %v3571, %v3570
        %v3661 = vpack.c.b16 %v3573, %v3572
        %v3662 = vpack.c.b16 %v3575, %v3574
        %v3663 = vpack.c.b16 %v3577, %v3576
        %v3664 = vpack.c.b16 %v3579, %v3578
        %v3665 = vpack.c.b16 %v3581, %v3580
        %v3666 = vpack.c.b16 %v3583, %v3582
        %v3667 = vpack.c.b16 %v3585, %v3584
        %v3668 = vpack.c.b16 %v3587, %v3586
        %v3669 = vpack.c.b16 %v3589, %v3588
        %v3670 = vpack.c.b16 %v3591, %v3590
        %v3671 = vpack.c.b16 %v3593, %v3592
        %v3672 = vpack.c.b16 %v3595, %v3594
        %v3673 = vpack.c.b16 %v3597, %v3596
        %v3674 = vpack.c.b16 %v3599, %v3598
        %v3675 = vpack.c.b16 %v3601, %v3600
        %v3676 = vpack.c.b16 %v3603, %v3602
        %v3677 = vpack.c.b16 %v3605, %v3604
        %v3678 = vpack.c.b16 %v3607, %v3606
        %v3679 = vpack.c.b16 %v3609, %v3608
        %v3680 = vpack.c.b16 %v3611, %v3610
        %v3681 = vpack.c.b16 %v3613, %v3612
        %v3682 = vpack.c.b16 %v3615, %v3614
        %v3683 = vpack.c.b16 %v3617, %v3616
        %v3684 = vpack.c.b16 %v3619, %v3618
        %v3685 = vpack.c.b16 %v3621, %v3620
        %v3686 = vpack.c.b16 %v3623, %v3622
        %v3687 = vpack.c.b16 %v3625, %v3624
        %v3688 = vpack.c.b16 %v3627, %v3626
        %v3689 = vpack.c.b16 %v3629, %v3628
        %v3690 = vpack.c.b16 %v3631, %v3630
        %v3691 = vpack.c.b16 %v3633, %v3632
        %v3692 = vpack.c.b16 %v3635, %v3634
        %v3693 = vpack.c.b16 %v3637, %v3636
        %3750 = vmatprep.subr.bf16.mxu0 0
        %3751 = vmatpush1.bf16.msra.mxu0 %v3638
        %3752 = vmatprep.subr.bf16.mxu0 0
        %3753 = vmatpush1.bf16.msra.mxu0 %v3639
        %3754 = vmatprep.subr.bf16.mxu0 0
        %3755 = vmatpush1.bf16.msra.mxu0 %v3640
        %3756 = vmatprep.subr.bf16.mxu0 0
        %3757 = vmatpush1.bf16.msra.mxu0 %v3641
        %3758 = vmatprep.subr.bf16.mxu0 0
        %3759 = vmatpush1.bf16.msra.mxu0 %v3642
        %3760 = vmatprep.subr.bf16.mxu0 0
        %3761 = vmatpush1.bf16.msra.mxu0 %v3643
        %3762 = vmatprep.subr.bf16.mxu0 0
        %3763 = vmatpush1.bf16.msra.mxu0 %v3644
        %3764 = vmatprep.subr.bf16.mxu0 0
        %3765 = vmatpush1.bf16.msra.mxu0 %v3645
        %3766 = vmatprep.subr.bf16.mxu0 0
        %3767 = vmatpush1.bf16.msra.mxu0 %v3646
        %3768 = vmatprep.subr.bf16.mxu0 0
        %3769 = vmatpush1.bf16.msra.mxu0 %v3647
        %3770 = vmatprep.subr.bf16.mxu0 0
        %3771 = vmatpush1.bf16.msra.mxu0 %v3648
        %3772 = vmatprep.subr.bf16.mxu0 0
        %3773 = vmatpush1.bf16.msra.mxu0 %v3649
        %3774 = vmatprep.subr.bf16.mxu0 0
        %3775 = vmatpush1.bf16.msra.mxu0 %v3650
        %3776 = vmatprep.subr.bf16.mxu0 0
        %3777 = vmatpush1.bf16.msra.mxu0 %v3651
        %3778 = vmatprep.subr.bf16.mxu0 0
        %3779 = vmatpush1.bf16.msra.mxu0 %v3652
        %3780 = vmatprep.subr.bf16.mxu0 0
        %3781 = vmatpush1.bf16.msra.mxu0 %v3653
        %3782 = vmatprep.mubr.bf16.mxu0 %v2581
        %3783 = vmatmul.mubr.bf16.gmra.mrb[0].mxu0 %v2537
        %v3784 = vpop.f32.mrb[0].mxu0
        %v3785 = vadd.f32 %v3412, %v3784
        %v3786 = vpop.f32.mrb[0].mxu0
        %v3787 = vpop.f32.mrb[0].mxu0
        %v3788 = vadd.f32 %v3412, %v3787
        %v3789 = vpop.f32.mrb[0].mxu0
        %3790 = vmatprep.mubr.bf16.mxu0 %v2593
        %3791 = vmatmul.mubr.bf16.gmra.mrb[0].mxu0 %v2538
        %v3792 = vpop.f32.mrb[0].mxu0
        %v3793 = vadd.f32 %v3412, %v3792
        %v3794 = vpop.f32.mrb[0].mxu0
        %v3795 = vpop.f32.mrb[0].mxu0
        %v3796 = vadd.f32 %v3412, %v3795
        %v3797 = vpop.f32.mrb[0].mxu0
        %3798 = vmatprep.mubr.bf16.mxu0 %v2605
        %3799 = vmatmul.mubr.bf16.gmra.mrb[0].mxu0 %v2539
        %v3800 = vpop.f32.mrb[0].mxu0
        %v3801 = vadd.f32 %v3412, %v3800
        %v3802 = vpop.f32.mrb[0].mxu0
        %v3803 = vpop.f32.mrb[0].mxu0
        %v3804 = vadd.f32 %v3412, %v3803
        %v3805 = vpop.f32.mrb[0].mxu0
        %3806 = vmatprep.mubr.bf16.mxu0 %v2617
        %3807 = vmatmul.mubr.bf16.gmra.mrb[0].mxu0 %v2540
        %v3808 = vpop.f32.mrb[0].mxu0
        %v3809 = vadd.f32 %v3412, %v3808
        %v3810 = vpop.f32.mrb[0].mxu0
        %v3811 = vpop.f32.mrb[0].mxu0
        %v3812 = vadd.f32 %v3412, %v3811
        %v3813 = vpop.f32.mrb[0].mxu0
        %3814 = vmatprep.mubr.bf16.mxu0 %v2629
        %3815 = vmatmul.mubr.bf16.gmra.mrb[0].mxu0 %v2541
        %v3816 = vpop.f32.mrb[0].mxu0
        %v3817 = vadd.f32 %v3412, %v3816
        %v3818 = vpop.f32.mrb[0].mxu0
        %v3819 = vpop.f32.mrb[0].mxu0
        %v3820 = vadd.f32 %v3412, %v3819
        %v3821 = vpop.f32.mrb[0].mxu0
        %3822 = vmatprep.mubr.bf16.mxu0 %v2641
        %3823 = vmatmul.mubr.bf16.gmra.mrb[0].mxu0 %v2542
        %v3824 = vpop.f32.mrb[0].mxu0
        %v3825 = vadd.f32 %v3412, %v3824
        %v3826 = vpop.f32.mrb[0].mxu0
        %v3827 = vpop.f32.mrb[0].mxu0
        %v3828 = vadd.f32 %v3412, %v3827
        %v3829 = vpop.f32.mrb[0].mxu0
        %3830 = vmatprep.mubr.bf16.mxu0 %v2653
        %3831 = vmatmul.mubr.bf16.gmra.mrb[0].mxu0 %v2543
        %v3832 = vpop.f32.mrb[0].mxu0
        %v3833 = vadd.f32 %v3412, %v3832
        %v3834 = vpop.f32.mrb[0].mxu0
        %v3835 = vpop.f32.mrb[0].mxu0
        %v3836 = vadd.f32 %v3412, %v3835
        %v3837 = vpop.f32.mrb[0].mxu0
        %3838 = vmatprep.mubr.bf16.mxu0 %v2665
        %3839 = vmatmul.mubr.bf16.gmra.mrb[0].mxu0 %v2544
        %v3840 = vpop.f32.mrb[0].mxu0
        %v3841 = vadd.f32 %v3412, %v3840
        %v3842 = vpop.f32.mrb[0].mxu0
        %v3843 = vpop.f32.mrb[0].mxu0
        %v3844 = vadd.f32 %v3412, %v3843
        %v3845 = vpop.f32.mrb[0].mxu0
        %3846 = vmatprep.mubr.bf16.mxu0 %v2677
        %3847 = vmatmul.mubr.bf16.gmra.mrb[0].mxu0 %v2545
        %v3848 = vpop.f32.mrb[0].mxu0
        %v3849 = vadd.f32 %v3412, %v3848
        %v3850 = vpop.f32.mrb[0].mxu0
        %v3851 = vpop.f32.mrb[0].mxu0
        %v3852 = vadd.f32 %v3412, %v3851
        %v3853 = vpop.f32.mrb[0].mxu0
        %3854 = vmatprep.mubr.bf16.mxu0 %v2689
        %3855 = vmatmul.mubr.bf16.gmra.mrb[0].mxu0 %v2546
        %v3856 = vpop.f32.mrb[0].mxu0
        %v3857 = vadd.f32 %v3412, %v3856
        %v3858 = vpop.f32.mrb[0].mxu0
        %v3859 = vpop.f32.mrb[0].mxu0
        %v3860 = vadd.f32 %v3412, %v3859
        %v3861 = vpop.f32.mrb[0].mxu0
        %3862 = vmatprep.mubr.bf16.mxu0 %v2701
        %3863 = vmatmul.mubr.bf16.gmra.mrb[0].mxu0 %v2547
        %v3864 = vpop.f32.mrb[0].mxu0
        %v3865 = vadd.f32 %v3412, %v3864
        %v3866 = vpop.f32.mrb[0].mxu0
        %v3867 = vpop.f32.mrb[0].mxu0
        %v3868 = vadd.f32 %v3412, %v3867
        %v3869 = vpop.f32.mrb[0].mxu0
        %3870 = vmatprep.mubr.bf16.mxu0 %v2713
        %3871 = vmatmul.mubr.bf16.gmra.mrb[0].mxu0 %v2548
        %v3872 = vpop.f32.mrb[0].mxu0
        %v3873 = vadd.f32 %v3412, %v3872
        %v3874 = vpop.f32.mrb[0].mxu0
        %v3875 = vpop.f32.mrb[0].mxu0
        %v3876 = vadd.f32 %v3412, %v3875
        %v3877 = vpop.f32.mrb[0].mxu0
        %3878 = vmatprep.mubr.bf16.mxu0 %v2725
        %3879 = vmatmul.mubr.bf16.gmra.mrb[0].mxu0 %v2549
        %v3880 = vpop.f32.mrb[0].mxu0
        %v3881 = vadd.f32 %v3412, %v3880
        %v3882 = vpop.f32.mrb[0].mxu0
        %v3883 = vpop.f32.mrb[0].mxu0
        %v3884 = vadd.f32 %v3412, %v3883
        %v3885 = vpop.f32.mrb[0].mxu0
        %3886 = vmatprep.mubr.bf16.mxu0 %v2737
        %3887 = vmatmul.mubr.bf16.gmra.mrb[0].mxu0 %v2550
        %v3888 = vpop.f32.mrb[0].mxu0
        %v3889 = vadd.f32 %v3412, %v3888
        %v3890 = vpop.f32.mrb[0].mxu0
        %v3891 = vpop.f32.mrb[0].mxu0
        %v3892 = vadd.f32 %v3412, %v3891
        %v3893 = vpop.f32.mrb[0].mxu0
        %3894 = vmatprep.mubr.bf16.mxu0 %v2749
        %3895 = vmatmul.mubr.bf16.gmra.mrb[0].mxu0 %v2551
        %v3896 = vpop.f32.mrb[0].mxu0
        %v3897 = vadd.f32 %v3412, %v3896
        %v3898 = vpop.f32.mrb[0].mxu0
        %v3899 = vpop.f32.mrb[0].mxu0
        %v3900 = vadd.f32 %v3412, %v3899
        %v3901 = vpop.f32.mrb[0].mxu0
        %3902 = vmatprep.mubr.bf16.mxu0 %v2761
        %3903 = vmatmul.mubr.bf16.gmra.mrb[0].mxu0 %v2552
        %v3904 = vpop.f32.mrb[0].mxu0
        %v3905 = vadd.f32 %v3412, %v3904
        %v3906 = vpop.f32.mrb[0].mxu0
        %v3907 = vpop.f32.mrb[0].mxu0
        %v3908 = vadd.f32 %v3412, %v3907
        %v3909 = vpop.f32.mrb[0].mxu0
        %3910 = vdwg.mxu0
        %3911 = vmatprep.subr.bf16.mxu0 0
        %3912 = vmatpush1.bf16.msra.mxu0 %v3654
        %3913 = vmatprep.subr.bf16.mxu0 0
        %3914 = vmatpush1.bf16.msra.mxu0 %v3655
        %3915 = vmatprep.subr.bf16.mxu0 0
        %3916 = vmatpush1.bf16.msra.mxu0 %v3656
        %3917 = vmatprep.subr.bf16.mxu0 0
        %3918 = vmatpush1.bf16.msra.mxu0 %v3657
        %3919 = vmatprep.subr.bf16.mxu0 0
        %3920 = vmatpush1.bf16.msra.mxu0 %v3658
        %3921 = vmatprep.subr.bf16.mxu0 0
        %3922 = vmatpush1.bf16.msra.mxu0 %v3659
        %3923 = vmatprep.subr.bf16.mxu0 0
        %3924 = vmatpush1.bf16.msra.mxu0 %v3660
        %3925 = vmatprep.subr.bf16.mxu0 0
        %3926 = vmatpush1.bf16.msra.mxu0 %v3661
        %3927 = vmatprep.subr.bf16.mxu0 0
        %3928 = vmatpush1.bf16.msra.mxu0 %v3662
        %3929 = vmatprep.subr.bf16.mxu0 0
        %3930 = vmatpush1.bf16.msra.mxu0 %v3663
        %3931 = vmatprep.subr.bf16.mxu0 0
        %3932 = vmatpush1.bf16.msra.mxu0 %v3664
        %3933 = vmatprep.subr.bf16.mxu0 0
        %3934 = vmatpush1.bf16.msra.mxu0 %v3665
        %3935 = vmatprep.subr.bf16.mxu0 0
        %3936 = vmatpush1.bf16.msra.mxu0 %v3666
        %3937 = vmatprep.subr.bf16.mxu0 0
        %3938 = vmatpush1.bf16.msra.mxu0 %v3667
        %3939 = vmatprep.subr.bf16.mxu0 0
        %3940 = vmatpush1.bf16.msra.mxu0 %v3668
        %3941 = vmatprep.subr.bf16.mxu0 0
        %3942 = vmatpush1.bf16.msra.mxu0 %v3669
        %3943 = vmatprep.mubr.bf16.mxu0 %v2884
        %3944 = vmatmul.mubr.bf16.gmra.mrb[0].mxu0 %v2813
        %v3945 = vpop.f32.mrb[0].mxu0
        %v3946 = vadd.f32 %v3785, %v3945
        %v3947 = vpop.f32.mrb[0].mxu0
        %v3948 = vpop.f32.mrb[0].mxu0
        %v3949 = vadd.f32 %v3788, %v3948
        %v3950 = vpop.f32.mrb[0].mxu0
        %3951 = vmatprep.mubr.bf16.mxu0 %v2893
        %3952 = vmatmul.mubr.bf16.gmra.mrb[0].mxu0 %v2816
        %v3953 = vpop.f32.mrb[0].mxu0
        %v3954 = vadd.f32 %v3793, %v3953
        %v3955 = vpop.f32.mrb[0].mxu0
        %v3956 = vpop.f32.mrb[0].mxu0
        %v3957 = vadd.f32 %v3796, %v3956
        %v3958 = vpop.f32.mrb[0].mxu0
        %3959 = vmatprep.mubr.bf16.mxu0 %v2902
        %3960 = vmatmul.mubr.bf16.gmra.mrb[0].mxu0 %v2819
        %v3961 = vpop.f32.mrb[0].mxu0
        %v3962 = vadd.f32 %v3801, %v3961
        %v3963 = vpop.f32.mrb[0].mxu0
        %v3964 = vpop.f32.mrb[0].mxu0
        %v3965 = vadd.f32 %v3804, %v3964
        %v3966 = vpop.f32.mrb[0].mxu0
        %3967 = vmatprep.mubr.bf16.mxu0 %v2911
        %3968 = vmatmul.mubr.bf16.gmra.mrb[0].mxu0 %v2822
        %v3969 = vpop.f32.mrb[0].mxu0
        %v3970 = vadd.f32 %v3809, %v3969
        %v3971 = vpop.f32.mrb[0].mxu0
        %v3972 = vpop.f32.mrb[0].mxu0
        %v3973 = vadd.f32 %v3812, %v3972
        %v3974 = vpop.f32.mrb[0].mxu0
        %3975 = vmatprep.mubr.bf16.mxu0 %v2920
        %3976 = vmatmul.mubr.bf16.gmra.mrb[0].mxu0 %v2825
        %v3977 = vpop.f32.mrb[0].mxu0
        %v3978 = vadd.f32 %v3817, %v3977
        %v3979 = vpop.f32.mrb[0].mxu0
        %v3980 = vpop.f32.mrb[0].mxu0
        %v3981 = vadd.f32 %v3820, %v3980
        %v3982 = vpop.f32.mrb[0].mxu0
        %3983 = vmatprep.mubr.bf16.mxu0 %v2929
        %3984 = vmatmul.mubr.bf16.gmra.mrb[0].mxu0 %v2828
        %v3985 = vpop.f32.mrb[0].mxu0
        %v3986 = vadd.f32 %v3825, %v3985
        %v3987 = vpop.f32.mrb[0].mxu0
        %v3988 = vpop.f32.mrb[0].mxu0
        %v3989 = vadd.f32 %v3828, %v3988
        %v3990 = vpop.f32.mrb[0].mxu0
        %3991 = vmatprep.mubr.bf16.mxu0 %v2938
        %3992 = vmatmul.mubr.bf16.gmra.mrb[0].mxu0 %v2831
        %v3993 = vpop.f32.mrb[0].mxu0
        %v3994 = vadd.f32 %v3833, %v3993
        %v3995 = vpop.f32.mrb[0].mxu0
        %v3996 = vpop.f32.mrb[0].mxu0
        %v3997 = vadd.f32 %v3836, %v3996
        %v3998 = vpop.f32.mrb[0].mxu0
        %3999 = vmatprep.mubr.bf16.mxu0 %v2947
        %4000 = vmatmul.mubr.bf16.gmra.mrb[0].mxu0 %v2834
        %v4001 = vpop.f32.mrb[0].mxu0
        %v4002 = vadd.f32 %v3841, %v4001
        %v4003 = vpop.f32.mrb[0].mxu0
        %v4004 = vpop.f32.mrb[0].mxu0
        %v4005 = vadd.f32 %v3844, %v4004
        %v4006 = vpop.f32.mrb[0].mxu0
        %4007 = vmatprep.mubr.bf16.mxu0 %v2956
        %4008 = vmatmul.mubr.bf16.gmra.mrb[0].mxu0 %v2837
        %v4009 = vpop.f32.mrb[0].mxu0
        %v4010 = vadd.f32 %v3849, %v4009
        %v4011 = vpop.f32.mrb[0].mxu0
        %v4012 = vpop.f32.mrb[0].mxu0
        %v4013 = vadd.f32 %v3852, %v4012
        %v4014 = vpop.f32.mrb[0].mxu0
        %4015 = vmatprep.mubr.bf16.mxu0 %v2965
        %4016 = vmatmul.mubr.bf16.gmra.mrb[0].mxu0 %v2840
        %v4017 = vpop.f32.mrb[0].mxu0
        %v4018 = vadd.f32 %v3857, %v4017
        %v4019 = vpop.f32.mrb[0].mxu0
        %v4020 = vpop.f32.mrb[0].mxu0
        %v4021 = vadd.f32 %v3860, %v4020
        %v4022 = vpop.f32.mrb[0].mxu0
        %4023 = vmatprep.mubr.bf16.mxu0 %v2974
        %4024 = vmatmul.mubr.bf16.gmra.mrb[0].mxu0 %v2843
        %v4025 = vpop.f32.mrb[0].mxu0
        %v4026 = vadd.f32 %v3865, %v4025
        %v4027 = vpop.f32.mrb[0].mxu0
        %v4028 = vpop.f32.mrb[0].mxu0
        %v4029 = vadd.f32 %v3868, %v4028
        %v4030 = vpop.f32.mrb[0].mxu0
        %4031 = vmatprep.mubr.bf16.mxu0 %v2983
        %4032 = vmatmul.mubr.bf16.gmra.mrb[0].mxu0 %v2846
        %v4033 = vpop.f32.mrb[0].mxu0
        %v4034 = vadd.f32 %v3873, %v4033
        %v4035 = vpop.f32.mrb[0].mxu0
        %v4036 = vpop.f32.mrb[0].mxu0
        %v4037 = vadd.f32 %v3876, %v4036
        %v4038 = vpop.f32.mrb[0].mxu0
        %4039 = vmatprep.mubr.bf16.mxu0 %v2992
        %4040 = vmatmul.mubr.bf16.gmra.mrb[0].mxu0 %v2849
        %v4041 = vpop.f32.mrb[0].mxu0
        %v4042 = vadd.f32 %v3881, %v4041
        %v4043 = vpop.f32.mrb[0].mxu0
        %v4044 = vpop.f32.mrb[0].mxu0
        %v4045 = vadd.f32 %v3884, %v4044
        %v4046 = vpop.f32.mrb[0].mxu0
        %4047 = vmatprep.mubr.bf16.mxu0 %v3001
        %4048 = vmatmul.mubr.bf16.gmra.mrb[0].mxu0 %v2852
        %v4049 = vpop.f32.mrb[0].mxu0
        %v4050 = vadd.f32 %v3889, %v4049
        %v4051 = vpop.f32.mrb[0].mxu0
        %v4052 = vpop.f32.mrb[0].mxu0
        %v4053 = vadd.f32 %v3892, %v4052
        %v4054 = vpop.f32.mrb[0].mxu0
        %4055 = vmatprep.mubr.bf16.mxu0 %v3010
        %4056 = vmatmul.mubr.bf16.gmra.mrb[0].mxu0 %v2855
        %v4057 = vpop.f32.mrb[0].mxu0
        %v4058 = vadd.f32 %v3897, %v4057
        %v4059 = vpop.f32.mrb[0].mxu0
        %v4060 = vpop.f32.mrb[0].mxu0
        %v4061 = vadd.f32 %v3900, %v4060
        %v4062 = vpop.f32.mrb[0].mxu0
        %4063 = vmatprep.mubr.bf16.mxu0 %v3019
        %4064 = vmatmul.mubr.bf16.gmra.mrb[0].mxu0 %v2858
        %v4065 = vpop.f32.mrb[0].mxu0
        %v4066 = vadd.f32 %v3905, %v4065
        %v4067 = vpop.f32.mrb[0].mxu0
        %v4068 = vpop.f32.mrb[0].mxu0
        %v4069 = vadd.f32 %v3908, %v4068
        %v4070 = vpop.f32.mrb[0].mxu0
        %4071 = vdwg.mxu0
        %4072 = vmatprep.subr.bf16.mxu0 0
        %4073 = vmatpush1.bf16.msra.mxu0 %v3670
        %4074 = vmatprep.subr.bf16.mxu0 0
        %4075 = vmatpush1.bf16.msra.mxu0 %v3671
        %4076 = vmatprep.subr.bf16.mxu0 0
        %4077 = vmatpush1.bf16.msra.mxu0 %v3672
        %4078 = vmatprep.subr.bf16.mxu0 0
        %4079 = vmatpush1.bf16.msra.mxu0 %v3673
        %4080 = vmatprep.subr.bf16.mxu0 0
        %4081 = vmatpush1.bf16.msra.mxu0 %v3674
        %4082 = vmatprep.subr.bf16.mxu0 0
        %4083 = vmatpush1.bf16.msra.mxu0 %v3675
        %4084 = vmatprep.subr.bf16.mxu0 0
        %4085 = vmatpush1.bf16.msra.mxu0 %v3676
        %4086 = vmatprep.subr.bf16.mxu0 0
        %4087 = vmatpush1.bf16.msra.mxu0 %v3677
        %4088 = vmatprep.subr.bf16.mxu0 0
        %4089 = vmatpush1.bf16.msra.mxu0 %v3678
        %4090 = vmatprep.subr.bf16.mxu0 0
        %4091 = vmatpush1.bf16.msra.mxu0 %v3679
        %4092 = vmatprep.subr.bf16.mxu0 0
        %4093 = vmatpush1.bf16.msra.mxu0 %v3680
        %4094 = vmatprep.subr.bf16.mxu0 0
        %4095 = vmatpush1.bf16.msra.mxu0 %v3681
        %4096 = vmatprep.subr.bf16.mxu0 0
        %4097 = vmatpush1.bf16.msra.mxu0 %v3682
        %4098 = vmatprep.subr.bf16.mxu0 0
        %4099 = vmatpush1.bf16.msra.mxu0 %v3683
        %4100 = vmatprep.subr.bf16.mxu0 0
        %4101 = vmatpush1.bf16.msra.mxu0 %v3684
        %4102 = vmatprep.subr.bf16.mxu0 0
        %4103 = vmatpush1.bf16.msra.mxu0 %v3685
        %4104 = vmatprep.mubr.bf16.mxu0 %v3108
        %4105 = vmatmul.mubr.bf16.gmra.mrb[0].mxu0 %v3039
        %v4106 = vpop.f32.mrb[0].mxu0
        %v4107 = vadd.f32 %v3946, %v4106
        %v4108 = vpop.f32.mrb[0].mxu0
        %v4109 = vpop.f32.mrb[0].mxu0
        %v4110 = vadd.f32 %v3949, %v4109
        %v4111 = vpop.f32.mrb[0].mxu0
        %4112 = vmatprep.mubr.bf16.mxu0 %v3115
        %4113 = vmatmul.mubr.bf16.gmra.mrb[0].mxu0 %v3042
        %v4114 = vpop.f32.mrb[0].mxu0
        %v4115 = vadd.f32 %v3954, %v4114
        %v4116 = vpop.f32.mrb[0].mxu0
        %v4117 = vpop.f32.mrb[0].mxu0
        %v4118 = vadd.f32 %v3957, %v4117
        %v4119 = vpop.f32.mrb[0].mxu0
        %4120 = vmatprep.mubr.bf16.mxu0 %v3122
        %4121 = vmatmul.mubr.bf16.gmra.mrb[0].mxu0 %v3045
        %v4122 = vpop.f32.mrb[0].mxu0
        %v4123 = vadd.f32 %v3962, %v4122
        %v4124 = vpop.f32.mrb[0].mxu0
        %v4125 = vpop.f32.mrb[0].mxu0
        %v4126 = vadd.f32 %v3965, %v4125
        %v4127 = vpop.f32.mrb[0].mxu0
        %4128 = vmatprep.mubr.bf16.mxu0 %v3129
        %4129 = vmatmul.mubr.bf16.gmra.mrb[0].mxu0 %v3048
        %v4130 = vpop.f32.mrb[0].mxu0
        %v4131 = vadd.f32 %v3970, %v4130
        %v4132 = vpop.f32.mrb[0].mxu0
        %v4133 = vpop.f32.mrb[0].mxu0
        %v4134 = vadd.f32 %v3973, %v4133
        %v4135 = vpop.f32.mrb[0].mxu0
        %4136 = vmatprep.mubr.bf16.mxu0 %v3136
        %4137 = vmatmul.mubr.bf16.gmra.mrb[0].mxu0 %v3051
        %v4138 = vpop.f32.mrb[0].mxu0
        %v4139 = vadd.f32 %v3978, %v4138
        %v4140 = vpop.f32.mrb[0].mxu0
        %v4141 = vpop.f32.mrb[0].mxu0
        %v4142 = vadd.f32 %v3981, %v4141
        %v4143 = vpop.f32.mrb[0].mxu0
        %4144 = vmatprep.mubr.bf16.mxu0 %v3143
        %4145 = vmatmul.mubr.bf16.gmra.mrb[0].mxu0 %v3054
        %v4146 = vpop.f32.mrb[0].mxu0
        %v4147 = vadd.f32 %v3986, %v4146
        %v4148 = vpop.f32.mrb[0].mxu0
        %v4149 = vpop.f32.mrb[0].mxu0
        %v4150 = vadd.f32 %v3989, %v4149
        %v4151 = vpop.f32.mrb[0].mxu0
        %4152 = vmatprep.mubr.bf16.mxu0 %v3150
        %4153 = vmatmul.mubr.bf16.gmra.mrb[0].mxu0 %v3057
        %v4154 = vpop.f32.mrb[0].mxu0
        %v4155 = vadd.f32 %v3994, %v4154
        %v4156 = vpop.f32.mrb[0].mxu0
        %v4157 = vpop.f32.mrb[0].mxu0
        %v4158 = vadd.f32 %v3997, %v4157
        %v4159 = vpop.f32.mrb[0].mxu0
        %4160 = vmatprep.mubr.bf16.mxu0 %v3157
        %4161 = vmatmul.mubr.bf16.gmra.mrb[0].mxu0 %v3060
        %v4162 = vpop.f32.mrb[0].mxu0
        %v4163 = vadd.f32 %v4002, %v4162
        %v4164 = vpop.f32.mrb[0].mxu0
        %v4165 = vpop.f32.mrb[0].mxu0
        %v4166 = vadd.f32 %v4005, %v4165
        %v4167 = vpop.f32.mrb[0].mxu0
        %4168 = vmatprep.mubr.bf16.mxu0 %v3164
        %4169 = vmatmul.mubr.bf16.gmra.mrb[0].mxu0 %v3063
        %v4170 = vpop.f32.mrb[0].mxu0
        %v4171 = vadd.f32 %v4010, %v4170
        %v4172 = vpop.f32.mrb[0].mxu0
        %v4173 = vpop.f32.mrb[0].mxu0
        %v4174 = vadd.f32 %v4013, %v4173
        %v4175 = vpop.f32.mrb[0].mxu0
        %4176 = vmatprep.mubr.bf16.mxu0 %v3171
        %4177 = vmatmul.mubr.bf16.gmra.mrb[0].mxu0 %v3066
        %v4178 = vpop.f32.mrb[0].mxu0
        %v4179 = vadd.f32 %v4018, %v4178
        %v4180 = vpop.f32.mrb[0].mxu0
        %v4181 = vpop.f32.mrb[0].mxu0
        %v4182 = vadd.f32 %v4021, %v4181
        %v4183 = vpop.f32.mrb[0].mxu0
        %4184 = vmatprep.mubr.bf16.mxu0 %v3178
        %4185 = vmatmul.mubr.bf16.gmra.mrb[0].mxu0 %v3069
        %v4186 = vpop.f32.mrb[0].mxu0
        %v4187 = vadd.f32 %v4026, %v4186
        %v4188 = vpop.f32.mrb[0].mxu0
        %v4189 = vpop.f32.mrb[0].mxu0
        %v4190 = vadd.f32 %v4029, %v4189
        %v4191 = vpop.f32.mrb[0].mxu0
        %4192 = vmatprep.mubr.bf16.mxu0 %v3185
        %4193 = vmatmul.mubr.bf16.gmra.mrb[0].mxu0 %v3072
        %v4194 = vpop.f32.mrb[0].mxu0
        %v4195 = vadd.f32 %v4034, %v4194
        %v4196 = vpop.f32.mrb[0].mxu0
        %v4197 = vpop.f32.mrb[0].mxu0
        %v4198 = vadd.f32 %v4037, %v4197
        %v4199 = vpop.f32.mrb[0].mxu0
        %4200 = vmatprep.mubr.bf16.mxu0 %v3192
        %4201 = vmatmul.mubr.bf16.gmra.mrb[0].mxu0 %v3075
        %v4202 = vpop.f32.mrb[0].mxu0
        %v4203 = vadd.f32 %v4042, %v4202
        %v4204 = vpop.f32.mrb[0].mxu0
        %v4205 = vpop.f32.mrb[0].mxu0
        %v4206 = vadd.f32 %v4045, %v4205
        %v4207 = vpop.f32.mrb[0].mxu0
        %4208 = vmatprep.mubr.bf16.mxu0 %v3199
        %4209 = vmatmul.mubr.bf16.gmra.mrb[0].mxu0 %v3078
        %v4210 = vpop.f32.mrb[0].mxu0
        %v4211 = vadd.f32 %v4050, %v4210
        %v4212 = vpop.f32.mrb[0].mxu0
        %v4213 = vpop.f32.mrb[0].mxu0
        %v4214 = vadd.f32 %v4053, %v4213
        %v4215 = vpop.f32.mrb[0].mxu0
        %4216 = vmatprep.mubr.bf16.mxu0 %v3206
        %4217 = vmatmul.mubr.bf16.gmra.mrb[0].mxu0 %v3081
        %v4218 = vpop.f32.mrb[0].mxu0
        %v4219 = vadd.f32 %v4058, %v4218
        %v4220 = vpop.f32.mrb[0].mxu0
        %v4221 = vpop.f32.mrb[0].mxu0
        %v4222 = vadd.f32 %v4061, %v4221
        %v4223 = vpop.f32.mrb[0].mxu0
        %4224 = vmatprep.mubr.bf16.mxu0 %v3213
        %4225 = vmatmul.mubr.bf16.gmra.mrb[0].mxu0 %v3084
        %v4226 = vpop.f32.mrb[0].mxu0
        %v4227 = vadd.f32 %v4066, %v4226
        %v4228 = vpop.f32.mrb[0].mxu0
        %v4229 = vpop.f32.mrb[0].mxu0
        %v4230 = vadd.f32 %v4069, %v4229
        %v4231 = vpop.f32.mrb[0].mxu0
        %4232 = vdwg.mxu0
        %4233 = vmatprep.subr.bf16.mxu0 0
        %4234 = vmatpush1.bf16.msra.mxu0 %v3686
        %4235 = vmatprep.subr.bf16.mxu0 0
        %4236 = vmatpush1.bf16.msra.mxu0 %v3687
        %4237 = vmatprep.subr.bf16.mxu0 0
        %4238 = vmatpush1.bf16.msra.mxu0 %v3688
        %4239 = vmatprep.subr.bf16.mxu0 0
        %4240 = vmatpush1.bf16.msra.mxu0 %v3689
        %4241 = vmatprep.subr.bf16.mxu0 0
        %4242 = vmatpush1.bf16.msra.mxu0 %v3690
        %4243 = vmatprep.subr.bf16.mxu0 0
        %4244 = vmatpush1.bf16.msra.mxu0 %v3691
        %4245 = vmatprep.subr.bf16.mxu0 0
        %4246 = vmatpush1.bf16.msra.mxu0 %v3692
        %4247 = vmatprep.subr.bf16.mxu0 0
        %4248 = vmatpush1.bf16.msra.mxu0 %v3693
        %4249 = vmatprep.subr.bf16.mxu0 0
        %4250 = vmatpush1.bf16.msra.mxu0 0
        %4251 = vmatprep.subr.bf16.mxu0 0
        %4252 = vmatpush1.bf16.msra.mxu0 0
        %4253 = vmatprep.subr.bf16.mxu0 0
        %4254 = vmatpush1.bf16.msra.mxu0 0
        %4255 = vmatprep.subr.bf16.mxu0 0
        %4256 = vmatpush1.bf16.msra.mxu0 0
        %4257 = vmatprep.subr.bf16.mxu0 0
        %4258 = vmatpush1.bf16.msra.mxu0 0
        %4259 = vmatprep.subr.bf16.mxu0 0
        %4260 = vmatpush1.bf16.msra.mxu0 0
        %4261 = vmatprep.subr.bf16.mxu0 0
        %4262 = vmatpush1.bf16.msra.mxu0 0
        %4263 = vmatprep.subr.bf16.mxu0 0
        %4264 = vmatpush1.bf16.msra.mxu0 0
        %4265 = vmatprep.mubr.bf16.mxu0 0
        %4266 = vmatmul.mubr.bf16.gmra.mrb[0].mxu0 %v3233
        %v4267 = vpop.f32.mrb[0].mxu0
        %v4268 = vadd.f32 %v4107, %v4267
        %v4269 = vpop.f32.mrb[0].mxu0
        %v4270 = vpop.f32.mrb[0].mxu0
        %v4271 = vadd.f32 %v4110, %v4270
        %v4272 = vpop.f32.mrb[0].mxu0
        %4273 = vmatprep.mubr.bf16.mxu0 0
        %4274 = vmatmul.mubr.bf16.gmra.mrb[0].mxu0 %v3236
        %v4275 = vpop.f32.mrb[0].mxu0
        %v4276 = vadd.f32 %v4115, %v4275
        %v4277 = vpop.f32.mrb[0].mxu0
        %v4278 = vpop.f32.mrb[0].mxu0
        %v4279 = vadd.f32 %v4118, %v4278
        %v4280 = vpop.f32.mrb[0].mxu0
        %4281 = vmatprep.mubr.bf16.mxu0 0
        %4282 = vmatmul.mubr.bf16.gmra.mrb[0].mxu0 %v3239
        %v4283 = vpop.f32.mrb[0].mxu0
        %v4284 = vadd.f32 %v4123, %v4283
        %v4285 = vpop.f32.mrb[0].mxu0
        %v4286 = vpop.f32.mrb[0].mxu0
        %v4287 = vadd.f32 %v4126, %v4286
        %v4288 = vpop.f32.mrb[0].mxu0
        %4289 = vmatprep.mubr.bf16.mxu0 0
        %4290 = vmatmul.mubr.bf16.gmra.mrb[0].mxu0 %v3242
        %v4291 = vpop.f32.mrb[0].mxu0
        %v4292 = vadd.f32 %v4131, %v4291
        %v4293 = vpop.f32.mrb[0].mxu0
        %v4294 = vpop.f32.mrb[0].mxu0
        %v4295 = vadd.f32 %v4134, %v4294
        %v4296 = vpop.f32.mrb[0].mxu0
        %4297 = vmatprep.mubr.bf16.mxu0 0
        %4298 = vmatmul.mubr.bf16.gmra.mrb[0].mxu0 %v3245
        %v4299 = vpop.f32.mrb[0].mxu0
        %v4300 = vadd.f32 %v4139, %v4299
        %v4301 = vpop.f32.mrb[0].mxu0
        %v4302 = vpop.f32.mrb[0].mxu0
        %v4303 = vadd.f32 %v4142, %v4302
        %v4304 = vpop.f32.mrb[0].mxu0
        %4305 = vmatprep.mubr.bf16.mxu0 0
        %4306 = vmatmul.mubr.bf16.gmra.mrb[0].mxu0 %v3248
        %v4307 = vpop.f32.mrb[0].mxu0
        %v4308 = vadd.f32 %v4147, %v4307
        %v4309 = vpop.f32.mrb[0].mxu0
        %v4310 = vpop.f32.mrb[0].mxu0
        %v4311 = vadd.f32 %v4150, %v4310
        %v4312 = vpop.f32.mrb[0].mxu0
        %4313 = vmatprep.mubr.bf16.mxu0 0
        %4314 = vmatmul.mubr.bf16.gmra.mrb[0].mxu0 %v3251
        %v4315 = vpop.f32.mrb[0].mxu0
        %v4316 = vadd.f32 %v4155, %v4315
        %v4317 = vpop.f32.mrb[0].mxu0
        %v4318 = vpop.f32.mrb[0].mxu0
        %v4319 = vadd.f32 %v4158, %v4318
        %v4320 = vpop.f32.mrb[0].mxu0
        %4321 = vmatprep.mubr.bf16.mxu0 0
        %4322 = vmatmul.mubr.bf16.gmra.mrb[0].mxu0 %v3254
        %v4323 = vpop.f32.mrb[0].mxu0
        %v4324 = vadd.f32 %v4163, %v4323
        %v4325 = vpop.f32.mrb[0].mxu0
        %v4326 = vpop.f32.mrb[0].mxu0
        %v4327 = vadd.f32 %v4166, %v4326
        %v4328 = vpop.f32.mrb[0].mxu0
        %4329 = vmatprep.mubr.bf16.mxu0 0
        %4330 = vmatmul.mubr.bf16.gmra.mrb[0].mxu0 %v3257
        %v4331 = vpop.f32.mrb[0].mxu0
        %v4332 = vadd.f32 %v4171, %v4331
        %v4333 = vpop.f32.mrb[0].mxu0
        %v4334 = vpop.f32.mrb[0].mxu0
        %v4335 = vadd.f32 %v4174, %v4334
        %v4336 = vpop.f32.mrb[0].mxu0
        %4337 = vmatprep.mubr.bf16.mxu0 0
        %4338 = vmatmul.mubr.bf16.gmra.mrb[0].mxu0 %v3260
        %v4339 = vpop.f32.mrb[0].mxu0
        %v4340 = vadd.f32 %v4179, %v4339
        %v4341 = vpop.f32.mrb[0].mxu0
        %v4342 = vpop.f32.mrb[0].mxu0
        %v4343 = vadd.f32 %v4182, %v4342
        %v4344 = vpop.f32.mrb[0].mxu0
        %4345 = vmatprep.mubr.bf16.mxu0 0
        %4346 = vmatmul.mubr.bf16.gmra.mrb[0].mxu0 %v3263
        %v4347 = vpop.f32.mrb[0].mxu0
        %v4348 = vadd.f32 %v4187, %v4347
        %v4349 = vpop.f32.mrb[0].mxu0
        %v4350 = vpop.f32.mrb[0].mxu0
        %v4351 = vadd.f32 %v4190, %v4350
        %v4352 = vpop.f32.mrb[0].mxu0
        %4353 = vmatprep.mubr.bf16.mxu0 0
        %4354 = vmatmul.mubr.bf16.gmra.mrb[0].mxu0 %v3266
        %v4355 = vpop.f32.mrb[0].mxu0
        %v4356 = vadd.f32 %v4195, %v4355
        %v4357 = vpop.f32.mrb[0].mxu0
        %v4358 = vpop.f32.mrb[0].mxu0
        %v4359 = vadd.f32 %v4198, %v4358
        %v4360 = vpop.f32.mrb[0].mxu0
        %4361 = vmatprep.mubr.bf16.mxu0 0
        %4362 = vmatmul.mubr.bf16.gmra.mrb[0].mxu0 %v3269
        %v4363 = vpop.f32.mrb[0].mxu0
        %v4364 = vadd.f32 %v4203, %v4363
        %v4365 = vpop.f32.mrb[0].mxu0
        %v4366 = vpop.f32.mrb[0].mxu0
        %v4367 = vadd.f32 %v4206, %v4366
        %v4368 = vpop.f32.mrb[0].mxu0
        %4369 = vmatprep.mubr.bf16.mxu0 0
        %4370 = vmatmul.mubr.bf16.gmra.mrb[0].mxu0 %v3272
        %v4371 = vpop.f32.mrb[0].mxu0
        %v4372 = vadd.f32 %v4211, %v4371
        %v4373 = vpop.f32.mrb[0].mxu0
        %v4374 = vpop.f32.mrb[0].mxu0
        %v4375 = vadd.f32 %v4214, %v4374
        %v4376 = vpop.f32.mrb[0].mxu0
        %4377 = vmatprep.mubr.bf16.mxu0 0
        %4378 = vmatmul.mubr.bf16.gmra.mrb[0].mxu0 %v3275
        %v4379 = vpop.f32.mrb[0].mxu0
        %v4380 = vadd.f32 %v4219, %v4379
        %v4381 = vpop.f32.mrb[0].mxu0
        %v4382 = vpop.f32.mrb[0].mxu0
        %v4383 = vadd.f32 %v4222, %v4382
        %v4384 = vpop.f32.mrb[0].mxu0
        %4385 = vmatprep.mubr.bf16.mxu0 0
        %4386 = vmatmul.mubr.bf16.gmra.mrb[0].mxu0 %v3278
        %v4387 = vpop.f32.mrb[0].mxu0
        %v4388 = vadd.f32 %v4227, %v4387
        %v4389 = vpop.f32.mrb[0].mxu0
        %v4390 = vpop.f32.mrb[0].mxu0
        %v4391 = vadd.f32 %v4230, %v4390
        %v4392 = vpop.f32.mrb[0].mxu0
        %4393 = vdwg.mxu0
        %v4394 = vmax.f32 %v4268, 0.0
        %v4395 = vmax.f32 %v4271, 0.0
        %v4396 = vmax.f32 %v4276, 0.0
        %v4397 = vmax.f32 %v4279, 0.0
        %v4398 = vmax.f32 %v4284, 0.0
        %v4399 = vmax.f32 %v4287, 0.0
        %v4400 = vmax.f32 %v4292, 0.0
        %v4401 = vmax.f32 %v4295, 0.0
        %v4402 = vmax.f32 %v4300, 0.0
        %v4403 = vmax.f32 %v4303, 0.0
        %v4404 = vmax.f32 %v4308, 0.0
        %v4405 = vmax.f32 %v4311, 0.0
        %v4406 = vmax.f32 %v4316, 0.0
        %v4407 = vmax.f32 %v4319, 0.0
        %v4408 = vmax.f32 %v4324, 0.0
        %v4409 = vmax.f32 %v4327, 0.0
        %v4410 = vmax.f32 %v4332, 0.0
        %v4411 = vmax.f32 %v4335, 0.0
        %v4412 = vmax.f32 %v4340, 0.0
        %v4413 = vmax.f32 %v4343, 0.0
        %v4414 = vmax.f32 %v4348, 0.0
        %v4415 = vmax.f32 %v4351, 0.0
        %v4416 = vmax.f32 %v4356, 0.0
        %v4417 = vmax.f32 %v4359, 0.0
        %v4418 = vmax.f32 %v4364, 0.0
        %v4419 = vmax.f32 %v4367, 0.0
        %v4420 = vmax.f32 %v4372, 0.0
        %v4421 = vmax.f32 %v4375, 0.0
        %v4422 = vmax.f32 %v4380, 0.0
        %v4423 = vmax.f32 %v4383, 0.0
        %v4424 = vmax.f32 %v4388, 0.0
        %v4425 = vmax.f32 %v4391, 0.0
        %v4426 = vpack.c.bf16 %v4395, %v4394
        %v4427 = vpack.c.bf16 %v4397, %v4396
        %v4428 = vpack.c.bf16 %v4399, %v4398
        %v4429 = vpack.c.bf16 %v4401, %v4400
        %v4430 = vpack.c.bf16 %v4403, %v4402
        %v4431 = vpack.c.bf16 %v4405, %v4404
        %v4432 = vpack.c.bf16 %v4407, %v4406
        %v4433 = vpack.c.bf16 %v4409, %v4408
        %v4434 = vpack.c.bf16 %v4411, %v4410
        %v4435 = vpack.c.bf16 %v4413, %v4412
        %v4436 = vpack.c.bf16 %v4415, %v4414
        %v4437 = vpack.c.bf16 %v4417, %v4416
        %v4438 = vpack.c.bf16 %v4419, %v4418
        %v4439 = vpack.c.bf16 %v4421, %v4420
        %v4440 = vpack.c.bf16 %v4423, %v4422
        %v4441 = vpack.c.bf16 %v4425, %v4424
        %v4442 = vld [vmem:[#allocation11] sm:$0xf]
        %v4443 = vld [vmem:[#allocation11 + $0x4] sm:$0xf]
        %v4444 = vld [vmem:[#allocation11 + $0x8] sm:$0xf]
        %v4445 = vld [vmem:[#allocation11 + $0xc] sm:$0xf]
        %v4446 = vld [vmem:[#allocation11 + $0x10] sm:$0xf]
        %v4447 = vld [vmem:[#allocation11 + $0x14] sm:$0xf]
        %v4448 = vld [vmem:[#allocation11 + $0x18] sm:$0xf]
        %v4449 = vld [vmem:[#allocation11 + $0x1c] sm:$0xf]
        %v4450 = vld [vmem:[#allocation11 + $0x20] sm:$0xf]
        %v4451 = vld [vmem:[#allocation11 + $0x24] sm:$0xf]
        %v4452 = vld [vmem:[#allocation11 + $0x28] sm:$0xf]
        %v4453 = vld [vmem:[#allocation11 + $0x2c] sm:$0xf]
        %v4454 = vld [vmem:[#allocation11 + $0x30] sm:$0xf]
        %v4455 = vld [vmem:[#allocation11 + $0x34] sm:$0xf]
        %v4456 = vld [vmem:[#allocation11 + $0x38] sm:$0xf]
        %v4457 = vld [vmem:[#allocation11 + $0x3c] sm:$0xf]
        %v4458 = vld [vmem:[#allocation11 + $0x40] sm:$0xf]
        %v4459 = vld [vmem:[#allocation11 + $0x44] sm:$0xf]
        %v4460 = vld [vmem:[#allocation11 + $0x48] sm:$0xf]
        %v4461 = vld [vmem:[#allocation11 + $0x4c] sm:$0xf]
        %v4462 = vld [vmem:[#allocation11 + $0x50] sm:$0xf]
        %v4463 = vld [vmem:[#allocation11 + $0x54] sm:$0xf]
        %v4464 = vld [vmem:[#allocation11 + $0x58] sm:$0xf]
        %v4465 = vld [vmem:[#allocation11 + $0x5c] sm:$0xf]
        %v4466 = vld [vmem:[#allocation11 + $0x60] sm:$0xf]
        %v4467 = vld [vmem:[#allocation11 + $0x64] sm:$0xf]
        %v4468 = vld [vmem:[#allocation11 + $0x68] sm:$0xf]
        %v4469 = vld [vmem:[#allocation11 + $0x6c] sm:$0xf]
        %v4470 = vld [vmem:[#allocation11 + $0x70] sm:$0xf]
        %v4471 = vld [vmem:[#allocation11 + $0x74] sm:$0xf]
        %v4472 = vld [vmem:[#allocation11 + $0x78] sm:$0xf]
        %v4473 = vld [vmem:[#allocation11 + $0x7c] sm:$0xf]
        %v4474 = vld [vmem:[#allocation11 + $0x80] sm:$0xf]
        %v4475 = vld [vmem:[#allocation11 + $0x84] sm:$0xf]
        %v4476 = vld [vmem:[#allocation11 + $0x88] sm:$0xf]
        %v4477 = vld [vmem:[#allocation11 + $0x8c] sm:$0xf]
        %v4478 = vld [vmem:[#allocation11 + $0x90] sm:$0xf]
        %v4479 = vld [vmem:[#allocation11 + $0x94] sm:$0xf]
        %v4480 = vld [vmem:[#allocation11 + $0x98] sm:$0xf]
        %v4481 = vld [vmem:[#allocation11 + $0x9c] sm:$0xf]
        %v4482 = vld [vmem:[#allocation11 + $0xa0] sm:$0xf]
        %v4483 = vld [vmem:[#allocation11 + $0xa4] sm:$0xf]
        %v4484 = vld [vmem:[#allocation11 + $0xa8] sm:$0xf]
        %v4485 = vld [vmem:[#allocation11 + $0xac] sm:$0xf]
        %v4486 = vld [vmem:[#allocation11 + $0xb0] sm:$0xf]
        %v4487 = vld [vmem:[#allocation11 + $0xb4] sm:$0xf]
        %v4488 = vld [vmem:[#allocation11 + $0xb8] sm:$0xf]
        %v4489 = vld [vmem:[#allocation11 + $0xbc] sm:$0xf]
        %v4490 = vld [vmem:[#allocation11 + $0xc0] sm:$0xf]
        %v4491 = vld [vmem:[#allocation11 + $0xc4] sm:$0xf]
        %v4492 = vld [vmem:[#allocation11 + $0xc8] sm:$0xf]
        %v4493 = vld [vmem:[#allocation11 + $0xcc] sm:$0xf]
        %v4494 = vld [vmem:[#allocation11 + $0xd0] sm:$0xf]
        %v4495 = vld [vmem:[#allocation11 + $0xd4] sm:$0xf]
        %v4496 = vld [vmem:[#allocation11 + $0xd8] sm:$0xf]
        %v4497 = vld [vmem:[#allocation11 + $0xdc] sm:$0xf]
        %v4498 = vld [vmem:[#allocation11 + $0xe0] sm:$0xf]
        %v4499 = vld [vmem:[#allocation11 + $0xe4] sm:$0xf]
        %v4500 = vld [vmem:[#allocation11 + $0xe8] sm:$0xf]
        %v4501 = vld [vmem:[#allocation11 + $0xec] sm:$0xf]
        %v4502 = vld [vmem:[#allocation11 + $0xf0] sm:$0xf]
        %v4503 = vld [vmem:[#allocation11 + $0xf4] sm:$0xf]
        %v4504 = vld [vmem:[#allocation11 + $0xf8] sm:$0xf]
        %v4505 = vld [vmem:[#allocation11 + $0xfc] sm:$0xf]
        %v4506 = vld [vmem:[#allocation11 + $0x100] sm:$0xf]
        %v4507 = vld [vmem:[#allocation11 + $0x104] sm:$0xf]
        %v4508 = vld [vmem:[#allocation11 + $0x108] sm:$0xf]
        %v4509 = vld [vmem:[#allocation11 + $0x10c] sm:$0xf]
        %v4510 = vld [vmem:[#allocation11 + $0x110] sm:$0xf]
        %v4511 = vld [vmem:[#allocation11 + $0x114] sm:$0xf]
        %v4512 = vld [vmem:[#allocation11 + $0x118] sm:$0xf]
        %v4513 = vld [vmem:[#allocation11 + $0x11c] sm:$0xf]
        %v4514 = vld [vmem:[#allocation11 + $0x120] sm:$0xf]
        %v4515 = vld [vmem:[#allocation11 + $0x124] sm:$0xf]
        %v4516 = vld [vmem:[#allocation11 + $0x128] sm:$0xf]
        %v4517 = vld [vmem:[#allocation11 + $0x12c] sm:$0xf]
        %v4518 = vld [vmem:[#allocation11 + $0x130] sm:$0xf]
        %v4519 = vld [vmem:[#allocation11 + $0x134] sm:$0xf]
        %v4520 = vld [vmem:[#allocation11 + $0x138] sm:$0xf]
        %v4521 = vld [vmem:[#allocation11 + $0x13c] sm:$0xf]
        %v4522 = vld [vmem:[#allocation11 + $0x140] sm:$0xf]
        %v4523 = vld [vmem:[#allocation11 + $0x144] sm:$0xf]
        %v4524 = vld [vmem:[#allocation11 + $0x148] sm:$0xf]
        %v4525 = vld [vmem:[#allocation11 + $0x14c] sm:$0xf]
        %v4526 = vld [vmem:[#allocation11 + $0x150] sm:$0xf]
        %v4527 = vld [vmem:[#allocation11 + $0x154] sm:$0xf]
        %v4528 = vld [vmem:[#allocation11 + $0x158] sm:$0xf]
        %v4529 = vld [vmem:[#allocation11 + $0x15c] sm:$0xf]
        %v4530 = vld [vmem:[#allocation11 + $0x160] sm:$0xf]
        %v4531 = vld [vmem:[#allocation11 + $0x164] sm:$0xf]
        %v4532 = vld [vmem:[#allocation11 + $0x168] sm:$0xf]
        %v4533 = vld [vmem:[#allocation11 + $0x16c] sm:$0xf]
        %v4534 = vld [vmem:[#allocation11 + $0x170] sm:$0xf]
        %v4535 = vld [vmem:[#allocation11 + $0x174] sm:$0xf]
        %v4536 = vld [vmem:[#allocation11 + $0x178] sm:$0xf]
        %v4537 = vld [vmem:[#allocation11 + $0x17c] sm:$0xf]
        %v4538 = vld [vmem:[#allocation11 + $0x180] sm:$0xf]
        %v4539 = vld [vmem:[#allocation11 + $0x184] sm:$0xf]
        %v4540 = vld [vmem:[#allocation11 + $0x188] sm:$0xf]
        %v4541 = vld [vmem:[#allocation11 + $0x18c] sm:$0xf]
        %v4542 = vld [vmem:[#allocation11 + $0x190] sm:$0xf]
        %v4543 = vld [vmem:[#allocation11 + $0x194] sm:$0xf]
        %v4544 = vld [vmem:[#allocation11 + $0x198] sm:$0xf]
        %v4545 = vld [vmem:[#allocation11 + $0x19c] sm:$0xf]
        %v4546 = vld [vmem:[#allocation11 + $0x1a0] sm:$0xf]
        %v4547 = vld [vmem:[#allocation11 + $0x1a4] sm:$0xf]
        %v4548 = vld [vmem:[#allocation11 + $0x1a8] sm:$0xf]
        %v4549 = vld [vmem:[#allocation11 + $0x1ac] sm:$0xf]
        %v4550 = vld [vmem:[#allocation11 + $0x1b0] sm:$0xf]
        %v4551 = vld [vmem:[#allocation11 + $0x1b4] sm:$0xf]
        %v4552 = vld [vmem:[#allocation11 + $0x1b8] sm:$0xf]
        %v4553 = vld [vmem:[#allocation11 + $0x1bc] sm:$0xf]
        %v4554 = vld [vmem:[#allocation13] sm:$0x1]
        %v4556 = vlaneseq
        %v4557 = vshrl.u32 %v4556, 7
        %v4558 = vsub.s32 0, %v4557
        %v4559 = vrot.slane %v4554, %v4558
        %v4673 = vunpack.c.l.b16 %v4442
        %v4674 = vunpack.c.l.b16 %v4443
        %v4675 = vunpack.c.l.b16 %v4444
        %v4676 = vunpack.c.l.b16 %v4445
        %v4677 = vunpack.c.l.b16 %v4446
        %v4678 = vunpack.c.l.b16 %v4447
        %v4679 = vunpack.c.l.b16 %v4448
        %v4680 = vunpack.c.l.b16 %v4449
        %v4681 = vunpack.c.l.b16 %v4450
        %v4682 = vunpack.c.l.b16 %v4451
        %v4683 = vunpack.c.l.b16 %v4452
        %v4684 = vunpack.c.l.b16 %v4453
        %v4685 = vunpack.c.l.b16 %v4454
        %v4686 = vunpack.c.l.b16 %v4455
        %v4687 = vunpack.c.l.b16 %v4456
        %v4688 = vunpack.c.l.b16 %v4457
        %v4689 = vunpack.c.l.b16 %v4458
        %v4690 = vunpack.c.l.b16 %v4459
        %v4691 = vunpack.c.l.b16 %v4460
        %v4692 = vunpack.c.l.b16 %v4461
        %v4693 = vunpack.c.l.b16 %v4462
        %v4694 = vunpack.c.l.b16 %v4463
        %v4695 = vunpack.c.l.b16 %v4464
        %v4696 = vunpack.c.l.b16 %v4465
        %v4697 = vunpack.c.l.b16 %v4466
        %v4698 = vunpack.c.l.b16 %v4467
        %v4699 = vunpack.c.l.b16 %v4468
        %v4700 = vunpack.c.l.b16 %v4469
        %v4701 = vunpack.c.l.b16 %v4470
        %v4702 = vunpack.c.l.b16 %v4471
        %v4703 = vunpack.c.l.b16 %v4472
        %v4704 = vunpack.c.l.b16 %v4473
        %v4705 = vunpack.c.l.b16 %v4474
        %v4706 = vunpack.c.l.b16 %v4475
        %v4707 = vunpack.c.l.b16 %v4476
        %v4708 = vunpack.c.l.b16 %v4477
        %v4709 = vunpack.c.l.b16 %v4478
        %v4710 = vunpack.c.l.b16 %v4479
        %v4711 = vunpack.c.l.b16 %v4480
        %v4712 = vunpack.c.l.b16 %v4481
        %v4713 = vunpack.c.l.b16 %v4482
        %v4714 = vunpack.c.l.b16 %v4483
        %v4715 = vunpack.c.l.b16 %v4484
        %v4716 = vunpack.c.l.b16 %v4485
        %v4717 = vunpack.c.l.b16 %v4486
        %v4718 = vunpack.c.l.b16 %v4487
        %v4719 = vunpack.c.l.b16 %v4488
        %v4720 = vunpack.c.l.b16 %v4489
        %v4721 = vunpack.c.l.b16 %v4490
        %v4722 = vunpack.c.l.b16 %v4491
        %v4723 = vunpack.c.l.b16 %v4492
        %v4724 = vunpack.c.l.b16 %v4493
        %v4725 = vunpack.c.l.b16 %v4494
        %v4726 = vunpack.c.l.b16 %v4495
        %v4727 = vunpack.c.l.b16 %v4496
        %v4728 = vunpack.c.l.b16 %v4497
        %v4729 = vunpack.c.l.b16 %v4498
        %v4730 = vunpack.c.l.b16 %v4499
        %v4731 = vunpack.c.l.b16 %v4500
        %v4732 = vunpack.c.l.b16 %v4501
        %v4733 = vunpack.c.l.b16 %v4502
        %v4734 = vunpack.c.l.b16 %v4503
        %v4735 = vunpack.c.l.b16 %v4504
        %v4736 = vunpack.c.l.b16 %v4505
        %v4737 = vunpack.c.l.b16 %v4506
        %v4738 = vunpack.c.l.b16 %v4507
        %v4739 = vunpack.c.l.b16 %v4508
        %v4740 = vunpack.c.l.b16 %v4509
        %v4741 = vunpack.c.l.b16 %v4510
        %v4742 = vunpack.c.l.b16 %v4511
        %v4743 = vunpack.c.l.b16 %v4512
        %v4744 = vunpack.c.l.b16 %v4513
        %v4745 = vunpack.c.l.b16 %v4514
        %v4746 = vunpack.c.l.b16 %v4515
        %v4747 = vunpack.c.l.b16 %v4516
        %v4748 = vunpack.c.l.b16 %v4517
        %v4749 = vunpack.c.l.b16 %v4518
        %v4750 = vunpack.c.l.b16 %v4519
        %v4751 = vunpack.c.l.b16 %v4520
        %v4752 = vunpack.c.l.b16 %v4521
        %v4753 = vunpack.c.l.b16 %v4522
        %v4754 = vunpack.c.l.b16 %v4523
        %v4755 = vunpack.c.l.b16 %v4524
        %v4756 = vunpack.c.l.b16 %v4525
        %v4757 = vunpack.c.l.b16 %v4526
        %v4758 = vunpack.c.l.b16 %v4527
        %v4759 = vunpack.c.l.b16 %v4528
        %v4760 = vunpack.c.l.b16 %v4529
        %v4761 = vunpack.c.l.b16 %v4530
        %v4762 = vunpack.c.l.b16 %v4531
        %v4763 = vunpack.c.l.b16 %v4532
        %v4764 = vunpack.c.l.b16 %v4533
        %v4765 = vunpack.c.l.b16 %v4534
        %v4766 = vunpack.c.l.b16 %v4535
        %v4767 = vunpack.c.l.b16 %v4536
        %v4768 = vunpack.c.l.b16 %v4537
        %v4769 = vunpack.c.l.b16 %v4538
        %v4770 = vunpack.c.l.b16 %v4539
        %v4771 = vunpack.c.l.b16 %v4540
        %v4772 = vunpack.c.l.b16 %v4541
        %v4773 = vunpack.c.l.b16 %v4542
        %v4774 = vunpack.c.l.b16 %v4543
        %v4775 = vunpack.c.l.b16 %v4544
        %v4776 = vunpack.c.l.b16 %v4545
        %v4777 = vunpack.c.l.b16 %v4546
        %v4778 = vunpack.c.l.b16 %v4547
        %v4779 = vunpack.c.l.b16 %v4548
        %v4780 = vunpack.c.l.b16 %v4549
        %v4781 = vunpack.c.l.b16 %v4550
        %v4782 = vunpack.c.l.b16 %v4551
        %v4783 = vunpack.c.l.b16 %v4552
        %v4784 = vunpack.c.l.b16 %v4553
        %v4785 = vpack.c.b16 %v4674, %v4673
        %v4786 = vpack.c.b16 %v4676, %v4675
        %v4787 = vpack.c.b16 %v4678, %v4677
        %v4788 = vpack.c.b16 %v4680, %v4679
        %v4789 = vpack.c.b16 %v4682, %v4681
        %v4790 = vpack.c.b16 %v4684, %v4683
        %v4791 = vpack.c.b16 %v4686, %v4685
        %v4792 = vpack.c.b16 %v4688, %v4687
        %v4793 = vpack.c.b16 %v4690, %v4689
        %v4794 = vpack.c.b16 %v4692, %v4691
        %v4795 = vpack.c.b16 %v4694, %v4693
        %v4796 = vpack.c.b16 %v4696, %v4695
        %v4797 = vpack.c.b16 %v4698, %v4697
        %v4798 = vpack.c.b16 %v4700, %v4699
        %v4799 = vpack.c.b16 %v4702, %v4701
        %v4800 = vpack.c.b16 %v4704, %v4703
        %v4801 = vpack.c.b16 %v4706, %v4705
        %v4802 = vpack.c.b16 %v4708, %v4707
        %v4803 = vpack.c.b16 %v4710, %v4709
        %v4804 = vpack.c.b16 %v4712, %v4711
        %v4805 = vpack.c.b16 %v4714, %v4713
        %v4806 = vpack.c.b16 %v4716, %v4715
        %v4807 = vpack.c.b16 %v4718, %v4717
        %v4808 = vpack.c.b16 %v4720, %v4719
        %v4809 = vpack.c.b16 %v4722, %v4721
        %v4810 = vpack.c.b16 %v4724, %v4723
        %v4811 = vpack.c.b16 %v4726, %v4725
        %v4812 = vpack.c.b16 %v4728, %v4727
        %v4813 = vpack.c.b16 %v4730, %v4729
        %v4814 = vpack.c.b16 %v4732, %v4731
        %v4815 = vpack.c.b16 %v4734, %v4733
        %v4816 = vpack.c.b16 %v4736, %v4735
        %v4817 = vpack.c.b16 %v4738, %v4737
        %v4818 = vpack.c.b16 %v4740, %v4739
        %v4819 = vpack.c.b16 %v4742, %v4741
        %v4820 = vpack.c.b16 %v4744, %v4743
        %v4821 = vpack.c.b16 %v4746, %v4745
        %v4822 = vpack.c.b16 %v4748, %v4747
        %v4823 = vpack.c.b16 %v4750, %v4749
        %v4824 = vpack.c.b16 %v4752, %v4751
        %v4825 = vpack.c.b16 %v4754, %v4753
        %v4826 = vpack.c.b16 %v4756, %v4755
        %v4827 = vpack.c.b16 %v4758, %v4757
        %v4828 = vpack.c.b16 %v4760, %v4759
        %v4829 = vpack.c.b16 %v4762, %v4761
        %v4830 = vpack.c.b16 %v4764, %v4763
        %v4831 = vpack.c.b16 %v4766, %v4765
        %v4832 = vpack.c.b16 %v4768, %v4767
        %v4833 = vpack.c.b16 %v4770, %v4769
        %v4834 = vpack.c.b16 %v4772, %v4771
        %v4835 = vpack.c.b16 %v4774, %v4773
        %v4836 = vpack.c.b16 %v4776, %v4775
        %v4837 = vpack.c.b16 %v4778, %v4777
        %v4838 = vpack.c.b16 %v4780, %v4779
        %v4839 = vpack.c.b16 %v4782, %v4781
        %v4840 = vpack.c.b16 %v4784, %v4783
        %4897 = vmatprep.subr.bf16.mxu0 0
        %4898 = vmatpush1.bf16.msra.mxu0 %v4785
        %4899 = vmatprep.subr.bf16.mxu0 0
        %4900 = vmatpush1.bf16.msra.mxu0 %v4786
        %4901 = vmatprep.subr.bf16.mxu0 0
        %4902 = vmatpush1.bf16.msra.mxu0 %v4787
        %4903 = vmatprep.subr.bf16.mxu0 0
        %4904 = vmatpush1.bf16.msra.mxu0 %v4788
        %4905 = vmatprep.subr.bf16.mxu0 0
        %4906 = vmatpush1.bf16.msra.mxu0 %v4789
        %4907 = vmatprep.subr.bf16.mxu0 0
        %4908 = vmatpush1.bf16.msra.mxu0 %v4790
        %4909 = vmatprep.subr.bf16.mxu0 0
        %4910 = vmatpush1.bf16.msra.mxu0 %v4791
        %4911 = vmatprep.subr.bf16.mxu0 0
        %4912 = vmatpush1.bf16.msra.mxu0 %v4792
        %4913 = vmatprep.subr.bf16.mxu0 0
        %4914 = vmatpush1.bf16.msra.mxu0 %v4793
        %4915 = vmatprep.subr.bf16.mxu0 0
        %4916 = vmatpush1.bf16.msra.mxu0 %v4794
        %4917 = vmatprep.subr.bf16.mxu0 0
        %4918 = vmatpush1.bf16.msra.mxu0 %v4795
        %4919 = vmatprep.subr.bf16.mxu0 0
        %4920 = vmatpush1.bf16.msra.mxu0 %v4796
        %4921 = vmatprep.subr.bf16.mxu0 0
        %4922 = vmatpush1.bf16.msra.mxu0 %v4797
        %4923 = vmatprep.subr.bf16.mxu0 0
        %4924 = vmatpush1.bf16.msra.mxu0 %v4798
        %4925 = vmatprep.subr.bf16.mxu0 0
        %4926 = vmatpush1.bf16.msra.mxu0 %v4799
        %4927 = vmatprep.subr.bf16.mxu0 0
        %4928 = vmatpush1.bf16.msra.mxu0 %v4800
        %4929 = vmatprep.mubr.bf16.mxu0 0
        %4930 = vmatmul.mubr.bf16.gmra.mrb[0].mxu0 0
        %v4931 = vpop.f32.mrb[0].mxu0
        %v4932 = vadd.f32 %v4559, %v4931
        %v4933 = vpop.f32.mrb[0].mxu0
        %v4934 = vpop.f32.mrb[0].mxu0
        %v4935 = vadd.f32 %v4559, %v4934
        %v4936 = vpop.f32.mrb[0].mxu0
        %4937 = vmatprep.mubr.bf16.mxu0 0
        %4938 = vmatmul.mubr.bf16.gmra.mrb[0].mxu0 0
        %v4939 = vpop.f32.mrb[0].mxu0
        %v4940 = vadd.f32 %v4559, %v4939
        %v4941 = vpop.f32.mrb[0].mxu0
        %v4942 = vpop.f32.mrb[0].mxu0
        %v4943 = vadd.f32 %v4559, %v4942
        %v4944 = vpop.f32.mrb[0].mxu0
        %4945 = vmatprep.mubr.bf16.mxu0 %v4426
        %4946 = vmatmul.mubr.bf16.gmra.mrb[0].mxu0 0
        %v4947 = vpop.f32.mrb[0].mxu0
        %v4948 = vadd.f32 %v4559, %v4947
        %v4949 = vpop.f32.mrb[0].mxu0
        %v4950 = vpop.f32.mrb[0].mxu0
        %v4951 = vadd.f32 %v4559, %v4950
        %v4952 = vpop.f32.mrb[0].mxu0
        %4953 = vmatprep.mubr.bf16.mxu0 %v4427
        %4954 = vmatmul.mubr.bf16.gmra.mrb[0].mxu0 %v4426
        %v4955 = vpop.f32.mrb[0].mxu0
        %v4956 = vadd.f32 %v4559, %v4955
        %v4957 = vpop.f32.mrb[0].mxu0
        %v4958 = vpop.f32.mrb[0].mxu0
        %v4959 = vadd.f32 %v4559, %v4958
        %v4960 = vpop.f32.mrb[0].mxu0
        %4961 = vmatprep.mubr.bf16.mxu0 %v4428
        %4962 = vmatmul.mubr.bf16.gmra.mrb[0].mxu0 %v4427
        %v4963 = vpop.f32.mrb[0].mxu0
        %v4964 = vadd.f32 %v4559, %v4963
        %v4965 = vpop.f32.mrb[0].mxu0
        %v4966 = vpop.f32.mrb[0].mxu0
        %v4967 = vadd.f32 %v4559, %v4966
        %v4968 = vpop.f32.mrb[0].mxu0
        %4969 = vmatprep.mubr.bf16.mxu0 %v4429
        %4970 = vmatmul.mubr.bf16.gmra.mrb[0].mxu0 %v4428
        %v4971 = vpop.f32.mrb[0].mxu0
        %v4972 = vadd.f32 %v4559, %v4971
        %v4973 = vpop.f32.mrb[0].mxu0
        %v4974 = vpop.f32.mrb[0].mxu0
        %v4975 = vadd.f32 %v4559, %v4974
        %v4976 = vpop.f32.mrb[0].mxu0
        %4977 = vmatprep.mubr.bf16.mxu0 %v4430
        %4978 = vmatmul.mubr.bf16.gmra.mrb[0].mxu0 %v4429
        %v4979 = vpop.f32.mrb[0].mxu0
        %v4980 = vadd.f32 %v4559, %v4979
        %v4981 = vpop.f32.mrb[0].mxu0
        %v4982 = vpop.f32.mrb[0].mxu0
        %v4983 = vadd.f32 %v4559, %v4982
        %v4984 = vpop.f32.mrb[0].mxu0
        %4985 = vmatprep.mubr.bf16.mxu0 %v4431
        %4986 = vmatmul.mubr.bf16.gmra.mrb[0].mxu0 %v4430
        %v4987 = vpop.f32.mrb[0].mxu0
        %v4988 = vadd.f32 %v4559, %v4987
        %v4989 = vpop.f32.mrb[0].mxu0
        %v4990 = vpop.f32.mrb[0].mxu0
        %v4991 = vadd.f32 %v4559, %v4990
        %v4992 = vpop.f32.mrb[0].mxu0
        %4993 = vmatprep.mubr.bf16.mxu0 %v4432
        %4994 = vmatmul.mubr.bf16.gmra.mrb[0].mxu0 %v4431
        %v4995 = vpop.f32.mrb[0].mxu0
        %v4996 = vadd.f32 %v4559, %v4995
        %v4997 = vpop.f32.mrb[0].mxu0
        %v4998 = vpop.f32.mrb[0].mxu0
        %v4999 = vadd.f32 %v4559, %v4998
        %v5000 = vpop.f32.mrb[0].mxu0
        %5001 = vmatprep.mubr.bf16.mxu0 %v4433
        %5002 = vmatmul.mubr.bf16.gmra.mrb[0].mxu0 %v4432
        %v5003 = vpop.f32.mrb[0].mxu0
        %v5004 = vadd.f32 %v4559, %v5003
        %v5005 = vpop.f32.mrb[0].mxu0
        %v5006 = vpop.f32.mrb[0].mxu0
        %v5007 = vadd.f32 %v4559, %v5006
        %v5008 = vpop.f32.mrb[0].mxu0
        %5009 = vmatprep.mubr.bf16.mxu0 %v4434
        %5010 = vmatmul.mubr.bf16.gmra.mrb[0].mxu0 %v4433
        %v5011 = vpop.f32.mrb[0].mxu0
        %v5012 = vadd.f32 %v4559, %v5011
        %v5013 = vpop.f32.mrb[0].mxu0
        %v5014 = vpop.f32.mrb[0].mxu0
        %v5015 = vadd.f32 %v4559, %v5014
        %v5016 = vpop.f32.mrb[0].mxu0
        %5017 = vmatprep.mubr.bf16.mxu0 %v4435
        %5018 = vmatmul.mubr.bf16.gmra.mrb[0].mxu0 %v4434
        %v5019 = vpop.f32.mrb[0].mxu0
        %v5020 = vadd.f32 %v4559, %v5019
        %v5021 = vpop.f32.mrb[0].mxu0
        %v5022 = vpop.f32.mrb[0].mxu0
        %v5023 = vadd.f32 %v4559, %v5022
        %v5024 = vpop.f32.mrb[0].mxu0
        %5025 = vmatprep.mubr.bf16.mxu0 %v4436
        %5026 = vmatmul.mubr.bf16.gmra.mrb[0].mxu0 %v4435
        %v5027 = vpop.f32.mrb[0].mxu0
        %v5028 = vadd.f32 %v4559, %v5027
        %v5029 = vpop.f32.mrb[0].mxu0
        %v5030 = vpop.f32.mrb[0].mxu0
        %v5031 = vadd.f32 %v4559, %v5030
        %v5032 = vpop.f32.mrb[0].mxu0
        %5033 = vmatprep.mubr.bf16.mxu0 %v4437
        %5034 = vmatmul.mubr.bf16.gmra.mrb[0].mxu0 %v4436
        %v5035 = vpop.f32.mrb[0].mxu0
        %v5036 = vadd.f32 %v4559, %v5035
        %v5037 = vpop.f32.mrb[0].mxu0
        %v5038 = vpop.f32.mrb[0].mxu0
        %v5039 = vadd.f32 %v4559, %v5038
        %v5040 = vpop.f32.mrb[0].mxu0
        %5041 = vmatprep.mubr.bf16.mxu0 %v4438
        %5042 = vmatmul.mubr.bf16.gmra.mrb[0].mxu0 %v4437
        %v5043 = vpop.f32.mrb[0].mxu0
        %v5044 = vadd.f32 %v4559, %v5043
        %v5045 = vpop.f32.mrb[0].mxu0
        %v5046 = vpop.f32.mrb[0].mxu0
        %v5047 = vadd.f32 %v4559, %v5046
        %v5048 = vpop.f32.mrb[0].mxu0
        %5049 = vmatprep.mubr.bf16.mxu0 %v4439
        %5050 = vmatmul.mubr.bf16.gmra.mrb[0].mxu0 %v4438
        %v5051 = vpop.f32.mrb[0].mxu0
        %v5052 = vadd.f32 %v4559, %v5051
        %v5053 = vpop.f32.mrb[0].mxu0
        %v5054 = vpop.f32.mrb[0].mxu0
        %v5055 = vadd.f32 %v4559, %v5054
        %v5056 = vpop.f32.mrb[0].mxu0
        %5057 = vdwg.mxu0
        %5058 = vmatprep.subr.bf16.mxu0 0
        %5059 = vmatpush1.bf16.msra.mxu0 %v4801
        %5060 = vmatprep.subr.bf16.mxu0 0
        %5061 = vmatpush1.bf16.msra.mxu0 %v4802
        %5062 = vmatprep.subr.bf16.mxu0 0
        %5063 = vmatpush1.bf16.msra.mxu0 %v4803
        %5064 = vmatprep.subr.bf16.mxu0 0
        %5065 = vmatpush1.bf16.msra.mxu0 %v4804
        %5066 = vmatprep.subr.bf16.mxu0 0
        %5067 = vmatpush1.bf16.msra.mxu0 %v4805
        %5068 = vmatprep.subr.bf16.mxu0 0
        %5069 = vmatpush1.bf16.msra.mxu0 %v4806
        %5070 = vmatprep.subr.bf16.mxu0 0
        %5071 = vmatpush1.bf16.msra.mxu0 %v4807
        %5072 = vmatprep.subr.bf16.mxu0 0
        %5073 = vmatpush1.bf16.msra.mxu0 %v4808
        %5074 = vmatprep.subr.bf16.mxu0 0
        %5075 = vmatpush1.bf16.msra.mxu0 %v4809
        %5076 = vmatprep.subr.bf16.mxu0 0
        %5077 = vmatpush1.bf16.msra.mxu0 %v4810
        %5078 = vmatprep.subr.bf16.mxu0 0
        %5079 = vmatpush1.bf16.msra.mxu0 %v4811
        %5080 = vmatprep.subr.bf16.mxu0 0
        %5081 = vmatpush1.bf16.msra.mxu0 %v4812
        %5082 = vmatprep.subr.bf16.mxu0 0
        %5083 = vmatpush1.bf16.msra.mxu0 %v4813
        %5084 = vmatprep.subr.bf16.mxu0 0
        %5085 = vmatpush1.bf16.msra.mxu0 %v4814
        %5086 = vmatprep.subr.bf16.mxu0 0
        %5087 = vmatpush1.bf16.msra.mxu0 %v4815
        %5088 = vmatprep.subr.bf16.mxu0 0
        %5089 = vmatpush1.bf16.msra.mxu0 %v4816
        %5090 = vmatprep.mubr.bf16.mxu0 %v4426
        %5091 = vmatmul.mubr.bf16.gmra.mrb[0].mxu0 0
        %v5092 = vpop.f32.mrb[0].mxu0
        %v5093 = vadd.f32 %v4932, %v5092
        %v5094 = vpop.f32.mrb[0].mxu0
        %v5095 = vpop.f32.mrb[0].mxu0
        %v5096 = vadd.f32 %v4935, %v5095
        %v5097 = vpop.f32.mrb[0].mxu0
        %5098 = vmatprep.mubr.bf16.mxu0 %v4427
        %5099 = vmatmul.mubr.bf16.gmra.mrb[0].mxu0 %v4426
        %v5100 = vpop.f32.mrb[0].mxu0
        %v5101 = vadd.f32 %v4940, %v5100
        %v5102 = vpop.f32.mrb[0].mxu0
        %v5103 = vpop.f32.mrb[0].mxu0
        %v5104 = vadd.f32 %v4943, %v5103
        %v5105 = vpop.f32.mrb[0].mxu0
        %5106 = vmatprep.mubr.bf16.mxu0 %v4428
        %5107 = vmatmul.mubr.bf16.gmra.mrb[0].mxu0 %v4427
        %v5108 = vpop.f32.mrb[0].mxu0
        %v5109 = vadd.f32 %v4948, %v5108
        %v5110 = vpop.f32.mrb[0].mxu0
        %v5111 = vpop.f32.mrb[0].mxu0
        %v5112 = vadd.f32 %v4951, %v5111
        %v5113 = vpop.f32.mrb[0].mxu0
        %5114 = vmatprep.mubr.bf16.mxu0 %v4429
        %5115 = vmatmul.mubr.bf16.gmra.mrb[0].mxu0 %v4428
        %v5116 = vpop.f32.mrb[0].mxu0
        %v5117 = vadd.f32 %v4956, %v5116
        %v5118 = vpop.f32.mrb[0].mxu0
        %v5119 = vpop.f32.mrb[0].mxu0
        %v5120 = vadd.f32 %v4959, %v5119
        %v5121 = vpop.f32.mrb[0].mxu0
        %5122 = vmatprep.mubr.bf16.mxu0 %v4430
        %5123 = vmatmul.mubr.bf16.gmra.mrb[0].mxu0 %v4429
        %v5124 = vpop.f32.mrb[0].mxu0
        %v5125 = vadd.f32 %v4964, %v5124
        %v5126 = vpop.f32.mrb[0].mxu0
        %v5127 = vpop.f32.mrb[0].mxu0
        %v5128 = vadd.f32 %v4967, %v5127
        %v5129 = vpop.f32.mrb[0].mxu0
        %5130 = vmatprep.mubr.bf16.mxu0 %v4431
        %5131 = vmatmul.mubr.bf16.gmra.mrb[0].mxu0 %v4430
        %v5132 = vpop.f32.mrb[0].mxu0
        %v5133 = vadd.f32 %v4972, %v5132
        %v5134 = vpop.f32.mrb[0].mxu0
        %v5135 = vpop.f32.mrb[0].mxu0
        %v5136 = vadd.f32 %v4975, %v5135
        %v5137 = vpop.f32.mrb[0].mxu0
        %5138 = vmatprep.mubr.bf16.mxu0 %v4432
        %5139 = vmatmul.mubr.bf16.gmra.mrb[0].mxu0 %v4431
        %v5140 = vpop.f32.mrb[0].mxu0
        %v5141 = vadd.f32 %v4980, %v5140
        %v5142 = vpop.f32.mrb[0].mxu0
        %v5143 = vpop.f32.mrb[0].mxu0
        %v5144 = vadd.f32 %v4983, %v5143
        %v5145 = vpop.f32.mrb[0].mxu0
        %5146 = vmatprep.mubr.bf16.mxu0 %v4433
        %5147 = vmatmul.mubr.bf16.gmra.mrb[0].mxu0 %v4432
        %v5148 = vpop.f32.mrb[0].mxu0
        %v5149 = vadd.f32 %v4988, %v5148
        %v5150 = vpop.f32.mrb[0].mxu0
        %v5151 = vpop.f32.mrb[0].mxu0
        %v5152 = vadd.f32 %v4991, %v5151
        %v5153 = vpop.f32.mrb[0].mxu0
        %5154 = vmatprep.mubr.bf16.mxu0 %v4434
        %5155 = vmatmul.mubr.bf16.gmra.mrb[0].mxu0 %v4433
        %v5156 = vpop.f32.mrb[0].mxu0
        %v5157 = vadd.f32 %v4996, %v5156
        %v5158 = vpop.f32.mrb[0].mxu0
        %v5159 = vpop.f32.mrb[0].mxu0
        %v5160 = vadd.f32 %v4999, %v5159
        %v5161 = vpop.f32.mrb[0].mxu0
        %5162 = vmatprep.mubr.bf16.mxu0 %v4435
        %5163 = vmatmul.mubr.bf16.gmra.mrb[0].mxu0 %v4434
        %v5164 = vpop.f32.mrb[0].mxu0
        %v5165 = vadd.f32 %v5004, %v5164
        %v5166 = vpop.f32.mrb[0].mxu0
        %v5167 = vpop.f32.mrb[0].mxu0
        %v5168 = vadd.f32 %v5007, %v5167
        %v5169 = vpop.f32.mrb[0].mxu0
        %5170 = vmatprep.mubr.bf16.mxu0 %v4436
        %5171 = vmatmul.mubr.bf16.gmra.mrb[0].mxu0 %v4435
        %v5172 = vpop.f32.mrb[0].mxu0
        %v5173 = vadd.f32 %v5012, %v5172
        %v5174 = vpop.f32.mrb[0].mxu0
        %v5175 = vpop.f32.mrb[0].mxu0
        %v5176 = vadd.f32 %v5015, %v5175
        %v5177 = vpop.f32.mrb[0].mxu0
        %5178 = vmatprep.mubr.bf16.mxu0 %v4437
        %5179 = vmatmul.mubr.bf16.gmra.mrb[0].mxu0 %v4436
        %v5180 = vpop.f32.mrb[0].mxu0
        %v5181 = vadd.f32 %v5020, %v5180
        %v5182 = vpop.f32.mrb[0].mxu0
        %v5183 = vpop.f32.mrb[0].mxu0
        %v5184 = vadd.f32 %v5023, %v5183
        %v5185 = vpop.f32.mrb[0].mxu0
        %5186 = vmatprep.mubr.bf16.mxu0 %v4438
        %5187 = vmatmul.mubr.bf16.gmra.mrb[0].mxu0 %v4437
        %v5188 = vpop.f32.mrb[0].mxu0
        %v5189 = vadd.f32 %v5028, %v5188
        %v5190 = vpop.f32.mrb[0].mxu0
        %v5191 = vpop.f32.mrb[0].mxu0
        %v5192 = vadd.f32 %v5031, %v5191
        %v5193 = vpop.f32.mrb[0].mxu0
        %5194 = vmatprep.mubr.bf16.mxu0 %v4439
        %5195 = vmatmul.mubr.bf16.gmra.mrb[0].mxu0 %v4438
        %v5196 = vpop.f32.mrb[0].mxu0
        %v5197 = vadd.f32 %v5036, %v5196
        %v5198 = vpop.f32.mrb[0].mxu0
        %v5199 = vpop.f32.mrb[0].mxu0
        %v5200 = vadd.f32 %v5039, %v5199
        %v5201 = vpop.f32.mrb[0].mxu0
        %5202 = vmatprep.mubr.bf16.mxu0 %v4440
        %5203 = vmatmul.mubr.bf16.gmra.mrb[0].mxu0 %v4439
        %v5204 = vpop.f32.mrb[0].mxu0
        %v5205 = vadd.f32 %v5044, %v5204
        %v5206 = vpop.f32.mrb[0].mxu0
        %v5207 = vpop.f32.mrb[0].mxu0
        %v5208 = vadd.f32 %v5047, %v5207
        %v5209 = vpop.f32.mrb[0].mxu0
        %5210 = vmatprep.mubr.bf16.mxu0 %v4441
        %5211 = vmatmul.mubr.bf16.gmra.mrb[0].mxu0 %v4440
        %v5212 = vpop.f32.mrb[0].mxu0
        %v5213 = vadd.f32 %v5052, %v5212
        %v5214 = vpop.f32.mrb[0].mxu0
        %v5215 = vpop.f32.mrb[0].mxu0
        %v5216 = vadd.f32 %v5055, %v5215
        %v5217 = vpop.f32.mrb[0].mxu0
        %5218 = vdwg.mxu0
        %5219 = vmatprep.subr.bf16.mxu0 0
        %5220 = vmatpush1.bf16.msra.mxu0 %v4817
        %5221 = vmatprep.subr.bf16.mxu0 0
        %5222 = vmatpush1.bf16.msra.mxu0 %v4818
        %5223 = vmatprep.subr.bf16.mxu0 0
        %5224 = vmatpush1.bf16.msra.mxu0 %v4819
        %5225 = vmatprep.subr.bf16.mxu0 0
        %5226 = vmatpush1.bf16.msra.mxu0 %v4820
        %5227 = vmatprep.subr.bf16.mxu0 0
        %5228 = vmatpush1.bf16.msra.mxu0 %v4821
        %5229 = vmatprep.subr.bf16.mxu0 0
        %5230 = vmatpush1.bf16.msra.mxu0 %v4822
        %5231 = vmatprep.subr.bf16.mxu0 0
        %5232 = vmatpush1.bf16.msra.mxu0 %v4823
        %5233 = vmatprep.subr.bf16.mxu0 0
        %5234 = vmatpush1.bf16.msra.mxu0 %v4824
        %5235 = vmatprep.subr.bf16.mxu0 0
        %5236 = vmatpush1.bf16.msra.mxu0 %v4825
        %5237 = vmatprep.subr.bf16.mxu0 0
        %5238 = vmatpush1.bf16.msra.mxu0 %v4826
        %5239 = vmatprep.subr.bf16.mxu0 0
        %5240 = vmatpush1.bf16.msra.mxu0 %v4827
        %5241 = vmatprep.subr.bf16.mxu0 0
        %5242 = vmatpush1.bf16.msra.mxu0 %v4828
        %5243 = vmatprep.subr.bf16.mxu0 0
        %5244 = vmatpush1.bf16.msra.mxu0 %v4829
        %5245 = vmatprep.subr.bf16.mxu0 0
        %5246 = vmatpush1.bf16.msra.mxu0 %v4830
        %5247 = vmatprep.subr.bf16.mxu0 0
        %5248 = vmatpush1.bf16.msra.mxu0 %v4831
        %5249 = vmatprep.subr.bf16.mxu0 0
        %5250 = vmatpush1.bf16.msra.mxu0 %v4832
        %5251 = vmatprep.mubr.bf16.mxu0 %v4428
        %5252 = vmatmul.mubr.bf16.gmra.mrb[0].mxu0 %v4427
        %v5253 = vpop.f32.mrb[0].mxu0
        %v5254 = vadd.f32 %v5093, %v5253
        %v5255 = vpop.f32.mrb[0].mxu0
        %v5256 = vpop.f32.mrb[0].mxu0
        %v5257 = vadd.f32 %v5096, %v5256
        %v5258 = vpop.f32.mrb[0].mxu0
        %5259 = vmatprep.mubr.bf16.mxu0 %v4429
        %5260 = vmatmul.mubr.bf16.gmra.mrb[0].mxu0 %v4428
        %v5261 = vpop.f32.mrb[0].mxu0
        %v5262 = vadd.f32 %v5101, %v5261
        %v5263 = vpop.f32.mrb[0].mxu0
        %v5264 = vpop.f32.mrb[0].mxu0
        %v5265 = vadd.f32 %v5104, %v5264
        %v5266 = vpop.f32.mrb[0].mxu0
        %5267 = vmatprep.mubr.bf16.mxu0 %v4430
        %5268 = vmatmul.mubr.bf16.gmra.mrb[0].mxu0 %v4429
        %v5269 = vpop.f32.mrb[0].mxu0
        %v5270 = vadd.f32 %v5109, %v5269
        %v5271 = vpop.f32.mrb[0].mxu0
        %v5272 = vpop.f32.mrb[0].mxu0
        %v5273 = vadd.f32 %v5112, %v5272
        %v5274 = vpop.f32.mrb[0].mxu0
        %5275 = vmatprep.mubr.bf16.mxu0 %v4431
        %5276 = vmatmul.mubr.bf16.gmra.mrb[0].mxu0 %v4430
        %v5277 = vpop.f32.mrb[0].mxu0
        %v5278 = vadd.f32 %v5117, %v5277
        %v5279 = vpop.f32.mrb[0].mxu0
        %v5280 = vpop.f32.mrb[0].mxu0
        %v5281 = vadd.f32 %v5120, %v5280
        %v5282 = vpop.f32.mrb[0].mxu0
        %5283 = vmatprep.mubr.bf16.mxu0 %v4432
        %5284 = vmatmul.mubr.bf16.gmra.mrb[0].mxu0 %v4431
        %v5285 = vpop.f32.mrb[0].mxu0
        %v5286 = vadd.f32 %v5125, %v5285
        %v5287 = vpop.f32.mrb[0].mxu0
        %v5288 = vpop.f32.mrb[0].mxu0
        %v5289 = vadd.f32 %v5128, %v5288
        %v5290 = vpop.f32.mrb[0].mxu0
        %5291 = vmatprep.mubr.bf16.mxu0 %v4433
        %5292 = vmatmul.mubr.bf16.gmra.mrb[0].mxu0 %v4432
        %v5293 = vpop.f32.mrb[0].mxu0
        %v5294 = vadd.f32 %v5133, %v5293
        %v5295 = vpop.f32.mrb[0].mxu0
        %v5296 = vpop.f32.mrb[0].mxu0
        %v5297 = vadd.f32 %v5136, %v5296
        %v5298 = vpop.f32.mrb[0].mxu0
        %5299 = vmatprep.mubr.bf16.mxu0 %v4434
        %5300 = vmatmul.mubr.bf16.gmra.mrb[0].mxu0 %v4433
        %v5301 = vpop.f32.mrb[0].mxu0
        %v5302 = vadd.f32 %v5141, %v5301
        %v5303 = vpop.f32.mrb[0].mxu0
        %v5304 = vpop.f32.mrb[0].mxu0
        %v5305 = vadd.f32 %v5144, %v5304
        %v5306 = vpop.f32.mrb[0].mxu0
        %5307 = vmatprep.mubr.bf16.mxu0 %v4435
        %5308 = vmatmul.mubr.bf16.gmra.mrb[0].mxu0 %v4434
        %v5309 = vpop.f32.mrb[0].mxu0
        %v5310 = vadd.f32 %v5149, %v5309
        %v5311 = vpop.f32.mrb[0].mxu0
        %v5312 = vpop.f32.mrb[0].mxu0
        %v5313 = vadd.f32 %v5152, %v5312
        %v5314 = vpop.f32.mrb[0].mxu0
        %5315 = vmatprep.mubr.bf16.mxu0 %v4436
        %5316 = vmatmul.mubr.bf16.gmra.mrb[0].mxu0 %v4435
        %v5317 = vpop.f32.mrb[0].mxu0
        %v5318 = vadd.f32 %v5157, %v5317
        %v5319 = vpop.f32.mrb[0].mxu0
        %v5320 = vpop.f32.mrb[0].mxu0
        %v5321 = vadd.f32 %v5160, %v5320
        %v5322 = vpop.f32.mrb[0].mxu0
        %5323 = vmatprep.mubr.bf16.mxu0 %v4437
        %5324 = vmatmul.mubr.bf16.gmra.mrb[0].mxu0 %v4436
        %v5325 = vpop.f32.mrb[0].mxu0
        %v5326 = vadd.f32 %v5165, %v5325
        %v5327 = vpop.f32.mrb[0].mxu0
        %v5328 = vpop.f32.mrb[0].mxu0
        %v5329 = vadd.f32 %v5168, %v5328
        %v5330 = vpop.f32.mrb[0].mxu0
        %5331 = vmatprep.mubr.bf16.mxu0 %v4438
        %5332 = vmatmul.mubr.bf16.gmra.mrb[0].mxu0 %v4437
        %v5333 = vpop.f32.mrb[0].mxu0
        %v5334 = vadd.f32 %v5173, %v5333
        %v5335 = vpop.f32.mrb[0].mxu0
        %v5336 = vpop.f32.mrb[0].mxu0
        %v5337 = vadd.f32 %v5176, %v5336
        %v5338 = vpop.f32.mrb[0].mxu0
        %5339 = vmatprep.mubr.bf16.mxu0 %v4439
        %5340 = vmatmul.mubr.bf16.gmra.mrb[0].mxu0 %v4438
        %v5341 = vpop.f32.mrb[0].mxu0
        %v5342 = vadd.f32 %v5181, %v5341
        %v5343 = vpop.f32.mrb[0].mxu0
        %v5344 = vpop.f32.mrb[0].mxu0
        %v5345 = vadd.f32 %v5184, %v5344
        %v5346 = vpop.f32.mrb[0].mxu0
        %5347 = vmatprep.mubr.bf16.mxu0 %v4440
        %5348 = vmatmul.mubr.bf16.gmra.mrb[0].mxu0 %v4439
        %v5349 = vpop.f32.mrb[0].mxu0
        %v5350 = vadd.f32 %v5189, %v5349
        %v5351 = vpop.f32.mrb[0].mxu0
        %v5352 = vpop.f32.mrb[0].mxu0
        %v5353 = vadd.f32 %v5192, %v5352
        %v5354 = vpop.f32.mrb[0].mxu0
        %5355 = vmatprep.mubr.bf16.mxu0 %v4441
        %5356 = vmatmul.mubr.bf16.gmra.mrb[0].mxu0 %v4440
        %v5357 = vpop.f32.mrb[0].mxu0
        %v5358 = vadd.f32 %v5197, %v5357
        %v5359 = vpop.f32.mrb[0].mxu0
        %v5360 = vpop.f32.mrb[0].mxu0
        %v5361 = vadd.f32 %v5200, %v5360
        %v5362 = vpop.f32.mrb[0].mxu0
        %5363 = vmatprep.mubr.bf16.mxu0 0
        %5364 = vmatmul.mubr.bf16.gmra.mrb[0].mxu0 %v4441
        %v5365 = vpop.f32.mrb[0].mxu0
        %v5366 = vadd.f32 %v5205, %v5365
        %v5367 = vpop.f32.mrb[0].mxu0
        %v5368 = vpop.f32.mrb[0].mxu0
        %v5369 = vadd.f32 %v5208, %v5368
        %v5370 = vpop.f32.mrb[0].mxu0
        %5371 = vmatprep.mubr.bf16.mxu0 0
        %5372 = vmatmul.mubr.bf16.gmra.mrb[0].mxu0 0
        %v5373 = vpop.f32.mrb[0].mxu0
        %v5374 = vadd.f32 %v5213, %v5373
        %v5375 = vpop.f32.mrb[0].mxu0
        %v5376 = vpop.f32.mrb[0].mxu0
        %v5377 = vadd.f32 %v5216, %v5376
        %v5378 = vpop.f32.mrb[0].mxu0
        %5379 = vdwg.mxu0
        %5380 = vmatprep.subr.bf16.mxu0 0
        %5381 = vmatpush1.bf16.msra.mxu0 %v4833
        %5382 = vmatprep.subr.bf16.mxu0 0
        %5383 = vmatpush1.bf16.msra.mxu0 %v4834
        %5384 = vmatprep.subr.bf16.mxu0 0
        %5385 = vmatpush1.bf16.msra.mxu0 %v4835
        %5386 = vmatprep.subr.bf16.mxu0 0
        %5387 = vmatpush1.bf16.msra.mxu0 %v4836
        %5388 = vmatprep.subr.bf16.mxu0 0
        %5389 = vmatpush1.bf16.msra.mxu0 %v4837
        %5390 = vmatprep.subr.bf16.mxu0 0
        %5391 = vmatpush1.bf16.msra.mxu0 %v4838
        %5392 = vmatprep.subr.bf16.mxu0 0
        %5393 = vmatpush1.bf16.msra.mxu0 %v4839
        %5394 = vmatprep.subr.bf16.mxu0 0
        %5395 = vmatpush1.bf16.msra.mxu0 %v4840
        %5396 = vmatprep.subr.bf16.mxu0 0
        %5397 = vmatpush1.bf16.msra.mxu0 0
        %5398 = vmatprep.subr.bf16.mxu0 0
        %5399 = vmatpush1.bf16.msra.mxu0 0
        %5400 = vmatprep.subr.bf16.mxu0 0
        %5401 = vmatpush1.bf16.msra.mxu0 0
        %5402 = vmatprep.subr.bf16.mxu0 0
        %5403 = vmatpush1.bf16.msra.mxu0 0
        %5404 = vmatprep.subr.bf16.mxu0 0
        %5405 = vmatpush1.bf16.msra.mxu0 0
        %5406 = vmatprep.subr.bf16.mxu0 0
        %5407 = vmatpush1.bf16.msra.mxu0 0
        %5408 = vmatprep.subr.bf16.mxu0 0
        %5409 = vmatpush1.bf16.msra.mxu0 0
        %5410 = vmatprep.subr.bf16.mxu0 0
        %5411 = vmatpush1.bf16.msra.mxu0 0
        %5412 = vmatprep.mubr.bf16.mxu0 0
        %5413 = vmatmul.mubr.bf16.gmra.mrb[0].mxu0 %v4429
        %v5414 = vpop.f32.mrb[0].mxu0
        %v5415 = vadd.f32 %v5254, %v5414
        %v5416 = vpop.f32.mrb[0].mxu0
        %v5417 = vpop.f32.mrb[0].mxu0
        %v5418 = vadd.f32 %v5257, %v5417
        %v5419 = vpop.f32.mrb[0].mxu0
        %5420 = vmatprep.mubr.bf16.mxu0 0
        %5421 = vmatmul.mubr.bf16.gmra.mrb[0].mxu0 %v4430
        %v5422 = vpop.f32.mrb[0].mxu0
        %v5423 = vadd.f32 %v5262, %v5422
        %v5424 = vpop.f32.mrb[0].mxu0
        %v5425 = vpop.f32.mrb[0].mxu0
        %v5426 = vadd.f32 %v5265, %v5425
        %v5427 = vpop.f32.mrb[0].mxu0
        %5428 = vmatprep.mubr.bf16.mxu0 0
        %5429 = vmatmul.mubr.bf16.gmra.mrb[0].mxu0 %v4431
        %v5430 = vpop.f32.mrb[0].mxu0
        %v5431 = vadd.f32 %v5270, %v5430
        %v5432 = vpop.f32.mrb[0].mxu0
        %v5433 = vpop.f32.mrb[0].mxu0
        %v5434 = vadd.f32 %v5273, %v5433
        %v5435 = vpop.f32.mrb[0].mxu0
        %5436 = vmatprep.mubr.bf16.mxu0 0
        %5437 = vmatmul.mubr.bf16.gmra.mrb[0].mxu0 %v4432
        %v5438 = vpop.f32.mrb[0].mxu0
        %v5439 = vadd.f32 %v5278, %v5438
        %v5440 = vpop.f32.mrb[0].mxu0
        %v5441 = vpop.f32.mrb[0].mxu0
        %v5442 = vadd.f32 %v5281, %v5441
        %v5443 = vpop.f32.mrb[0].mxu0
        %5444 = vmatprep.mubr.bf16.mxu0 0
        %5445 = vmatmul.mubr.bf16.gmra.mrb[0].mxu0 %v4433
        %v5446 = vpop.f32.mrb[0].mxu0
        %v5447 = vadd.f32 %v5286, %v5446
        %v5448 = vpop.f32.mrb[0].mxu0
        %v5449 = vpop.f32.mrb[0].mxu0
        %v5450 = vadd.f32 %v5289, %v5449
        %v5451 = vpop.f32.mrb[0].mxu0
        %5452 = vmatprep.mubr.bf16.mxu0 0
        %5453 = vmatmul.mubr.bf16.gmra.mrb[0].mxu0 %v4434
        %v5454 = vpop.f32.mrb[0].mxu0
        %v5455 = vadd.f32 %v5294, %v5454
        %v5456 = vpop.f32.mrb[0].mxu0
        %v5457 = vpop.f32.mrb[0].mxu0
        %v5458 = vadd.f32 %v5297, %v5457
        %v5459 = vpop.f32.mrb[0].mxu0
        %5460 = vmatprep.mubr.bf16.mxu0 0
        %5461 = vmatmul.mubr.bf16.gmra.mrb[0].mxu0 %v4435
        %v5462 = vpop.f32.mrb[0].mxu0
        %v5463 = vadd.f32 %v5302, %v5462
        %v5464 = vpop.f32.mrb[0].mxu0
        %v5465 = vpop.f32.mrb[0].mxu0
        %v5466 = vadd.f32 %v5305, %v5465
        %v5467 = vpop.f32.mrb[0].mxu0
        %5468 = vmatprep.mubr.bf16.mxu0 0
        %5469 = vmatmul.mubr.bf16.gmra.mrb[0].mxu0 %v4436
        %v5470 = vpop.f32.mrb[0].mxu0
        %v5471 = vadd.f32 %v5310, %v5470
        %v5472 = vpop.f32.mrb[0].mxu0
        %v5473 = vpop.f32.mrb[0].mxu0
        %v5474 = vadd.f32 %v5313, %v5473
        %v5475 = vpop.f32.mrb[0].mxu0
        %5476 = vmatprep.mubr.bf16.mxu0 0
        %5477 = vmatmul.mubr.bf16.gmra.mrb[0].mxu0 %v4437
        %v5478 = vpop.f32.mrb[0].mxu0
        %v5479 = vadd.f32 %v5318, %v5478
        %v5480 = vpop.f32.mrb[0].mxu0
        %v5481 = vpop.f32.mrb[0].mxu0
        %v5482 = vadd.f32 %v5321, %v5481
        %v5483 = vpop.f32.mrb[0].mxu0
        %5484 = vmatprep.mubr.bf16.mxu0 0
        %5485 = vmatmul.mubr.bf16.gmra.mrb[0].mxu0 %v4438
        %v5486 = vpop.f32.mrb[0].mxu0
        %v5487 = vadd.f32 %v5326, %v5486
        %v5488 = vpop.f32.mrb[0].mxu0
        %v5489 = vpop.f32.mrb[0].mxu0
        %v5490 = vadd.f32 %v5329, %v5489
        %v5491 = vpop.f32.mrb[0].mxu0
        %5492 = vmatprep.mubr.bf16.mxu0 0
        %5493 = vmatmul.mubr.bf16.gmra.mrb[0].mxu0 %v4439
        %v5494 = vpop.f32.mrb[0].mxu0
        %v5495 = vadd.f32 %v5334, %v5494
        %v5496 = vpop.f32.mrb[0].mxu0
        %v5497 = vpop.f32.mrb[0].mxu0
        %v5498 = vadd.f32 %v5337, %v5497
        %v5499 = vpop.f32.mrb[0].mxu0
        %5500 = vmatprep.mubr.bf16.mxu0 0
        %5501 = vmatmul.mubr.bf16.gmra.mrb[0].mxu0 %v4440
        %v5502 = vpop.f32.mrb[0].mxu0
        %v5503 = vadd.f32 %v5342, %v5502
        %v5504 = vpop.f32.mrb[0].mxu0
        %v5505 = vpop.f32.mrb[0].mxu0
        %v5506 = vadd.f32 %v5345, %v5505
        %v5507 = vpop.f32.mrb[0].mxu0
        %5508 = vmatprep.mubr.bf16.mxu0 0
        %5509 = vmatmul.mubr.bf16.gmra.mrb[0].mxu0 %v4441
        %v5510 = vpop.f32.mrb[0].mxu0
        %v5511 = vadd.f32 %v5350, %v5510
        %v5512 = vpop.f32.mrb[0].mxu0
        %v5513 = vpop.f32.mrb[0].mxu0
        %v5514 = vadd.f32 %v5353, %v5513
        %v5515 = vpop.f32.mrb[0].mxu0
        %5516 = vmatprep.mubr.bf16.mxu0 0
        %5517 = vmatmul.mubr.bf16.gmra.mrb[0].mxu0 0
        %v5518 = vpop.f32.mrb[0].mxu0
        %v5519 = vadd.f32 %v5358, %v5518
        %v5520 = vpop.f32.mrb[0].mxu0
        %v5521 = vpop.f32.mrb[0].mxu0
        %v5522 = vadd.f32 %v5361, %v5521
        %v5523 = vpop.f32.mrb[0].mxu0
        %5524 = vmatprep.mubr.bf16.mxu0 0
        %5525 = vmatmul.mubr.bf16.gmra.mrb[0].mxu0 0
        %v5526 = vpop.f32.mrb[0].mxu0
        %v5527 = vadd.f32 %v5366, %v5526
        %v5528 = vpop.f32.mrb[0].mxu0
        %v5529 = vpop.f32.mrb[0].mxu0
        %v5530 = vadd.f32 %v5369, %v5529
        %v5531 = vpop.f32.mrb[0].mxu0
        %5532 = vmatprep.mubr.bf16.mxu0 0
        %5533 = vmatmul.mubr.bf16.gmra.mrb[0].mxu0 0
        %v5534 = vpop.f32.mrb[0].mxu0
        %v5535 = vadd.f32 %v5374, %v5534
        %v5536 = vpop.f32.mrb[0].mxu0
        %v5537 = vpop.f32.mrb[0].mxu0
        %v5538 = vadd.f32 %v5377, %v5537
        %v5539 = vpop.f32.mrb[0].mxu0
        %5540 = vdwg.mxu0
        %v5541 = vmax.f32 %v5415, 0.0
        %v5542 = vmax.f32 %v5418, 0.0
        %v5543 = vmax.f32 %v5423, 0.0
        %v5544 = vmax.f32 %v5426, 0.0
        %v5545 = vmax.f32 %v5431, 0.0
        %v5546 = vmax.f32 %v5434, 0.0
        %v5547 = vmax.f32 %v5439, 0.0
        %v5548 = vmax.f32 %v5442, 0.0
        %v5549 = vmax.f32 %v5447, 0.0
        %v5550 = vmax.f32 %v5450, 0.0
        %v5551 = vmax.f32 %v5455, 0.0
        %v5552 = vmax.f32 %v5458, 0.0
        %v5553 = vmax.f32 %v5463, 0.0
        %v5554 = vmax.f32 %v5466, 0.0
        %v5555 = vmax.f32 %v5471, 0.0
        %v5556 = vmax.f32 %v5474, 0.0
        %v5557 = vmax.f32 %v5479, 0.0
        %v5558 = vmax.f32 %v5482, 0.0
        %v5559 = vmax.f32 %v5487, 0.0
        %v5560 = vmax.f32 %v5490, 0.0
        %v5561 = vmax.f32 %v5495, 0.0
        %v5562 = vmax.f32 %v5498, 0.0
        %v5563 = vmax.f32 %v5503, 0.0
        %v5564 = vmax.f32 %v5506, 0.0
        %v5565 = vmax.f32 %v5511, 0.0
        %v5566 = vmax.f32 %v5514, 0.0
        %v5567 = vmax.f32 %v5519, 0.0
        %v5568 = vmax.f32 %v5522, 0.0
        %v5569 = vmax.f32 %v5527, 0.0
        %v5570 = vmax.f32 %v5530, 0.0
        %v5571 = vmax.f32 %v5535, 0.0
        %v5572 = vmax.f32 %v5538, 0.0
        %v5573 = vpack.c.bf16 %v5542, %v5541
        %v5574 = vpack.c.bf16 %v5544, %v5543
        %v5575 = vpack.c.bf16 %v5546, %v5545
        %v5576 = vpack.c.bf16 %v5548, %v5547
        %v5577 = vpack.c.bf16 %v5550, %v5549
        %v5578 = vpack.c.bf16 %v5552, %v5551
        %v5579 = vpack.c.bf16 %v5554, %v5553
        %v5580 = vpack.c.bf16 %v5556, %v5555
        %v5581 = vpack.c.bf16 %v5558, %v5557
        %v5582 = vpack.c.bf16 %v5560, %v5559
        %v5583 = vpack.c.bf16 %v5562, %v5561
        %v5584 = vpack.c.bf16 %v5564, %v5563
        %v5585 = vpack.c.bf16 %v5566, %v5565
        %v5586 = vpack.c.bf16 %v5568, %v5567
        %v5587 = vpack.c.bf16 %v5570, %v5569
        %v5588 = vpack.c.bf16 %v5572, %v5571
        %v5589 = vld [vmem:[#allocation14] sm:$0xff]
        %v5590 = vld [vmem:[#allocation14 + $0x8] sm:$0xff]
        %v5591 = vld [vmem:[#allocation14 + $0x10] sm:$0xff]
        %v5592 = vld [vmem:[#allocation14 + $0x18] sm:$0xf]
        %v5593 = vld [vmem:[#allocation14 + $0x1c] sm:$0xff]
        %v5594 = vld [vmem:[#allocation14 + $0x24] sm:$0xff]
        %v5595 = vld [vmem:[#allocation14 + $0x2c] sm:$0xff]
        %v5596 = vld [vmem:[#allocation14 + $0x34] sm:$0xf]
        %v5597 = vld [vmem:[#allocation14 + $0x38] sm:$0xff]
        %v5598 = vld [vmem:[#allocation14 + $0x40] sm:$0xff]
        %v5599 = vld [vmem:[#allocation14 + $0x48] sm:$0xff]
        %v5600 = vld [vmem:[#allocation14 + $0x50] sm:$0xf]
        %v5601 = vld [vmem:[#allocation14 + $0x54] sm:$0xff]
        %v5602 = vld [vmem:[#allocation14 + $0x5c] sm:$0xff]
        %v5603 = vld [vmem:[#allocation14 + $0x64] sm:$0xff]
        %v5604 = vld [vmem:[#allocation14 + $0x6c] sm:$0xf]
        %v5605 = vld [vmem:[#allocation14 + $0x70] sm:$0xff]
        %v5606 = vld [vmem:[#allocation14 + $0x78] sm:$0xff]
        %v5607 = vld [vmem:[#allocation14 + $0x80] sm:$0xff]
        %v5608 = vld [vmem:[#allocation14 + $0x88] sm:$0xf]
        %v5609 = vld [vmem:[#allocation14 + $0x8c] sm:$0xff]
        %v5610 = vld [vmem:[#allocation14 + $0x94] sm:$0xff]
        %v5611 = vld [vmem:[#allocation14 + $0x9c] sm:$0xff]
        %v5612 = vld [vmem:[#allocation14 + $0xa4] sm:$0xf]
        %v5613 = vld [vmem:[#allocation14 + $0xa8] sm:$0xff]
        %v5614 = vld [vmem:[#allocation14 + $0xb0] sm:$0xff]
        %v5615 = vld [vmem:[#allocation14 + $0xb8] sm:$0xff]
        %v5616 = vld [vmem:[#allocation14 + $0xc0] sm:$0xf]
        %v5617 = vld [vmem:[#allocation14 + $0xc4] sm:$0xff]
        %v5618 = vld [vmem:[#allocation14 + $0xcc] sm:$0xff]
        %v5619 = vld [vmem:[#allocation14 + $0xd4] sm:$0xff]
        %v5620 = vld [vmem:[#allocation14 + $0xdc] sm:$0xf]
        %v5621 = vld [vmem:[#allocation14 + $0xe0] sm:$0xff]
        %v5622 = vld [vmem:[#allocation14 + $0xe8] sm:$0xff]
        %v5623 = vld [vmem:[#allocation14 + $0xf0] sm:$0xff]
        %v5624 = vld [vmem:[#allocation14 + $0xf8] sm:$0xf]
        %v5625 = vld [vmem:[#allocation14 + $0xfc] sm:$0xff]
        %v5626 = vld [vmem:[#allocation14 + $0x104] sm:$0xff]
        %v5627 = vld [vmem:[#allocation14 + $0x10c] sm:$0xff]
        %v5628 = vld [vmem:[#allocation14 + $0x114] sm:$0xf]
        %v5629 = vld [vmem:[#allocation14 + $0x118] sm:$0xff]
        %v5630 = vld [vmem:[#allocation14 + $0x120] sm:$0xff]
        %v5631 = vld [vmem:[#allocation14 + $0x128] sm:$0xff]
        %v5632 = vld [vmem:[#allocation14 + $0x130] sm:$0xf]
        %v5633 = vld [vmem:[#allocation14 + $0x134] sm:$0xff]
        %v5634 = vld [vmem:[#allocation14 + $0x13c] sm:$0xff]
        %v5635 = vld [vmem:[#allocation14 + $0x144] sm:$0xff]
        %v5636 = vld [vmem:[#allocation14 + $0x14c] sm:$0xf]
        %v5637 = vld [vmem:[#allocation14 + $0x150] sm:$0xff]
        %v5638 = vld [vmem:[#allocation14 + $0x158] sm:$0xff]
        %v5639 = vld [vmem:[#allocation14 + $0x160] sm:$0xff]
        %v5640 = vld [vmem:[#allocation14 + $0x168] sm:$0xf]
        %v5641 = vld [vmem:[#allocation14 + $0x16c] sm:$0xff]
        %v5642 = vld [vmem:[#allocation14 + $0x174] sm:$0xff]
        %v5643 = vld [vmem:[#allocation14 + $0x17c] sm:$0xff]
        %v5644 = vld [vmem:[#allocation14 + $0x184] sm:$0xf]
        %v5645 = vld [vmem:[#allocation14 + $0x188] sm:$0xff]
        %v5646 = vld [vmem:[#allocation14 + $0x190] sm:$0xff]
        %v5647 = vld [vmem:[#allocation14 + $0x198] sm:$0xff]
        %v5648 = vld [vmem:[#allocation14 + $0x1a0] sm:$0xf]
        %v5649 = vld [vmem:[#allocation14 + $0x1a4] sm:$0xff]
        %v5650 = vld [vmem:[#allocation14 + $0x1ac] sm:$0xff]
        %v5651 = vld [vmem:[#allocation14 + $0x1b4] sm:$0xff]
        %v5652 = vld [vmem:[#allocation14 + $0x1bc] sm:$0xf]
        %v5653 = vld [vmem:[#allocation16] sm:$0xff]
        %v5654 = vld [vmem:[#allocation16 + $0x8] sm:$0xff]
        %v5655 = vld [vmem:[#allocation16 + $0x10] sm:$0xff]
        %v5656 = vld [vmem:[#allocation16 + $0x18] sm:$0xf]
        %v5657 = vld [vmem:[#allocation16 + $0x1c] sm:$0xff]
        %v5658 = vld [vmem:[#allocation16 + $0x24] sm:$0xff]
        %v5659 = vld [vmem:[#allocation16 + $0x2c] sm:$0xff]
        %v5660 = vld [vmem:[#allocation16 + $0x34] sm:$0xf]
        %v5661 = vld [vmem:[#allocation16 + $0x38] sm:$0xff]
        %v5662 = vld [vmem:[#allocation16 + $0x40] sm:$0xff]
        %v5663 = vld [vmem:[#allocation16 + $0x48] sm:$0xff]
        %v5664 = vld [vmem:[#allocation16 + $0x50] sm:$0xf]
        %v5665 = vld [vmem:[#allocation16 + $0x54] sm:$0xff]
        %v5666 = vld [vmem:[#allocation16 + $0x5c] sm:$0xff]
        %v5667 = vld [vmem:[#allocation16 + $0x64] sm:$0xff]
        %v5668 = vld [vmem:[#allocation16 + $0x6c] sm:$0xf]
        %v5669 = vld [vmem:[#allocation16 + $0x70] sm:$0xff]
        %v5670 = vld [vmem:[#allocation16 + $0x78] sm:$0xff]
        %v5671 = vld [vmem:[#allocation16 + $0x80] sm:$0xff]
        %v5672 = vld [vmem:[#allocation16 + $0x88] sm:$0xf]
        %v5673 = vld [vmem:[#allocation16 + $0x8c] sm:$0xff]
        %v5674 = vld [vmem:[#allocation16 + $0x94] sm:$0xff]
        %v5675 = vld [vmem:[#allocation16 + $0x9c] sm:$0xff]
        %v5676 = vld [vmem:[#allocation16 + $0xa4] sm:$0xf]
        %v5677 = vld [vmem:[#allocation16 + $0xa8] sm:$0xff]
        %v5678 = vld [vmem:[#allocation16 + $0xb0] sm:$0xff]
        %v5679 = vld [vmem:[#allocation16 + $0xb8] sm:$0xff]
        %v5680 = vld [vmem:[#allocation16 + $0xc0] sm:$0xf]
        %v5681 = vld [vmem:[#allocation16 + $0xc4] sm:$0xff]
        %v5682 = vld [vmem:[#allocation16 + $0xcc] sm:$0xff]
        %v5683 = vld [vmem:[#allocation16 + $0xd4] sm:$0xff]
        %v5684 = vld [vmem:[#allocation16 + $0xdc] sm:$0xf]
        %v5685 = vld [vmem:[#allocation16 + $0xe0] sm:$0xff]
        %v5686 = vld [vmem:[#allocation16 + $0xe8] sm:$0xff]
        %v5687 = vld [vmem:[#allocation16 + $0xf0] sm:$0xff]
        %v5688 = vld [vmem:[#allocation16 + $0xf8] sm:$0xf]
        %v5689 = vld [vmem:[#allocation16 + $0xfc] sm:$0xff]
        %v5690 = vld [vmem:[#allocation16 + $0x104] sm:$0xff]
        %v5691 = vld [vmem:[#allocation16 + $0x10c] sm:$0xff]
        %v5692 = vld [vmem:[#allocation16 + $0x114] sm:$0xf]
        %v5693 = vld [vmem:[#allocation16 + $0x118] sm:$0xff]
        %v5694 = vld [vmem:[#allocation16 + $0x120] sm:$0xff]
        %v5695 = vld [vmem:[#allocation16 + $0x128] sm:$0xff]
        %v5696 = vld [vmem:[#allocation16 + $0x130] sm:$0xf]
        %v5697 = vld [vmem:[#allocation16 + $0x134] sm:$0xff]
        %v5698 = vld [vmem:[#allocation16 + $0x13c] sm:$0xff]
        %v5699 = vld [vmem:[#allocation16 + $0x144] sm:$0xff]
        %v5700 = vld [vmem:[#allocation16 + $0x14c] sm:$0xf]
        %v5701 = vld [vmem:[#allocation16 + $0x150] sm:$0xff]
        %v5702 = vld [vmem:[#allocation16 + $0x158] sm:$0xff]
        %v5703 = vld [vmem:[#allocation16 + $0x160] sm:$0xff]
        %v5704 = vld [vmem:[#allocation16 + $0x168] sm:$0xf]
        %v5705 = vld [vmem:[#allocation16 + $0x16c] sm:$0xff]
        %v5706 = vld [vmem:[#allocation16 + $0x174] sm:$0xff]
        %v5707 = vld [vmem:[#allocation16 + $0x17c] sm:$0xff]
        %v5708 = vld [vmem:[#allocation16 + $0x184] sm:$0xf]
        %v5709 = vld [vmem:[#allocation16 + $0x188] sm:$0xff]
        %v5710 = vld [vmem:[#allocation16 + $0x190] sm:$0xff]
        %v5711 = vld [vmem:[#allocation16 + $0x198] sm:$0xff]
        %v5712 = vld [vmem:[#allocation16 + $0x1a0] sm:$0xf]
        %v5713 = vld [vmem:[#allocation16 + $0x1a4] sm:$0xff]
        %v5714 = vld [vmem:[#allocation16 + $0x1ac] sm:$0xff]
        %v5715 = vld [vmem:[#allocation16 + $0x1b4] sm:$0xff]
        %v5716 = vld [vmem:[#allocation16 + $0x1bc] sm:$0xf]
        %v5781 = vunpack.c.l.b16 %v5653
        %v5782 = vunpack.c.h.b16 %v5653
        %v5783 = vunpack.c.l.b16 %v5654
        %v5784 = vunpack.c.h.b16 %v5654
        %v5785 = vunpack.c.l.b16 %v5655
        %v5786 = vunpack.c.h.b16 %v5655
        %v5787 = vunpack.c.l.b16 %v5656
        %v5788 = vunpack.c.l.b16 %v5657
        %v5789 = vunpack.c.h.b16 %v5657
        %v5790 = vunpack.c.l.b16 %v5658
        %v5791 = vunpack.c.h.b16 %v5658
        %v5792 = vunpack.c.l.b16 %v5659
        %v5793 = vunpack.c.h.b16 %v5659
        %v5794 = vunpack.c.l.b16 %v5660
        %v5795 = vunpack.c.l.b16 %v5661
        %v5796 = vunpack.c.h.b16 %v5661
        %v5797 = vunpack.c.l.b16 %v5662
        %v5798 = vunpack.c.h.b16 %v5662
        %v5799 = vunpack.c.l.b16 %v5663
        %v5800 = vunpack.c.h.b16 %v5663
        %v5801 = vunpack.c.l.b16 %v5664
        %v5802 = vunpack.c.l.b16 %v5665
        %v5803 = vunpack.c.h.b16 %v5665
        %v5804 = vunpack.c.l.b16 %v5666
        %v5805 = vunpack.c.h.b16 %v5666
        %v5806 = vunpack.c.l.b16 %v5667
        %v5807 = vunpack.c.h.b16 %v5667
        %v5808 = vunpack.c.l.b16 %v5668
        %v5809 = vunpack.c.l.b16 %v5669
        %v5810 = vunpack.c.h.b16 %v5669
        %v5811 = vunpack.c.l.b16 %v5670
        %v5812 = vunpack.c.h.b16 %v5670
        %v5813 = vunpack.c.l.b16 %v5671
        %v5814 = vunpack.c.h.b16 %v5671
        %v5815 = vunpack.c.l.b16 %v5672
        %v5816 = vunpack.c.l.b16 %v5673
        %v5817 = vunpack.c.h.b16 %v5673
        %v5818 = vunpack.c.l.b16 %v5674
        %v5819 = vunpack.c.h.b16 %v5674
        %v5820 = vunpack.c.l.b16 %v5675
        %v5821 = vunpack.c.h.b16 %v5675
        %v5822 = vunpack.c.l.b16 %v5676
        %v5823 = vunpack.c.l.b16 %v5677
        %v5824 = vunpack.c.h.b16 %v5677
        %v5825 = vunpack.c.l.b16 %v5678
        %v5826 = vunpack.c.h.b16 %v5678
        %v5827 = vunpack.c.l.b16 %v5679
        %v5828 = vunpack.c.h.b16 %v5679
        %v5829 = vunpack.c.l.b16 %v5680
        %v5830 = vunpack.c.l.b16 %v5681
        %v5831 = vunpack.c.h.b16 %v5681
        %v5832 = vunpack.c.l.b16 %v5682
        %v5833 = vunpack.c.h.b16 %v5682
        %v5834 = vunpack.c.l.b16 %v5683
        %v5835 = vunpack.c.h.b16 %v5683
        %v5836 = vunpack.c.l.b16 %v5684
        %v5837 = vunpack.c.l.b16 %v5685
        %v5838 = vunpack.c.h.b16 %v5685
        %v5839 = vunpack.c.l.b16 %v5686
        %v5840 = vunpack.c.h.b16 %v5686
        %v5841 = vunpack.c.l.b16 %v5687
        %v5842 = vunpack.c.h.b16 %v5687
        %v5843 = vunpack.c.l.b16 %v5688
        %v5844 = vunpack.c.l.b16 %v5689
        %v5845 = vunpack.c.h.b16 %v5689
        %v5846 = vunpack.c.l.b16 %v5690
        %v5847 = vunpack.c.h.b16 %v5690
        %v5848 = vunpack.c.l.b16 %v5691
        %v5849 = vunpack.c.h.b16 %v5691
        %v5850 = vunpack.c.l.b16 %v5692
        %v5851 = vunpack.c.l.b16 %v5693
        %v5852 = vunpack.c.h.b16 %v5693
        %v5853 = vunpack.c.l.b16 %v5694
        %v5854 = vunpack.c.h.b16 %v5694
        %v5855 = vunpack.c.l.b16 %v5695
        %v5856 = vunpack.c.h.b16 %v5695
        %v5857 = vunpack.c.l.b16 %v5696
        %v5858 = vunpack.c.l.b16 %v5697
        %v5859 = vunpack.c.h.b16 %v5697
        %v5860 = vunpack.c.l.b16 %v5698
        %v5861 = vunpack.c.h.b16 %v5698
        %v5862 = vunpack.c.l.b16 %v5699
        %v5863 = vunpack.c.h.b16 %v5699
        %v5864 = vunpack.c.l.b16 %v5700
        %v5865 = vunpack.c.l.b16 %v5701
        %v5866 = vunpack.c.h.b16 %v5701
        %v5867 = vunpack.c.l.b16 %v5702
        %v5868 = vunpack.c.h.b16 %v5702
        %v5869 = vunpack.c.l.b16 %v5703
        %v5870 = vunpack.c.h.b16 %v5703
        %v5871 = vunpack.c.l.b16 %v5704
        %v5872 = vunpack.c.l.b16 %v5705
        %v5873 = vunpack.c.h.b16 %v5705
        %v5874 = vunpack.c.l.b16 %v5706
        %v5875 = vunpack.c.h.b16 %v5706
        %v5876 = vunpack.c.l.b16 %v5707
        %v5877 = vunpack.c.h.b16 %v5707
        %v5878 = vunpack.c.l.b16 %v5708
        %v5879 = vunpack.c.l.b16 %v5709
        %v5880 = vunpack.c.h.b16 %v5709
        %v5881 = vunpack.c.l.b16 %v5710
        %v5882 = vunpack.c.h.b16 %v5710
        %v5883 = vunpack.c.l.b16 %v5711
        %v5884 = vunpack.c.h.b16 %v5711
        %v5885 = vunpack.c.l.b16 %v5712
        %v5886 = vunpack.c.l.b16 %v5713
        %v5887 = vunpack.c.h.b16 %v5713
        %v5888 = vunpack.c.l.b16 %v5714
        %v5889 = vunpack.c.h.b16 %v5714
        %v5890 = vunpack.c.l.b16 %v5715
        %v5891 = vunpack.c.h.b16 %v5715
        %v5892 = vunpack.c.l.b16 %v5716
        %v5893 = vpack.c.b16 %v5788, %v5781
        %v5894 = vpack.c.b16 %v5789, %v5782
        %v5895 = vpack.c.b16 %v5790, %v5783
        %v5896 = vpack.c.b16 %v5791, %v5784
        %v5897 = vpack.c.b16 %v5792, %v5785
        %v5898 = vpack.c.b16 %v5793, %v5786
        %v5899 = vpack.c.b16 %v5794, %v5787
        %v5900 = vpack.c.b16 %v5802, %v5795
        %v5901 = vpack.c.b16 %v5803, %v5796
        %v5902 = vpack.c.b16 %v5804, %v5797
        %v5903 = vpack.c.b16 %v5805, %v5798
        %v5904 = vpack.c.b16 %v5806, %v5799
        %v5905 = vpack.c.b16 %v5807, %v5800
        %v5906 = vpack.c.b16 %v5808, %v5801
        %v5907 = vpack.c.b16 %v5816, %v5809
        %v5908 = vpack.c.b16 %v5817, %v5810
        %v5909 = vpack.c.b16 %v5818, %v5811
        %v5910 = vpack.c.b16 %v5819, %v5812
        %v5911 = vpack.c.b16 %v5820, %v5813
        %v5912 = vpack.c.b16 %v5821, %v5814
        %v5913 = vpack.c.b16 %v5822, %v5815
        %v5914 = vpack.c.b16 %v5830, %v5823
        %v5915 = vpack.c.b16 %v5831, %v5824
        %v5916 = vpack.c.b16 %v5832, %v5825
        %v5917 = vpack.c.b16 %v5833, %v5826
        %v5918 = vpack.c.b16 %v5834, %v5827
        %v5919 = vpack.c.b16 %v5835, %v5828
        %v5920 = vpack.c.b16 %v5836, %v5829
        %v5921 = vpack.c.b16 %v5844, %v5837
        %v5922 = vpack.c.b16 %v5845, %v5838
        %v5923 = vpack.c.b16 %v5846, %v5839
        %v5924 = vpack.c.b16 %v5847, %v5840
        %v5925 = vpack.c.b16 %v5848, %v5841
        %v5926 = vpack.c.b16 %v5849, %v5842
        %v5927 = vpack.c.b16 %v5850, %v5843
        %v5928 = vpack.c.b16 %v5858, %v5851
        %v5929 = vpack.c.b16 %v5859, %v5852
        %v5930 = vpack.c.b16 %v5860, %v5853
        %v5931 = vpack.c.b16 %v5861, %v5854
        %v5932 = vpack.c.b16 %v5862, %v5855
        %v5933 = vpack.c.b16 %v5863, %v5856
        %v5934 = vpack.c.b16 %v5864, %v5857
        %v5935 = vpack.c.b16 %v5872, %v5865
        %v5936 = vpack.c.b16 %v5873, %v5866
        %v5937 = vpack.c.b16 %v5874, %v5867
        %v5938 = vpack.c.b16 %v5875, %v5868
        %v5939 = vpack.c.b16 %v5876, %v5869
        %v5940 = vpack.c.b16 %v5877, %v5870
        %v5941 = vpack.c.b16 %v5878, %v5871
        %v5942 = vpack.c.b16 %v5886, %v5879
        %v5943 = vpack.c.b16 %v5887, %v5880
        %v5944 = vpack.c.b16 %v5888, %v5881
        %v5945 = vpack.c.b16 %v5889, %v5882
        %v5946 = vpack.c.b16 %v5890, %v5883
        %v5947 = vpack.c.b16 %v5891, %v5884
        %v5948 = vpack.c.b16 %v5892, %v5885
        %6005 = vmatprep.subr.bf16.mxu0 %v5894
        %6006 = vmatpush1.bf16.msra.mxu0 %v5893
        %6007 = vmatprep.subr.bf16.mxu0 %v5901
        %6008 = vmatpush1.bf16.msra.mxu0 %v5900
        %6009 = vmatprep.subr.bf16.mxu0 %v5908
        %6010 = vmatpush1.bf16.msra.mxu0 %v5907
        %6011 = vmatprep.subr.bf16.mxu0 %v5915
        %6012 = vmatpush1.bf16.msra.mxu0 %v5914
        %6013 = vmatprep.subr.bf16.mxu0 %v5922
        %6014 = vmatpush1.bf16.msra.mxu0 %v5921
        %6015 = vmatprep.subr.bf16.mxu0 %v5929
        %6016 = vmatpush1.bf16.msra.mxu0 %v5928
        %6017 = vmatprep.subr.bf16.mxu0 %v5936
        %6018 = vmatpush1.bf16.msra.mxu0 %v5935
        %6019 = vmatprep.subr.bf16.mxu0 %v5943
        %6020 = vmatpush1.bf16.msra.mxu0 %v5942
        %6021 = vmatprep.subr.bf16.mxu0 0
        %6022 = vmatpush1.bf16.msra.mxu0 0
        %6023 = vmatprep.subr.bf16.mxu0 0
        %6024 = vmatpush1.bf16.msra.mxu0 0
        %6025 = vmatprep.subr.bf16.mxu0 0
        %6026 = vmatpush1.bf16.msra.mxu0 0
        %6027 = vmatprep.subr.bf16.mxu0 0
        %6028 = vmatpush1.bf16.msra.mxu0 0
        %6029 = vmatprep.subr.bf16.mxu0 0
        %6030 = vmatpush1.bf16.msra.mxu0 0
        %6031 = vmatprep.subr.bf16.mxu0 0
        %6032 = vmatpush1.bf16.msra.mxu0 0
        %6033 = vmatprep.subr.bf16.mxu0 0
        %6034 = vmatpush1.bf16.msra.mxu0 0
        %6035 = vmatprep.subr.bf16.mxu0 0
        %6036 = vmatpush1.bf16.msra.mxu0 0
        %6037 = vmatprep.mubr.bf16.mxu0 0
        %6038 = vmatmul.mubr.bf16.gmra.mrb[0].mxu0 %v5573
        %v6039 = vpop.f32.mrb[0].mxu0
        %v6040 = vadd.f32 0.0, %v6039
        %v6041 = vpop.f32.mrb[0].mxu0
        %v6042 = vadd.f32 0.0, %v6041
        %v6043 = vpop.f32.mrb[0].mxu0
        %v6044 = vadd.f32 0.0, %v6043
        %v6045 = vpop.f32.mrb[0].mxu0
        %v6046 = vadd.f32 0.0, %v6045
        %6047 = vmatprep.mubr.bf16.mxu0 0
        %6048 = vmatmul.mubr.bf16.gmra.mrb[0].mxu0 %v5574
        %v6049 = vpop.f32.mrb[0].mxu0
        %v6050 = vadd.f32 0.0, %v6049
        %v6051 = vpop.f32.mrb[0].mxu0
        %v6052 = vadd.f32 0.0, %v6051
        %v6053 = vpop.f32.mrb[0].mxu0
        %v6054 = vadd.f32 0.0, %v6053
        %v6055 = vpop.f32.mrb[0].mxu0
        %v6056 = vadd.f32 0.0, %v6055
        %6057 = vmatprep.mubr.bf16.mxu0 0
        %6058 = vmatmul.mubr.bf16.gmra.mrb[0].mxu0 %v5575
        %v6059 = vpop.f32.mrb[0].mxu0
        %v6060 = vadd.f32 0.0, %v6059
        %v6061 = vpop.f32.mrb[0].mxu0
        %v6062 = vadd.f32 0.0, %v6061
        %v6063 = vpop.f32.mrb[0].mxu0
        %v6064 = vadd.f32 0.0, %v6063
        %v6065 = vpop.f32.mrb[0].mxu0
        %v6066 = vadd.f32 0.0, %v6065
        %6067 = vmatprep.mubr.bf16.mxu0 0
        %6068 = vmatmul.mubr.bf16.gmra.mrb[0].mxu0 %v5576
        %v6069 = vpop.f32.mrb[0].mxu0
        %v6070 = vadd.f32 0.0, %v6069
        %v6071 = vpop.f32.mrb[0].mxu0
        %v6072 = vadd.f32 0.0, %v6071
        %v6073 = vpop.f32.mrb[0].mxu0
        %v6074 = vadd.f32 0.0, %v6073
        %v6075 = vpop.f32.mrb[0].mxu0
        %v6076 = vadd.f32 0.0, %v6075
        %6077 = vmatprep.mubr.bf16.mxu0 0
        %6078 = vmatmul.mubr.bf16.gmra.mrb[0].mxu0 %v5577
        %v6079 = vpop.f32.mrb[0].mxu0
        %v6080 = vadd.f32 0.0, %v6079
        %v6081 = vpop.f32.mrb[0].mxu0
        %v6082 = vadd.f32 0.0, %v6081
        %v6083 = vpop.f32.mrb[0].mxu0
        %v6084 = vadd.f32 0.0, %v6083
        %v6085 = vpop.f32.mrb[0].mxu0
        %v6086 = vadd.f32 0.0, %v6085
        %6087 = vmatprep.mubr.bf16.mxu0 0
        %6088 = vmatmul.mubr.bf16.gmra.mrb[0].mxu0 %v5578
        %v6089 = vpop.f32.mrb[0].mxu0
        %v6090 = vadd.f32 0.0, %v6089
        %v6091 = vpop.f32.mrb[0].mxu0
        %v6092 = vadd.f32 0.0, %v6091
        %v6093 = vpop.f32.mrb[0].mxu0
        %v6094 = vadd.f32 0.0, %v6093
        %v6095 = vpop.f32.mrb[0].mxu0
        %v6096 = vadd.f32 0.0, %v6095
        %6097 = vmatprep.mubr.bf16.mxu0 0
        %6098 = vmatmul.mubr.bf16.gmra.mrb[0].mxu0 %v5579
        %v6099 = vpop.f32.mrb[0].mxu0
        %v6100 = vadd.f32 0.0, %v6099
        %v6101 = vpop.f32.mrb[0].mxu0
        %v6102 = vadd.f32 0.0, %v6101
        %v6103 = vpop.f32.mrb[0].mxu0
        %v6104 = vadd.f32 0.0, %v6103
        %v6105 = vpop.f32.mrb[0].mxu0
        %v6106 = vadd.f32 0.0, %v6105
        %6107 = vmatprep.mubr.bf16.mxu0 0
        %6108 = vmatmul.mubr.bf16.gmra.mrb[0].mxu0 %v5580
        %v6109 = vpop.f32.mrb[0].mxu0
        %v6110 = vadd.f32 0.0, %v6109
        %v6111 = vpop.f32.mrb[0].mxu0
        %v6112 = vadd.f32 0.0, %v6111
        %v6113 = vpop.f32.mrb[0].mxu0
        %v6114 = vadd.f32 0.0, %v6113
        %v6115 = vpop.f32.mrb[0].mxu0
        %v6116 = vadd.f32 0.0, %v6115
        %6117 = vmatprep.mubr.bf16.mxu0 0
        %6118 = vmatmul.mubr.bf16.gmra.mrb[0].mxu0 %v5581
        %v6119 = vpop.f32.mrb[0].mxu0
        %v6120 = vadd.f32 0.0, %v6119
        %v6121 = vpop.f32.mrb[0].mxu0
        %v6122 = vadd.f32 0.0, %v6121
        %v6123 = vpop.f32.mrb[0].mxu0
        %v6124 = vadd.f32 0.0, %v6123
        %v6125 = vpop.f32.mrb[0].mxu0
        %v6126 = vadd.f32 0.0, %v6125
        %6127 = vmatprep.mubr.bf16.mxu0 0
        %6128 = vmatmul.mubr.bf16.gmra.mrb[0].mxu0 %v5582
        %v6129 = vpop.f32.mrb[0].mxu0
        %v6130 = vadd.f32 0.0, %v6129
        %v6131 = vpop.f32.mrb[0].mxu0
        %v6132 = vadd.f32 0.0, %v6131
        %v6133 = vpop.f32.mrb[0].mxu0
        %v6134 = vadd.f32 0.0, %v6133
        %v6135 = vpop.f32.mrb[0].mxu0
        %v6136 = vadd.f32 0.0, %v6135
        %6137 = vmatprep.mubr.bf16.mxu0 0
        %6138 = vmatmul.mubr.bf16.gmra.mrb[0].mxu0 %v5583
        %v6139 = vpop.f32.mrb[0].mxu0
        %v6140 = vadd.f32 0.0, %v6139
        %v6141 = vpop.f32.mrb[0].mxu0
        %v6142 = vadd.f32 0.0, %v6141
        %v6143 = vpop.f32.mrb[0].mxu0
        %v6144 = vadd.f32 0.0, %v6143
        %v6145 = vpop.f32.mrb[0].mxu0
        %v6146 = vadd.f32 0.0, %v6145
        %6147 = vmatprep.mubr.bf16.mxu0 0
        %6148 = vmatmul.mubr.bf16.gmra.mrb[0].mxu0 %v5584
        %v6149 = vpop.f32.mrb[0].mxu0
        %v6150 = vadd.f32 0.0, %v6149
        %v6151 = vpop.f32.mrb[0].mxu0
        %v6152 = vadd.f32 0.0, %v6151
        %v6153 = vpop.f32.mrb[0].mxu0
        %v6154 = vadd.f32 0.0, %v6153
        %v6155 = vpop.f32.mrb[0].mxu0
        %v6156 = vadd.f32 0.0, %v6155
        %6157 = vmatprep.mubr.bf16.mxu0 0
        %6158 = vmatmul.mubr.bf16.gmra.mrb[0].mxu0 %v5585
        %v6159 = vpop.f32.mrb[0].mxu0
        %v6160 = vadd.f32 0.0, %v6159
        %v6161 = vpop.f32.mrb[0].mxu0
        %v6162 = vadd.f32 0.0, %v6161
        %v6163 = vpop.f32.mrb[0].mxu0
        %v6164 = vadd.f32 0.0, %v6163
        %v6165 = vpop.f32.mrb[0].mxu0
        %v6166 = vadd.f32 0.0, %v6165
        %6167 = vmatprep.mubr.bf16.mxu0 0
        %6168 = vmatmul.mubr.bf16.gmra.mrb[0].mxu0 %v5586
        %v6169 = vpop.f32.mrb[0].mxu0
        %v6170 = vadd.f32 0.0, %v6169
        %v6171 = vpop.f32.mrb[0].mxu0
        %v6172 = vadd.f32 0.0, %v6171
        %v6173 = vpop.f32.mrb[0].mxu0
        %v6174 = vadd.f32 0.0, %v6173
        %v6175 = vpop.f32.mrb[0].mxu0
        %v6176 = vadd.f32 0.0, %v6175
        %6177 = vmatprep.mubr.bf16.mxu0 0
        %6178 = vmatmul.mubr.bf16.gmra.mrb[0].mxu0 %v5587
        %v6179 = vpop.f32.mrb[0].mxu0
        %v6180 = vadd.f32 0.0, %v6179
        %v6181 = vpop.f32.mrb[0].mxu0
        %v6182 = vadd.f32 0.0, %v6181
        %v6183 = vpop.f32.mrb[0].mxu0
        %v6184 = vadd.f32 0.0, %v6183
        %v6185 = vpop.f32.mrb[0].mxu0
        %v6186 = vadd.f32 0.0, %v6185
        %6187 = vmatprep.mubr.bf16.mxu0 0
        %6188 = vmatmul.mubr.bf16.gmra.mrb[0].mxu0 %v5588
        %v6189 = vpop.f32.mrb[0].mxu0
        %v6190 = vadd.f32 0.0, %v6189
        %v6191 = vpop.f32.mrb[0].mxu0
        %v6192 = vadd.f32 0.0, %v6191
        %v6193 = vpop.f32.mrb[0].mxu0
        %v6194 = vadd.f32 0.0, %v6193
        %v6195 = vpop.f32.mrb[0].mxu0
        %v6196 = vadd.f32 0.0, %v6195
        %6197 = vdwg.mxu0
        %6198 = vmatprep.subr.bf16.mxu0 %v5896
        %6199 = vmatpush1.bf16.msra.mxu0 %v5895
        %6200 = vmatprep.subr.bf16.mxu0 %v5903
        %6201 = vmatpush1.bf16.msra.mxu0 %v5902
        %6202 = vmatprep.subr.bf16.mxu0 %v5910
        %6203 = vmatpush1.bf16.msra.mxu0 %v5909
        %6204 = vmatprep.subr.bf16.mxu0 %v5917
        %6205 = vmatpush1.bf16.msra.mxu0 %v5916
        %6206 = vmatprep.subr.bf16.mxu0 %v5924
        %6207 = vmatpush1.bf16.msra.mxu0 %v5923
        %6208 = vmatprep.subr.bf16.mxu0 %v5931
        %6209 = vmatpush1.bf16.msra.mxu0 %v5930
        %6210 = vmatprep.subr.bf16.mxu0 %v5938
        %6211 = vmatpush1.bf16.msra.mxu0 %v5937
        %6212 = vmatprep.subr.bf16.mxu0 %v5945
        %6213 = vmatpush1.bf16.msra.mxu0 %v5944
        %6214 = vmatprep.subr.bf16.mxu0 0
        %6215 = vmatpush1.bf16.msra.mxu0 0
        %6216 = vmatprep.subr.bf16.mxu0 0
        %6217 = vmatpush1.bf16.msra.mxu0 0
        %6218 = vmatprep.subr.bf16.mxu0 0
        %6219 = vmatpush1.bf16.msra.mxu0 0
        %6220 = vmatprep.subr.bf16.mxu0 0
        %6221 = vmatpush1.bf16.msra.mxu0 0
        %6222 = vmatprep.subr.bf16.mxu0 0
        %6223 = vmatpush1.bf16.msra.mxu0 0
        %6224 = vmatprep.subr.bf16.mxu0 0
        %6225 = vmatpush1.bf16.msra.mxu0 0
        %6226 = vmatprep.subr.bf16.mxu0 0
        %6227 = vmatpush1.bf16.msra.mxu0 0
        %6228 = vmatprep.subr.bf16.mxu0 0
        %6229 = vmatpush1.bf16.msra.mxu0 0
        %6230 = vmatprep.mubr.bf16.mxu0 0
        %6231 = vmatmul.mubr.bf16.gmra.mrb[0].mxu0 %v5573
        %v6232 = vpop.f32.mrb[0].mxu0
        %v6233 = vadd.f32 0.0, %v6232
        %v6234 = vpop.f32.mrb[0].mxu0
        %v6235 = vadd.f32 0.0, %v6234
        %v6236 = vpop.f32.mrb[0].mxu0
        %v6237 = vadd.f32 0.0, %v6236
        %v6238 = vpop.f32.mrb[0].mxu0
        %v6239 = vadd.f32 0.0, %v6238
        %6240 = vmatprep.mubr.bf16.mxu0 0
        %6241 = vmatmul.mubr.bf16.gmra.mrb[0].mxu0 %v5574
        %v6242 = vpop.f32.mrb[0].mxu0
        %v6243 = vadd.f32 0.0, %v6242
        %v6244 = vpop.f32.mrb[0].mxu0
        %v6245 = vadd.f32 0.0, %v6244
        %v6246 = vpop.f32.mrb[0].mxu0
        %v6247 = vadd.f32 0.0, %v6246
        %v6248 = vpop.f32.mrb[0].mxu0
        %v6249 = vadd.f32 0.0, %v6248
        %6250 = vmatprep.mubr.bf16.mxu0 0
        %6251 = vmatmul.mubr.bf16.gmra.mrb[0].mxu0 %v5575
        %v6252 = vpop.f32.mrb[0].mxu0
        %v6253 = vadd.f32 0.0, %v6252
        %v6254 = vpop.f32.mrb[0].mxu0
        %v6255 = vadd.f32 0.0, %v6254
        %v6256 = vpop.f32.mrb[0].mxu0
        %v6257 = vadd.f32 0.0, %v6256
        %v6258 = vpop.f32.mrb[0].mxu0
        %v6259 = vadd.f32 0.0, %v6258
        %6260 = vmatprep.mubr.bf16.mxu0 0
        %6261 = vmatmul.mubr.bf16.gmra.mrb[0].mxu0 %v5576
        %v6262 = vpop.f32.mrb[0].mxu0
        %v6263 = vadd.f32 0.0, %v6262
        %v6264 = vpop.f32.mrb[0].mxu0
        %v6265 = vadd.f32 0.0, %v6264
        %v6266 = vpop.f32.mrb[0].mxu0
        %v6267 = vadd.f32 0.0, %v6266
        %v6268 = vpop.f32.mrb[0].mxu0
        %v6269 = vadd.f32 0.0, %v6268
        %6270 = vmatprep.mubr.bf16.mxu0 0
        %6271 = vmatmul.mubr.bf16.gmra.mrb[0].mxu0 %v5577
        %v6272 = vpop.f32.mrb[0].mxu0
        %v6273 = vadd.f32 0.0, %v6272
        %v6274 = vpop.f32.mrb[0].mxu0
        %v6275 = vadd.f32 0.0, %v6274
        %v6276 = vpop.f32.mrb[0].mxu0
        %v6277 = vadd.f32 0.0, %v6276
        %v6278 = vpop.f32.mrb[0].mxu0
        %v6279 = vadd.f32 0.0, %v6278
        %6280 = vmatprep.mubr.bf16.mxu0 0
        %6281 = vmatmul.mubr.bf16.gmra.mrb[0].mxu0 %v5578
        %v6282 = vpop.f32.mrb[0].mxu0
        %v6283 = vadd.f32 0.0, %v6282
        %v6284 = vpop.f32.mrb[0].mxu0
        %v6285 = vadd.f32 0.0, %v6284
        %v6286 = vpop.f32.mrb[0].mxu0
        %v6287 = vadd.f32 0.0, %v6286
        %v6288 = vpop.f32.mrb[0].mxu0
        %v6289 = vadd.f32 0.0, %v6288
        %6290 = vmatprep.mubr.bf16.mxu0 0
        %6291 = vmatmul.mubr.bf16.gmra.mrb[0].mxu0 %v5579
        %v6292 = vpop.f32.mrb[0].mxu0
        %v6293 = vadd.f32 0.0, %v6292
        %v6294 = vpop.f32.mrb[0].mxu0
        %v6295 = vadd.f32 0.0, %v6294
        %v6296 = vpop.f32.mrb[0].mxu0
        %v6297 = vadd.f32 0.0, %v6296
        %v6298 = vpop.f32.mrb[0].mxu0
        %v6299 = vadd.f32 0.0, %v6298
        %6300 = vmatprep.mubr.bf16.mxu0 0
        %6301 = vmatmul.mubr.bf16.gmra.mrb[0].mxu0 %v5580
        %v6302 = vpop.f32.mrb[0].mxu0
        %v6303 = vadd.f32 0.0, %v6302
        %v6304 = vpop.f32.mrb[0].mxu0
        %v6305 = vadd.f32 0.0, %v6304
        %v6306 = vpop.f32.mrb[0].mxu0
        %v6307 = vadd.f32 0.0, %v6306
        %v6308 = vpop.f32.mrb[0].mxu0
        %v6309 = vadd.f32 0.0, %v6308
        %6310 = vmatprep.mubr.bf16.mxu0 0
        %6311 = vmatmul.mubr.bf16.gmra.mrb[0].mxu0 %v5581
        %v6312 = vpop.f32.mrb[0].mxu0
        %v6313 = vadd.f32 0.0, %v6312
        %v6314 = vpop.f32.mrb[0].mxu0
        %v6315 = vadd.f32 0.0, %v6314
        %v6316 = vpop.f32.mrb[0].mxu0
        %v6317 = vadd.f32 0.0, %v6316
        %v6318 = vpop.f32.mrb[0].mxu0
        %v6319 = vadd.f32 0.0, %v6318
        %6320 = vmatprep.mubr.bf16.mxu0 0
        %6321 = vmatmul.mubr.bf16.gmra.mrb[0].mxu0 %v5582
        %v6322 = vpop.f32.mrb[0].mxu0
        %v6323 = vadd.f32 0.0, %v6322
        %v6324 = vpop.f32.mrb[0].mxu0
        %v6325 = vadd.f32 0.0, %v6324
        %v6326 = vpop.f32.mrb[0].mxu0
        %v6327 = vadd.f32 0.0, %v6326
        %v6328 = vpop.f32.mrb[0].mxu0
        %v6329 = vadd.f32 0.0, %v6328
        %6330 = vmatprep.mubr.bf16.mxu0 0
        %6331 = vmatmul.mubr.bf16.gmra.mrb[0].mxu0 %v5583
        %v6332 = vpop.f32.mrb[0].mxu0
        %v6333 = vadd.f32 0.0, %v6332
        %v6334 = vpop.f32.mrb[0].mxu0
        %v6335 = vadd.f32 0.0, %v6334
        %v6336 = vpop.f32.mrb[0].mxu0
        %v6337 = vadd.f32 0.0, %v6336
        %v6338 = vpop.f32.mrb[0].mxu0
        %v6339 = vadd.f32 0.0, %v6338
        %6340 = vmatprep.mubr.bf16.mxu0 0
        %6341 = vmatmul.mubr.bf16.gmra.mrb[0].mxu0 %v5584
        %v6342 = vpop.f32.mrb[0].mxu0
        %v6343 = vadd.f32 0.0, %v6342
        %v6344 = vpop.f32.mrb[0].mxu0
        %v6345 = vadd.f32 0.0, %v6344
        %v6346 = vpop.f32.mrb[0].mxu0
        %v6347 = vadd.f32 0.0, %v6346
        %v6348 = vpop.f32.mrb[0].mxu0
        %v6349 = vadd.f32 0.0, %v6348
        %6350 = vmatprep.mubr.bf16.mxu0 0
        %6351 = vmatmul.mubr.bf16.gmra.mrb[0].mxu0 %v5585
        %v6352 = vpop.f32.mrb[0].mxu0
        %v6353 = vadd.f32 0.0, %v6352
        %v6354 = vpop.f32.mrb[0].mxu0
        %v6355 = vadd.f32 0.0, %v6354
        %v6356 = vpop.f32.mrb[0].mxu0
        %v6357 = vadd.f32 0.0, %v6356
        %v6358 = vpop.f32.mrb[0].mxu0
        %v6359 = vadd.f32 0.0, %v6358
        %6360 = vmatprep.mubr.bf16.mxu0 0
        %6361 = vmatmul.mubr.bf16.gmra.mrb[0].mxu0 %v5586
        %v6362 = vpop.f32.mrb[0].mxu0
        %v6363 = vadd.f32 0.0, %v6362
        %v6364 = vpop.f32.mrb[0].mxu0
        %v6365 = vadd.f32 0.0, %v6364
        %v6366 = vpop.f32.mrb[0].mxu0
        %v6367 = vadd.f32 0.0, %v6366
        %v6368 = vpop.f32.mrb[0].mxu0
        %v6369 = vadd.f32 0.0, %v6368
        %6370 = vmatprep.mubr.bf16.mxu0 0
        %6371 = vmatmul.mubr.bf16.gmra.mrb[0].mxu0 %v5587
        %v6372 = vpop.f32.mrb[0].mxu0
        %v6373 = vadd.f32 0.0, %v6372
        %v6374 = vpop.f32.mrb[0].mxu0
        %v6375 = vadd.f32 0.0, %v6374
        %v6376 = vpop.f32.mrb[0].mxu0
        %v6377 = vadd.f32 0.0, %v6376
        %v6378 = vpop.f32.mrb[0].mxu0
        %v6379 = vadd.f32 0.0, %v6378
        %6380 = vmatprep.mubr.bf16.mxu0 0
        %6381 = vmatmul.mubr.bf16.gmra.mrb[0].mxu0 %v5588
        %v6382 = vpop.f32.mrb[0].mxu0
        %v6383 = vadd.f32 0.0, %v6382
        %v6384 = vpop.f32.mrb[0].mxu0
        %v6385 = vadd.f32 0.0, %v6384
        %v6386 = vpop.f32.mrb[0].mxu0
        %v6387 = vadd.f32 0.0, %v6386
        %v6388 = vpop.f32.mrb[0].mxu0
        %v6389 = vadd.f32 0.0, %v6388
        %6390 = vdwg.mxu0
        %6391 = vmatprep.subr.bf16.mxu0 %v5898
        %6392 = vmatpush1.bf16.msra.mxu0 %v5897
        %6393 = vmatprep.subr.bf16.mxu0 %v5905
        %6394 = vmatpush1.bf16.msra.mxu0 %v5904
        %6395 = vmatprep.subr.bf16.mxu0 %v5912
        %6396 = vmatpush1.bf16.msra.mxu0 %v5911
        %6397 = vmatprep.subr.bf16.mxu0 %v5919
        %6398 = vmatpush1.bf16.msra.mxu0 %v5918
        %6399 = vmatprep.subr.bf16.mxu0 %v5926
        %6400 = vmatpush1.bf16.msra.mxu0 %v5925
        %6401 = vmatprep.subr.bf16.mxu0 %v5933
        %6402 = vmatpush1.bf16.msra.mxu0 %v5932
        %6403 = vmatprep.subr.bf16.mxu0 %v5940
        %6404 = vmatpush1.bf16.msra.mxu0 %v5939
        %6405 = vmatprep.subr.bf16.mxu0 %v5947
        %6406 = vmatpush1.bf16.msra.mxu0 %v5946
        %6407 = vmatprep.subr.bf16.mxu0 0
        %6408 = vmatpush1.bf16.msra.mxu0 0
        %6409 = vmatprep.subr.bf16.mxu0 0
        %6410 = vmatpush1.bf16.msra.mxu0 0
        %6411 = vmatprep.subr.bf16.mxu0 0
        %6412 = vmatpush1.bf16.msra.mxu0 0
        %6413 = vmatprep.subr.bf16.mxu0 0
        %6414 = vmatpush1.bf16.msra.mxu0 0
        %6415 = vmatprep.subr.bf16.mxu0 0
        %6416 = vmatpush1.bf16.msra.mxu0 0
        %6417 = vmatprep.subr.bf16.mxu0 0
        %6418 = vmatpush1.bf16.msra.mxu0 0
        %6419 = vmatprep.subr.bf16.mxu0 0
        %6420 = vmatpush1.bf16.msra.mxu0 0
        %6421 = vmatprep.subr.bf16.mxu0 0
        %6422 = vmatpush1.bf16.msra.mxu0 0
        %6423 = vmatprep.mubr.bf16.mxu0 0
        %6424 = vmatmul.mubr.bf16.gmra.mrb[0].mxu0 %v5573
        %v6425 = vpop.f32.mrb[0].mxu0
        %v6426 = vadd.f32 0.0, %v6425
        %v6427 = vpop.f32.mrb[0].mxu0
        %v6428 = vadd.f32 0.0, %v6427
        %v6429 = vpop.f32.mrb[0].mxu0
        %v6430 = vadd.f32 0.0, %v6429
        %v6431 = vpop.f32.mrb[0].mxu0
        %v6432 = vadd.f32 0.0, %v6431
        %6433 = vmatprep.mubr.bf16.mxu0 0
        %6434 = vmatmul.mubr.bf16.gmra.mrb[0].mxu0 %v5574
        %v6435 = vpop.f32.mrb[0].mxu0
        %v6436 = vadd.f32 0.0, %v6435
        %v6437 = vpop.f32.mrb[0].mxu0
        %v6438 = vadd.f32 0.0, %v6437
        %v6439 = vpop.f32.mrb[0].mxu0
        %v6440 = vadd.f32 0.0, %v6439
        %v6441 = vpop.f32.mrb[0].mxu0
        %v6442 = vadd.f32 0.0, %v6441
        %6443 = vmatprep.mubr.bf16.mxu0 0
        %6444 = vmatmul.mubr.bf16.gmra.mrb[0].mxu0 %v5575
        %v6445 = vpop.f32.mrb[0].mxu0
        %v6446 = vadd.f32 0.0, %v6445
        %v6447 = vpop.f32.mrb[0].mxu0
        %v6448 = vadd.f32 0.0, %v6447
        %v6449 = vpop.f32.mrb[0].mxu0
        %v6450 = vadd.f32 0.0, %v6449
        %v6451 = vpop.f32.mrb[0].mxu0
        %v6452 = vadd.f32 0.0, %v6451
        %6453 = vmatprep.mubr.bf16.mxu0 0
        %6454 = vmatmul.mubr.bf16.gmra.mrb[0].mxu0 %v5576
        %v6455 = vpop.f32.mrb[0].mxu0
        %v6456 = vadd.f32 0.0, %v6455
        %v6457 = vpop.f32.mrb[0].mxu0
        %v6458 = vadd.f32 0.0, %v6457
        %v6459 = vpop.f32.mrb[0].mxu0
        %v6460 = vadd.f32 0.0, %v6459
        %v6461 = vpop.f32.mrb[0].mxu0
        %v6462 = vadd.f32 0.0, %v6461
        %6463 = vmatprep.mubr.bf16.mxu0 0
        %6464 = vmatmul.mubr.bf16.gmra.mrb[0].mxu0 %v5577
        %v6465 = vpop.f32.mrb[0].mxu0
        %v6466 = vadd.f32 0.0, %v6465
        %v6467 = vpop.f32.mrb[0].mxu0
        %v6468 = vadd.f32 0.0, %v6467
        %v6469 = vpop.f32.mrb[0].mxu0
        %v6470 = vadd.f32 0.0, %v6469
        %v6471 = vpop.f32.mrb[0].mxu0
        %v6472 = vadd.f32 0.0, %v6471
        %6473 = vmatprep.mubr.bf16.mxu0 0
        %6474 = vmatmul.mubr.bf16.gmra.mrb[0].mxu0 %v5578
        %v6475 = vpop.f32.mrb[0].mxu0
        %v6476 = vadd.f32 0.0, %v6475
        %v6477 = vpop.f32.mrb[0].mxu0
        %v6478 = vadd.f32 0.0, %v6477
        %v6479 = vpop.f32.mrb[0].mxu0
        %v6480 = vadd.f32 0.0, %v6479
        %v6481 = vpop.f32.mrb[0].mxu0
        %v6482 = vadd.f32 0.0, %v6481
        %6483 = vmatprep.mubr.bf16.mxu0 0
        %6484 = vmatmul.mubr.bf16.gmra.mrb[0].mxu0 %v5579
        %v6485 = vpop.f32.mrb[0].mxu0
        %v6486 = vadd.f32 0.0, %v6485
        %v6487 = vpop.f32.mrb[0].mxu0
        %v6488 = vadd.f32 0.0, %v6487
        %v6489 = vpop.f32.mrb[0].mxu0
        %v6490 = vadd.f32 0.0, %v6489
        %v6491 = vpop.f32.mrb[0].mxu0
        %v6492 = vadd.f32 0.0, %v6491
        %6493 = vmatprep.mubr.bf16.mxu0 0
        %6494 = vmatmul.mubr.bf16.gmra.mrb[0].mxu0 %v5580
        %v6495 = vpop.f32.mrb[0].mxu0
        %v6496 = vadd.f32 0.0, %v6495
        %v6497 = vpop.f32.mrb[0].mxu0
        %v6498 = vadd.f32 0.0, %v6497
        %v6499 = vpop.f32.mrb[0].mxu0
        %v6500 = vadd.f32 0.0, %v6499
        %v6501 = vpop.f32.mrb[0].mxu0
        %v6502 = vadd.f32 0.0, %v6501
        %6503 = vmatprep.mubr.bf16.mxu0 0
        %6504 = vmatmul.mubr.bf16.gmra.mrb[0].mxu0 %v5581
        %v6505 = vpop.f32.mrb[0].mxu0
        %v6506 = vadd.f32 0.0, %v6505
        %v6507 = vpop.f32.mrb[0].mxu0
        %v6508 = vadd.f32 0.0, %v6507
        %v6509 = vpop.f32.mrb[0].mxu0
        %v6510 = vadd.f32 0.0, %v6509
        %v6511 = vpop.f32.mrb[0].mxu0
        %v6512 = vadd.f32 0.0, %v6511
        %6513 = vmatprep.mubr.bf16.mxu0 0
        %6514 = vmatmul.mubr.bf16.gmra.mrb[0].mxu0 %v5582
        %v6515 = vpop.f32.mrb[0].mxu0
        %v6516 = vadd.f32 0.0, %v6515
        %v6517 = vpop.f32.mrb[0].mxu0
        %v6518 = vadd.f32 0.0, %v6517
        %v6519 = vpop.f32.mrb[0].mxu0
        %v6520 = vadd.f32 0.0, %v6519
        %v6521 = vpop.f32.mrb[0].mxu0
        %v6522 = vadd.f32 0.0, %v6521
        %6523 = vmatprep.mubr.bf16.mxu0 0
        %6524 = vmatmul.mubr.bf16.gmra.mrb[0].mxu0 %v5583
        %v6525 = vpop.f32.mrb[0].mxu0
        %v6526 = vadd.f32 0.0, %v6525
        %v6527 = vpop.f32.mrb[0].mxu0
        %v6528 = vadd.f32 0.0, %v6527
        %v6529 = vpop.f32.mrb[0].mxu0
        %v6530 = vadd.f32 0.0, %v6529
        %v6531 = vpop.f32.mrb[0].mxu0
        %v6532 = vadd.f32 0.0, %v6531
        %6533 = vmatprep.mubr.bf16.mxu0 0
        %6534 = vmatmul.mubr.bf16.gmra.mrb[0].mxu0 %v5584
        %v6535 = vpop.f32.mrb[0].mxu0
        %v6536 = vadd.f32 0.0, %v6535
        %v6537 = vpop.f32.mrb[0].mxu0
        %v6538 = vadd.f32 0.0, %v6537
        %v6539 = vpop.f32.mrb[0].mxu0
        %v6540 = vadd.f32 0.0, %v6539
        %v6541 = vpop.f32.mrb[0].mxu0
        %v6542 = vadd.f32 0.0, %v6541
        %6543 = vmatprep.mubr.bf16.mxu0 0
        %6544 = vmatmul.mubr.bf16.gmra.mrb[0].mxu0 %v5585
        %v6545 = vpop.f32.mrb[0].mxu0
        %v6546 = vadd.f32 0.0, %v6545
        %v6547 = vpop.f32.mrb[0].mxu0
        %v6548 = vadd.f32 0.0, %v6547
        %v6549 = vpop.f32.mrb[0].mxu0
        %v6550 = vadd.f32 0.0, %v6549
        %v6551 = vpop.f32.mrb[0].mxu0
        %v6552 = vadd.f32 0.0, %v6551
        %6553 = vmatprep.mubr.bf16.mxu0 0
        %6554 = vmatmul.mubr.bf16.gmra.mrb[0].mxu0 %v5586
        %v6555 = vpop.f32.mrb[0].mxu0
        %v6556 = vadd.f32 0.0, %v6555
        %v6557 = vpop.f32.mrb[0].mxu0
        %v6558 = vadd.f32 0.0, %v6557
        %v6559 = vpop.f32.mrb[0].mxu0
        %v6560 = vadd.f32 0.0, %v6559
        %v6561 = vpop.f32.mrb[0].mxu0
        %v6562 = vadd.f32 0.0, %v6561
        %6563 = vmatprep.mubr.bf16.mxu0 0
        %6564 = vmatmul.mubr.bf16.gmra.mrb[0].mxu0 %v5587
        %v6565 = vpop.f32.mrb[0].mxu0
        %v6566 = vadd.f32 0.0, %v6565
        %v6567 = vpop.f32.mrb[0].mxu0
        %v6568 = vadd.f32 0.0, %v6567
        %v6569 = vpop.f32.mrb[0].mxu0
        %v6570 = vadd.f32 0.0, %v6569
        %v6571 = vpop.f32.mrb[0].mxu0
        %v6572 = vadd.f32 0.0, %v6571
        %6573 = vmatprep.mubr.bf16.mxu0 0
        %6574 = vmatmul.mubr.bf16.gmra.mrb[0].mxu0 %v5588
        %v6575 = vpop.f32.mrb[0].mxu0
        %v6576 = vadd.f32 0.0, %v6575
        %v6577 = vpop.f32.mrb[0].mxu0
        %v6578 = vadd.f32 0.0, %v6577
        %v6579 = vpop.f32.mrb[0].mxu0
        %v6580 = vadd.f32 0.0, %v6579
        %v6581 = vpop.f32.mrb[0].mxu0
        %v6582 = vadd.f32 0.0, %v6581
        %6583 = vdwg.mxu0
        %6584 = vmatprep.subr.bf16.mxu0 0
        %6585 = vmatpush1.bf16.msra.mxu0 %v5899
        %6586 = vmatprep.subr.bf16.mxu0 0
        %6587 = vmatpush1.bf16.msra.mxu0 %v5906
        %6588 = vmatprep.subr.bf16.mxu0 0
        %6589 = vmatpush1.bf16.msra.mxu0 %v5913
        %6590 = vmatprep.subr.bf16.mxu0 0
        %6591 = vmatpush1.bf16.msra.mxu0 %v5920
        %6592 = vmatprep.subr.bf16.mxu0 0
        %6593 = vmatpush1.bf16.msra.mxu0 %v5927
        %6594 = vmatprep.subr.bf16.mxu0 0
        %6595 = vmatpush1.bf16.msra.mxu0 %v5934
        %6596 = vmatprep.subr.bf16.mxu0 0
        %6597 = vmatpush1.bf16.msra.mxu0 %v5941
        %6598 = vmatprep.subr.bf16.mxu0 0
        %6599 = vmatpush1.bf16.msra.mxu0 %v5948
        %6600 = vmatprep.subr.bf16.mxu0 0
        %6601 = vmatpush1.bf16.msra.mxu0 0
        %6602 = vmatprep.subr.bf16.mxu0 0
        %6603 = vmatpush1.bf16.msra.mxu0 0
        %6604 = vmatprep.subr.bf16.mxu0 0
        %6605 = vmatpush1.bf16.msra.mxu0 0
        %6606 = vmatprep.subr.bf16.mxu0 0
        %6607 = vmatpush1.bf16.msra.mxu0 0
        %6608 = vmatprep.subr.bf16.mxu0 0
        %6609 = vmatpush1.bf16.msra.mxu0 0
        %6610 = vmatprep.subr.bf16.mxu0 0
        %6611 = vmatpush1.bf16.msra.mxu0 0
        %6612 = vmatprep.subr.bf16.mxu0 0
        %6613 = vmatpush1.bf16.msra.mxu0 0
        %6614 = vmatprep.subr.bf16.mxu0 0
        %6615 = vmatpush1.bf16.msra.mxu0 0
        %6616 = vmatprep.mubr.bf16.mxu0 0
        %6617 = vmatmul.mubr.bf16.gmra.mrb[0].mxu0 %v5573
        %v6618 = vpop.f32.mrb[0].mxu0
        %v6619 = vadd.f32 0.0, %v6618
        %v6620 = vpop.f32.mrb[0].mxu0
        %v6621 = vpop.f32.mrb[0].mxu0
        %v6622 = vadd.f32 0.0, %v6621
        %v6623 = vpop.f32.mrb[0].mxu0
        %6624 = vmatprep.mubr.bf16.mxu0 0
        %6625 = vmatmul.mubr.bf16.gmra.mrb[0].mxu0 %v5574
        %v6626 = vpop.f32.mrb[0].mxu0
        %v6627 = vadd.f32 0.0, %v6626
        %v6628 = vpop.f32.mrb[0].mxu0
        %v6629 = vpop.f32.mrb[0].mxu0
        %v6630 = vadd.f32 0.0, %v6629
        %v6631 = vpop.f32.mrb[0].mxu0
        %6632 = vmatprep.mubr.bf16.mxu0 0
        %6633 = vmatmul.mubr.bf16.gmra.mrb[0].mxu0 %v5575
        %v6634 = vpop.f32.mrb[0].mxu0
        %v6635 = vadd.f32 0.0, %v6634
        %v6636 = vpop.f32.mrb[0].mxu0
        %v6637 = vpop.f32.mrb[0].mxu0
        %v6638 = vadd.f32 0.0, %v6637
        %v6639 = vpop.f32.mrb[0].mxu0
        %6640 = vmatprep.mubr.bf16.mxu0 0
        %6641 = vmatmul.mubr.bf16.gmra.mrb[0].mxu0 %v5576
        %v6642 = vpop.f32.mrb[0].mxu0
        %v6643 = vadd.f32 0.0, %v6642
        %v6644 = vpop.f32.mrb[0].mxu0
        %v6645 = vpop.f32.mrb[0].mxu0
        %v6646 = vadd.f32 0.0, %v6645
        %v6647 = vpop.f32.mrb[0].mxu0
        %6648 = vmatprep.mubr.bf16.mxu0 0
        %6649 = vmatmul.mubr.bf16.gmra.mrb[0].mxu0 %v5577
        %v6650 = vpop.f32.mrb[0].mxu0
        %v6651 = vadd.f32 0.0, %v6650
        %v6652 = vpop.f32.mrb[0].mxu0
        %v6653 = vpop.f32.mrb[0].mxu0
        %v6654 = vadd.f32 0.0, %v6653
        %v6655 = vpop.f32.mrb[0].mxu0
        %6656 = vmatprep.mubr.bf16.mxu0 0
        %6657 = vmatmul.mubr.bf16.gmra.mrb[0].mxu0 %v5578
        %v6658 = vpop.f32.mrb[0].mxu0
        %v6659 = vadd.f32 0.0, %v6658
        %v6660 = vpop.f32.mrb[0].mxu0
        %v6661 = vpop.f32.mrb[0].mxu0
        %v6662 = vadd.f32 0.0, %v6661
        %v6663 = vpop.f32.mrb[0].mxu0
        %6664 = vmatprep.mubr.bf16.mxu0 0
        %6665 = vmatmul.mubr.bf16.gmra.mrb[0].mxu0 %v5579
        %v6666 = vpop.f32.mrb[0].mxu0
        %v6667 = vadd.f32 0.0, %v6666
        %v6668 = vpop.f32.mrb[0].mxu0
        %v6669 = vpop.f32.mrb[0].mxu0
        %v6670 = vadd.f32 0.0, %v6669
        %v6671 = vpop.f32.mrb[0].mxu0
        %6672 = vmatprep.mubr.bf16.mxu0 0
        %6673 = vmatmul.mubr.bf16.gmra.mrb[0].mxu0 %v5580
        %v6674 = vpop.f32.mrb[0].mxu0
        %v6675 = vadd.f32 0.0, %v6674
        %v6676 = vpop.f32.mrb[0].mxu0
        %v6677 = vpop.f32.mrb[0].mxu0
        %v6678 = vadd.f32 0.0, %v6677
        %v6679 = vpop.f32.mrb[0].mxu0
        %6680 = vmatprep.mubr.bf16.mxu0 0
        %6681 = vmatmul.mubr.bf16.gmra.mrb[0].mxu0 %v5581
        %v6682 = vpop.f32.mrb[0].mxu0
        %v6683 = vadd.f32 0.0, %v6682
        %v6684 = vpop.f32.mrb[0].mxu0
        %v6685 = vpop.f32.mrb[0].mxu0
        %v6686 = vadd.f32 0.0, %v6685
        %v6687 = vpop.f32.mrb[0].mxu0
        %6688 = vmatprep.mubr.bf16.mxu0 0
        %6689 = vmatmul.mubr.bf16.gmra.mrb[0].mxu0 %v5582
        %v6690 = vpop.f32.mrb[0].mxu0
        %v6691 = vadd.f32 0.0, %v6690
        %v6692 = vpop.f32.mrb[0].mxu0
        %v6693 = vpop.f32.mrb[0].mxu0
        %v6694 = vadd.f32 0.0, %v6693
        %v6695 = vpop.f32.mrb[0].mxu0
        %6696 = vmatprep.mubr.bf16.mxu0 0
        %6697 = vmatmul.mubr.bf16.gmra.mrb[0].mxu0 %v5583
        %v6698 = vpop.f32.mrb[0].mxu0
        %v6699 = vadd.f32 0.0, %v6698
        %v6700 = vpop.f32.mrb[0].mxu0
        %v6701 = vpop.f32.mrb[0].mxu0
        %v6702 = vadd.f32 0.0, %v6701
        %v6703 = vpop.f32.mrb[0].mxu0
        %6704 = vmatprep.mubr.bf16.mxu0 0
        %6705 = vmatmul.mubr.bf16.gmra.mrb[0].mxu0 %v5584
        %v6706 = vpop.f32.mrb[0].mxu0
        %v6707 = vadd.f32 0.0, %v6706
        %v6708 = vpop.f32.mrb[0].mxu0
        %v6709 = vpop.f32.mrb[0].mxu0
        %v6710 = vadd.f32 0.0, %v6709
        %v6711 = vpop.f32.mrb[0].mxu0
        %6712 = vmatprep.mubr.bf16.mxu0 0
        %6713 = vmatmul.mubr.bf16.gmra.mrb[0].mxu0 %v5585
        %v6714 = vpop.f32.mrb[0].mxu0
        %v6715 = vadd.f32 0.0, %v6714
        %v6716 = vpop.f32.mrb[0].mxu0
        %v6717 = vpop.f32.mrb[0].mxu0
        %v6718 = vadd.f32 0.0, %v6717
        %v6719 = vpop.f32.mrb[0].mxu0
        %6720 = vmatprep.mubr.bf16.mxu0 0
        %6721 = vmatmul.mubr.bf16.gmra.mrb[0].mxu0 %v5586
        %v6722 = vpop.f32.mrb[0].mxu0
        %v6723 = vadd.f32 0.0, %v6722
        %v6724 = vpop.f32.mrb[0].mxu0
        %v6725 = vpop.f32.mrb[0].mxu0
        %v6726 = vadd.f32 0.0, %v6725
        %v6727 = vpop.f32.mrb[0].mxu0
        %6728 = vmatprep.mubr.bf16.mxu0 0
        %6729 = vmatmul.mubr.bf16.gmra.mrb[0].mxu0 %v5587
        %v6730 = vpop.f32.mrb[0].mxu0
        %v6731 = vadd.f32 0.0, %v6730
        %v6732 = vpop.f32.mrb[0].mxu0
        %v6733 = vpop.f32.mrb[0].mxu0
        %v6734 = vadd.f32 0.0, %v6733
        %v6735 = vpop.f32.mrb[0].mxu0
        %6736 = vmatprep.mubr.bf16.mxu0 0
        %6737 = vmatmul.mubr.bf16.gmra.mrb[0].mxu0 %v5588
        %v6738 = vpop.f32.mrb[0].mxu0
        %v6739 = vadd.f32 0.0, %v6738
        %v6740 = vpop.f32.mrb[0].mxu0
        %v6741 = vpop.f32.mrb[0].mxu0
        %v6742 = vadd.f32 0.0, %v6741
        %v6743 = vpop.f32.mrb[0].mxu0
        %6744 = vdwg.mxu0
        %v6809 = vunpack.c.l.b16 %v5589
        %v6810 = vunpack.c.h.b16 %v5589
        %v6811 = vunpack.c.l.b16 %v5590
        %v6812 = vunpack.c.h.b16 %v5590
        %v6813 = vunpack.c.l.b16 %v5591
        %v6814 = vunpack.c.h.b16 %v5591
        %v6815 = vunpack.c.l.b16 %v5592
        %v6816 = vunpack.c.l.b16 %v5593
        %v6817 = vunpack.c.h.b16 %v5593
        %v6818 = vunpack.c.l.b16 %v5594
        %v6819 = vunpack.c.h.b16 %v5594
        %v6820 = vunpack.c.l.b16 %v5595
        %v6821 = vunpack.c.h.b16 %v5595
        %v6822 = vunpack.c.l.b16 %v5596
        %v6823 = vunpack.c.l.b16 %v5597
        %v6824 = vunpack.c.h.b16 %v5597
        %v6825 = vunpack.c.l.b16 %v5598
        %v6826 = vunpack.c.h.b16 %v5598
        %v6827 = vunpack.c.l.b16 %v5599
        %v6828 = vunpack.c.h.b16 %v5599
        %v6829 = vunpack.c.l.b16 %v5600
        %v6830 = vunpack.c.l.b16 %v5601
        %v6831 = vunpack.c.h.b16 %v5601
        %v6832 = vunpack.c.l.b16 %v5602
        %v6833 = vunpack.c.h.b16 %v5602
        %v6834 = vunpack.c.l.b16 %v5603
        %v6835 = vunpack.c.h.b16 %v5603
        %v6836 = vunpack.c.l.b16 %v5604
        %v6837 = vunpack.c.l.b16 %v5605
        %v6838 = vunpack.c.h.b16 %v5605
        %v6839 = vunpack.c.l.b16 %v5606
        %v6840 = vunpack.c.h.b16 %v5606
        %v6841 = vunpack.c.l.b16 %v5607
        %v6842 = vunpack.c.h.b16 %v5607
        %v6843 = vunpack.c.l.b16 %v5608
        %v6844 = vunpack.c.l.b16 %v5609
        %v6845 = vunpack.c.h.b16 %v5609
        %v6846 = vunpack.c.l.b16 %v5610
        %v6847 = vunpack.c.h.b16 %v5610
        %v6848 = vunpack.c.l.b16 %v5611
        %v6849 = vunpack.c.h.b16 %v5611
        %v6850 = vunpack.c.l.b16 %v5612
        %v6851 = vunpack.c.l.b16 %v5613
        %v6852 = vunpack.c.h.b16 %v5613
        %v6853 = vunpack.c.l.b16 %v5614
        %v6854 = vunpack.c.h.b16 %v5614
        %v6855 = vunpack.c.l.b16 %v5615
        %v6856 = vunpack.c.h.b16 %v5615
        %v6857 = vunpack.c.l.b16 %v5616
        %v6858 = vunpack.c.l.b16 %v5617
        %v6859 = vunpack.c.h.b16 %v5617
        %v6860 = vunpack.c.l.b16 %v5618
        %v6861 = vunpack.c.h.b16 %v5618
        %v6862 = vunpack.c.l.b16 %v5619
        %v6863 = vunpack.c.h.b16 %v5619
        %v6864 = vunpack.c.l.b16 %v5620
        %v6865 = vunpack.c.l.b16 %v5621
        %v6866 = vunpack.c.h.b16 %v5621
        %v6867 = vunpack.c.l.b16 %v5622
        %v6868 = vunpack.c.h.b16 %v5622
        %v6869 = vunpack.c.l.b16 %v5623
        %v6870 = vunpack.c.h.b16 %v5623
        %v6871 = vunpack.c.l.b16 %v5624
        %v6872 = vunpack.c.l.b16 %v5625
        %v6873 = vunpack.c.h.b16 %v5625
        %v6874 = vunpack.c.l.b16 %v5626
        %v6875 = vunpack.c.h.b16 %v5626
        %v6876 = vunpack.c.l.b16 %v5627
        %v6877 = vunpack.c.h.b16 %v5627
        %v6878 = vunpack.c.l.b16 %v5628
        %v6879 = vunpack.c.l.b16 %v5629
        %v6880 = vunpack.c.h.b16 %v5629
        %v6881 = vunpack.c.l.b16 %v5630
        %v6882 = vunpack.c.h.b16 %v5630
        %v6883 = vunpack.c.l.b16 %v5631
        %v6884 = vunpack.c.h.b16 %v5631
        %v6885 = vunpack.c.l.b16 %v5632
        %v6886 = vunpack.c.l.b16 %v5633
        %v6887 = vunpack.c.h.b16 %v5633
        %v6888 = vunpack.c.l.b16 %v5634
        %v6889 = vunpack.c.h.b16 %v5634
        %v6890 = vunpack.c.l.b16 %v5635
        %v6891 = vunpack.c.h.b16 %v5635
        %v6892 = vunpack.c.l.b16 %v5636
        %v6893 = vunpack.c.l.b16 %v5637
        %v6894 = vunpack.c.h.b16 %v5637
        %v6895 = vunpack.c.l.b16 %v5638
        %v6896 = vunpack.c.h.b16 %v5638
        %v6897 = vunpack.c.l.b16 %v5639
        %v6898 = vunpack.c.h.b16 %v5639
        %v6899 = vunpack.c.l.b16 %v5640
        %v6900 = vunpack.c.l.b16 %v5641
        %v6901 = vunpack.c.h.b16 %v5641
        %v6902 = vunpack.c.l.b16 %v5642
        %v6903 = vunpack.c.h.b16 %v5642
        %v6904 = vunpack.c.l.b16 %v5643
        %v6905 = vunpack.c.h.b16 %v5643
        %v6906 = vunpack.c.l.b16 %v5644
        %v6907 = vunpack.c.l.b16 %v5645
        %v6908 = vunpack.c.h.b16 %v5645
        %v6909 = vunpack.c.l.b16 %v5646
        %v6910 = vunpack.c.h.b16 %v5646
        %v6911 = vunpack.c.l.b16 %v5647
        %v6912 = vunpack.c.h.b16 %v5647
        %v6913 = vunpack.c.l.b16 %v5648
        %v6914 = vunpack.c.l.b16 %v5649
        %v6915 = vunpack.c.h.b16 %v5649
        %v6916 = vunpack.c.l.b16 %v5650
        %v6917 = vunpack.c.h.b16 %v5650
        %v6918 = vunpack.c.l.b16 %v5651
        %v6919 = vunpack.c.h.b16 %v5651
        %v6920 = vunpack.c.l.b16 %v5652
        %v6921 = vpack.c.b16 %v6816, %v6809
        %v6922 = vpack.c.b16 %v6817, %v6810
        %v6923 = vpack.c.b16 %v6818, %v6811
        %v6924 = vpack.c.b16 %v6819, %v6812
        %v6925 = vpack.c.b16 %v6820, %v6813
        %v6926 = vpack.c.b16 %v6821, %v6814
        %v6927 = vpack.c.b16 %v6822, %v6815
        %v6928 = vpack.c.b16 %v6830, %v6823
        %v6929 = vpack.c.b16 %v6831, %v6824
        %v6930 = vpack.c.b16 %v6832, %v6825
        %v6931 = vpack.c.b16 %v6833, %v6826
        %v6932 = vpack.c.b16 %v6834, %v6827
        %v6933 = vpack.c.b16 %v6835, %v6828
        %v6934 = vpack.c.b16 %v6836, %v6829
        %v6935 = vpack.c.b16 %v6844, %v6837
        %v6936 = vpack.c.b16 %v6845, %v6838
        %v6937 = vpack.c.b16 %v6846, %v6839
        %v6938 = vpack.c.b16 %v6847, %v6840
        %v6939 = vpack.c.b16 %v6848, %v6841
        %v6940 = vpack.c.b16 %v6849, %v6842
        %v6941 = vpack.c.b16 %v6850, %v6843
        %v6942 = vpack.c.b16 %v6858, %v6851
        %v6943 = vpack.c.b16 %v6859, %v6852
        %v6944 = vpack.c.b16 %v6860, %v6853
        %v6945 = vpack.c.b16 %v6861, %v6854
        %v6946 = vpack.c.b16 %v6862, %v6855
        %v6947 = vpack.c.b16 %v6863, %v6856
        %v6948 = vpack.c.b16 %v6864, %v6857
        %v6949 = vpack.c.b16 %v6872, %v6865
        %v6950 = vpack.c.b16 %v6873, %v6866
        %v6951 = vpack.c.b16 %v6874, %v6867
        %v6952 = vpack.c.b16 %v6875, %v6868
        %v6953 = vpack.c.b16 %v6876, %v6869
        %v6954 = vpack.c.b16 %v6877, %v6870
        %v6955 = vpack.c.b16 %v6878, %v6871
        %v6956 = vpack.c.b16 %v6886, %v6879
        %v6957 = vpack.c.b16 %v6887, %v6880
        %v6958 = vpack.c.b16 %v6888, %v6881
        %v6959 = vpack.c.b16 %v6889, %v6882
        %v6960 = vpack.c.b16 %v6890, %v6883
        %v6961 = vpack.c.b16 %v6891, %v6884
        %v6962 = vpack.c.b16 %v6892, %v6885
        %v6963 = vpack.c.b16 %v6900, %v6893
        %v6964 = vpack.c.b16 %v6901, %v6894
        %v6965 = vpack.c.b16 %v6902, %v6895
        %v6966 = vpack.c.b16 %v6903, %v6896
        %v6967 = vpack.c.b16 %v6904, %v6897
        %v6968 = vpack.c.b16 %v6905, %v6898
        %v6969 = vpack.c.b16 %v6906, %v6899
        %v6970 = vpack.c.b16 %v6914, %v6907
        %v6971 = vpack.c.b16 %v6915, %v6908
        %v6972 = vpack.c.b16 %v6916, %v6909
        %v6973 = vpack.c.b16 %v6917, %v6910
        %v6974 = vpack.c.b16 %v6918, %v6911
        %v6975 = vpack.c.b16 %v6919, %v6912
        %v6976 = vpack.c.b16 %v6920, %v6913
        %7033 = vmatprep.subr.bf16.mxu0 %v6922
        %7034 = vmatpush1.bf16.msra.mxu0 %v6921
        %7035 = vmatprep.subr.bf16.mxu0 %v6929
        %7036 = vmatpush1.bf16.msra.mxu0 %v6928
        %7037 = vmatprep.subr.bf16.mxu0 %v6936
        %7038 = vmatpush1.bf16.msra.mxu0 %v6935
        %7039 = vmatprep.subr.bf16.mxu0 %v6943
        %7040 = vmatpush1.bf16.msra.mxu0 %v6942
        %7041 = vmatprep.subr.bf16.mxu0 %v6950
        %7042 = vmatpush1.bf16.msra.mxu0 %v6949
        %7043 = vmatprep.subr.bf16.mxu0 %v6957
        %7044 = vmatpush1.bf16.msra.mxu0 %v6956
        %7045 = vmatprep.subr.bf16.mxu0 %v6964
        %7046 = vmatpush1.bf16.msra.mxu0 %v6963
        %7047 = vmatprep.subr.bf16.mxu0 %v6971
        %7048 = vmatpush1.bf16.msra.mxu0 %v6970
        %7049 = vmatprep.subr.bf16.mxu0 0
        %7050 = vmatpush1.bf16.msra.mxu0 0
        %7051 = vmatprep.subr.bf16.mxu0 0
        %7052 = vmatpush1.bf16.msra.mxu0 0
        %7053 = vmatprep.subr.bf16.mxu0 0
        %7054 = vmatpush1.bf16.msra.mxu0 0
        %7055 = vmatprep.subr.bf16.mxu0 0
        %7056 = vmatpush1.bf16.msra.mxu0 0
        %7057 = vmatprep.subr.bf16.mxu0 0
        %7058 = vmatpush1.bf16.msra.mxu0 0
        %7059 = vmatprep.subr.bf16.mxu0 0
        %7060 = vmatpush1.bf16.msra.mxu0 0
        %7061 = vmatprep.subr.bf16.mxu0 0
        %7062 = vmatpush1.bf16.msra.mxu0 0
        %7063 = vmatprep.subr.bf16.mxu0 0
        %7064 = vmatpush1.bf16.msra.mxu0 0
        %7065 = vmatprep.mubr.bf16.mxu0 0
        %7066 = vmatmul.mubr.bf16.gmra.mrb[0].mxu0 %v2358
        %v7067 = vpop.f32.mrb[0].mxu0
        %v7068 = vadd.f32 %v6040, %v7067
        %v7069 = vpop.f32.mrb[0].mxu0
        %v7070 = vadd.f32 %v6042, %v7069
        %v7071 = vpop.f32.mrb[0].mxu0
        %v7072 = vadd.f32 %v6044, %v7071
        %v7073 = vpop.f32.mrb[0].mxu0
        %v7074 = vadd.f32 %v6046, %v7073
        %7075 = vmatprep.mubr.bf16.mxu0 0
        %7076 = vmatmul.mubr.bf16.gmra.mrb[0].mxu0 %v2359
        %v7077 = vpop.f32.mrb[0].mxu0
        %v7078 = vadd.f32 %v6050, %v7077
        %v7079 = vpop.f32.mrb[0].mxu0
        %v7080 = vadd.f32 %v6052, %v7079
        %v7081 = vpop.f32.mrb[0].mxu0
        %v7082 = vadd.f32 %v6054, %v7081
        %v7083 = vpop.f32.mrb[0].mxu0
        %v7084 = vadd.f32 %v6056, %v7083
        %7085 = vmatprep.mubr.bf16.mxu0 0
        %7086 = vmatmul.mubr.bf16.gmra.mrb[0].mxu0 %v2360
        %v7087 = vpop.f32.mrb[0].mxu0
        %v7088 = vadd.f32 %v6060, %v7087
        %v7089 = vpop.f32.mrb[0].mxu0
        %v7090 = vadd.f32 %v6062, %v7089
        %v7091 = vpop.f32.mrb[0].mxu0
        %v7092 = vadd.f32 %v6064, %v7091
        %v7093 = vpop.f32.mrb[0].mxu0
        %v7094 = vadd.f32 %v6066, %v7093
        %7095 = vmatprep.mubr.bf16.mxu0 0
        %7096 = vmatmul.mubr.bf16.gmra.mrb[0].mxu0 %v2361
        %v7097 = vpop.f32.mrb[0].mxu0
        %v7098 = vadd.f32 %v6070, %v7097
        %v7099 = vpop.f32.mrb[0].mxu0
        %v7100 = vadd.f32 %v6072, %v7099
        %v7101 = vpop.f32.mrb[0].mxu0
        %v7102 = vadd.f32 %v6074, %v7101
        %v7103 = vpop.f32.mrb[0].mxu0
        %v7104 = vadd.f32 %v6076, %v7103
        %7105 = vmatprep.mubr.bf16.mxu0 0
        %7106 = vmatmul.mubr.bf16.gmra.mrb[0].mxu0 %v2362
        %v7107 = vpop.f32.mrb[0].mxu0
        %v7108 = vadd.f32 %v6080, %v7107
        %v7109 = vpop.f32.mrb[0].mxu0
        %v7110 = vadd.f32 %v6082, %v7109
        %v7111 = vpop.f32.mrb[0].mxu0
        %v7112 = vadd.f32 %v6084, %v7111
        %v7113 = vpop.f32.mrb[0].mxu0
        %v7114 = vadd.f32 %v6086, %v7113
        %7115 = vmatprep.mubr.bf16.mxu0 0
        %7116 = vmatmul.mubr.bf16.gmra.mrb[0].mxu0 %v2363
        %v7117 = vpop.f32.mrb[0].mxu0
        %v7118 = vadd.f32 %v6090, %v7117
        %v7119 = vpop.f32.mrb[0].mxu0
        %v7120 = vadd.f32 %v6092, %v7119
        %v7121 = vpop.f32.mrb[0].mxu0
        %v7122 = vadd.f32 %v6094, %v7121
        %v7123 = vpop.f32.mrb[0].mxu0
        %v7124 = vadd.f32 %v6096, %v7123
        %7125 = vmatprep.mubr.bf16.mxu0 0
        %7126 = vmatmul.mubr.bf16.gmra.mrb[0].mxu0 %v2364
        %v7127 = vpop.f32.mrb[0].mxu0
        %v7128 = vadd.f32 %v6100, %v7127
        %v7129 = vpop.f32.mrb[0].mxu0
        %v7130 = vadd.f32 %v6102, %v7129
        %v7131 = vpop.f32.mrb[0].mxu0
        %v7132 = vadd.f32 %v6104, %v7131
        %v7133 = vpop.f32.mrb[0].mxu0
        %v7134 = vadd.f32 %v6106, %v7133
        %7135 = vmatprep.mubr.bf16.mxu0 0
        %7136 = vmatmul.mubr.bf16.gmra.mrb[0].mxu0 %v2365
        %v7137 = vpop.f32.mrb[0].mxu0
        %v7138 = vadd.f32 %v6110, %v7137
        %v7139 = vpop.f32.mrb[0].mxu0
        %v7140 = vadd.f32 %v6112, %v7139
        %v7141 = vpop.f32.mrb[0].mxu0
        %v7142 = vadd.f32 %v6114, %v7141
        %v7143 = vpop.f32.mrb[0].mxu0
        %v7144 = vadd.f32 %v6116, %v7143
        %7145 = vmatprep.mubr.bf16.mxu0 0
        %7146 = vmatmul.mubr.bf16.gmra.mrb[0].mxu0 %v2366
        %v7147 = vpop.f32.mrb[0].mxu0
        %v7148 = vadd.f32 %v6120, %v7147
        %v7149 = vpop.f32.mrb[0].mxu0
        %v7150 = vadd.f32 %v6122, %v7149
        %v7151 = vpop.f32.mrb[0].mxu0
        %v7152 = vadd.f32 %v6124, %v7151
        %v7153 = vpop.f32.mrb[0].mxu0
        %v7154 = vadd.f32 %v6126, %v7153
        %7155 = vmatprep.mubr.bf16.mxu0 0
        %7156 = vmatmul.mubr.bf16.gmra.mrb[0].mxu0 %v2367
        %v7157 = vpop.f32.mrb[0].mxu0
        %v7158 = vadd.f32 %v6130, %v7157
        %v7159 = vpop.f32.mrb[0].mxu0
        %v7160 = vadd.f32 %v6132, %v7159
        %v7161 = vpop.f32.mrb[0].mxu0
        %v7162 = vadd.f32 %v6134, %v7161
        %v7163 = vpop.f32.mrb[0].mxu0
        %v7164 = vadd.f32 %v6136, %v7163
        %7165 = vmatprep.mubr.bf16.mxu0 0
        %7166 = vmatmul.mubr.bf16.gmra.mrb[0].mxu0 %v2368
        %v7167 = vpop.f32.mrb[0].mxu0
        %v7168 = vadd.f32 %v6140, %v7167
        %v7169 = vpop.f32.mrb[0].mxu0
        %v7170 = vadd.f32 %v6142, %v7169
        %v7171 = vpop.f32.mrb[0].mxu0
        %v7172 = vadd.f32 %v6144, %v7171
        %v7173 = vpop.f32.mrb[0].mxu0
        %v7174 = vadd.f32 %v6146, %v7173
        %7175 = vmatprep.mubr.bf16.mxu0 0
        %7176 = vmatmul.mubr.bf16.gmra.mrb[0].mxu0 %v2369
        %v7177 = vpop.f32.mrb[0].mxu0
        %v7178 = vadd.f32 %v6150, %v7177
        %v7179 = vpop.f32.mrb[0].mxu0
        %v7180 = vadd.f32 %v6152, %v7179
        %v7181 = vpop.f32.mrb[0].mxu0
        %v7182 = vadd.f32 %v6154, %v7181
        %v7183 = vpop.f32.mrb[0].mxu0
        %v7184 = vadd.f32 %v6156, %v7183
        %7185 = vmatprep.mubr.bf16.mxu0 0
        %7186 = vmatmul.mubr.bf16.gmra.mrb[0].mxu0 %v2370
        %v7187 = vpop.f32.mrb[0].mxu0
        %v7188 = vadd.f32 %v6160, %v7187
        %v7189 = vpop.f32.mrb[0].mxu0
        %v7190 = vadd.f32 %v6162, %v7189
        %v7191 = vpop.f32.mrb[0].mxu0
        %v7192 = vadd.f32 %v6164, %v7191
        %v7193 = vpop.f32.mrb[0].mxu0
        %v7194 = vadd.f32 %v6166, %v7193
        %7195 = vmatprep.mubr.bf16.mxu0 0
        %7196 = vmatmul.mubr.bf16.gmra.mrb[0].mxu0 %v2371
        %v7197 = vpop.f32.mrb[0].mxu0
        %v7198 = vadd.f32 %v6170, %v7197
        %v7199 = vpop.f32.mrb[0].mxu0
        %v7200 = vadd.f32 %v6172, %v7199
        %v7201 = vpop.f32.mrb[0].mxu0
        %v7202 = vadd.f32 %v6174, %v7201
        %v7203 = vpop.f32.mrb[0].mxu0
        %v7204 = vadd.f32 %v6176, %v7203
        %7205 = vmatprep.mubr.bf16.mxu0 0
        %7206 = vmatmul.mubr.bf16.gmra.mrb[0].mxu0 %v2372
        %v7207 = vpop.f32.mrb[0].mxu0
        %v7208 = vadd.f32 %v6180, %v7207
        %v7209 = vpop.f32.mrb[0].mxu0
        %v7210 = vadd.f32 %v6182, %v7209
        %v7211 = vpop.f32.mrb[0].mxu0
        %v7212 = vadd.f32 %v6184, %v7211
        %v7213 = vpop.f32.mrb[0].mxu0
        %v7214 = vadd.f32 %v6186, %v7213
        %7215 = vmatprep.mubr.bf16.mxu0 0
        %7216 = vmatmul.mubr.bf16.gmra.mrb[0].mxu0 %v2373
        %v7217 = vpop.f32.mrb[0].mxu0
        %v7218 = vadd.f32 %v6190, %v7217
        %v7219 = vpop.f32.mrb[0].mxu0
        %v7220 = vadd.f32 %v6192, %v7219
        %v7221 = vpop.f32.mrb[0].mxu0
        %v7222 = vadd.f32 %v6194, %v7221
        %v7223 = vpop.f32.mrb[0].mxu0
        %v7224 = vadd.f32 %v6196, %v7223
        %7225 = vdwg.mxu0
        %7226 = vmatprep.subr.bf16.mxu0 %v6924
        %7227 = vmatpush1.bf16.msra.mxu0 %v6923
        %7228 = vmatprep.subr.bf16.mxu0 %v6931
        %7229 = vmatpush1.bf16.msra.mxu0 %v6930
        %7230 = vmatprep.subr.bf16.mxu0 %v6938
        %7231 = vmatpush1.bf16.msra.mxu0 %v6937
        %7232 = vmatprep.subr.bf16.mxu0 %v6945
        %7233 = vmatpush1.bf16.msra.mxu0 %v6944
        %7234 = vmatprep.subr.bf16.mxu0 %v6952
        %7235 = vmatpush1.bf16.msra.mxu0 %v6951
        %7236 = vmatprep.subr.bf16.mxu0 %v6959
        %7237 = vmatpush1.bf16.msra.mxu0 %v6958
        %7238 = vmatprep.subr.bf16.mxu0 %v6966
        %7239 = vmatpush1.bf16.msra.mxu0 %v6965
        %7240 = vmatprep.subr.bf16.mxu0 %v6973
        %7241 = vmatpush1.bf16.msra.mxu0 %v6972
        %7242 = vmatprep.subr.bf16.mxu0 0
        %7243 = vmatpush1.bf16.msra.mxu0 0
        %7244 = vmatprep.subr.bf16.mxu0 0
        %7245 = vmatpush1.bf16.msra.mxu0 0
        %7246 = vmatprep.subr.bf16.mxu0 0
        %7247 = vmatpush1.bf16.msra.mxu0 0
        %7248 = vmatprep.subr.bf16.mxu0 0
        %7249 = vmatpush1.bf16.msra.mxu0 0
        %7250 = vmatprep.subr.bf16.mxu0 0
        %7251 = vmatpush1.bf16.msra.mxu0 0
        %7252 = vmatprep.subr.bf16.mxu0 0
        %7253 = vmatpush1.bf16.msra.mxu0 0
        %7254 = vmatprep.subr.bf16.mxu0 0
        %7255 = vmatpush1.bf16.msra.mxu0 0
        %7256 = vmatprep.subr.bf16.mxu0 0
        %7257 = vmatpush1.bf16.msra.mxu0 0
        %7258 = vmatprep.mubr.bf16.mxu0 0
        %7259 = vmatmul.mubr.bf16.gmra.mrb[0].mxu0 %v2358
        %v7260 = vpop.f32.mrb[0].mxu0
        %v7261 = vadd.f32 %v6233, %v7260
        %v7262 = vpop.f32.mrb[0].mxu0
        %v7263 = vadd.f32 %v6235, %v7262
        %v7264 = vpop.f32.mrb[0].mxu0
        %v7265 = vadd.f32 %v6237, %v7264
        %v7266 = vpop.f32.mrb[0].mxu0
        %v7267 = vadd.f32 %v6239, %v7266
        %7268 = vmatprep.mubr.bf16.mxu0 0
        %7269 = vmatmul.mubr.bf16.gmra.mrb[0].mxu0 %v2359
        %v7270 = vpop.f32.mrb[0].mxu0
        %v7271 = vadd.f32 %v6243, %v7270
        %v7272 = vpop.f32.mrb[0].mxu0
        %v7273 = vadd.f32 %v6245, %v7272
        %v7274 = vpop.f32.mrb[0].mxu0
        %v7275 = vadd.f32 %v6247, %v7274
        %v7276 = vpop.f32.mrb[0].mxu0
        %v7277 = vadd.f32 %v6249, %v7276
        %7278 = vmatprep.mubr.bf16.mxu0 0
        %7279 = vmatmul.mubr.bf16.gmra.mrb[0].mxu0 %v2360
        %v7280 = vpop.f32.mrb[0].mxu0
        %v7281 = vadd.f32 %v6253, %v7280
        %v7282 = vpop.f32.mrb[0].mxu0
        %v7283 = vadd.f32 %v6255, %v7282
        %v7284 = vpop.f32.mrb[0].mxu0
        %v7285 = vadd.f32 %v6257, %v7284
        %v7286 = vpop.f32.mrb[0].mxu0
        %v7287 = vadd.f32 %v6259, %v7286
        %7288 = vmatprep.mubr.bf16.mxu0 0
        %7289 = vmatmul.mubr.bf16.gmra.mrb[0].mxu0 %v2361
        %v7290 = vpop.f32.mrb[0].mxu0
        %v7291 = vadd.f32 %v6263, %v7290
        %v7292 = vpop.f32.mrb[0].mxu0
        %v7293 = vadd.f32 %v6265, %v7292
        %v7294 = vpop.f32.mrb[0].mxu0
        %v7295 = vadd.f32 %v6267, %v7294
        %v7296 = vpop.f32.mrb[0].mxu0
        %v7297 = vadd.f32 %v6269, %v7296
        %7298 = vmatprep.mubr.bf16.mxu0 0
        %7299 = vmatmul.mubr.bf16.gmra.mrb[0].mxu0 %v2362
        %v7300 = vpop.f32.mrb[0].mxu0
        %v7301 = vadd.f32 %v6273, %v7300
        %v7302 = vpop.f32.mrb[0].mxu0
        %v7303 = vadd.f32 %v6275, %v7302
        %v7304 = vpop.f32.mrb[0].mxu0
        %v7305 = vadd.f32 %v6277, %v7304
        %v7306 = vpop.f32.mrb[0].mxu0
        %v7307 = vadd.f32 %v6279, %v7306
        %7308 = vmatprep.mubr.bf16.mxu0 0
        %7309 = vmatmul.mubr.bf16.gmra.mrb[0].mxu0 %v2363
        %v7310 = vpop.f32.mrb[0].mxu0
        %v7311 = vadd.f32 %v6283, %v7310
        %v7312 = vpop.f32.mrb[0].mxu0
        %v7313 = vadd.f32 %v6285, %v7312
        %v7314 = vpop.f32.mrb[0].mxu0
        %v7315 = vadd.f32 %v6287, %v7314
        %v7316 = vpop.f32.mrb[0].mxu0
        %v7317 = vadd.f32 %v6289, %v7316
        %7318 = vmatprep.mubr.bf16.mxu0 0
        %7319 = vmatmul.mubr.bf16.gmra.mrb[0].mxu0 %v2364
        %v7320 = vpop.f32.mrb[0].mxu0
        %v7321 = vadd.f32 %v6293, %v7320
        %v7322 = vpop.f32.mrb[0].mxu0
        %v7323 = vadd.f32 %v6295, %v7322
        %v7324 = vpop.f32.mrb[0].mxu0
        %v7325 = vadd.f32 %v6297, %v7324
        %v7326 = vpop.f32.mrb[0].mxu0
        %v7327 = vadd.f32 %v6299, %v7326
        %7328 = vmatprep.mubr.bf16.mxu0 0
        %7329 = vmatmul.mubr.bf16.gmra.mrb[0].mxu0 %v2365
        %v7330 = vpop.f32.mrb[0].mxu0
        %v7331 = vadd.f32 %v6303, %v7330
        %v7332 = vpop.f32.mrb[0].mxu0
        %v7333 = vadd.f32 %v6305, %v7332
        %v7334 = vpop.f32.mrb[0].mxu0
        %v7335 = vadd.f32 %v6307, %v7334
        %v7336 = vpop.f32.mrb[0].mxu0
        %v7337 = vadd.f32 %v6309, %v7336
        %7338 = vmatprep.mubr.bf16.mxu0 0
        %7339 = vmatmul.mubr.bf16.gmra.mrb[0].mxu0 %v2366
        %v7340 = vpop.f32.mrb[0].mxu0
        %v7341 = vadd.f32 %v6313, %v7340
        %v7342 = vpop.f32.mrb[0].mxu0
        %v7343 = vadd.f32 %v6315, %v7342
        %v7344 = vpop.f32.mrb[0].mxu0
        %v7345 = vadd.f32 %v6317, %v7344
        %v7346 = vpop.f32.mrb[0].mxu0
        %v7347 = vadd.f32 %v6319, %v7346
        %7348 = vmatprep.mubr.bf16.mxu0 0
        %7349 = vmatmul.mubr.bf16.gmra.mrb[0].mxu0 %v2367
        %v7350 = vpop.f32.mrb[0].mxu0
        %v7351 = vadd.f32 %v6323, %v7350
        %v7352 = vpop.f32.mrb[0].mxu0
        %v7353 = vadd.f32 %v6325, %v7352
        %v7354 = vpop.f32.mrb[0].mxu0
        %v7355 = vadd.f32 %v6327, %v7354
        %v7356 = vpop.f32.mrb[0].mxu0
        %v7357 = vadd.f32 %v6329, %v7356
        %7358 = vmatprep.mubr.bf16.mxu0 0
        %7359 = vmatmul.mubr.bf16.gmra.mrb[0].mxu0 %v2368
        %v7360 = vpop.f32.mrb[0].mxu0
        %v7361 = vadd.f32 %v6333, %v7360
        %v7362 = vpop.f32.mrb[0].mxu0
        %v7363 = vadd.f32 %v6335, %v7362
        %v7364 = vpop.f32.mrb[0].mxu0
        %v7365 = vadd.f32 %v6337, %v7364
        %v7366 = vpop.f32.mrb[0].mxu0
        %v7367 = vadd.f32 %v6339, %v7366
        %7368 = vmatprep.mubr.bf16.mxu0 0
        %7369 = vmatmul.mubr.bf16.gmra.mrb[0].mxu0 %v2369
        %v7370 = vpop.f32.mrb[0].mxu0
        %v7371 = vadd.f32 %v6343, %v7370
        %v7372 = vpop.f32.mrb[0].mxu0
        %v7373 = vadd.f32 %v6345, %v7372
        %v7374 = vpop.f32.mrb[0].mxu0
        %v7375 = vadd.f32 %v6347, %v7374
        %v7376 = vpop.f32.mrb[0].mxu0
        %v7377 = vadd.f32 %v6349, %v7376
        %7378 = vmatprep.mubr.bf16.mxu0 0
        %7379 = vmatmul.mubr.bf16.gmra.mrb[0].mxu0 %v2370
        %v7380 = vpop.f32.mrb[0].mxu0
        %v7381 = vadd.f32 %v6353, %v7380
        %v7382 = vpop.f32.mrb[0].mxu0
        %v7383 = vadd.f32 %v6355, %v7382
        %v7384 = vpop.f32.mrb[0].mxu0
        %v7385 = vadd.f32 %v6357, %v7384
        %v7386 = vpop.f32.mrb[0].mxu0
        %v7387 = vadd.f32 %v6359, %v7386
        %7388 = vmatprep.mubr.bf16.mxu0 0
        %7389 = vmatmul.mubr.bf16.gmra.mrb[0].mxu0 %v2371
        %v7390 = vpop.f32.mrb[0].mxu0
        %v7391 = vadd.f32 %v6363, %v7390
        %v7392 = vpop.f32.mrb[0].mxu0
        %v7393 = vadd.f32 %v6365, %v7392
        %v7394 = vpop.f32.mrb[0].mxu0
        %v7395 = vadd.f32 %v6367, %v7394
        %v7396 = vpop.f32.mrb[0].mxu0
        %v7397 = vadd.f32 %v6369, %v7396
        %7398 = vmatprep.mubr.bf16.mxu0 0
        %7399 = vmatmul.mubr.bf16.gmra.mrb[0].mxu0 %v2372
        %v7400 = vpop.f32.mrb[0].mxu0
        %v7401 = vadd.f32 %v6373, %v7400
        %v7402 = vpop.f32.mrb[0].mxu0
        %v7403 = vadd.f32 %v6375, %v7402
        %v7404 = vpop.f32.mrb[0].mxu0
        %v7405 = vadd.f32 %v6377, %v7404
        %v7406 = vpop.f32.mrb[0].mxu0
        %v7407 = vadd.f32 %v6379, %v7406
        %7408 = vmatprep.mubr.bf16.mxu0 0
        %7409 = vmatmul.mubr.bf16.gmra.mrb[0].mxu0 %v2373
        %v7410 = vpop.f32.mrb[0].mxu0
        %v7411 = vadd.f32 %v6383, %v7410
        %v7412 = vpop.f32.mrb[0].mxu0
        %v7413 = vadd.f32 %v6385, %v7412
        %v7414 = vpop.f32.mrb[0].mxu0
        %v7415 = vadd.f32 %v6387, %v7414
        %v7416 = vpop.f32.mrb[0].mxu0
        %v7417 = vadd.f32 %v6389, %v7416
        %7418 = vdwg.mxu0
        %7419 = vmatprep.subr.bf16.mxu0 %v6926
        %7420 = vmatpush1.bf16.msra.mxu0 %v6925
        %7421 = vmatprep.subr.bf16.mxu0 %v6933
        %7422 = vmatpush1.bf16.msra.mxu0 %v6932
        %7423 = vmatprep.subr.bf16.mxu0 %v6940
        %7424 = vmatpush1.bf16.msra.mxu0 %v6939
        %7425 = vmatprep.subr.bf16.mxu0 %v6947
        %7426 = vmatpush1.bf16.msra.mxu0 %v6946
        %7427 = vmatprep.subr.bf16.mxu0 %v6954
        %7428 = vmatpush1.bf16.msra.mxu0 %v6953
        %7429 = vmatprep.subr.bf16.mxu0 %v6961
        %7430 = vmatpush1.bf16.msra.mxu0 %v6960
        %7431 = vmatprep.subr.bf16.mxu0 %v6968
        %7432 = vmatpush1.bf16.msra.mxu0 %v6967
        %7433 = vmatprep.subr.bf16.mxu0 %v6975
        %7434 = vmatpush1.bf16.msra.mxu0 %v6974
        %7435 = vmatprep.subr.bf16.mxu0 0
        %7436 = vmatpush1.bf16.msra.mxu0 0
        %7437 = vmatprep.subr.bf16.mxu0 0
        %7438 = vmatpush1.bf16.msra.mxu0 0
        %7439 = vmatprep.subr.bf16.mxu0 0
        %7440 = vmatpush1.bf16.msra.mxu0 0
        %7441 = vmatprep.subr.bf16.mxu0 0
        %7442 = vmatpush1.bf16.msra.mxu0 0
        %7443 = vmatprep.subr.bf16.mxu0 0
        %7444 = vmatpush1.bf16.msra.mxu0 0
        %7445 = vmatprep.subr.bf16.mxu0 0
        %7446 = vmatpush1.bf16.msra.mxu0 0
        %7447 = vmatprep.subr.bf16.mxu0 0
        %7448 = vmatpush1.bf16.msra.mxu0 0
        %7449 = vmatprep.subr.bf16.mxu0 0
        %7450 = vmatpush1.bf16.msra.mxu0 0
        %7451 = vmatprep.mubr.bf16.mxu0 0
        %7452 = vmatmul.mubr.bf16.gmra.mrb[0].mxu0 %v2358
        %v7453 = vpop.f32.mrb[0].mxu0
        %v7454 = vadd.f32 %v6426, %v7453
        %v7455 = vpop.f32.mrb[0].mxu0
        %v7456 = vadd.f32 %v6428, %v7455
        %v7457 = vpop.f32.mrb[0].mxu0
        %v7458 = vadd.f32 %v6430, %v7457
        %v7459 = vpop.f32.mrb[0].mxu0
        %v7460 = vadd.f32 %v6432, %v7459
        %7461 = vmatprep.mubr.bf16.mxu0 0
        %7462 = vmatmul.mubr.bf16.gmra.mrb[0].mxu0 %v2359
        %v7463 = vpop.f32.mrb[0].mxu0
        %v7464 = vadd.f32 %v6436, %v7463
        %v7465 = vpop.f32.mrb[0].mxu0
        %v7466 = vadd.f32 %v6438, %v7465
        %v7467 = vpop.f32.mrb[0].mxu0
        %v7468 = vadd.f32 %v6440, %v7467
        %v7469 = vpop.f32.mrb[0].mxu0
        %v7470 = vadd.f32 %v6442, %v7469
        %7471 = vmatprep.mubr.bf16.mxu0 0
        %7472 = vmatmul.mubr.bf16.gmra.mrb[0].mxu0 %v2360
        %v7473 = vpop.f32.mrb[0].mxu0
        %v7474 = vadd.f32 %v6446, %v7473
        %v7475 = vpop.f32.mrb[0].mxu0
        %v7476 = vadd.f32 %v6448, %v7475
        %v7477 = vpop.f32.mrb[0].mxu0
        %v7478 = vadd.f32 %v6450, %v7477
        %v7479 = vpop.f32.mrb[0].mxu0
        %v7480 = vadd.f32 %v6452, %v7479
        %7481 = vmatprep.mubr.bf16.mxu0 0
        %7482 = vmatmul.mubr.bf16.gmra.mrb[0].mxu0 %v2361
        %v7483 = vpop.f32.mrb[0].mxu0
        %v7484 = vadd.f32 %v6456, %v7483
        %v7485 = vpop.f32.mrb[0].mxu0
        %v7486 = vadd.f32 %v6458, %v7485
        %v7487 = vpop.f32.mrb[0].mxu0
        %v7488 = vadd.f32 %v6460, %v7487
        %v7489 = vpop.f32.mrb[0].mxu0
        %v7490 = vadd.f32 %v6462, %v7489
        %7491 = vmatprep.mubr.bf16.mxu0 0
        %7492 = vmatmul.mubr.bf16.gmra.mrb[0].mxu0 %v2362
        %v7493 = vpop.f32.mrb[0].mxu0
        %v7494 = vadd.f32 %v6466, %v7493
        %v7495 = vpop.f32.mrb[0].mxu0
        %v7496 = vadd.f32 %v6468, %v7495
        %v7497 = vpop.f32.mrb[0].mxu0
        %v7498 = vadd.f32 %v6470, %v7497
        %v7499 = vpop.f32.mrb[0].mxu0
        %v7500 = vadd.f32 %v6472, %v7499
        %7501 = vmatprep.mubr.bf16.mxu0 0
        %7502 = vmatmul.mubr.bf16.gmra.mrb[0].mxu0 %v2363
        %v7503 = vpop.f32.mrb[0].mxu0
        %v7504 = vadd.f32 %v6476, %v7503
        %v7505 = vpop.f32.mrb[0].mxu0
        %v7506 = vadd.f32 %v6478, %v7505
        %v7507 = vpop.f32.mrb[0].mxu0
        %v7508 = vadd.f32 %v6480, %v7507
        %v7509 = vpop.f32.mrb[0].mxu0
        %v7510 = vadd.f32 %v6482, %v7509
        %7511 = vmatprep.mubr.bf16.mxu0 0
        %7512 = vmatmul.mubr.bf16.gmra.mrb[0].mxu0 %v2364
        %v7513 = vpop.f32.mrb[0].mxu0
        %v7514 = vadd.f32 %v6486, %v7513
        %v7515 = vpop.f32.mrb[0].mxu0
        %v7516 = vadd.f32 %v6488, %v7515
        %v7517 = vpop.f32.mrb[0].mxu0
        %v7518 = vadd.f32 %v6490, %v7517
        %v7519 = vpop.f32.mrb[0].mxu0
        %v7520 = vadd.f32 %v6492, %v7519
        %7521 = vmatprep.mubr.bf16.mxu0 0
        %7522 = vmatmul.mubr.bf16.gmra.mrb[0].mxu0 %v2365
        %v7523 = vpop.f32.mrb[0].mxu0
        %v7524 = vadd.f32 %v6496, %v7523
        %v7525 = vpop.f32.mrb[0].mxu0
        %v7526 = vadd.f32 %v6498, %v7525
        %v7527 = vpop.f32.mrb[0].mxu0
        %v7528 = vadd.f32 %v6500, %v7527
        %v7529 = vpop.f32.mrb[0].mxu0
        %v7530 = vadd.f32 %v6502, %v7529
        %7531 = vmatprep.mubr.bf16.mxu0 0
        %7532 = vmatmul.mubr.bf16.gmra.mrb[0].mxu0 %v2366
        %v7533 = vpop.f32.mrb[0].mxu0
        %v7534 = vadd.f32 %v6506, %v7533
        %v7535 = vpop.f32.mrb[0].mxu0
        %v7536 = vadd.f32 %v6508, %v7535
        %v7537 = vpop.f32.mrb[0].mxu0
        %v7538 = vadd.f32 %v6510, %v7537
        %v7539 = vpop.f32.mrb[0].mxu0
        %v7540 = vadd.f32 %v6512, %v7539
        %7541 = vmatprep.mubr.bf16.mxu0 0
        %7542 = vmatmul.mubr.bf16.gmra.mrb[0].mxu0 %v2367
        %v7543 = vpop.f32.mrb[0].mxu0
        %v7544 = vadd.f32 %v6516, %v7543
        %v7545 = vpop.f32.mrb[0].mxu0
        %v7546 = vadd.f32 %v6518, %v7545
        %v7547 = vpop.f32.mrb[0].mxu0
        %v7548 = vadd.f32 %v6520, %v7547
        %v7549 = vpop.f32.mrb[0].mxu0
        %v7550 = vadd.f32 %v6522, %v7549
        %7551 = vmatprep.mubr.bf16.mxu0 0
        %7552 = vmatmul.mubr.bf16.gmra.mrb[0].mxu0 %v2368
        %v7553 = vpop.f32.mrb[0].mxu0
        %v7554 = vadd.f32 %v6526, %v7553
        %v7555 = vpop.f32.mrb[0].mxu0
        %v7556 = vadd.f32 %v6528, %v7555
        %v7557 = vpop.f32.mrb[0].mxu0
        %v7558 = vadd.f32 %v6530, %v7557
        %v7559 = vpop.f32.mrb[0].mxu0
        %v7560 = vadd.f32 %v6532, %v7559
        %7561 = vmatprep.mubr.bf16.mxu0 0
        %7562 = vmatmul.mubr.bf16.gmra.mrb[0].mxu0 %v2369
        %v7563 = vpop.f32.mrb[0].mxu0
        %v7564 = vadd.f32 %v6536, %v7563
        %v7565 = vpop.f32.mrb[0].mxu0
        %v7566 = vadd.f32 %v6538, %v7565
        %v7567 = vpop.f32.mrb[0].mxu0
        %v7568 = vadd.f32 %v6540, %v7567
        %v7569 = vpop.f32.mrb[0].mxu0
        %v7570 = vadd.f32 %v6542, %v7569
        %7571 = vmatprep.mubr.bf16.mxu0 0
        %7572 = vmatmul.mubr.bf16.gmra.mrb[0].mxu0 %v2370
        %v7573 = vpop.f32.mrb[0].mxu0
        %v7574 = vadd.f32 %v6546, %v7573
        %v7575 = vpop.f32.mrb[0].mxu0
        %v7576 = vadd.f32 %v6548, %v7575
        %v7577 = vpop.f32.mrb[0].mxu0
        %v7578 = vadd.f32 %v6550, %v7577
        %v7579 = vpop.f32.mrb[0].mxu0
        %v7580 = vadd.f32 %v6552, %v7579
        %7581 = vmatprep.mubr.bf16.mxu0 0
        %7582 = vmatmul.mubr.bf16.gmra.mrb[0].mxu0 %v2371
        %v7583 = vpop.f32.mrb[0].mxu0
        %v7584 = vadd.f32 %v6556, %v7583
        %v7585 = vpop.f32.mrb[0].mxu0
        %v7586 = vadd.f32 %v6558, %v7585
        %v7587 = vpop.f32.mrb[0].mxu0
        %v7588 = vadd.f32 %v6560, %v7587
        %v7589 = vpop.f32.mrb[0].mxu0
        %v7590 = vadd.f32 %v6562, %v7589
        %7591 = vmatprep.mubr.bf16.mxu0 0
        %7592 = vmatmul.mubr.bf16.gmra.mrb[0].mxu0 %v2372
        %v7593 = vpop.f32.mrb[0].mxu0
        %v7594 = vadd.f32 %v6566, %v7593
        %v7595 = vpop.f32.mrb[0].mxu0
        %v7596 = vadd.f32 %v6568, %v7595
        %v7597 = vpop.f32.mrb[0].mxu0
        %v7598 = vadd.f32 %v6570, %v7597
        %v7599 = vpop.f32.mrb[0].mxu0
        %v7600 = vadd.f32 %v6572, %v7599
        %7601 = vmatprep.mubr.bf16.mxu0 0
        %7602 = vmatmul.mubr.bf16.gmra.mrb[0].mxu0 %v2373
        %v7603 = vpop.f32.mrb[0].mxu0
        %v7604 = vadd.f32 %v6576, %v7603
        %v7605 = vpop.f32.mrb[0].mxu0
        %v7606 = vadd.f32 %v6578, %v7605
        %v7607 = vpop.f32.mrb[0].mxu0
        %v7608 = vadd.f32 %v6580, %v7607
        %v7609 = vpop.f32.mrb[0].mxu0
        %v7610 = vadd.f32 %v6582, %v7609
        %7611 = vdwg.mxu0
        %7612 = vmatprep.subr.bf16.mxu0 0
        %7613 = vmatpush1.bf16.msra.mxu0 %v6927
        %7614 = vmatprep.subr.bf16.mxu0 0
        %7615 = vmatpush1.bf16.msra.mxu0 %v6934
        %7616 = vmatprep.subr.bf16.mxu0 0
        %7617 = vmatpush1.bf16.msra.mxu0 %v6941
        %7618 = vmatprep.subr.bf16.mxu0 0
        %7619 = vmatpush1.bf16.msra.mxu0 %v6948
        %7620 = vmatprep.subr.bf16.mxu0 0
        %7621 = vmatpush1.bf16.msra.mxu0 %v6955
        %7622 = vmatprep.subr.bf16.mxu0 0
        %7623 = vmatpush1.bf16.msra.mxu0 %v6962
        %7624 = vmatprep.subr.bf16.mxu0 0
        %7625 = vmatpush1.bf16.msra.mxu0 %v6969
        %7626 = vmatprep.subr.bf16.mxu0 0
        %7627 = vmatpush1.bf16.msra.mxu0 %v6976
        %7628 = vmatprep.subr.bf16.mxu0 0
        %7629 = vmatpush1.bf16.msra.mxu0 0
        %7630 = vmatprep.subr.bf16.mxu0 0
        %7631 = vmatpush1.bf16.msra.mxu0 0
        %7632 = vmatprep.subr.bf16.mxu0 0
        %7633 = vmatpush1.bf16.msra.mxu0 0
        %7634 = vmatprep.subr.bf16.mxu0 0
        %7635 = vmatpush1.bf16.msra.mxu0 0
        %7636 = vmatprep.subr.bf16.mxu0 0
        %7637 = vmatpush1.bf16.msra.mxu0 0
        %7638 = vmatprep.subr.bf16.mxu0 0
        %7639 = vmatpush1.bf16.msra.mxu0 0
        %7640 = vmatprep.subr.bf16.mxu0 0
        %7641 = vmatpush1.bf16.msra.mxu0 0
        %7642 = vmatprep.subr.bf16.mxu0 0
        %7643 = vmatpush1.bf16.msra.mxu0 0
        %7644 = vmatprep.mubr.bf16.mxu0 0
        %7645 = vmatmul.mubr.bf16.gmra.mrb[0].mxu0 %v2358
        %v7646 = vpop.f32.mrb[0].mxu0
        %v7647 = vadd.f32 %v6619, %v7646
        %v7648 = vpop.f32.mrb[0].mxu0
        %v7649 = vpop.f32.mrb[0].mxu0
        %v7650 = vadd.f32 %v6622, %v7649
        %v7651 = vpop.f32.mrb[0].mxu0
        %7652 = vmatprep.mubr.bf16.mxu0 0
        %7653 = vmatmul.mubr.bf16.gmra.mrb[0].mxu0 %v2359
        %v7654 = vpop.f32.mrb[0].mxu0
        %v7655 = vadd.f32 %v6627, %v7654
        %v7656 = vpop.f32.mrb[0].mxu0
        %v7657 = vpop.f32.mrb[0].mxu0
        %v7658 = vadd.f32 %v6630, %v7657
        %v7659 = vpop.f32.mrb[0].mxu0
        %7660 = vmatprep.mubr.bf16.mxu0 0
        %7661 = vmatmul.mubr.bf16.gmra.mrb[0].mxu0 %v2360
        %v7662 = vpop.f32.mrb[0].mxu0
        %v7663 = vadd.f32 %v6635, %v7662
        %v7664 = vpop.f32.mrb[0].mxu0
        %v7665 = vpop.f32.mrb[0].mxu0
        %v7666 = vadd.f32 %v6638, %v7665
        %v7667 = vpop.f32.mrb[0].mxu0
        %7668 = vmatprep.mubr.bf16.mxu0 0
        %7669 = vmatmul.mubr.bf16.gmra.mrb[0].mxu0 %v2361
        %v7670 = vpop.f32.mrb[0].mxu0
        %v7671 = vadd.f32 %v6643, %v7670
        %v7672 = vpop.f32.mrb[0].mxu0
        %v7673 = vpop.f32.mrb[0].mxu0
        %v7674 = vadd.f32 %v6646, %v7673
        %v7675 = vpop.f32.mrb[0].mxu0
        %7676 = vmatprep.mubr.bf16.mxu0 0
        %7677 = vmatmul.mubr.bf16.gmra.mrb[0].mxu0 %v2362
        %v7678 = vpop.f32.mrb[0].mxu0
        %v7679 = vadd.f32 %v6651, %v7678
        %v7680 = vpop.f32.mrb[0].mxu0
        %v7681 = vpop.f32.mrb[0].mxu0
        %v7682 = vadd.f32 %v6654, %v7681
        %v7683 = vpop.f32.mrb[0].mxu0
        %7684 = vmatprep.mubr.bf16.mxu0 0
        %7685 = vmatmul.mubr.bf16.gmra.mrb[0].mxu0 %v2363
        %v7686 = vpop.f32.mrb[0].mxu0
        %v7687 = vadd.f32 %v6659, %v7686
        %v7688 = vpop.f32.mrb[0].mxu0
        %v7689 = vpop.f32.mrb[0].mxu0
        %v7690 = vadd.f32 %v6662, %v7689
        %v7691 = vpop.f32.mrb[0].mxu0
        %7692 = vmatprep.mubr.bf16.mxu0 0
        %7693 = vmatmul.mubr.bf16.gmra.mrb[0].mxu0 %v2364
        %v7694 = vpop.f32.mrb[0].mxu0
        %v7695 = vadd.f32 %v6667, %v7694
        %v7696 = vpop.f32.mrb[0].mxu0
        %v7697 = vpop.f32.mrb[0].mxu0
        %v7698 = vadd.f32 %v6670, %v7697
        %v7699 = vpop.f32.mrb[0].mxu0
        %7700 = vmatprep.mubr.bf16.mxu0 0
        %7701 = vmatmul.mubr.bf16.gmra.mrb[0].mxu0 %v2365
        %v7702 = vpop.f32.mrb[0].mxu0
        %v7703 = vadd.f32 %v6675, %v7702
        %v7704 = vpop.f32.mrb[0].mxu0
        %v7705 = vpop.f32.mrb[0].mxu0
        %v7706 = vadd.f32 %v6678, %v7705
        %v7707 = vpop.f32.mrb[0].mxu0
        %7708 = vmatprep.mubr.bf16.mxu0 0
        %7709 = vmatmul.mubr.bf16.gmra.mrb[0].mxu0 %v2366
        %v7710 = vpop.f32.mrb[0].mxu0
        %v7711 = vadd.f32 %v6683, %v7710
        %v7712 = vpop.f32.mrb[0].mxu0
        %v7713 = vpop.f32.mrb[0].mxu0
        %v7714 = vadd.f32 %v6686, %v7713
        %v7715 = vpop.f32.mrb[0].mxu0
        %7716 = vmatprep.mubr.bf16.mxu0 0
        %7717 = vmatmul.mubr.bf16.gmra.mrb[0].mxu0 %v2367
        %v7718 = vpop.f32.mrb[0].mxu0
        %v7719 = vadd.f32 %v6691, %v7718
        %v7720 = vpop.f32.mrb[0].mxu0
        %v7721 = vpop.f32.mrb[0].mxu0
        %v7722 = vadd.f32 %v6694, %v7721
        %v7723 = vpop.f32.mrb[0].mxu0
        %7724 = vmatprep.mubr.bf16.mxu0 0
        %7725 = vmatmul.mubr.bf16.gmra.mrb[0].mxu0 %v2368
        %v7726 = vpop.f32.mrb[0].mxu0
        %v7727 = vadd.f32 %v6699, %v7726
        %v7728 = vpop.f32.mrb[0].mxu0
        %v7729 = vpop.f32.mrb[0].mxu0
        %v7730 = vadd.f32 %v6702, %v7729
        %v7731 = vpop.f32.mrb[0].mxu0
        %7732 = vmatprep.mubr.bf16.mxu0 0
        %7733 = vmatmul.mubr.bf16.gmra.mrb[0].mxu0 %v2369
        %v7734 = vpop.f32.mrb[0].mxu0
        %v7735 = vadd.f32 %v6707, %v7734
        %v7736 = vpop.f32.mrb[0].mxu0
        %v7737 = vpop.f32.mrb[0].mxu0
        %v7738 = vadd.f32 %v6710, %v7737
        %v7739 = vpop.f32.mrb[0].mxu0
        %7740 = vmatprep.mubr.bf16.mxu0 0
        %7741 = vmatmul.mubr.bf16.gmra.mrb[0].mxu0 %v2370
        %v7742 = vpop.f32.mrb[0].mxu0
        %v7743 = vadd.f32 %v6715, %v7742
        %v7744 = vpop.f32.mrb[0].mxu0
        %v7745 = vpop.f32.mrb[0].mxu0
        %v7746 = vadd.f32 %v6718, %v7745
        %v7747 = vpop.f32.mrb[0].mxu0
        %7748 = vmatprep.mubr.bf16.mxu0 0
        %7749 = vmatmul.mubr.bf16.gmra.mrb[0].mxu0 %v2371
        %v7750 = vpop.f32.mrb[0].mxu0
        %v7751 = vadd.f32 %v6723, %v7750
        %v7752 = vpop.f32.mrb[0].mxu0
        %v7753 = vpop.f32.mrb[0].mxu0
        %v7754 = vadd.f32 %v6726, %v7753
        %v7755 = vpop.f32.mrb[0].mxu0
        %7756 = vmatprep.mubr.bf16.mxu0 0
        %7757 = vmatmul.mubr.bf16.gmra.mrb[0].mxu0 %v2372
        %v7758 = vpop.f32.mrb[0].mxu0
        %v7759 = vadd.f32 %v6731, %v7758
        %v7760 = vpop.f32.mrb[0].mxu0
        %v7761 = vpop.f32.mrb[0].mxu0
        %v7762 = vadd.f32 %v6734, %v7761
        %v7763 = vpop.f32.mrb[0].mxu0
        %7764 = vmatprep.mubr.bf16.mxu0 0
        %7765 = vmatmul.mubr.bf16.gmra.mrb[0].mxu0 %v2373
        %v7766 = vpop.f32.mrb[0].mxu0
        %v7767 = vadd.f32 %v6739, %v7766
        %v7768 = vpop.f32.mrb[0].mxu0
        %v7769 = vpop.f32.mrb[0].mxu0
        %v7770 = vadd.f32 %v6742, %v7769
        %v7771 = vpop.f32.mrb[0].mxu0
        %7772 = vdwg.mxu0
        %v7773 = vld [vmem:[#allocation17] sm:$0xff]
        %v7775 = vlaneseq
        %v7776 = vshrl.u32 %v7775, 7
        %v7777 = vsub.s32 0, %v7776
        %v7778 = vrot.slane %v7773, %v7777
        %v7779 = vlaneseq
        %v7780 = vshrl.u32 %v7779, 7
        %v7781 = vsub.s32 1, %v7780
        %v7782 = vrot.slane %v7773, %v7781
        %v7783 = vlaneseq
        %v7784 = vshrl.u32 %v7783, 7
        %v7785 = vsub.s32 2, %v7784
        %v7786 = vrot.slane %v7773, %v7785
        %v7787 = vlaneseq
        %v7788 = vshrl.u32 %v7787, 7
        %v7789 = vsub.s32 3, %v7788
        %v7790 = vrot.slane %v7773, %v7789
        %v7791 = vlaneseq
        %v7792 = vshrl.u32 %v7791, 7
        %v7793 = vsub.s32 4, %v7792
        %v7794 = vrot.slane %v7773, %v7793
        %v7795 = vlaneseq
        %v7796 = vshrl.u32 %v7795, 7
        %v7797 = vsub.s32 5, %v7796
        %v7798 = vrot.slane %v7773, %v7797
        %v7799 = vlaneseq
        %v7800 = vshrl.u32 %v7799, 7
        %v7801 = vsub.s32 6, %v7800
        %v7802 = vrot.slane %v7773, %v7801
        %v7810 = vadd.f32 %v7068, %v7778
        %v7811 = vadd.f32 %v7070, %v7782
        %v7812 = vadd.f32 %v7261, %v7786
        %v7813 = vadd.f32 %v7263, %v7790
        %v7814 = vadd.f32 %v7454, %v7794
        %v7815 = vadd.f32 %v7456, %v7798
        %v7816 = vadd.f32 %v7647, %v7802
        %v7817 = vadd.f32 %v7072, %v7778
        %v7818 = vadd.f32 %v7074, %v7782
        %v7819 = vadd.f32 %v7265, %v7786
        %v7820 = vadd.f32 %v7267, %v7790
        %v7821 = vadd.f32 %v7458, %v7794
        %v7822 = vadd.f32 %v7460, %v7798
        %v7823 = vadd.f32 %v7650, %v7802
        %v7824 = vadd.f32 %v7078, %v7778
        %v7825 = vadd.f32 %v7080, %v7782
        %v7826 = vadd.f32 %v7271, %v7786
        %v7827 = vadd.f32 %v7273, %v7790
        %v7828 = vadd.f32 %v7464, %v7794
        %v7829 = vadd.f32 %v7466, %v7798
        %v7830 = vadd.f32 %v7655, %v7802
        %v7831 = vadd.f32 %v7082, %v7778
        %v7832 = vadd.f32 %v7084, %v7782
        %v7833 = vadd.f32 %v7275, %v7786
        %v7834 = vadd.f32 %v7277, %v7790
        %v7835 = vadd.f32 %v7468, %v7794
        %v7836 = vadd.f32 %v7470, %v7798
        %v7837 = vadd.f32 %v7658, %v7802
        %v7838 = vadd.f32 %v7088, %v7778
        %v7839 = vadd.f32 %v7090, %v7782
        %v7840 = vadd.f32 %v7281, %v7786
        %v7841 = vadd.f32 %v7283, %v7790
        %v7842 = vadd.f32 %v7474, %v7794
        %v7843 = vadd.f32 %v7476, %v7798
        %v7844 = vadd.f32 %v7663, %v7802
        %v7845 = vadd.f32 %v7092, %v7778
        %v7846 = vadd.f32 %v7094, %v7782
        %v7847 = vadd.f32 %v7285, %v7786
        %v7848 = vadd.f32 %v7287, %v7790
        %v7849 = vadd.f32 %v7478, %v7794
        %v7850 = vadd.f32 %v7480, %v7798
        %v7851 = vadd.f32 %v7666, %v7802
        %v7852 = vadd.f32 %v7098, %v7778
        %v7853 = vadd.f32 %v7100, %v7782
        %v7854 = vadd.f32 %v7291, %v7786
        %v7855 = vadd.f32 %v7293, %v7790
        %v7856 = vadd.f32 %v7484, %v7794
        %v7857 = vadd.f32 %v7486, %v7798
        %v7858 = vadd.f32 %v7671, %v7802
        %v7859 = vadd.f32 %v7102, %v7778
        %v7860 = vadd.f32 %v7104, %v7782
        %v7861 = vadd.f32 %v7295, %v7786
        %v7862 = vadd.f32 %v7297, %v7790
        %v7863 = vadd.f32 %v7488, %v7794
        %v7864 = vadd.f32 %v7490, %v7798
        %v7865 = vadd.f32 %v7674, %v7802
        %v7866 = vadd.f32 %v7108, %v7778
        %v7867 = vadd.f32 %v7110, %v7782
        %v7868 = vadd.f32 %v7301, %v7786
        %v7869 = vadd.f32 %v7303, %v7790
        %v7870 = vadd.f32 %v7494, %v7794
        %v7871 = vadd.f32 %v7496, %v7798
        %v7872 = vadd.f32 %v7679, %v7802
        %v7873 = vadd.f32 %v7112, %v7778
        %v7874 = vadd.f32 %v7114, %v7782
        %v7875 = vadd.f32 %v7305, %v7786
        %v7876 = vadd.f32 %v7307, %v7790
        %v7877 = vadd.f32 %v7498, %v7794
        %v7878 = vadd.f32 %v7500, %v7798
        %v7879 = vadd.f32 %v7682, %v7802
        %v7880 = vadd.f32 %v7118, %v7778
        %v7881 = vadd.f32 %v7120, %v7782
        %v7882 = vadd.f32 %v7311, %v7786
        %v7883 = vadd.f32 %v7313, %v7790
        %v7884 = vadd.f32 %v7504, %v7794
        %v7885 = vadd.f32 %v7506, %v7798
        %v7886 = vadd.f32 %v7687, %v7802
        %v7887 = vadd.f32 %v7122, %v7778
        %v7888 = vadd.f32 %v7124, %v7782
        %v7889 = vadd.f32 %v7315, %v7786
        %v7890 = vadd.f32 %v7317, %v7790
        %v7891 = vadd.f32 %v7508, %v7794
        %v7892 = vadd.f32 %v7510, %v7798
        %v7893 = vadd.f32 %v7690, %v7802
        %v7894 = vadd.f32 %v7128, %v7778
        %v7895 = vadd.f32 %v7130, %v7782
        %v7896 = vadd.f32 %v7321, %v7786
        %v7897 = vadd.f32 %v7323, %v7790
        %v7898 = vadd.f32 %v7514, %v7794
        %v7899 = vadd.f32 %v7516, %v7798
        %v7900 = vadd.f32 %v7695, %v7802
        %v7901 = vadd.f32 %v7132, %v7778
        %v7902 = vadd.f32 %v7134, %v7782
        %v7903 = vadd.f32 %v7325, %v7786
        %v7904 = vadd.f32 %v7327, %v7790
        %v7905 = vadd.f32 %v7518, %v7794
        %v7906 = vadd.f32 %v7520, %v7798
        %v7907 = vadd.f32 %v7698, %v7802
        %v7908 = vadd.f32 %v7138, %v7778
        %v7909 = vadd.f32 %v7140, %v7782
        %v7910 = vadd.f32 %v7331, %v7786
        %v7911 = vadd.f32 %v7333, %v7790
        %v7912 = vadd.f32 %v7524, %v7794
        %v7913 = vadd.f32 %v7526, %v7798
        %v7914 = vadd.f32 %v7703, %v7802
        %v7915 = vadd.f32 %v7142, %v7778
        %v7916 = vadd.f32 %v7144, %v7782
        %v7917 = vadd.f32 %v7335, %v7786
        %v7918 = vadd.f32 %v7337, %v7790
        %v7919 = vadd.f32 %v7528, %v7794
        %v7920 = vadd.f32 %v7530, %v7798
        %v7921 = vadd.f32 %v7706, %v7802
        %v7922 = vadd.f32 %v7148, %v7778
        %v7923 = vadd.f32 %v7150, %v7782
        %v7924 = vadd.f32 %v7341, %v7786
        %v7925 = vadd.f32 %v7343, %v7790
        %v7926 = vadd.f32 %v7534, %v7794
        %v7927 = vadd.f32 %v7536, %v7798
        %v7928 = vadd.f32 %v7711, %v7802
        %v7929 = vadd.f32 %v7152, %v7778
        %v7930 = vadd.f32 %v7154, %v7782
        %v7931 = vadd.f32 %v7345, %v7786
        %v7932 = vadd.f32 %v7347, %v7790
        %v7933 = vadd.f32 %v7538, %v7794
        %v7934 = vadd.f32 %v7540, %v7798
        %v7935 = vadd.f32 %v7714, %v7802
        %v7936 = vadd.f32 %v7158, %v7778
        %v7937 = vadd.f32 %v7160, %v7782
        %v7938 = vadd.f32 %v7351, %v7786
        %v7939 = vadd.f32 %v7353, %v7790
        %v7940 = vadd.f32 %v7544, %v7794
        %v7941 = vadd.f32 %v7546, %v7798
        %v7942 = vadd.f32 %v7719, %v7802
        %v7943 = vadd.f32 %v7162, %v7778
        %v7944 = vadd.f32 %v7164, %v7782
        %v7945 = vadd.f32 %v7355, %v7786
        %v7946 = vadd.f32 %v7357, %v7790
        %v7947 = vadd.f32 %v7548, %v7794
        %v7948 = vadd.f32 %v7550, %v7798
        %v7949 = vadd.f32 %v7722, %v7802
        %v7950 = vadd.f32 %v7168, %v7778
        %v7951 = vadd.f32 %v7170, %v7782
        %v7952 = vadd.f32 %v7361, %v7786
        %v7953 = vadd.f32 %v7363, %v7790
        %v7954 = vadd.f32 %v7554, %v7794
        %v7955 = vadd.f32 %v7556, %v7798
        %v7956 = vadd.f32 %v7727, %v7802
        %v7957 = vadd.f32 %v7172, %v7778
        %v7958 = vadd.f32 %v7174, %v7782
        %v7959 = vadd.f32 %v7365, %v7786
        %v7960 = vadd.f32 %v7367, %v7790
        %v7961 = vadd.f32 %v7558, %v7794
        %v7962 = vadd.f32 %v7560, %v7798
        %v7963 = vadd.f32 %v7730, %v7802
        %v7964 = vadd.f32 %v7178, %v7778
        %v7965 = vadd.f32 %v7180, %v7782
        %v7966 = vadd.f32 %v7371, %v7786
        %v7967 = vadd.f32 %v7373, %v7790
        %v7968 = vadd.f32 %v7564, %v7794
        %v7969 = vadd.f32 %v7566, %v7798
        %v7970 = vadd.f32 %v7735, %v7802
        %v7971 = vadd.f32 %v7182, %v7778
        %v7972 = vadd.f32 %v7184, %v7782
        %v7973 = vadd.f32 %v7375, %v7786
        %v7974 = vadd.f32 %v7377, %v7790
        %v7975 = vadd.f32 %v7568, %v7794
        %v7976 = vadd.f32 %v7570, %v7798
        %v7977 = vadd.f32 %v7738, %v7802
        %v7978 = vadd.f32 %v7188, %v7778
        %v7979 = vadd.f32 %v7190, %v7782
        %v7980 = vadd.f32 %v7381, %v7786
        %v7981 = vadd.f32 %v7383, %v7790
        %v7982 = vadd.f32 %v7574, %v7794
        %v7983 = vadd.f32 %v7576, %v7798
        %v7984 = vadd.f32 %v7743, %v7802
        %v7985 = vadd.f32 %v7192, %v7778
        %v7986 = vadd.f32 %v7194, %v7782
        %v7987 = vadd.f32 %v7385, %v7786
        %v7988 = vadd.f32 %v7387, %v7790
        %v7989 = vadd.f32 %v7578, %v7794
        %v7990 = vadd.f32 %v7580, %v7798
        %v7991 = vadd.f32 %v7746, %v7802
        %v7992 = vadd.f32 %v7198, %v7778
        %v7993 = vadd.f32 %v7200, %v7782
        %v7994 = vadd.f32 %v7391, %v7786
        %v7995 = vadd.f32 %v7393, %v7790
        %v7996 = vadd.f32 %v7584, %v7794
        %v7997 = vadd.f32 %v7586, %v7798
        %v7998 = vadd.f32 %v7751, %v7802
        %v7999 = vadd.f32 %v7202, %v7778
        %v8000 = vadd.f32 %v7204, %v7782
        %v8001 = vadd.f32 %v7395, %v7786
        %v8002 = vadd.f32 %v7397, %v7790
        %v8003 = vadd.f32 %v7588, %v7794
        %v8004 = vadd.f32 %v7590, %v7798
        %v8005 = vadd.f32 %v7754, %v7802
        %v8006 = vadd.f32 %v7208, %v7778
        %v8007 = vadd.f32 %v7210, %v7782
        %v8008 = vadd.f32 %v7401, %v7786
        %v8009 = vadd.f32 %v7403, %v7790
        %v8010 = vadd.f32 %v7594, %v7794
        %v8011 = vadd.f32 %v7596, %v7798
        %v8012 = vadd.f32 %v7759, %v7802
        %v8013 = vadd.f32 %v7212, %v7778
        %v8014 = vadd.f32 %v7214, %v7782
        %v8015 = vadd.f32 %v7405, %v7786
        %v8016 = vadd.f32 %v7407, %v7790
        %v8017 = vadd.f32 %v7598, %v7794
        %v8018 = vadd.f32 %v7600, %v7798
        %v8019 = vadd.f32 %v7762, %v7802
        %v8020 = vadd.f32 %v7218, %v7778
        %v8021 = vadd.f32 %v7220, %v7782
        %v8022 = vadd.f32 %v7411, %v7786
        %v8023 = vadd.f32 %v7413, %v7790
        %v8024 = vadd.f32 %v7604, %v7794
        %v8025 = vadd.f32 %v7606, %v7798
        %v8026 = vadd.f32 %v7767, %v7802
        %v8027 = vadd.f32 %v7222, %v7778
        %v8028 = vadd.f32 %v7224, %v7782
        %v8029 = vadd.f32 %v7415, %v7786
        %v8030 = vadd.f32 %v7417, %v7790
        %v8031 = vadd.f32 %v7608, %v7794
        %v8032 = vadd.f32 %v7610, %v7798
        %v8033 = vadd.f32 %v7770, %v7802
        %v8034 = vmul.f32 %v7810, 0.1
        %v8035 = vmul.f32 %v7811, 0.1
        %v8036 = vmul.f32 %v7812, 0.1
        %v8037 = vmul.f32 %v7813, 0.1
        %v8038 = vmul.f32 %v7814, 0.1
        %v8039 = vmul.f32 %v7815, 0.1
        %v8040 = vmul.f32 %v7816, 0.1
        %v8041 = vmul.f32 %v7817, 0.1
        %v8042 = vmul.f32 %v7818, 0.1
        %v8043 = vmul.f32 %v7819, 0.1
        %v8044 = vmul.f32 %v7820, 0.1
        %v8045 = vmul.f32 %v7821, 0.1
        %v8046 = vmul.f32 %v7822, 0.1
        %v8047 = vmul.f32 %v7823, 0.1
        %v8048 = vmul.f32 %v7824, 0.1
        %v8049 = vmul.f32 %v7825, 0.1
        %v8050 = vmul.f32 %v7826, 0.1
        %v8051 = vmul.f32 %v7827, 0.1
        %v8052 = vmul.f32 %v7828, 0.1
        %v8053 = vmul.f32 %v7829, 0.1
        %v8054 = vmul.f32 %v7830, 0.1
        %v8055 = vmul.f32 %v7831, 0.1
        %v8056 = vmul.f32 %v7832, 0.1
        %v8057 = vmul.f32 %v7833, 0.1
        %v8058 = vmul.f32 %v7834, 0.1
        %v8059 = vmul.f32 %v7835, 0.1
        %v8060 = vmul.f32 %v7836, 0.1
        %v8061 = vmul.f32 %v7837, 0.1
        %v8062 = vmul.f32 %v7838, 0.1
        %v8063 = vmul.f32 %v7839, 0.1
        %v8064 = vmul.f32 %v7840, 0.1
        %v8065 = vmul.f32 %v7841, 0.1
        %v8066 = vmul.f32 %v7842, 0.1
        %v8067 = vmul.f32 %v7843, 0.1
        %v8068 = vmul.f32 %v7844, 0.1
        %v8069 = vmul.f32 %v7845, 0.1
        %v8070 = vmul.f32 %v7846, 0.1
        %v8071 = vmul.f32 %v7847, 0.1
        %v8072 = vmul.f32 %v7848, 0.1
        %v8073 = vmul.f32 %v7849, 0.1
        %v8074 = vmul.f32 %v7850, 0.1
        %v8075 = vmul.f32 %v7851, 0.1
        %v8076 = vmul.f32 %v7852, 0.1
        %v8077 = vmul.f32 %v7853, 0.1
        %v8078 = vmul.f32 %v7854, 0.1
        %v8079 = vmul.f32 %v7855, 0.1
        %v8080 = vmul.f32 %v7856, 0.1
        %v8081 = vmul.f32 %v7857, 0.1
        %v8082 = vmul.f32 %v7858, 0.1
        %v8083 = vmul.f32 %v7859, 0.1
        %v8084 = vmul.f32 %v7860, 0.1
        %v8085 = vmul.f32 %v7861, 0.1
        %v8086 = vmul.f32 %v7862, 0.1
        %v8087 = vmul.f32 %v7863, 0.1
        %v8088 = vmul.f32 %v7864, 0.1
        %v8089 = vmul.f32 %v7865, 0.1
        %v8090 = vmul.f32 %v7866, 0.1
        %v8091 = vmul.f32 %v7867, 0.1
        %v8092 = vmul.f32 %v7868, 0.1
        %v8093 = vmul.f32 %v7869, 0.1
        %v8094 = vmul.f32 %v7870, 0.1
        %v8095 = vmul.f32 %v7871, 0.1
        %v8096 = vmul.f32 %v7872, 0.1
        %v8097 = vmul.f32 %v7873, 0.1
        %v8098 = vmul.f32 %v7874, 0.1
        %v8099 = vmul.f32 %v7875, 0.1
        %v8100 = vmul.f32 %v7876, 0.1
        %v8101 = vmul.f32 %v7877, 0.1
        %v8102 = vmul.f32 %v7878, 0.1
        %v8103 = vmul.f32 %v7879, 0.1
        %v8104 = vmul.f32 %v7880, 0.1
        %v8105 = vmul.f32 %v7881, 0.1
        %v8106 = vmul.f32 %v7882, 0.1
        %v8107 = vmul.f32 %v7883, 0.1
        %v8108 = vmul.f32 %v7884, 0.1
        %v8109 = vmul.f32 %v7885, 0.1
        %v8110 = vmul.f32 %v7886, 0.1
        %v8111 = vmul.f32 %v7887, 0.1
        %v8112 = vmul.f32 %v7888, 0.1
        %v8113 = vmul.f32 %v7889, 0.1
        %v8114 = vmul.f32 %v7890, 0.1
        %v8115 = vmul.f32 %v7891, 0.1
        %v8116 = vmul.f32 %v7892, 0.1
        %v8117 = vmul.f32 %v7893, 0.1
        %v8118 = vmul.f32 %v7894, 0.1
        %v8119 = vmul.f32 %v7895, 0.1
        %v8120 = vmul.f32 %v7896, 0.1
        %v8121 = vmul.f32 %v7897, 0.1
        %v8122 = vmul.f32 %v7898, 0.1
        %v8123 = vmul.f32 %v7899, 0.1
        %v8124 = vmul.f32 %v7900, 0.1
        %v8125 = vmul.f32 %v7901, 0.1
        %v8126 = vmul.f32 %v7902, 0.1
        %v8127 = vmul.f32 %v7903, 0.1
        %v8128 = vmul.f32 %v7904, 0.1
        %v8129 = vmul.f32 %v7905, 0.1
        %v8130 = vmul.f32 %v7906, 0.1
        %v8131 = vmul.f32 %v7907, 0.1
        %v8132 = vmul.f32 %v7908, 0.1
        %v8133 = vmul.f32 %v7909, 0.1
        %v8134 = vmul.f32 %v7910, 0.1
        %v8135 = vmul.f32 %v7911, 0.1
        %v8136 = vmul.f32 %v7912, 0.1
        %v8137 = vmul.f32 %v7913, 0.1
        %v8138 = vmul.f32 %v7914, 0.1
        %v8139 = vmul.f32 %v7915, 0.1
        %v8140 = vmul.f32 %v7916, 0.1
        %v8141 = vmul.f32 %v7917, 0.1
        %v8142 = vmul.f32 %v7918, 0.1
        %v8143 = vmul.f32 %v7919, 0.1
        %v8144 = vmul.f32 %v7920, 0.1
        %v8145 = vmul.f32 %v7921, 0.1
        %v8146 = vmul.f32 %v7922, 0.1
        %v8147 = vmul.f32 %v7923, 0.1
        %v8148 = vmul.f32 %v7924, 0.1
        %v8149 = vmul.f32 %v7925, 0.1
        %v8150 = vmul.f32 %v7926, 0.1
        %v8151 = vmul.f32 %v7927, 0.1
        %v8152 = vmul.f32 %v7928, 0.1
        %v8153 = vmul.f32 %v7929, 0.1
        %v8154 = vmul.f32 %v7930, 0.1
        %v8155 = vmul.f32 %v7931, 0.1
        %v8156 = vmul.f32 %v7932, 0.1
        %v8157 = vmul.f32 %v7933, 0.1
        %v8158 = vmul.f32 %v7934, 0.1
        %v8159 = vmul.f32 %v7935, 0.1
        %v8160 = vmul.f32 %v7936, 0.1
        %v8161 = vmul.f32 %v7937, 0.1
        %v8162 = vmul.f32 %v7938, 0.1
        %v8163 = vmul.f32 %v7939, 0.1
        %v8164 = vmul.f32 %v7940, 0.1
        %v8165 = vmul.f32 %v7941, 0.1
        %v8166 = vmul.f32 %v7942, 0.1
        %v8167 = vmul.f32 %v7943, 0.1
        %v8168 = vmul.f32 %v7944, 0.1
        %v8169 = vmul.f32 %v7945, 0.1
        %v8170 = vmul.f32 %v7946, 0.1
        %v8171 = vmul.f32 %v7947, 0.1
        %v8172 = vmul.f32 %v7948, 0.1
        %v8173 = vmul.f32 %v7949, 0.1
        %v8174 = vmul.f32 %v7950, 0.1
        %v8175 = vmul.f32 %v7951, 0.1
        %v8176 = vmul.f32 %v7952, 0.1
        %v8177 = vmul.f32 %v7953, 0.1
        %v8178 = vmul.f32 %v7954, 0.1
        %v8179 = vmul.f32 %v7955, 0.1
        %v8180 = vmul.f32 %v7956, 0.1
        %v8181 = vmul.f32 %v7957, 0.1
        %v8182 = vmul.f32 %v7958, 0.1
        %v8183 = vmul.f32 %v7959, 0.1
        %v8184 = vmul.f32 %v7960, 0.1
        %v8185 = vmul.f32 %v7961, 0.1
        %v8186 = vmul.f32 %v7962, 0.1
        %v8187 = vmul.f32 %v7963, 0.1
        %v8188 = vmul.f32 %v7964, 0.1
        %v8189 = vmul.f32 %v7965, 0.1
        %v8190 = vmul.f32 %v7966, 0.1
        %v8191 = vmul.f32 %v7967, 0.1
        %v8192 = vmul.f32 %v7968, 0.1
        %v8193 = vmul.f32 %v7969, 0.1
        %v8194 = vmul.f32 %v7970, 0.1
        %v8195 = vmul.f32 %v7971, 0.1
        %v8196 = vmul.f32 %v7972, 0.1
        %v8197 = vmul.f32 %v7973, 0.1
        %v8198 = vmul.f32 %v7974, 0.1
        %v8199 = vmul.f32 %v7975, 0.1
        %v8200 = vmul.f32 %v7976, 0.1
        %v8201 = vmul.f32 %v7977, 0.1
        %v8202 = vmul.f32 %v7978, 0.1
        %v8203 = vmul.f32 %v7979, 0.1
        %v8204 = vmul.f32 %v7980, 0.1
        %v8205 = vmul.f32 %v7981, 0.1
        %v8206 = vmul.f32 %v7982, 0.1
        %v8207 = vmul.f32 %v7983, 0.1
        %v8208 = vmul.f32 %v7984, 0.1
        %v8209 = vmul.f32 %v7985, 0.1
        %v8210 = vmul.f32 %v7986, 0.1
        %v8211 = vmul.f32 %v7987, 0.1
        %v8212 = vmul.f32 %v7988, 0.1
        %v8213 = vmul.f32 %v7989, 0.1
        %v8214 = vmul.f32 %v7990, 0.1
        %v8215 = vmul.f32 %v7991, 0.1
        %v8216 = vmul.f32 %v7992, 0.1
        %v8217 = vmul.f32 %v7993, 0.1
        %v8218 = vmul.f32 %v7994, 0.1
        %v8219 = vmul.f32 %v7995, 0.1
        %v8220 = vmul.f32 %v7996, 0.1
        %v8221 = vmul.f32 %v7997, 0.1
        %v8222 = vmul.f32 %v7998, 0.1
        %v8223 = vmul.f32 %v7999, 0.1
        %v8224 = vmul.f32 %v8000, 0.1
        %v8225 = vmul.f32 %v8001, 0.1
        %v8226 = vmul.f32 %v8002, 0.1
        %v8227 = vmul.f32 %v8003, 0.1
        %v8228 = vmul.f32 %v8004, 0.1
        %v8229 = vmul.f32 %v8005, 0.1
        %v8230 = vmul.f32 %v8006, 0.1
        %v8231 = vmul.f32 %v8007, 0.1
        %v8232 = vmul.f32 %v8008, 0.1
        %v8233 = vmul.f32 %v8009, 0.1
        %v8234 = vmul.f32 %v8010, 0.1
        %v8235 = vmul.f32 %v8011, 0.1
        %v8236 = vmul.f32 %v8012, 0.1
        %v8237 = vmul.f32 %v8013, 0.1
        %v8238 = vmul.f32 %v8014, 0.1
        %v8239 = vmul.f32 %v8015, 0.1
        %v8240 = vmul.f32 %v8016, 0.1
        %v8241 = vmul.f32 %v8017, 0.1
        %v8242 = vmul.f32 %v8018, 0.1
        %v8243 = vmul.f32 %v8019, 0.1
        %v8244 = vmul.f32 %v8020, 0.1
        %v8245 = vmul.f32 %v8021, 0.1
        %v8246 = vmul.f32 %v8022, 0.1
        %v8247 = vmul.f32 %v8023, 0.1
        %v8248 = vmul.f32 %v8024, 0.1
        %v8249 = vmul.f32 %v8025, 0.1
        %v8250 = vmul.f32 %v8026, 0.1
        %v8251 = vmul.f32 %v8027, 0.1
        %v8252 = vmul.f32 %v8028, 0.1
        %v8253 = vmul.f32 %v8029, 0.1
        %v8254 = vmul.f32 %v8030, 0.1
        %v8255 = vmul.f32 %v8031, 0.1
        %v8256 = vmul.f32 %v8032, 0.1
        %v8257 = vmul.f32 %v8033, 0.1
        %v8258 = vadd.f32 %v8034, %v502
        %v8259 = vadd.f32 %v8035, %v503
        %v8260 = vadd.f32 %v8036, %v504
        %v8261 = vadd.f32 %v8037, %v505
        %v8262 = vadd.f32 %v8038, %v506
        %v8263 = vadd.f32 %v8039, %v507
        %v8264 = vadd.f32 %v8040, %v508
        %v8265 = vadd.f32 %v8041, %v509
        %v8266 = vadd.f32 %v8042, %v510
        %v8267 = vadd.f32 %v8043, %v511
        %v8268 = vadd.f32 %v8044, %v512
        %v8269 = vadd.f32 %v8045, %v513
        %v8270 = vadd.f32 %v8046, %v514
        %v8271 = vadd.f32 %v8047, %v515
        %v8272 = vadd.f32 %v8048, %v516
        %v8273 = vadd.f32 %v8049, %v517
        %v8274 = vadd.f32 %v8050, %v518
        %v8275 = vadd.f32 %v8051, %v519
        %v8276 = vadd.f32 %v8052, %v520
        %v8277 = vadd.f32 %v8053, %v521
        %v8278 = vadd.f32 %v8054, %v522
        %v8279 = vadd.f32 %v8055, %v523
        %v8280 = vadd.f32 %v8056, %v524
        %v8281 = vadd.f32 %v8057, %v525
        %v8282 = vadd.f32 %v8058, %v526
        %v8283 = vadd.f32 %v8059, %v527
        %v8284 = vadd.f32 %v8060, %v528
        %v8285 = vadd.f32 %v8061, %v529
        %v8286 = vadd.f32 %v8062, %v530
        %v8287 = vadd.f32 %v8063, %v531
        %v8288 = vadd.f32 %v8064, %v532
        %v8289 = vadd.f32 %v8065, %v533
        %v8290 = vadd.f32 %v8066, %v534
        %v8291 = vadd.f32 %v8067, %v535
        %v8292 = vadd.f32 %v8068, %v536
        %v8293 = vadd.f32 %v8069, %v537
        %v8294 = vadd.f32 %v8070, %v538
        %v8295 = vadd.f32 %v8071, %v539
        %v8296 = vadd.f32 %v8072, %v540
        %v8297 = vadd.f32 %v8073, %v541
        %v8298 = vadd.f32 %v8074, %v542
        %v8299 = vadd.f32 %v8075, %v543
        %v8300 = vadd.f32 %v8076, %v544
        %v8301 = vadd.f32 %v8077, %v545
        %v8302 = vadd.f32 %v8078, %v546
        %v8303 = vadd.f32 %v8079, %v547
        %v8304 = vadd.f32 %v8080, %v548
        %v8305 = vadd.f32 %v8081, %v549
        %v8306 = vadd.f32 %v8082, %v550
        %v8307 = vadd.f32 %v8083, %v551
        %v8308 = vadd.f32 %v8084, %v552
        %v8309 = vadd.f32 %v8085, %v553
        %v8310 = vadd.f32 %v8086, %v554
        %v8311 = vadd.f32 %v8087, %v555
        %v8312 = vadd.f32 %v8088, %v556
        %v8313 = vadd.f32 %v8089, %v557
        %v8314 = vadd.f32 %v8090, %v558
        %v8315 = vadd.f32 %v8091, %v559
        %v8316 = vadd.f32 %v8092, %v560
        %v8317 = vadd.f32 %v8093, %v561
        %v8318 = vadd.f32 %v8094, %v562
        %v8319 = vadd.f32 %v8095, %v563
        %v8320 = vadd.f32 %v8096, %v564
        %v8321 = vadd.f32 %v8097, %v565
        %v8322 = vadd.f32 %v8098, %v566
        %v8323 = vadd.f32 %v8099, %v567
        %v8324 = vadd.f32 %v8100, %v568
        %v8325 = vadd.f32 %v8101, %v569
        %v8326 = vadd.f32 %v8102, %v570
        %v8327 = vadd.f32 %v8103, %v571
        %v8328 = vadd.f32 %v8104, %v572
        %v8329 = vadd.f32 %v8105, %v573
        %v8330 = vadd.f32 %v8106, %v574
        %v8331 = vadd.f32 %v8107, %v575
        %v8332 = vadd.f32 %v8108, %v576
        %v8333 = vadd.f32 %v8109, %v577
        %v8334 = vadd.f32 %v8110, %v578
        %v8335 = vadd.f32 %v8111, %v579
        %v8336 = vadd.f32 %v8112, %v580
        %v8337 = vadd.f32 %v8113, %v581
        %v8338 = vadd.f32 %v8114, %v582
        %v8339 = vadd.f32 %v8115, %v583
        %v8340 = vadd.f32 %v8116, %v584
        %v8341 = vadd.f32 %v8117, %v585
        %v8342 = vadd.f32 %v8118, %v586
        %v8343 = vadd.f32 %v8119, %v587
        %v8344 = vadd.f32 %v8120, %v588
        %v8345 = vadd.f32 %v8121, %v589
        %v8346 = vadd.f32 %v8122, %v590
        %v8347 = vadd.f32 %v8123, %v591
        %v8348 = vadd.f32 %v8124, %v592
        %v8349 = vadd.f32 %v8125, %v593
        %v8350 = vadd.f32 %v8126, %v594
        %v8351 = vadd.f32 %v8127, %v595
        %v8352 = vadd.f32 %v8128, %v596
        %v8353 = vadd.f32 %v8129, %v597
        %v8354 = vadd.f32 %v8130, %v598
        %v8355 = vadd.f32 %v8131, %v599
        %v8356 = vadd.f32 %v8132, %v600
        %v8357 = vadd.f32 %v8133, %v601
        %v8358 = vadd.f32 %v8134, %v602
        %v8359 = vadd.f32 %v8135, %v603
        %v8360 = vadd.f32 %v8136, %v604
        %v8361 = vadd.f32 %v8137, %v605
        %v8362 = vadd.f32 %v8138, %v606
        %v8363 = vadd.f32 %v8139, %v607
        %v8364 = vadd.f32 %v8140, %v608
        %v8365 = vadd.f32 %v8141, %v609
        %v8366 = vadd.f32 %v8142, %v610
        %v8367 = vadd.f32 %v8143, %v611
        %v8368 = vadd.f32 %v8144, %v612
        %v8369 = vadd.f32 %v8145, %v613
        %v8370 = vadd.f32 %v8146, %v614
        %v8371 = vadd.f32 %v8147, %v615
        %v8372 = vadd.f32 %v8148, %v616
        %v8373 = vadd.f32 %v8149, %v617
        %v8374 = vadd.f32 %v8150, %v618
        %v8375 = vadd.f32 %v8151, %v619
        %v8376 = vadd.f32 %v8152, %v620
        %v8377 = vadd.f32 %v8153, %v621
        %v8378 = vadd.f32 %v8154, %v622
        %v8379 = vadd.f32 %v8155, %v623
        %v8380 = vadd.f32 %v8156, %v624
        %v8381 = vadd.f32 %v8157, %v625
        %v8382 = vadd.f32 %v8158, %v626
        %v8383 = vadd.f32 %v8159, %v627
        %v8384 = vadd.f32 %v8160, %v628
        %v8385 = vadd.f32 %v8161, %v629
        %v8386 = vadd.f32 %v8162, %v630
        %v8387 = vadd.f32 %v8163, %v631
        %v8388 = vadd.f32 %v8164, %v632
        %v8389 = vadd.f32 %v8165, %v633
        %v8390 = vadd.f32 %v8166, %v634
        %v8391 = vadd.f32 %v8167, %v635
        %v8392 = vadd.f32 %v8168, %v636
        %v8393 = vadd.f32 %v8169, %v637
        %v8394 = vadd.f32 %v8170, %v638
        %v8395 = vadd.f32 %v8171, %v639
        %v8396 = vadd.f32 %v8172, %v640
        %v8397 = vadd.f32 %v8173, %v641
        %v8398 = vadd.f32 %v8174, %v642
        %v8399 = vadd.f32 %v8175, %v643
        %v8400 = vadd.f32 %v8176, %v644
        %v8401 = vadd.f32 %v8177, %v645
        %v8402 = vadd.f32 %v8178, %v646
        %v8403 = vadd.f32 %v8179, %v647
        %v8404 = vadd.f32 %v8180, %v648
        %v8405 = vadd.f32 %v8181, %v649
        %v8406 = vadd.f32 %v8182, %v650
        %v8407 = vadd.f32 %v8183, %v651
        %v8408 = vadd.f32 %v8184, %v652
        %v8409 = vadd.f32 %v8185, %v653
        %v8410 = vadd.f32 %v8186, %v654
        %v8411 = vadd.f32 %v8187, %v655
        %v8412 = vadd.f32 %v8188, %v656
        %v8413 = vadd.f32 %v8189, %v657
        %v8414 = vadd.f32 %v8190, %v658
        %v8415 = vadd.f32 %v8191, %v659
        %v8416 = vadd.f32 %v8192, %v660
        %v8417 = vadd.f32 %v8193, %v661
        %v8418 = vadd.f32 %v8194, %v662
        %v8419 = vadd.f32 %v8195, %v663
        %v8420 = vadd.f32 %v8196, %v664
        %v8421 = vadd.f32 %v8197, %v665
        %v8422 = vadd.f32 %v8198, %v666
        %v8423 = vadd.f32 %v8199, %v667
        %v8424 = vadd.f32 %v8200, %v668
        %v8425 = vadd.f32 %v8201, %v669
        %v8426 = vadd.f32 %v8202, %v670
        %v8427 = vadd.f32 %v8203, %v671
        %v8428 = vadd.f32 %v8204, %v672
        %v8429 = vadd.f32 %v8205, %v673
        %v8430 = vadd.f32 %v8206, %v674
        %v8431 = vadd.f32 %v8207, %v675
        %v8432 = vadd.f32 %v8208, %v676
        %v8433 = vadd.f32 %v8209, %v677
        %v8434 = vadd.f32 %v8210, %v678
        %v8435 = vadd.f32 %v8211, %v679
        %v8436 = vadd.f32 %v8212, %v680
        %v8437 = vadd.f32 %v8213, %v681
        %v8438 = vadd.f32 %v8214, %v682
        %v8439 = vadd.f32 %v8215, %v683
        %v8440 = vadd.f32 %v8216, %v684
        %v8441 = vadd.f32 %v8217, %v685
        %v8442 = vadd.f32 %v8218, %v686
        %v8443 = vadd.f32 %v8219, %v687
        %v8444 = vadd.f32 %v8220, %v688
        %v8445 = vadd.f32 %v8221, %v689
        %v8446 = vadd.f32 %v8222, %v690
        %v8447 = vadd.f32 %v8223, %v691
        %v8448 = vadd.f32 %v8224, %v692
        %v8449 = vadd.f32 %v8225, %v693
        %v8450 = vadd.f32 %v8226, %v694
        %v8451 = vadd.f32 %v8227, %v695
        %v8452 = vadd.f32 %v8228, %v696
        %v8453 = vadd.f32 %v8229, %v697
        %v8454 = vadd.f32 %v8230, %v698
        %v8455 = vadd.f32 %v8231, %v699
        %v8456 = vadd.f32 %v8232, %v700
        %v8457 = vadd.f32 %v8233, %v701
        %v8458 = vadd.f32 %v8234, %v702
        %v8459 = vadd.f32 %v8235, %v703
        %v8460 = vadd.f32 %v8236, %v704
        %v8461 = vadd.f32 %v8237, %v705
        %v8462 = vadd.f32 %v8238, %v706
        %v8463 = vadd.f32 %v8239, %v707
        %v8464 = vadd.f32 %v8240, %v708
        %v8465 = vadd.f32 %v8241, %v709
        %v8466 = vadd.f32 %v8242, %v710
        %v8467 = vadd.f32 %v8243, %v711
        %v8468 = vadd.f32 %v8244, %v712
        %v8469 = vadd.f32 %v8245, %v713
        %v8470 = vadd.f32 %v8246, %v714
        %v8471 = vadd.f32 %v8247, %v715
        %v8472 = vadd.f32 %v8248, %v716
        %v8473 = vadd.f32 %v8249, %v717
        %v8474 = vadd.f32 %v8250, %v718
        %v8475 = vadd.f32 %v8251, %v719
        %v8476 = vadd.f32 %v8252, %v720
        %v8477 = vadd.f32 %v8253, %v721
        %v8478 = vadd.f32 %v8254, %v722
        %v8479 = vadd.f32 %v8255, %v723
        %v8480 = vadd.f32 %v8256, %v724
        %v8481 = vadd.f32 %v8257, %v725
        %v8482 = vmax.f32 %v8258, 0.0
        %v8483 = vmax.f32 %v8259, 0.0
        %v8484 = vmax.f32 %v8260, 0.0
        %v8485 = vmax.f32 %v8261, 0.0
        %v8486 = vmax.f32 %v8262, 0.0
        %v8487 = vmax.f32 %v8263, 0.0
        %v8488 = vmax.f32 %v8264, 0.0
        %v8489 = vmax.f32 %v8265, 0.0
        %v8490 = vmax.f32 %v8266, 0.0
        %v8491 = vmax.f32 %v8267, 0.0
        %v8492 = vmax.f32 %v8268, 0.0
        %v8493 = vmax.f32 %v8269, 0.0
        %v8494 = vmax.f32 %v8270, 0.0
        %v8495 = vmax.f32 %v8271, 0.0
        %v8496 = vmax.f32 %v8272, 0.0
        %v8497 = vmax.f32 %v8273, 0.0
        %v8498 = vmax.f32 %v8274, 0.0
        %v8499 = vmax.f32 %v8275, 0.0
        %v8500 = vmax.f32 %v8276, 0.0
        %v8501 = vmax.f32 %v8277, 0.0
        %v8502 = vmax.f32 %v8278, 0.0
        %v8503 = vmax.f32 %v8279, 0.0
        %v8504 = vmax.f32 %v8280, 0.0
        %v8505 = vmax.f32 %v8281, 0.0
        %v8506 = vmax.f32 %v8282, 0.0
        %v8507 = vmax.f32 %v8283, 0.0
        %v8508 = vmax.f32 %v8284, 0.0
        %v8509 = vmax.f32 %v8285, 0.0
        %v8510 = vmax.f32 %v8286, 0.0
        %v8511 = vmax.f32 %v8287, 0.0
        %v8512 = vmax.f32 %v8288, 0.0
        %v8513 = vmax.f32 %v8289, 0.0
        %v8514 = vmax.f32 %v8290, 0.0
        %v8515 = vmax.f32 %v8291, 0.0
        %v8516 = vmax.f32 %v8292, 0.0
        %v8517 = vmax.f32 %v8293, 0.0
        %v8518 = vmax.f32 %v8294, 0.0
        %v8519 = vmax.f32 %v8295, 0.0
        %v8520 = vmax.f32 %v8296, 0.0
        %v8521 = vmax.f32 %v8297, 0.0
        %v8522 = vmax.f32 %v8298, 0.0
        %v8523 = vmax.f32 %v8299, 0.0
        %v8524 = vmax.f32 %v8300, 0.0
        %v8525 = vmax.f32 %v8301, 0.0
        %v8526 = vmax.f32 %v8302, 0.0
        %v8527 = vmax.f32 %v8303, 0.0
        %v8528 = vmax.f32 %v8304, 0.0
        %v8529 = vmax.f32 %v8305, 0.0
        %v8530 = vmax.f32 %v8306, 0.0
        %v8531 = vmax.f32 %v8307, 0.0
        %v8532 = vmax.f32 %v8308, 0.0
        %v8533 = vmax.f32 %v8309, 0.0
        %v8534 = vmax.f32 %v8310, 0.0
        %v8535 = vmax.f32 %v8311, 0.0
        %v8536 = vmax.f32 %v8312, 0.0
        %v8537 = vmax.f32 %v8313, 0.0
        %v8538 = vmax.f32 %v8314, 0.0
        %v8539 = vmax.f32 %v8315, 0.0
        %v8540 = vmax.f32 %v8316, 0.0
        %v8541 = vmax.f32 %v8317, 0.0
        %v8542 = vmax.f32 %v8318, 0.0
        %v8543 = vmax.f32 %v8319, 0.0
        %v8544 = vmax.f32 %v8320, 0.0
        %v8545 = vmax.f32 %v8321, 0.0
        %v8546 = vmax.f32 %v8322, 0.0
        %v8547 = vmax.f32 %v8323, 0.0
        %v8548 = vmax.f32 %v8324, 0.0
        %v8549 = vmax.f32 %v8325, 0.0
        %v8550 = vmax.f32 %v8326, 0.0
        %v8551 = vmax.f32 %v8327, 0.0
        %v8552 = vmax.f32 %v8328, 0.0
        %v8553 = vmax.f32 %v8329, 0.0
        %v8554 = vmax.f32 %v8330, 0.0
        %v8555 = vmax.f32 %v8331, 0.0
        %v8556 = vmax.f32 %v8332, 0.0
        %v8557 = vmax.f32 %v8333, 0.0
        %v8558 = vmax.f32 %v8334, 0.0
        %v8559 = vmax.f32 %v8335, 0.0
        %v8560 = vmax.f32 %v8336, 0.0
        %v8561 = vmax.f32 %v8337, 0.0
        %v8562 = vmax.f32 %v8338, 0.0
        %v8563 = vmax.f32 %v8339, 0.0
        %v8564 = vmax.f32 %v8340, 0.0
        %v8565 = vmax.f32 %v8341, 0.0
        %v8566 = vmax.f32 %v8342, 0.0
        %v8567 = vmax.f32 %v8343, 0.0
        %v8568 = vmax.f32 %v8344, 0.0
        %v8569 = vmax.f32 %v8345, 0.0
        %v8570 = vmax.f32 %v8346, 0.0
        %v8571 = vmax.f32 %v8347, 0.0
        %v8572 = vmax.f32 %v8348, 0.0
        %v8573 = vmax.f32 %v8349, 0.0
        %v8574 = vmax.f32 %v8350, 0.0
        %v8575 = vmax.f32 %v8351, 0.0
        %v8576 = vmax.f32 %v8352, 0.0
        %v8577 = vmax.f32 %v8353, 0.0
        %v8578 = vmax.f32 %v8354, 0.0
        %v8579 = vmax.f32 %v8355, 0.0
        %v8580 = vmax.f32 %v8356, 0.0
        %v8581 = vmax.f32 %v8357, 0.0
        %v8582 = vmax.f32 %v8358, 0.0
        %v8583 = vmax.f32 %v8359, 0.0
        %v8584 = vmax.f32 %v8360, 0.0
        %v8585 = vmax.f32 %v8361, 0.0
        %v8586 = vmax.f32 %v8362, 0.0
        %v8587 = vmax.f32 %v8363, 0.0
        %v8588 = vmax.f32 %v8364, 0.0
        %v8589 = vmax.f32 %v8365, 0.0
        %v8590 = vmax.f32 %v8366, 0.0
        %v8591 = vmax.f32 %v8367, 0.0
        %v8592 = vmax.f32 %v8368, 0.0
        %v8593 = vmax.f32 %v8369, 0.0
        %v8594 = vmax.f32 %v8370, 0.0
        %v8595 = vmax.f32 %v8371, 0.0
        %v8596 = vmax.f32 %v8372, 0.0
        %v8597 = vmax.f32 %v8373, 0.0
        %v8598 = vmax.f32 %v8374, 0.0
        %v8599 = vmax.f32 %v8375, 0.0
        %v8600 = vmax.f32 %v8376, 0.0
        %v8601 = vmax.f32 %v8377, 0.0
        %v8602 = vmax.f32 %v8378, 0.0
        %v8603 = vmax.f32 %v8379, 0.0
        %v8604 = vmax.f32 %v8380, 0.0
        %v8605 = vmax.f32 %v8381, 0.0
        %v8606 = vmax.f32 %v8382, 0.0
        %v8607 = vmax.f32 %v8383, 0.0
        %v8608 = vmax.f32 %v8384, 0.0
        %v8609 = vmax.f32 %v8385, 0.0
        %v8610 = vmax.f32 %v8386, 0.0
        %v8611 = vmax.f32 %v8387, 0.0
        %v8612 = vmax.f32 %v8388, 0.0
        %v8613 = vmax.f32 %v8389, 0.0
        %v8614 = vmax.f32 %v8390, 0.0
        %v8615 = vmax.f32 %v8391, 0.0
        %v8616 = vmax.f32 %v8392, 0.0
        %v8617 = vmax.f32 %v8393, 0.0
        %v8618 = vmax.f32 %v8394, 0.0
        %v8619 = vmax.f32 %v8395, 0.0
        %v8620 = vmax.f32 %v8396, 0.0
        %v8621 = vmax.f32 %v8397, 0.0
        %v8622 = vmax.f32 %v8398, 0.0
        %v8623 = vmax.f32 %v8399, 0.0
        %v8624 = vmax.f32 %v8400, 0.0
        %v8625 = vmax.f32 %v8401, 0.0
        %v8626 = vmax.f32 %v8402, 0.0
        %v8627 = vmax.f32 %v8403, 0.0
        %v8628 = vmax.f32 %v8404, 0.0
        %v8629 = vmax.f32 %v8405, 0.0
        %v8630 = vmax.f32 %v8406, 0.0
        %v8631 = vmax.f32 %v8407, 0.0
        %v8632 = vmax.f32 %v8408, 0.0
        %v8633 = vmax.f32 %v8409, 0.0
        %v8634 = vmax.f32 %v8410, 0.0
        %v8635 = vmax.f32 %v8411, 0.0
        %v8636 = vmax.f32 %v8412, 0.0
        %v8637 = vmax.f32 %v8413, 0.0
        %v8638 = vmax.f32 %v8414, 0.0
        %v8639 = vmax.f32 %v8415, 0.0
        %v8640 = vmax.f32 %v8416, 0.0
        %v8641 = vmax.f32 %v8417, 0.0
        %v8642 = vmax.f32 %v8418, 0.0
        %v8643 = vmax.f32 %v8419, 0.0
        %v8644 = vmax.f32 %v8420, 0.0
        %v8645 = vmax.f32 %v8421, 0.0
        %v8646 = vmax.f32 %v8422, 0.0
        %v8647 = vmax.f32 %v8423, 0.0
        %v8648 = vmax.f32 %v8424, 0.0
        %v8649 = vmax.f32 %v8425, 0.0
        %v8650 = vmax.f32 %v8426, 0.0
        %v8651 = vmax.f32 %v8427, 0.0
        %v8652 = vmax.f32 %v8428, 0.0
        %v8653 = vmax.f32 %v8429, 0.0
        %v8654 = vmax.f32 %v8430, 0.0
        %v8655 = vmax.f32 %v8431, 0.0
        %v8656 = vmax.f32 %v8432, 0.0
        %v8657 = vmax.f32 %v8433, 0.0
        %v8658 = vmax.f32 %v8434, 0.0
        %v8659 = vmax.f32 %v8435, 0.0
        %v8660 = vmax.f32 %v8436, 0.0
        %v8661 = vmax.f32 %v8437, 0.0
        %v8662 = vmax.f32 %v8438, 0.0
        %v8663 = vmax.f32 %v8439, 0.0
        %v8664 = vmax.f32 %v8440, 0.0
        %v8665 = vmax.f32 %v8441, 0.0
        %v8666 = vmax.f32 %v8442, 0.0
        %v8667 = vmax.f32 %v8443, 0.0
        %v8668 = vmax.f32 %v8444, 0.0
        %v8669 = vmax.f32 %v8445, 0.0
        %v8670 = vmax.f32 %v8446, 0.0
        %v8671 = vmax.f32 %v8447, 0.0
        %v8672 = vmax.f32 %v8448, 0.0
        %v8673 = vmax.f32 %v8449, 0.0
        %v8674 = vmax.f32 %v8450, 0.0
        %v8675 = vmax.f32 %v8451, 0.0
        %v8676 = vmax.f32 %v8452, 0.0
        %v8677 = vmax.f32 %v8453, 0.0
        %v8678 = vmax.f32 %v8454, 0.0
        %v8679 = vmax.f32 %v8455, 0.0
        %v8680 = vmax.f32 %v8456, 0.0
        %v8681 = vmax.f32 %v8457, 0.0
        %v8682 = vmax.f32 %v8458, 0.0
        %v8683 = vmax.f32 %v8459, 0.0
        %v8684 = vmax.f32 %v8460, 0.0
        %v8685 = vmax.f32 %v8461, 0.0
        %v8686 = vmax.f32 %v8462, 0.0
        %v8687 = vmax.f32 %v8463, 0.0
        %v8688 = vmax.f32 %v8464, 0.0
        %v8689 = vmax.f32 %v8465, 0.0
        %v8690 = vmax.f32 %v8466, 0.0
        %v8691 = vmax.f32 %v8467, 0.0
        %v8692 = vmax.f32 %v8468, 0.0
        %v8693 = vmax.f32 %v8469, 0.0
        %v8694 = vmax.f32 %v8470, 0.0
        %v8695 = vmax.f32 %v8471, 0.0
        %v8696 = vmax.f32 %v8472, 0.0
        %v8697 = vmax.f32 %v8473, 0.0
        %v8698 = vmax.f32 %v8474, 0.0
        %v8699 = vmax.f32 %v8475, 0.0
        %v8700 = vmax.f32 %v8476, 0.0
        %v8701 = vmax.f32 %v8477, 0.0
        %v8702 = vmax.f32 %v8478, 0.0
        %v8703 = vmax.f32 %v8479, 0.0
        %v8704 = vmax.f32 %v8480, 0.0
        %v8705 = vmax.f32 %v8481, 0.0
        %8706 = vst [vmem:[%s500] sm:$0xff] %v8482
        %8707 = vst [vmem:[%s500 + $0x8] sm:$0xff] %v8483
        %8708 = vst [vmem:[%s500 + $0x10] sm:$0xff] %v8484
        %8709 = vst [vmem:[%s500 + $0x18] sm:$0xff] %v8485
        %8710 = vst [vmem:[%s500 + $0x20] sm:$0xff] %v8486
        %8711 = vst [vmem:[%s500 + $0x28] sm:$0xff] %v8487
        %8712 = vst [vmem:[%s500 + $0x30] sm:$0xff] %v8488
        %8713 = vst [vmem:[%s500 + $0x38] sm:$0xff] %v8489
        %8714 = vst [vmem:[%s500 + $0x40] sm:$0xff] %v8490
        %8715 = vst [vmem:[%s500 + $0x48] sm:$0xff] %v8491
        %8716 = vst [vmem:[%s500 + $0x50] sm:$0xff] %v8492
        %8717 = vst [vmem:[%s500 + $0x58] sm:$0xff] %v8493
        %8718 = vst [vmem:[%s500 + $0x60] sm:$0xff] %v8494
        %8719 = vst [vmem:[%s500 + $0x68] sm:$0xff] %v8495
        %8720 = vst [vmem:[%s500 + $0x70] sm:$0xff] %v8496
        %8721 = vst [vmem:[%s500 + $0x78] sm:$0xff] %v8497
        %8722 = vst [vmem:[%s500 + $0x80] sm:$0xff] %v8498
        %8723 = vst [vmem:[%s500 + $0x88] sm:$0xff] %v8499
        %8724 = vst [vmem:[%s500 + $0x90] sm:$0xff] %v8500
        %8725 = vst [vmem:[%s500 + $0x98] sm:$0xff] %v8501
        %8726 = vst [vmem:[%s500 + $0xa0] sm:$0xff] %v8502
        %8727 = vst [vmem:[%s500 + $0xa8] sm:$0xff] %v8503
        %8728 = vst [vmem:[%s500 + $0xb0] sm:$0xff] %v8504
        %8729 = vst [vmem:[%s500 + $0xb8] sm:$0xff] %v8505
        %8730 = vst [vmem:[%s500 + $0xc0] sm:$0xff] %v8506
        %8731 = vst [vmem:[%s500 + $0xc8] sm:$0xff] %v8507
        %8732 = vst [vmem:[%s500 + $0xd0] sm:$0xff] %v8508
        %8733 = vst [vmem:[%s500 + $0xd8] sm:$0xff] %v8509
        %8734 = vst [vmem:[%s500 + $0xe0] sm:$0xff] %v8510
        %8735 = vst [vmem:[%s500 + $0xe8] sm:$0xff] %v8511
        %8736 = vst [vmem:[%s500 + $0xf0] sm:$0xff] %v8512
        %8737 = vst [vmem:[%s500 + $0xf8] sm:$0xff] %v8513
        %8738 = vst [vmem:[%s500 + $0x100] sm:$0xff] %v8514
        %8739 = vst [vmem:[%s500 + $0x108] sm:$0xff] %v8515
        %8740 = vst [vmem:[%s500 + $0x110] sm:$0xff] %v8516
        %8741 = vst [vmem:[%s500 + $0x118] sm:$0xff] %v8517
        %8742 = vst [vmem:[%s500 + $0x120] sm:$0xff] %v8518
        %8743 = vst [vmem:[%s500 + $0x128] sm:$0xff] %v8519
        %8744 = vst [vmem:[%s500 + $0x130] sm:$0xff] %v8520
        %8745 = vst [vmem:[%s500 + $0x138] sm:$0xff] %v8521
        %8746 = vst [vmem:[%s500 + $0x140] sm:$0xff] %v8522
        %8747 = vst [vmem:[%s500 + $0x148] sm:$0xff] %v8523
        %8748 = vst [vmem:[%s500 + $0x150] sm:$0xff] %v8524
        %8749 = vst [vmem:[%s500 + $0x158] sm:$0xff] %v8525
        %8750 = vst [vmem:[%s500 + $0x160] sm:$0xff] %v8526
        %8751 = vst [vmem:[%s500 + $0x168] sm:$0xff] %v8527
        %8752 = vst [vmem:[%s500 + $0x170] sm:$0xff] %v8528
        %8753 = vst [vmem:[%s500 + $0x178] sm:$0xff] %v8529
        %8754 = vst [vmem:[%s500 + $0x180] sm:$0xff] %v8530
        %8755 = vst [vmem:[%s500 + $0x188] sm:$0xff] %v8531
        %8756 = vst [vmem:[%s500 + $0x190] sm:$0xff] %v8532
        %8757 = vst [vmem:[%s500 + $0x198] sm:$0xff] %v8533
        %8758 = vst [vmem:[%s500 + $0x1a0] sm:$0xff] %v8534
        %8759 = vst [vmem:[%s500 + $0x1a8] sm:$0xff] %v8535
        %8760 = vst [vmem:[%s500 + $0x1b0] sm:$0xff] %v8536
        %8761 = vst [vmem:[%s500 + $0x1b8] sm:$0xff] %v8537
        %8762 = vst [vmem:[%s500 + $0x1c0] sm:$0xff] %v8538
        %8763 = vst [vmem:[%s500 + $0x1c8] sm:$0xff] %v8539
        %8764 = vst [vmem:[%s500 + $0x1d0] sm:$0xff] %v8540
        %8765 = vst [vmem:[%s500 + $0x1d8] sm:$0xff] %v8541
        %8766 = vst [vmem:[%s500 + $0x1e0] sm:$0xff] %v8542
        %8767 = vst [vmem:[%s500 + $0x1e8] sm:$0xff] %v8543
        %8768 = vst [vmem:[%s500 + $0x1f0] sm:$0xff] %v8544
        %8769 = vst [vmem:[%s500 + $0x1f8] sm:$0xff] %v8545
        %8770 = vst [vmem:[%s500 + $0x200] sm:$0xff] %v8546
        %8771 = vst [vmem:[%s500 + $0x208] sm:$0xff] %v8547
        %8772 = vst [vmem:[%s500 + $0x210] sm:$0xff] %v8548
        %8773 = vst [vmem:[%s500 + $0x218] sm:$0xff] %v8549
        %8774 = vst [vmem:[%s500 + $0x220] sm:$0xff] %v8550
        %8775 = vst [vmem:[%s500 + $0x228] sm:$0xff] %v8551
        %8776 = vst [vmem:[%s500 + $0x230] sm:$0xff] %v8552
        %8777 = vst [vmem:[%s500 + $0x238] sm:$0xff] %v8553
        %8778 = vst [vmem:[%s500 + $0x240] sm:$0xff] %v8554
        %8779 = vst [vmem:[%s500 + $0x248] sm:$0xff] %v8555
        %8780 = vst [vmem:[%s500 + $0x250] sm:$0xff] %v8556
        %8781 = vst [vmem:[%s500 + $0x258] sm:$0xff] %v8557
        %8782 = vst [vmem:[%s500 + $0x260] sm:$0xff] %v8558
        %8783 = vst [vmem:[%s500 + $0x268] sm:$0xff] %v8559
        %8784 = vst [vmem:[%s500 + $0x270] sm:$0xff] %v8560
        %8785 = vst [vmem:[%s500 + $0x278] sm:$0xff] %v8561
        %8786 = vst [vmem:[%s500 + $0x280] sm:$0xff] %v8562
        %8787 = vst [vmem:[%s500 + $0x288] sm:$0xff] %v8563
        %8788 = vst [vmem:[%s500 + $0x290] sm:$0xff] %v8564
        %8789 = vst [vmem:[%s500 + $0x298] sm:$0xff] %v8565
        %8790 = vst [vmem:[%s500 + $0x2a0] sm:$0xff] %v8566
        %8791 = vst [vmem:[%s500 + $0x2a8] sm:$0xff] %v8567
        %8792 = vst [vmem:[%s500 + $0x2b0] sm:$0xff] %v8568
        %8793 = vst [vmem:[%s500 + $0x2b8] sm:$0xff] %v8569
        %8794 = vst [vmem:[%s500 + $0x2c0] sm:$0xff] %v8570
        %8795 = vst [vmem:[%s500 + $0x2c8] sm:$0xff] %v8571
        %8796 = vst [vmem:[%s500 + $0x2d0] sm:$0xff] %v8572
        %8797 = vst [vmem:[%s500 + $0x2d8] sm:$0xff] %v8573
        %8798 = vst [vmem:[%s500 + $0x2e0] sm:$0xff] %v8574
        %8799 = vst [vmem:[%s500 + $0x2e8] sm:$0xff] %v8575
        %8800 = vst [vmem:[%s500 + $0x2f0] sm:$0xff] %v8576
        %8801 = vst [vmem:[%s500 + $0x2f8] sm:$0xff] %v8577
        %8802 = vst [vmem:[%s500 + $0x300] sm:$0xff] %v8578
        %8803 = vst [vmem:[%s500 + $0x308] sm:$0xff] %v8579
        %8804 = vst [vmem:[%s500 + $0x310] sm:$0xff] %v8580
        %8805 = vst [vmem:[%s500 + $0x318] sm:$0xff] %v8581
        %8806 = vst [vmem:[%s500 + $0x320] sm:$0xff] %v8582
        %8807 = vst [vmem:[%s500 + $0x328] sm:$0xff] %v8583
        %8808 = vst [vmem:[%s500 + $0x330] sm:$0xff] %v8584
        %8809 = vst [vmem:[%s500 + $0x338] sm:$0xff] %v8585
        %8810 = vst [vmem:[%s500 + $0x340] sm:$0xff] %v8586
        %8811 = vst [vmem:[%s500 + $0x348] sm:$0xff] %v8587
        %8812 = vst [vmem:[%s500 + $0x350] sm:$0xff] %v8588
        %8813 = vst [vmem:[%s500 + $0x358] sm:$0xff] %v8589
        %8814 = vst [vmem:[%s500 + $0x360] sm:$0xff] %v8590
        %8815 = vst [vmem:[%s500 + $0x368] sm:$0xff] %v8591
        %8816 = vst [vmem:[%s500 + $0x370] sm:$0xff] %v8592
        %8817 = vst [vmem:[%s500 + $0x378] sm:$0xff] %v8593
        %8818 = vst [vmem:[%s500 + $0x380] sm:$0xff] %v8594
        %8819 = vst [vmem:[%s500 + $0x388] sm:$0xff] %v8595
        %8820 = vst [vmem:[%s500 + $0x390] sm:$0xff] %v8596
        %8821 = vst [vmem:[%s500 + $0x398] sm:$0xff] %v8597
        %8822 = vst [vmem:[%s500 + $0x3a0] sm:$0xff] %v8598
        %8823 = vst [vmem:[%s500 + $0x3a8] sm:$0xff] %v8599
        %8824 = vst [vmem:[%s500 + $0x3b0] sm:$0xff] %v8600
        %8825 = vst [vmem:[%s500 + $0x3b8] sm:$0xff] %v8601
        %8826 = vst [vmem:[%s500 + $0x3c0] sm:$0xff] %v8602
        %8827 = vst [vmem:[%s500 + $0x3c8] sm:$0xff] %v8603
        %8828 = vst [vmem:[%s500 + $0x3d0] sm:$0xff] %v8604
        %8829 = vst [vmem:[%s500 + $0x3d8] sm:$0xff] %v8605
        %8830 = vst [vmem:[%s500 + $0x3e0] sm:$0xff] %v8606
        %8831 = vst [vmem:[%s500 + $0x3e8] sm:$0xff] %v8607
        %8832 = vst [vmem:[%s500 + $0x3f0] sm:$0xff] %v8608
        %8833 = vst [vmem:[%s500 + $0x3f8] sm:$0xff] %v8609
        %8834 = vst [vmem:[%s500 + $0x400] sm:$0xff] %v8610
        %8835 = vst [vmem:[%s500 + $0x408] sm:$0xff] %v8611
        %8836 = vst [vmem:[%s500 + $0x410] sm:$0xff] %v8612
        %8837 = vst [vmem:[%s500 + $0x418] sm:$0xff] %v8613
        %8838 = vst [vmem:[%s500 + $0x420] sm:$0xff] %v8614
        %8839 = vst [vmem:[%s500 + $0x428] sm:$0xff] %v8615
        %8840 = vst [vmem:[%s500 + $0x430] sm:$0xff] %v8616
        %8841 = vst [vmem:[%s500 + $0x438] sm:$0xff] %v8617
        %8842 = vst [vmem:[%s500 + $0x440] sm:$0xff] %v8618
        %8843 = vst [vmem:[%s500 + $0x448] sm:$0xff] %v8619
        %8844 = vst [vmem:[%s500 + $0x450] sm:$0xff] %v8620
        %8845 = vst [vmem:[%s500 + $0x458] sm:$0xff] %v8621
        %8846 = vst [vmem:[%s500 + $0x460] sm:$0xff] %v8622
        %8847 = vst [vmem:[%s500 + $0x468] sm:$0xff] %v8623
        %8848 = vst [vmem:[%s500 + $0x470] sm:$0xff] %v8624
        %8849 = vst [vmem:[%s500 + $0x478] sm:$0xff] %v8625
        %8850 = vst [vmem:[%s500 + $0x480] sm:$0xff] %v8626
        %8851 = vst [vmem:[%s500 + $0x488] sm:$0xff] %v8627
        %8852 = vst [vmem:[%s500 + $0x490] sm:$0xff] %v8628
        %8853 = vst [vmem:[%s500 + $0x498] sm:$0xff] %v8629
        %8854 = vst [vmem:[%s500 + $0x4a0] sm:$0xff] %v8630
        %8855 = vst [vmem:[%s500 + $0x4a8] sm:$0xff] %v8631
        %8856 = vst [vmem:[%s500 + $0x4b0] sm:$0xff] %v8632
        %8857 = vst [vmem:[%s500 + $0x4b8] sm:$0xff] %v8633
        %8858 = vst [vmem:[%s500 + $0x4c0] sm:$0xff] %v8634
        %8859 = vst [vmem:[%s500 + $0x4c8] sm:$0xff] %v8635
        %8860 = vst [vmem:[%s500 + $0x4d0] sm:$0xff] %v8636
        %8861 = vst [vmem:[%s500 + $0x4d8] sm:$0xff] %v8637
        %8862 = vst [vmem:[%s500 + $0x4e0] sm:$0xff] %v8638
        %8863 = vst [vmem:[%s500 + $0x4e8] sm:$0xff] %v8639
        %8864 = vst [vmem:[%s500 + $0x4f0] sm:$0xff] %v8640
        %8865 = vst [vmem:[%s500 + $0x4f8] sm:$0xff] %v8641
        %8866 = vst [vmem:[%s500 + $0x500] sm:$0xff] %v8642
        %8867 = vst [vmem:[%s500 + $0x508] sm:$0xff] %v8643
        %8868 = vst [vmem:[%s500 + $0x510] sm:$0xff] %v8644
        %8869 = vst [vmem:[%s500 + $0x518] sm:$0xff] %v8645
        %8870 = vst [vmem:[%s500 + $0x520] sm:$0xff] %v8646
        %8871 = vst [vmem:[%s500 + $0x528] sm:$0xff] %v8647
        %8872 = vst [vmem:[%s500 + $0x530] sm:$0xff] %v8648
        %8873 = vst [vmem:[%s500 + $0x538] sm:$0xff] %v8649
        %8874 = vst [vmem:[%s500 + $0x540] sm:$0xff] %v8650
        %8875 = vst [vmem:[%s500 + $0x548] sm:$0xff] %v8651
        %8876 = vst [vmem:[%s500 + $0x550] sm:$0xff] %v8652
        %8877 = vst [vmem:[%s500 + $0x558] sm:$0xff] %v8653
        %8878 = vst [vmem:[%s500 + $0x560] sm:$0xff] %v8654
        %8879 = vst [vmem:[%s500 + $0x568] sm:$0xff] %v8655
        %8880 = vst [vmem:[%s500 + $0x570] sm:$0xff] %v8656
        %8881 = vst [vmem:[%s500 + $0x578] sm:$0xff] %v8657
        %8882 = vst [vmem:[%s500 + $0x580] sm:$0xff] %v8658
        %8883 = vst [vmem:[%s500 + $0x588] sm:$0xff] %v8659
        %8884 = vst [vmem:[%s500 + $0x590] sm:$0xff] %v8660
        %8885 = vst [vmem:[%s500 + $0x598] sm:$0xff] %v8661
        %8886 = vst [vmem:[%s500 + $0x5a0] sm:$0xff] %v8662
        %8887 = vst [vmem:[%s500 + $0x5a8] sm:$0xff] %v8663
        %8888 = vst [vmem:[%s500 + $0x5b0] sm:$0xff] %v8664
        %8889 = vst [vmem:[%s500 + $0x5b8] sm:$0xff] %v8665
        %8890 = vst [vmem:[%s500 + $0x5c0] sm:$0xff] %v8666
        %8891 = vst [vmem:[%s500 + $0x5c8] sm:$0xff] %v8667
        %8892 = vst [vmem:[%s500 + $0x5d0] sm:$0xff] %v8668
        %8893 = vst [vmem:[%s500 + $0x5d8] sm:$0xff] %v8669
        %8894 = vst [vmem:[%s500 + $0x5e0] sm:$0xff] %v8670
        %8895 = vst [vmem:[%s500 + $0x5e8] sm:$0xff] %v8671
        %8896 = vst [vmem:[%s500 + $0x5f0] sm:$0xff] %v8672
        %8897 = vst [vmem:[%s500 + $0x5f8] sm:$0xff] %v8673
        %8898 = vst [vmem:[%s500 + $0x600] sm:$0xff] %v8674
        %8899 = vst [vmem:[%s500 + $0x608] sm:$0xff] %v8675
        %8900 = vst [vmem:[%s500 + $0x610] sm:$0xff] %v8676
        %8901 = vst [vmem:[%s500 + $0x618] sm:$0xff] %v8677
        %8902 = vst [vmem:[%s500 + $0x620] sm:$0xff] %v8678
        %8903 = vst [vmem:[%s500 + $0x628] sm:$0xff] %v8679
        %8904 = vst [vmem:[%s500 + $0x630] sm:$0xff] %v8680
        %8905 = vst [vmem:[%s500 + $0x638] sm:$0xff] %v8681
        %8906 = vst [vmem:[%s500 + $0x640] sm:$0xff] %v8682
        %8907 = vst [vmem:[%s500 + $0x648] sm:$0xff] %v8683
        %8908 = vst [vmem:[%s500 + $0x650] sm:$0xff] %v8684
        %8909 = vst [vmem:[%s500 + $0x658] sm:$0xff] %v8685
        %8910 = vst [vmem:[%s500 + $0x660] sm:$0xff] %v8686
        %8911 = vst [vmem:[%s500 + $0x668] sm:$0xff] %v8687
        %8912 = vst [vmem:[%s500 + $0x670] sm:$0xff] %v8688
        %8913 = vst [vmem:[%s500 + $0x678] sm:$0xff] %v8689
        %8914 = vst [vmem:[%s500 + $0x680] sm:$0xff] %v8690
        %8915 = vst [vmem:[%s500 + $0x688] sm:$0xff] %v8691
        %8916 = vst [vmem:[%s500 + $0x690] sm:$0xff] %v8692
        %8917 = vst [vmem:[%s500 + $0x698] sm:$0xff] %v8693
        %8918 = vst [vmem:[%s500 + $0x6a0] sm:$0xff] %v8694
        %8919 = vst [vmem:[%s500 + $0x6a8] sm:$0xff] %v8695
        %8920 = vst [vmem:[%s500 + $0x6b0] sm:$0xff] %v8696
        %8921 = vst [vmem:[%s500 + $0x6b8] sm:$0xff] %v8697
        %8922 = vst [vmem:[%s500 + $0x6c0] sm:$0xff] %v8698
        %8923 = vst [vmem:[%s500 + $0x6c8] sm:$0xff] %v8699
        %8924 = vst [vmem:[%s500 + $0x6d0] sm:$0xff] %v8700
        %8925 = vst [vmem:[%s500 + $0x6d8] sm:$0xff] %v8701
        %8926 = vst [vmem:[%s500 + $0x6e0] sm:$0xff] %v8702
        %8927 = vst [vmem:[%s500 + $0x6e8] sm:$0xff] %v8703
        %8928 = vst [vmem:[%s500 + $0x6f0] sm:$0xff] %v8704
        %8929 = vst [vmem:[%s500 + $0x6f8] sm:$0xff] %v8705
        %s8930 = sand.u32 %s255, 1
        %s8931 = scalar_lea.sflag [#allocation4], %s8930
        %s8932 = sand.u32 %s255, 1
        %s8933 = smul.addr %s8932, 1792
        %s8934 = scalar_lea.vmem [#allocation19], %s8933
        // Predicated region
        $region101: #{tpu_custom_call.1} parent=59 // pred_check
          %p8935 = pneg %p265
        $region102: #{tpu_custom_call.1} parent=59 // pred_check_branch
          %8937 = sbr.rel (%p8935) target = $region104
        $region103: #{tpu_custom_call.1} parent=59 // pred_region
          %s8939 = ssub.s32 28672, 28672
          %8940 = vsyncadd %s8931, %s8939
          %s8941 = smul.addr %s32, 224
          %s8942 = smul.addr %s8941, 128
          %s8943 = scalar_lea.hbm %s10, %s8942
          %s8944 = sshll.u32 %s8934, 4
          %s8945 = int_to_ptr.vmem [resolvable:$true] %s8944
          %8950 = dma.vmem_to_hbm [thread:$0]  %s8945, 28672, %s8943, %s8931, 896, 896, 56
        $region104: #{tpu_custom_call.1} parent=59 // pred_fallthru
          _
      $region60: #{tpu_custom_call.1} parent=5 // pred_fallthru
        _
      %p8951 = scmp.le.s32.totalorder 2, %s27
      // Predicated region
      $region105: #{tpu_custom_call.1} parent=5 // pred_check
        %p8952 = pneg %p8951
      $region106: #{tpu_custom_call.1} parent=5 // pred_check_branch
        %8954 = sbr.rel (%p8952) target = $region108
      $region107: #{tpu_custom_call.1} parent=5 // pred_region
        %s8955 = ssub.s32 %s27, 2
        // Predicated region
        $region109: #{tpu_custom_call.1} parent=107 // pred_check
          %p8956 = pneg %p271
        $region110: #{tpu_custom_call.1} parent=107 // pred_check_branch
          %8958 = sbr.rel (%p8956) target = $region112
        $region111: #{tpu_custom_call.1} parent=107 // pred_region
          %s8959 = sand.u32 %s256, 1
          %s8960 = scalar_lea.sflag [#allocation4], %s8959
          %s8961 = sand.u32 %s256, 1
          %s8962 = smul.addr %s8961, 1792
          %s8963 = scalar_lea.vmem [#allocation19], %s8962
          %8964 = dma.done %s8960, 28672
        $region112: #{tpu_custom_call.1} parent=107 // pred_fallthru
          _
      $region108: #{tpu_custom_call.1} parent=5 // pred_fallthru
        _
    $region6: #{tpu_custom_call.1} parent=1 // loop_footer
      %s31 = sadd.s32 1, %s27
    $region7: #{tpu_custom_call.1} parent=1 // loop_footer_branch
      %26 = sbr.rel target = $region3
    $region8: #{tpu_custom_call.1} parent=1 // loop_exit
      _
    %8965 = vsyncpa [#allocation3], 1
    %s8966 = scalar_lea.sflag [#allocation3], 1
    %8967 = vsyncpa %s8966, 1
    %8968 = vsyncpa [#allocation6], 1
    %8969 = vsyncpa [#allocation9], 1
    %8970 = vsyncpa [#allocation12], 1
    %8971 = vsyncpa [#allocation15], 1
    %8972 = vsyncpa [#allocation18], 1
    %8973 = vsyncpa [#allocation4], 1
    %s8974 = scalar_lea.sflag [#allocation4], 1
    %8975 = vsyncpa %s8974, 1

</llo_original>
